<compile_context>
chip_gen: v5e
topology: v5e:2x2
jax: 0.10.0
libtpu: 0.0.40
codegen_flags: <defaults>
</compile_context>

<pallas_src>
import numpy as np
import jax
import jax.numpy as jnp
from jax import lax
from jax.experimental import pallas as pl
from jax.experimental.pallas import tpu as pltpu

H = W = 20            # fixed by CLayerNorm([20, 20])
HP = WP = 22          # zero-padded spatial
PIX = HP * WP         # 484
BLK = 512             # lanes per batch segment (padded flat spatial)
EPS = 1e-5

# Lane rolls wrap only at the ends of the whole block; interior output lanes
# of a 512-lane segment only ever read lanes [0, PIX+WP+1) of the SAME segment
# as long as the trailing pad covers the largest 3x3 stencil offset (WP + 1).
assert BLK - PIX >= WP + 1, "trailing lane pad must cover the 3x3 stencil reach"


def _prop_kernel(x_ref, g_ref, b_ref, w_ref, mask_ref, o_ref, col_ref):
    f32 = jnp.float32
    bf16 = jnp.bfloat16
    C2, N = x_ref.shape                    # (2C, Nb*BLK)
    nb = N // BLK
    inv_hw = 1.0 / float(H * W)

    mask = mask_ref[...]                   # (1, N) f32 interior-pixel indicator
    x = x_ref[...]                         # (2C, N) f32, padding lanes are zero

    # ---- CLayerNorm([20,20]): per-(part,channel) stats per 512-lane segment.
    # Pad lanes are zero, so plain lane sums equal the interior sums;
    # var = E[x^2] - mean^2 avoids a masked (x - mean) materialization.
    segs = []
    for s in range(nb):
        xs = x[:, s * BLK:(s + 1) * BLK]
        mu = jnp.sum(xs, axis=1, keepdims=True) * inv_hw
        ex2 = jnp.sum(xs * xs, axis=1, keepdims=True) * inv_hw
        var = ex2 - mu * mu
        segs.append((xs - mu) * lax.rsqrt(var + EPS))
    xn = segs[0] if nb == 1 else jnp.concatenate(segs, axis=1)
    x = xn * g_ref[...] + b_ref[...]       # gamma/beta zero on pads -> pads stay 0

    # ---- constant bias/mask contraction rows [9*C2, 10*C2), written once per
    # step; the augmented weight's matching columns are [bias, 0, ..., 0], so
    # the matmul itself adds bias on interior lanes only.
    col_ref[9 * C2:, :] = jnp.broadcast_to(mask, (C2, N)).astype(bf16)

    # ---- complex 3x3 conv (pad=1): im2col (bf16) + one K=160 MXU matmul ----
    def cconv(v, j):
        for ky in range(3):
            for kx in range(3):
                tap = ky * 3 + kx
                dd = (ky - 1) * WP + (kx - 1)          # flat neighbor offset
                sh = v if dd == 0 else pltpu.roll(v, (-dd) % N, axis=1)
                col_ref[tap * C2:(tap + 1) * C2, :] = sh.astype(bf16)
        y = jnp.dot(w_ref[j], col_ref[...], preferred_element_type=f32)
        return y * mask                    # keep zero padding lanes exactly zero

    # ---- three CResBlock2d -------------------------------------------------
    for blk in range(3):
        h = jnp.maximum(cconv(x, 2 * blk), 0.0)        # CReLU
        h = cconv(h, 2 * blk + 1)
        x = jnp.maximum(x + h, 0.0)

    o_ref[...] = x


def propagation_layer2(x, params, *, batches_per_step=None, core_parallel=False):
    """x: complex64 (B, C, 20, 20) NCHW -> complex64 (B, C, 20, 20).

    batches_per_step: number of 512-lane batch segments packed per grid step
        (must divide B); defaults to the largest of {8,4,2,1} dividing B.
    core_parallel: set True on v7x to split the batch grid axis across the two
        TensorCores (pltpu.CORE_PARALLEL); harmless default "parallel" elsewhere.
    """
    B, C, h, w = x.shape
    assert (h, w) == (H, W)
    C2 = 2 * C
    f32 = jnp.float32
    bf16 = jnp.bfloat16

    if batches_per_step is None:
        batches_per_step = next(n for n in (8, 4, 2, 1) if B % n == 0)
    nb = batches_per_step
    assert B % nb == 0, "batches_per_step must divide batch size"
    nlanes = nb * BLK

    xr = jnp.real(x).astype(f32)
    xi = jnp.imag(x).astype(f32)

    # (B, 2C, 20, 20) -> (2C, B*BLK): block-real channels on sublanes, the
    # zero-padded 22x22 grid flattened + right-padded to 512 lanes per batch.
    v = jnp.concatenate([xr, xi], axis=1)                     # (B, 2C, 20, 20)
    v = jnp.pad(v, ((0, 0), (0, 0), (1, 1), (1, 1))).reshape(B, C2, PIX)
    v = jnp.pad(v, ((0, 0), (0, 0), (0, BLK - PIX)))
    xp = jnp.transpose(v, (1, 0, 2)).reshape(C2, B * BLK)

    # LayerNorm affine packed as (2C, Nb*BLK); zero on padding lanes.
    def pack_ln(gr, gi):
        def one(g):
            g = jnp.pad(g.astype(f32), ((1, 1), (1, 1))).reshape(PIX)
            g = jnp.pad(g, (0, BLK - PIX))
            return jnp.tile(g[None, :], (C, 1))               # (C, BLK)
        blkv = jnp.concatenate([one(gr), one(gi)], axis=0)    # (2C, BLK)
        return jnp.tile(blkv, (1, nb))                        # (2C, Nb*BLK)

    gamma = pack_ln(params["ln_gr"], params["ln_gi"])
    beta = pack_ln(params["ln_br"], params["ln_bi"])

    # Block-real weights [[Wr,-Wi],[Wi,Wr]] packed lane-dense per conv as
    # (2C, 9*2C) with taps along the contraction axis (tap = ky*3 + kx),
    # then augmented with C2 columns whose first carries the bias (matched by
    # the mask-valued contraction rows in-kernel).  Stored as bf16.
    wr = params["wr"].astype(f32)                             # (6, Co, Ci, 3, 3)
    wi = params["wi"].astype(f32)
    top = jnp.concatenate([wr, -wi], axis=2)                  # (6, Co, 2Ci, 3, 3)
    bot = jnp.concatenate([wi, wr], axis=2)
    wblk = jnp.concatenate([top, bot], axis=1)                # (6, 2C, 2C, 3, 3)
    wfull = jnp.transpose(wblk, (0, 3, 4, 1, 2)).reshape(6, 9, C2, C2)
    wfull = jnp.transpose(wfull, (0, 2, 1, 3)).reshape(6, C2, 9 * C2)
    cb = jnp.concatenate([params["br"], params["bi"]], axis=1).astype(f32)  # (6, 2C)
    bias_cols = jnp.zeros((6, C2, C2), f32).at[:, :, 0].set(cb)
    w_aug = jnp.concatenate([wfull, bias_cols], axis=2).astype(bf16)  # (6, C2, 10*C2)

    # interior-pixel mask, tiled to Nb 512-lane segments (built host-side)
    m2d = np.zeros((HP, WP), np.float32)
    m2d[1:-1, 1:-1] = 1.0
    mflat = np.zeros((BLK,), np.float32)
    mflat[:PIX] = m2d.reshape(-1)
    mask = jnp.tile(jnp.asarray(mflat).reshape(1, BLK), (1, nb))

    sem = pltpu.CORE_PARALLEL if core_parallel else "parallel"

    out = pl.pallas_call(
        _prop_kernel,
        out_shape=jax.ShapeDtypeStruct((C2, B * BLK), f32),
        grid=(B // nb,),
        in_specs=[
            pl.BlockSpec((C2, nlanes), lambda b: (0, b)),               # x
            pl.BlockSpec((C2, nlanes), lambda b: (0, 0)),               # gamma
            pl.BlockSpec((C2, nlanes), lambda b: (0, 0)),               # beta
            pl.BlockSpec((6, C2, 10 * C2), lambda b: (0, 0, 0)),        # conv W (bf16)
            pl.BlockSpec((1, nlanes), lambda b: (0, 0)),                # mask
        ],
        out_specs=pl.BlockSpec((C2, nlanes), lambda b: (0, b)),
        scratch_shapes=[pltpu.VMEM((10 * C2, nlanes), bf16)],           # im2col
        compiler_params=pltpu.CompilerParams(dimension_semantics=(sem,)),
    )(xp, gamma, beta, w_aug, mask)

    # (2C, B*BLK) -> complex (B, C, 20, 20)
    o = out.reshape(C2, B, BLK)[:, :, :PIX].reshape(C2, B, HP, WP)
    o = o[:, :, 1:HP - 1, 1:WP - 1]
    outr = jnp.transpose(o[:C], (1, 0, 2, 3))
    outi = jnp.transpose(o[C:], (1, 0, 2, 3))
    return (outr + 1j * outi).astype(jnp.complex64)


def _reference_forward(x, params):
    """Pure-JAX reference with identical (assumed) semantics, f32 convs."""
    xr = jnp.real(x).astype(jnp.float32)
    xi = jnp.imag(x).astype(jnp.float32)

    def ln(v, g, b):
        m = v.mean(axis=(-2, -1), keepdims=True)
        var = ((v - m) ** 2).mean(axis=(-2, -1), keepdims=True)
        return (v - m) * lax.rsqrt(var + EPS) * g + b

    xr = ln(xr, params["ln_gr"], params["ln_br"])
    xi = ln(xi, params["ln_gi"], params["ln_bi"])

    def conv(v, w):
        return lax.conv_general_dilated(
            v, w, (1, 1), "SAME",
            dimension_numbers=("NCHW", "OIHW", "NCHW"))

    def cconv(vr, vi, j):
        wr, wi = params["wr"][j], params["wi"][j]
        br, bi = params["br"][j], params["bi"][j]
        yr = conv(vr, wr) - conv(vi, wi) + br[None, :, None, None]
        yi = conv(vr, wi) + conv(vi, wr) + bi[None, :, None, None]
        return yr, yi

    for blk in range(3):
        hr, hi = cconv(xr, xi, 2 * blk)
        hr, hi = jnp.maximum(hr, 0.0), jnp.maximum(hi, 0.0)
        hr, hi = cconv(hr, hi, 2 * blk + 1)
        xr = jnp.maximum(xr + hr, 0.0)
        xi = jnp.maximum(xi + hi, 0.0)
    return (xr + 1j * xi).astype(jnp.complex64)


if __name__ == "__main__":
    B, C = 2, 8                    # hidden_channel = 8, spatial fixed at 20x20
    key = jax.random.PRNGKey(0)
    k = jax.random.split(key, 6)
    scale = 1.0 / np.sqrt(9.0 * C)
    params = dict(
        ln_gr=jnp.ones((H, W), jnp.float32),
        ln_br=jnp.zeros((H, W), jnp.float32),
        ln_gi=jnp.ones((H, W), jnp.float32),
        ln_bi=jnp.zeros((H, W), jnp.float32),
        wr=jax.random.normal(k[0], (6, C, C, 3, 3), jnp.float32) * scale,
        wi=jax.random.normal(k[1], (6, C, C, 3, 3), jnp.float32) * scale,
        br=jax.random.normal(k[2], (6, C), jnp.float32) * 0.1,
        bi=jax.random.normal(k[3], (6, C), jnp.float32) * 0.1,
    )
    xr0 = jax.random.normal(k[4], (B, C, H, W), jnp.float32)
    xi0 = jax.random.normal(k[5], (B, C, H, W), jnp.float32)
    x = (xr0 + 1j * xi0).astype(jnp.complex64)

    out = jax.block_until_ready(propagation_layer2(x, params))
    ref = jax.block_until_ready(_reference_forward(x, params))

    err = float(jnp.max(jnp.abs(out - ref)))
    denom = float(jnp.max(jnp.abs(ref))) + 1e-6
    assert bool(jnp.all(jnp.isfinite(jnp.abs(out)))), "non-finite output"
    # Conv matmuls use bf16 MXU operands with f32 accumulation (6 chained
    # convs), so allow a bf16-appropriate relative tolerance.
    assert err / denom < 2e-2, f"kernel/reference mismatch: abs={err} rel={err/denom}"
    print("KERNEL_OK")
</pallas_src>

<mosaic_0001>
module attributes {stable_mosaic.version = 11 : i64} {
  func.func @_prop_kernel(%arg0: i32, %arg1: memref<16x1024xf32, #tpu.memory_space<vmem>>, %arg2: memref<16x1024xf32, #tpu.memory_space<vmem>>, %arg3: memref<16x1024xf32, #tpu.memory_space<vmem>>, %arg4: memref<6x16x160xbf16, #tpu.memory_space<vmem>>, %arg5: memref<1x1024xf32, #tpu.memory_space<vmem>>, %arg6: memref<16x1024xf32, #tpu.memory_space<vmem>>, %arg7: memref<160x1024xbf16, #tpu.memory_space<vmem>>) attributes {dimension_semantics = [#tpu.dimension_semantics<parallel>], iteration_bounds = array<i64: 1>, scalar_prefetch = 0 : i64, scratch_operands = 1 : i64, tpu.core_type = #tpu.core_type<tc>, window_params = [{transform_indices = @transform_0, window_bounds = array<i64: 16, 1024>}, {pipeline_mode = #tpu.pipeline_mode<synchronous>, transform_indices = @transform_1, window_bounds = array<i64: 16, 1024>}, {pipeline_mode = #tpu.pipeline_mode<synchronous>, transform_indices = @transform_2, window_bounds = array<i64: 16, 1024>}, {pipeline_mode = #tpu.pipeline_mode<synchronous>, transform_indices = @transform_3, window_bounds = array<i64: 6, 16, 160>}, {pipeline_mode = #tpu.pipeline_mode<synchronous>, transform_indices = @transform_4, window_bounds = array<i64: 1, 1024>}, {transform_indices = @transform_5, window_bounds = array<i64: 16, 1024>}]} {
    %c0 = arith.constant 0 : index
    %c0_0 = arith.constant 0 : index
    %0 = vector.load %arg5[%c0, %c0_0] : memref<1x1024xf32, #tpu.memory_space<vmem>>, vector<1x1024xf32>
    %c0_1 = arith.constant 0 : index
    %c0_2 = arith.constant 0 : index
    %1 = vector.load %arg1[%c0_1, %c0_2] : memref<16x1024xf32, #tpu.memory_space<vmem>>, vector<16x1024xf32>
    %2 = vector.extract_strided_slice %1 {offsets = [0, 0], sizes = [16, 512], strides = [1, 1]} : vector<16x1024xf32> to vector<16x512xf32>
    %cst = arith.constant dense<0.000000e+00> : vector<16xf32>
    %3 = vector.multi_reduction <add>, %2, %cst [1] : vector<16x512xf32> to vector<16xf32>
    %4 = vector.shape_cast %3 : vector<16xf32> to vector<16x1xf32>
    %cst_3 = arith.constant 2.500000e-03 : f32
    %5 = vector.broadcast %cst_3 : f32 to vector<16x1xf32>
    %6 = arith.mulf %4, %5 : vector<16x1xf32>
    %7 = arith.mulf %2, %2 : vector<16x512xf32>
    %cst_4 = arith.constant dense<0.000000e+00> : vector<16xf32>
    %8 = vector.multi_reduction <add>, %7, %cst_4 [1] : vector<16x512xf32> to vector<16xf32>
    %9 = vector.shape_cast %8 : vector<16xf32> to vector<16x1xf32>
    %cst_5 = arith.constant 2.500000e-03 : f32
    %10 = vector.broadcast %cst_5 : f32 to vector<16x1xf32>
    %11 = arith.mulf %9, %10 : vector<16x1xf32>
    %12 = arith.mulf %6, %6 : vector<16x1xf32>
    %13 = arith.subf %11, %12 : vector<16x1xf32>
    %14 = vector.broadcast %6 : vector<16x1xf32> to vector<16x512xf32>
    %15 = arith.subf %2, %14 : vector<16x512xf32>
    %cst_6 = arith.constant 9.99999974E-6 : f32
    %16 = vector.broadcast %cst_6 : f32 to vector<16x1xf32>
    %17 = arith.addf %13, %16 : vector<16x1xf32>
    %18 = math.rsqrt %17 : vector<16x1xf32>
    %19 = vector.broadcast %18 : vector<16x1xf32> to vector<16x512xf32>
    %20 = arith.mulf %15, %19 : vector<16x512xf32>
    %21 = vector.extract_strided_slice %1 {offsets = [0, 512], sizes = [16, 512], strides = [1, 1]} : vector<16x1024xf32> to vector<16x512xf32>
    %cst_7 = arith.constant dense<0.000000e+00> : vector<16xf32>
    %22 = vector.multi_reduction <add>, %21, %cst_7 [1] : vector<16x512xf32> to vector<16xf32>
    %23 = vector.shape_cast %22 : vector<16xf32> to vector<16x1xf32>
    %cst_8 = arith.constant 2.500000e-03 : f32
    %24 = vector.broadcast %cst_8 : f32 to vector<16x1xf32>
    %25 = arith.mulf %23, %24 : vector<16x1xf32>
    %26 = arith.mulf %21, %21 : vector<16x512xf32>
    %cst_9 = arith.constant dense<0.000000e+00> : vector<16xf32>
    %27 = vector.multi_reduction <add>, %26, %cst_9 [1] : vector<16x512xf32> to vector<16xf32>
    %28 = vector.shape_cast %27 : vector<16xf32> to vector<16x1xf32>
    %cst_10 = arith.constant 2.500000e-03 : f32
    %29 = vector.broadcast %cst_10 : f32 to vector<16x1xf32>
    %30 = arith.mulf %28, %29 : vector<16x1xf32>
    %31 = arith.mulf %25, %25 : vector<16x1xf32>
    %32 = arith.subf %30, %31 : vector<16x1xf32>
    %33 = vector.broadcast %25 : vector<16x1xf32> to vector<16x512xf32>
    %34 = arith.subf %21, %33 : vector<16x512xf32>
    %cst_11 = arith.constant 9.99999974E-6 : f32
    %35 = vector.broadcast %cst_11 : f32 to vector<16x1xf32>
    %36 = arith.addf %32, %35 : vector<16x1xf32>
    %37 = math.rsqrt %36 : vector<16x1xf32>
    %38 = vector.broadcast %37 : vector<16x1xf32> to vector<16x512xf32>
    %39 = arith.mulf %34, %38 : vector<16x512xf32>
    %40 = tpu.concatenate %20, %39 in 1 : vector<16x512xf32>, vector<16x512xf32> -> vector<16x1024xf32>
    %c0_12 = arith.constant 0 : index
    %c0_13 = arith.constant 0 : index
    %41 = vector.load %arg2[%c0_12, %c0_13] : memref<16x1024xf32, #tpu.memory_space<vmem>>, vector<16x1024xf32>
    %42 = arith.mulf %40, %41 : vector<16x1024xf32>
    %c0_14 = arith.constant 0 : index
    %c0_15 = arith.constant 0 : index
    %43 = vector.load %arg3[%c0_14, %c0_15] : memref<16x1024xf32, #tpu.memory_space<vmem>>, vector<16x1024xf32>
    %44 = arith.addf %42, %43 : vector<16x1024xf32>
    %45 = vector.shape_cast %0 : vector<1x1024xf32> to vector<1x1024xf32>
    %46 = vector.broadcast %45 : vector<1x1024xf32> to vector<16x1024xf32>
    %47 = arith.truncf %46 : vector<16x1024xf32> to vector<16x1024xbf16>
    %c144 = arith.constant 144 : index
    %c0_16 = arith.constant 0 : index
    %48 = vector.load %arg7[%c144, %c0_16] : memref<160x1024xbf16, #tpu.memory_space<vmem>>, vector<16x1024xbf16>
    tpu.vector_store %arg7[%c144, %c0_16], %47 {strides = array<i32>} : memref<160x1024xbf16, #tpu.memory_space<vmem>>, vector<16x1024xbf16>,
    %c23_i32 = arith.constant 23 : i32
    %49 = tpu.dynamic_rotate %44 by %c23_i32 dim 1 : vector<16x1024xf32>, i32 -> vector<16x1024xf32>
    %50 = arith.truncf %49 : vector<16x1024xf32> to vector<16x1024xbf16>
    %c0_17 = arith.constant 0 : index
    %c0_18 = arith.constant 0 : index
    %51 = vector.load %arg7[%c0_17, %c0_18] : memref<160x1024xbf16, #tpu.memory_space<vmem>>, vector<16x1024xbf16>
    tpu.vector_store %arg7[%c0_17, %c0_18], %50 {strides = array<i32>} : memref<160x1024xbf16, #tpu.memory_space<vmem>>, vector<16x1024xbf16>,
    %c22_i32 = arith.constant 22 : i32
    %52 = tpu.dynamic_rotate %44 by %c22_i32 dim 1 : vector<16x1024xf32>, i32 -> vector<16x1024xf32>
    %53 = arith.truncf %52 : vector<16x1024xf32> to vector<16x1024xbf16>
    %c16 = arith.constant 16 : index
    %c0_19 = arith.constant 0 : index
    %54 = vector.load %arg7[%c16, %c0_19] : memref<160x1024xbf16, #tpu.memory_space<vmem>>, vector<16x1024xbf16>
    tpu.vector_store %arg7[%c16, %c0_19], %53 {strides = array<i32>} : memref<160x1024xbf16, #tpu.memory_space<vmem>>, vector<16x1024xbf16>,
    %c21_i32 = arith.constant 21 : i32
    %55 = tpu.dynamic_rotate %44 by %c21_i32 dim 1 : vector<16x1024xf32>, i32 -> vector<16x1024xf32>
    %56 = arith.truncf %55 : vector<16x1024xf32> to vector<16x1024xbf16>
    %c32 = arith.constant 32 : index
    %c0_20 = arith.constant 0 : index
    %57 = vector.load %arg7[%c32, %c0_20] : memref<160x1024xbf16, #tpu.memory_space<vmem>>, vector<16x1024xbf16>
    tpu.vector_store %arg7[%c32, %c0_20], %56 {strides = array<i32>} : memref<160x1024xbf16, #tpu.memory_space<vmem>>, vector<16x1024xbf16>,
    %c1_i32 = arith.constant 1 : i32
    %58 = tpu.dynamic_rotate %44 by %c1_i32 dim 1 : vector<16x1024xf32>, i32 -> vector<16x1024xf32>
    %59 = arith.truncf %58 : vector<16x1024xf32> to vector<16x1024xbf16>
    %c48 = arith.constant 48 : index
    %c0_21 = arith.constant 0 : index
    %60 = vector.load %arg7[%c48, %c0_21] : memref<160x1024xbf16, #tpu.memory_space<vmem>>, vector<16x1024xbf16>
    tpu.vector_store %arg7[%c48, %c0_21], %59 {strides = array<i32>} : memref<160x1024xbf16, #tpu.memory_space<vmem>>, vector<16x1024xbf16>,
    %61 = arith.truncf %44 : vector<16x1024xf32> to vector<16x1024xbf16>
    %c64 = arith.constant 64 : index
    %c0_22 = arith.constant 0 : index
    %62 = vector.load %arg7[%c64, %c0_22] : memref<160x1024xbf16, #tpu.memory_space<vmem>>, vector<16x1024xbf16>
    tpu.vector_store %arg7[%c64, %c0_22], %61 {strides = array<i32>} : memref<160x1024xbf16, #tpu.memory_space<vmem>>, vector<16x1024xbf16>,
    %c1023_i32 = arith.constant 1023 : i32
    %63 = tpu.dynamic_rotate %44 by %c1023_i32 dim 1 : vector<16x1024xf32>, i32 -> vector<16x1024xf32>
    %64 = arith.truncf %63 : vector<16x1024xf32> to vector<16x1024xbf16>
    %c80 = arith.constant 80 : index
    %c0_23 = arith.constant 0 : index
    %65 = vector.load %arg7[%c80, %c0_23] : memref<160x1024xbf16, #tpu.memory_space<vmem>>, vector<16x1024xbf16>
    tpu.vector_store %arg7[%c80, %c0_23], %64 {strides = array<i32>} : memref<160x1024xbf16, #tpu.memory_space<vmem>>, vector<16x1024xbf16>,
    %c1003_i32 = arith.constant 1003 : i32
    %66 = tpu.dynamic_rotate %44 by %c1003_i32 dim 1 : vector<16x1024xf32>, i32 -> vector<16x1024xf32>
    %67 = arith.truncf %66 : vector<16x1024xf32> to vector<16x1024xbf16>
    %c96 = arith.constant 96 : index
    %c0_24 = arith.constant 0 : index
    %68 = vector.load %arg7[%c96, %c0_24] : memref<160x1024xbf16, #tpu.memory_space<vmem>>, vector<16x1024xbf16>
    tpu.vector_store %arg7[%c96, %c0_24], %67 {strides = array<i32>} : memref<160x1024xbf16, #tpu.memory_space<vmem>>, vector<16x1024xbf16>,
    %c1002_i32 = arith.constant 1002 : i32
    %69 = tpu.dynamic_rotate %44 by %c1002_i32 dim 1 : vector<16x1024xf32>, i32 -> vector<16x1024xf32>
    %70 = arith.truncf %69 : vector<16x1024xf32> to vector<16x1024xbf16>
    %c112 = arith.constant 112 : index
    %c0_25 = arith.constant 0 : index
    %71 = vector.load %arg7[%c112, %c0_25] : memref<160x1024xbf16, #tpu.memory_space<vmem>>, vector<16x1024xbf16>
    tpu.vector_store %arg7[%c112, %c0_25], %70 {strides = array<i32>} : memref<160x1024xbf16, #tpu.memory_space<vmem>>, vector<16x1024xbf16>,
    %c1001_i32 = arith.constant 1001 : i32
    %72 = tpu.dynamic_rotate %44 by %c1001_i32 dim 1 : vector<16x1024xf32>, i32 -> vector<16x1024xf32>
    %73 = arith.truncf %72 : vector<16x1024xf32> to vector<16x1024xbf16>
    %c128 = arith.constant 128 : index
    %c0_26 = arith.constant 0 : index
    %74 = vector.load %arg7[%c128, %c0_26] : memref<160x1024xbf16, #tpu.memory_space<vmem>>, vector<16x1024xbf16>
    tpu.vector_store %arg7[%c128, %c0_26], %73 {strides = array<i32>} : memref<160x1024xbf16, #tpu.memory_space<vmem>>, vector<16x1024xbf16>,
    %c0_27 = arith.constant 0 : index
    %c0_28 = arith.constant 0 : index
    %c0_29 = arith.constant 0 : index
    %75 = vector.load %arg4[%c0_27, %c0_28, %c0_29] : memref<6x16x160xbf16, #tpu.memory_space<vmem>>, vector<1x16x160xbf16>
    %76 = vector.shape_cast %75 : vector<1x16x160xbf16> to vector<16x160xbf16>
    %c0_30 = arith.constant 0 : index
    %c0_31 = arith.constant 0 : index
    %77 = vector.load %arg7[%c0_30, %c0_31] : memref<160x1024xbf16, #tpu.memory_space<vmem>>, vector<160x1024xbf16>
    %cst_32 = arith.constant dense<0.000000e+00> : vector<16x1024xf32>
    %78 = tpu.matmul %76, %77, %cst_32 {dimension_numbers = #tpu.dot_dimension_numbers<[1], [0], [0], [1], [0, 0, 1, 1], [], []>} : vector<16x160xbf16>, vector<160x1024xbf16>, vector<16x1024xf32> -> vector<16x1024xf32>
    %79 = vector.broadcast %0 : vector<1x1024xf32> to vector<16x1024xf32>
    %80 = arith.mulf %78, %79 : vector<16x1024xf32>
    %cst_33 = arith.constant 0.000000e+00 : f32
    %81 = vector.broadcast %cst_33 : f32 to vector<16x1024xf32>
    %82 = arith.maximumf %80, %81 : vector<16x1024xf32>
    %c23_i32_34 = arith.constant 23 : i32
    %83 = tpu.dynamic_rotate %82 by %c23_i32_34 dim 1 : vector<16x1024xf32>, i32 -> vector<16x1024xf32>
    %84 = arith.truncf %83 : vector<16x1024xf32> to vector<16x1024xbf16>
    %c0_35 = arith.constant 0 : index
    %c0_36 = arith.constant 0 : index
    %85 = vector.load %arg7[%c0_35, %c0_36] : memref<160x1024xbf16, #tpu.memory_space<vmem>>, vector<16x1024xbf16>
    tpu.vector_store %arg7[%c0_35, %c0_36], %84 {strides = array<i32>} : memref<160x1024xbf16, #tpu.memory_space<vmem>>, vector<16x1024xbf16>,
    %c22_i32_37 = arith.constant 22 : i32
    %86 = tpu.dynamic_rotate %82 by %c22_i32_37 dim 1 : vector<16x1024xf32>, i32 -> vector<16x1024xf32>
    %87 = arith.truncf %86 : vector<16x1024xf32> to vector<16x1024xbf16>
    %c16_38 = arith.constant 16 : index
    %c0_39 = arith.constant 0 : index
    %88 = vector.load %arg7[%c16_38, %c0_39] : memref<160x1024xbf16, #tpu.memory_space<vmem>>, vector<16x1024xbf16>
    tpu.vector_store %arg7[%c16_38, %c0_39], %87 {strides = array<i32>} : memref<160x1024xbf16, #tpu.memory_space<vmem>>, vector<16x1024xbf16>,
    %c21_i32_40 = arith.constant 21 : i32
    %89 = tpu.dynamic_rotate %82 by %c21_i32_40 dim 1 : vector<16x1024xf32>, i32 -> vector<16x1024xf32>
    %90 = arith.truncf %89 : vector<16x1024xf32> to vector<16x1024xbf16>
    %c32_41 = arith.constant 32 : index
    %c0_42 = arith.constant 0 : index
    %91 = vector.load %arg7[%c32_41, %c0_42] : memref<160x1024xbf16, #tpu.memory_space<vmem>>, vector<16x1024xbf16>
    tpu.vector_store %arg7[%c32_41, %c0_42], %90 {strides = array<i32>} : memref<160x1024xbf16, #tpu.memory_space<vmem>>, vector<16x1024xbf16>,
    %c1_i32_43 = arith.constant 1 : i32
    %92 = tpu.dynamic_rotate %82 by %c1_i32_43 dim 1 : vector<16x1024xf32>, i32 -> vector<16x1024xf32>
    %93 = arith.truncf %92 : vector<16x1024xf32> to vector<16x1024xbf16>
    %c48_44 = arith.constant 48 : index
    %c0_45 = arith.constant 0 : index
    %94 = vector.load %arg7[%c48_44, %c0_45] : memref<160x1024xbf16, #tpu.memory_space<vmem>>, vector<16x1024xbf16>
    tpu.vector_store %arg7[%c48_44, %c0_45], %93 {strides = array<i32>} : memref<160x1024xbf16, #tpu.memory_space<vmem>>, vector<16x1024xbf16>,
    %95 = arith.truncf %82 : vector<16x1024xf32> to vector<16x1024xbf16>
    %c64_46 = arith.constant 64 : index
    %c0_47 = arith.constant 0 : index
    %96 = vector.load %arg7[%c64_46, %c0_47] : memref<160x1024xbf16, #tpu.memory_space<vmem>>, vector<16x1024xbf16>
    tpu.vector_store %arg7[%c64_46, %c0_47], %95 {strides = array<i32>} : memref<160x1024xbf16, #tpu.memory_space<vmem>>, vector<16x1024xbf16>,
    %c1023_i32_48 = arith.constant 1023 : i32
    %97 = tpu.dynamic_rotate %82 by %c1023_i32_48 dim 1 : vector<16x1024xf32>, i32 -> vector<16x1024xf32>
    %98 = arith.truncf %97 : vector<16x1024xf32> to vector<16x1024xbf16>
    %c80_49 = arith.constant 80 : index
    %c0_50 = arith.constant 0 : index
    %99 = vector.load %arg7[%c80_49, %c0_50] : memref<160x1024xbf16, #tpu.memory_space<vmem>>, vector<16x1024xbf16>
    tpu.vector_store %arg7[%c80_49, %c0_50], %98 {strides = array<i32>} : memref<160x1024xbf16, #tpu.memory_space<vmem>>, vector<16x1024xbf16>,
    %c1003_i32_51 = arith.constant 1003 : i32
    %100 = tpu.dynamic_rotate %82 by %c1003_i32_51 dim 1 : vector<16x1024xf32>, i32 -> vector<16x1024xf32>
    %101 = arith.truncf %100 : vector<16x1024xf32> to vector<16x1024xbf16>
    %c96_52 = arith.constant 96 : index
    %c0_53 = arith.constant 0 : index
    %102 = vector.load %arg7[%c96_52, %c0_53] : memref<160x1024xbf16, #tpu.memory_space<vmem>>, vector<16x1024xbf16>
    tpu.vector_store %arg7[%c96_52, %c0_53], %101 {strides = array<i32>} : memref<160x1024xbf16, #tpu.memory_space<vmem>>, vector<16x1024xbf16>,
    %c1002_i32_54 = arith.constant 1002 : i32
    %103 = tpu.dynamic_rotate %82 by %c1002_i32_54 dim 1 : vector<16x1024xf32>, i32 -> vector<16x1024xf32>
    %104 = arith.truncf %103 : vector<16x1024xf32> to vector<16x1024xbf16>
    %c112_55 = arith.constant 112 : index
    %c0_56 = arith.constant 0 : index
    %105 = vector.load %arg7[%c112_55, %c0_56] : memref<160x1024xbf16, #tpu.memory_space<vmem>>, vector<16x1024xbf16>
    tpu.vector_store %arg7[%c112_55, %c0_56], %104 {strides = array<i32>} : memref<160x1024xbf16, #tpu.memory_space<vmem>>, vector<16x1024xbf16>,
    %c1001_i32_57 = arith.constant 1001 : i32
    %106 = tpu.dynamic_rotate %82 by %c1001_i32_57 dim 1 : vector<16x1024xf32>, i32 -> vector<16x1024xf32>
    %107 = arith.truncf %106 : vector<16x1024xf32> to vector<16x1024xbf16>
    %c128_58 = arith.constant 128 : index
    %c0_59 = arith.constant 0 : index
    %108 = vector.load %arg7[%c128_58, %c0_59] : memref<160x1024xbf16, #tpu.memory_space<vmem>>, vector<16x1024xbf16>
    tpu.vector_store %arg7[%c128_58, %c0_59], %107 {strides = array<i32>} : memref<160x1024xbf16, #tpu.memory_space<vmem>>, vector<16x1024xbf16>,
    %c1 = arith.constant 1 : index
    %c0_60 = arith.constant 0 : index
    %c0_61 = arith.constant 0 : index
    %109 = vector.load %arg4[%c1, %c0_60, %c0_61] : memref<6x16x160xbf16, #tpu.memory_space<vmem>>, vector<1x16x160xbf16>
    %110 = vector.shape_cast %109 : vector<1x16x160xbf16> to vector<16x160xbf16>
    %c0_62 = arith.constant 0 : index
    %c0_63 = arith.constant 0 : index
    %111 = vector.load %arg7[%c0_62, %c0_63] : memref<160x1024xbf16, #tpu.memory_space<vmem>>, vector<160x1024xbf16>
    %cst_64 = arith.constant dense<0.000000e+00> : vector<16x1024xf32>
    %112 = tpu.matmul %110, %111, %cst_64 {dimension_numbers = #tpu.dot_dimension_numbers<[1], [0], [0], [1], [0, 0, 1, 1], [], []>} : vector<16x160xbf16>, vector<160x1024xbf16>, vector<16x1024xf32> -> vector<16x1024xf32>
    %113 = vector.broadcast %0 : vector<1x1024xf32> to vector<16x1024xf32>
    %114 = arith.mulf %112, %113 : vector<16x1024xf32>
    %115 = arith.addf %44, %114 : vector<16x1024xf32>
    %cst_65 = arith.constant 0.000000e+00 : f32
    %116 = vector.broadcast %cst_65 : f32 to vector<16x1024xf32>
    %117 = arith.maximumf %115, %116 : vector<16x1024xf32>
    %c23_i32_66 = arith.constant 23 : i32
    %118 = tpu.dynamic_rotate %117 by %c23_i32_66 dim 1 : vector<16x1024xf32>, i32 -> vector<16x1024xf32>
    %119 = arith.truncf %118 : vector<16x1024xf32> to vector<16x1024xbf16>
    %c0_67 = arith.constant 0 : index
    %c0_68 = arith.constant 0 : index
    %120 = vector.load %arg7[%c0_67, %c0_68] : memref<160x1024xbf16, #tpu.memory_space<vmem>>, vector<16x1024xbf16>
    tpu.vector_store %arg7[%c0_67, %c0_68], %119 {strides = array<i32>} : memref<160x1024xbf16, #tpu.memory_space<vmem>>, vector<16x1024xbf16>,
    %c22_i32_69 = arith.constant 22 : i32
    %121 = tpu.dynamic_rotate %117 by %c22_i32_69 dim 1 : vector<16x1024xf32>, i32 -> vector<16x1024xf32>
    %122 = arith.truncf %121 : vector<16x1024xf32> to vector<16x1024xbf16>
    %c16_70 = arith.constant 16 : index
    %c0_71 = arith.constant 0 : index
    %123 = vector.load %arg7[%c16_70, %c0_71] : memref<160x1024xbf16, #tpu.memory_space<vmem>>, vector<16x1024xbf16>
    tpu.vector_store %arg7[%c16_70, %c0_71], %122 {strides = array<i32>} : memref<160x1024xbf16, #tpu.memory_space<vmem>>, vector<16x1024xbf16>,
    %c21_i32_72 = arith.constant 21 : i32
    %124 = tpu.dynamic_rotate %117 by %c21_i32_72 dim 1 : vector<16x1024xf32>, i32 -> vector<16x1024xf32>
    %125 = arith.truncf %124 : vector<16x1024xf32> to vector<16x1024xbf16>
    %c32_73 = arith.constant 32 : index
    %c0_74 = arith.constant 0 : index
    %126 = vector.load %arg7[%c32_73, %c0_74] : memref<160x1024xbf16, #tpu.memory_space<vmem>>, vector<16x1024xbf16>
    tpu.vector_store %arg7[%c32_73, %c0_74], %125 {strides = array<i32>} : memref<160x1024xbf16, #tpu.memory_space<vmem>>, vector<16x1024xbf16>,
    %c1_i32_75 = arith.constant 1 : i32
    %127 = tpu.dynamic_rotate %117 by %c1_i32_75 dim 1 : vector<16x1024xf32>, i32 -> vector<16x1024xf32>
    %128 = arith.truncf %127 : vector<16x1024xf32> to vector<16x1024xbf16>
    %c48_76 = arith.constant 48 : index
    %c0_77 = arith.constant 0 : index
    %129 = vector.load %arg7[%c48_76, %c0_77] : memref<160x1024xbf16, #tpu.memory_space<vmem>>, vector<16x1024xbf16>
    tpu.vector_store %arg7[%c48_76, %c0_77], %128 {strides = array<i32>} : memref<160x1024xbf16, #tpu.memory_space<vmem>>, vector<16x1024xbf16>,
    %130 = arith.truncf %117 : vector<16x1024xf32> to vector<16x1024xbf16>
    %c64_78 = arith.constant 64 : index
    %c0_79 = arith.constant 0 : index
    %131 = vector.load %arg7[%c64_78, %c0_79] : memref<160x1024xbf16, #tpu.memory_space<vmem>>, vector<16x1024xbf16>
    tpu.vector_store %arg7[%c64_78, %c0_79], %130 {strides = array<i32>} : memref<160x1024xbf16, #tpu.memory_space<vmem>>, vector<16x1024xbf16>,
    %c1023_i32_80 = arith.constant 1023 : i32
    %132 = tpu.dynamic_rotate %117 by %c1023_i32_80 dim 1 : vector<16x1024xf32>, i32 -> vector<16x1024xf32>
    %133 = arith.truncf %132 : vector<16x1024xf32> to vector<16x1024xbf16>
    %c80_81 = arith.constant 80 : index
    %c0_82 = arith.constant 0 : index
    %134 = vector.load %arg7[%c80_81, %c0_82] : memref<160x1024xbf16, #tpu.memory_space<vmem>>, vector<16x1024xbf16>
    tpu.vector_store %arg7[%c80_81, %c0_82], %133 {strides = array<i32>} : memref<160x1024xbf16, #tpu.memory_space<vmem>>, vector<16x1024xbf16>,
    %c1003_i32_83 = arith.constant 1003 : i32
    %135 = tpu.dynamic_rotate %117 by %c1003_i32_83 dim 1 : vector<16x1024xf32>, i32 -> vector<16x1024xf32>
    %136 = arith.truncf %135 : vector<16x1024xf32> to vector<16x1024xbf16>
    %c96_84 = arith.constant 96 : index
    %c0_85 = arith.constant 0 : index
    %137 = vector.load %arg7[%c96_84, %c0_85] : memref<160x1024xbf16, #tpu.memory_space<vmem>>, vector<16x1024xbf16>
    tpu.vector_store %arg7[%c96_84, %c0_85], %136 {strides = array<i32>} : memref<160x1024xbf16, #tpu.memory_space<vmem>>, vector<16x1024xbf16>,
    %c1002_i32_86 = arith.constant 1002 : i32
    %138 = tpu.dynamic_rotate %117 by %c1002_i32_86 dim 1 : vector<16x1024xf32>, i32 -> vector<16x1024xf32>
    %139 = arith.truncf %138 : vector<16x1024xf32> to vector<16x1024xbf16>
    %c112_87 = arith.constant 112 : index
    %c0_88 = arith.constant 0 : index
    %140 = vector.load %arg7[%c112_87, %c0_88] : memref<160x1024xbf16, #tpu.memory_space<vmem>>, vector<16x1024xbf16>
    tpu.vector_store %arg7[%c112_87, %c0_88], %139 {strides = array<i32>} : memref<160x1024xbf16, #tpu.memory_space<vmem>>, vector<16x1024xbf16>,
    %c1001_i32_89 = arith.constant 1001 : i32
    %141 = tpu.dynamic_rotate %117 by %c1001_i32_89 dim 1 : vector<16x1024xf32>, i32 -> vector<16x1024xf32>
    %142 = arith.truncf %141 : vector<16x1024xf32> to vector<16x1024xbf16>
    %c128_90 = arith.constant 128 : index
    %c0_91 = arith.constant 0 : index
    %143 = vector.load %arg7[%c128_90, %c0_91] : memref<160x1024xbf16, #tpu.memory_space<vmem>>, vector<16x1024xbf16>
    tpu.vector_store %arg7[%c128_90, %c0_91], %142 {strides = array<i32>} : memref<160x1024xbf16, #tpu.memory_space<vmem>>, vector<16x1024xbf16>,
    %c2 = arith.constant 2 : index
    %c0_92 = arith.constant 0 : index
    %c0_93 = arith.constant 0 : index
    %144 = vector.load %arg4[%c2, %c0_92, %c0_93] : memref<6x16x160xbf16, #tpu.memory_space<vmem>>, vector<1x16x160xbf16>
    %145 = vector.shape_cast %144 : vector<1x16x160xbf16> to vector<16x160xbf16>
    %c0_94 = arith.constant 0 : index
    %c0_95 = arith.constant 0 : index
    %146 = vector.load %arg7[%c0_94, %c0_95] : memref<160x1024xbf16, #tpu.memory_space<vmem>>, vector<160x1024xbf16>
    %cst_96 = arith.constant dense<0.000000e+00> : vector<16x1024xf32>
    %147 = tpu.matmul %145, %146, %cst_96 {dimension_numbers = #tpu.dot_dimension_numbers<[1], [0], [0], [1], [0, 0, 1, 1], [], []>} : vector<16x160xbf16>, vector<160x1024xbf16>, vector<16x1024xf32> -> vector<16x1024xf32>
    %148 = vector.broadcast %0 : vector<1x1024xf32> to vector<16x1024xf32>
    %149 = arith.mulf %147, %148 : vector<16x1024xf32>
    %cst_97 = arith.constant 0.000000e+00 : f32
    %150 = vector.broadcast %cst_97 : f32 to vector<16x1024xf32>
    %151 = arith.maximumf %149, %150 : vector<16x1024xf32>
    %c23_i32_98 = arith.constant 23 : i32
    %152 = tpu.dynamic_rotate %151 by %c23_i32_98 dim 1 : vector<16x1024xf32>, i32 -> vector<16x1024xf32>
    %153 = arith.truncf %152 : vector<16x1024xf32> to vector<16x1024xbf16>
    %c0_99 = arith.constant 0 : index
    %c0_100 = arith.constant 0 : index
    %154 = vector.load %arg7[%c0_99, %c0_100] : memref<160x1024xbf16, #tpu.memory_space<vmem>>, vector<16x1024xbf16>
    tpu.vector_store %arg7[%c0_99, %c0_100], %153 {strides = array<i32>} : memref<160x1024xbf16, #tpu.memory_space<vmem>>, vector<16x1024xbf16>,
    %c22_i32_101 = arith.constant 22 : i32
    %155 = tpu.dynamic_rotate %151 by %c22_i32_101 dim 1 : vector<16x1024xf32>, i32 -> vector<16x1024xf32>
    %156 = arith.truncf %155 : vector<16x1024xf32> to vector<16x1024xbf16>
    %c16_102 = arith.constant 16 : index
    %c0_103 = arith.constant 0 : index
    %157 = vector.load %arg7[%c16_102, %c0_103] : memref<160x1024xbf16, #tpu.memory_space<vmem>>, vector<16x1024xbf16>
    tpu.vector_store %arg7[%c16_102, %c0_103], %156 {strides = array<i32>} : memref<160x1024xbf16, #tpu.memory_space<vmem>>, vector<16x1024xbf16>,
    %c21_i32_104 = arith.constant 21 : i32
    %158 = tpu.dynamic_rotate %151 by %c21_i32_104 dim 1 : vector<16x1024xf32>, i32 -> vector<16x1024xf32>
    %159 = arith.truncf %158 : vector<16x1024xf32> to vector<16x1024xbf16>
    %c32_105 = arith.constant 32 : index
    %c0_106 = arith.constant 0 : index
    %160 = vector.load %arg7[%c32_105, %c0_106] : memref<160x1024xbf16, #tpu.memory_space<vmem>>, vector<16x1024xbf16>
    tpu.vector_store %arg7[%c32_105, %c0_106], %159 {strides = array<i32>} : memref<160x1024xbf16, #tpu.memory_space<vmem>>, vector<16x1024xbf16>,
    %c1_i32_107 = arith.constant 1 : i32
    %161 = tpu.dynamic_rotate %151 by %c1_i32_107 dim 1 : vector<16x1024xf32>, i32 -> vector<16x1024xf32>
    %162 = arith.truncf %161 : vector<16x1024xf32> to vector<16x1024xbf16>
    %c48_108 = arith.constant 48 : index
    %c0_109 = arith.constant 0 : index
    %163 = vector.load %arg7[%c48_108, %c0_109] : memref<160x1024xbf16, #tpu.memory_space<vmem>>, vector<16x1024xbf16>
    tpu.vector_store %arg7[%c48_108, %c0_109], %162 {strides = array<i32>} : memref<160x1024xbf16, #tpu.memory_space<vmem>>, vector<16x1024xbf16>,
    %164 = arith.truncf %151 : vector<16x1024xf32> to vector<16x1024xbf16>
    %c64_110 = arith.constant 64 : index
    %c0_111 = arith.constant 0 : index
    %165 = vector.load %arg7[%c64_110, %c0_111] : memref<160x1024xbf16, #tpu.memory_space<vmem>>, vector<16x1024xbf16>
    tpu.vector_store %arg7[%c64_110, %c0_111], %164 {strides = array<i32>} : memref<160x1024xbf16, #tpu.memory_space<vmem>>, vector<16x1024xbf16>,
    %c1023_i32_112 = arith.constant 1023 : i32
    %166 = tpu.dynamic_rotate %151 by %c1023_i32_112 dim 1 : vector<16x1024xf32>, i32 -> vector<16x1024xf32>
    %167 = arith.truncf %166 : vector<16x1024xf32> to vector<16x1024xbf16>
    %c80_113 = arith.constant 80 : index
    %c0_114 = arith.constant 0 : index
    %168 = vector.load %arg7[%c80_113, %c0_114] : memref<160x1024xbf16, #tpu.memory_space<vmem>>, vector<16x1024xbf16>
    tpu.vector_store %arg7[%c80_113, %c0_114], %167 {strides = array<i32>} : memref<160x1024xbf16, #tpu.memory_space<vmem>>, vector<16x1024xbf16>,
    %c1003_i32_115 = arith.constant 1003 : i32
    %169 = tpu.dynamic_rotate %151 by %c1003_i32_115 dim 1 : vector<16x1024xf32>, i32 -> vector<16x1024xf32>
    %170 = arith.truncf %169 : vector<16x1024xf32> to vector<16x1024xbf16>
    %c96_116 = arith.constant 96 : index
    %c0_117 = arith.constant 0 : index
    %171 = vector.load %arg7[%c96_116, %c0_117] : memref<160x1024xbf16, #tpu.memory_space<vmem>>, vector<16x1024xbf16>
    tpu.vector_store %arg7[%c96_116, %c0_117], %170 {strides = array<i32>} : memref<160x1024xbf16, #tpu.memory_space<vmem>>, vector<16x1024xbf16>,
    %c1002_i32_118 = arith.constant 1002 : i32
    %172 = tpu.dynamic_rotate %151 by %c1002_i32_118 dim 1 : vector<16x1024xf32>, i32 -> vector<16x1024xf32>
    %173 = arith.truncf %172 : vector<16x1024xf32> to vector<16x1024xbf16>
    %c112_119 = arith.constant 112 : index
    %c0_120 = arith.constant 0 : index
    %174 = vector.load %arg7[%c112_119, %c0_120] : memref<160x1024xbf16, #tpu.memory_space<vmem>>, vector<16x1024xbf16>
    tpu.vector_store %arg7[%c112_119, %c0_120], %173 {strides = array<i32>} : memref<160x1024xbf16, #tpu.memory_space<vmem>>, vector<16x1024xbf16>,
    %c1001_i32_121 = arith.constant 1001 : i32
    %175 = tpu.dynamic_rotate %151 by %c1001_i32_121 dim 1 : vector<16x1024xf32>, i32 -> vector<16x1024xf32>
    %176 = arith.truncf %175 : vector<16x1024xf32> to vector<16x1024xbf16>
    %c128_122 = arith.constant 128 : index
    %c0_123 = arith.constant 0 : index
    %177 = vector.load %arg7[%c128_122, %c0_123] : memref<160x1024xbf16, #tpu.memory_space<vmem>>, vector<16x1024xbf16>
    tpu.vector_store %arg7[%c128_122, %c0_123], %176 {strides = array<i32>} : memref<160x1024xbf16, #tpu.memory_space<vmem>>, vector<16x1024xbf16>,
    %c3 = arith.constant 3 : index
    %c0_124 = arith.constant 0 : index
    %c0_125 = arith.constant 0 : index
    %178 = vector.load %arg4[%c3, %c0_124, %c0_125] : memref<6x16x160xbf16, #tpu.memory_space<vmem>>, vector<1x16x160xbf16>
    %179 = vector.shape_cast %178 : vector<1x16x160xbf16> to vector<16x160xbf16>
    %c0_126 = arith.constant 0 : index
    %c0_127 = arith.constant 0 : index
    %180 = vector.load %arg7[%c0_126, %c0_127] : memref<160x1024xbf16, #tpu.memory_space<vmem>>, vector<160x1024xbf16>
    %cst_128 = arith.constant dense<0.000000e+00> : vector<16x1024xf32>
    %181 = tpu.matmul %179, %180, %cst_128 {dimension_numbers = #tpu.dot_dimension_numbers<[1], [0], [0], [1], [0, 0, 1, 1], [], []>} : vector<16x160xbf16>, vector<160x1024xbf16>, vector<16x1024xf32> -> vector<16x1024xf32>
    %182 = vector.broadcast %0 : vector<1x1024xf32> to vector<16x1024xf32>
    %183 = arith.mulf %181, %182 : vector<16x1024xf32>
    %184 = arith.addf %117, %183 : vector<16x1024xf32>
    %cst_129 = arith.constant 0.000000e+00 : f32
    %185 = vector.broadcast %cst_129 : f32 to vector<16x1024xf32>
    %186 = arith.maximumf %184, %185 : vector<16x1024xf32>
    %c23_i32_130 = arith.constant 23 : i32
    %187 = tpu.dynamic_rotate %186 by %c23_i32_130 dim 1 : vector<16x1024xf32>, i32 -> vector<16x1024xf32>
    %188 = arith.truncf %187 : vector<16x1024xf32> to vector<16x1024xbf16>
    %c0_131 = arith.constant 0 : index
    %c0_132 = arith.constant 0 : index
    %189 = vector.load %arg7[%c0_131, %c0_132] : memref<160x1024xbf16, #tpu.memory_space<vmem>>, vector<16x1024xbf16>
    tpu.vector_store %arg7[%c0_131, %c0_132], %188 {strides = array<i32>} : memref<160x1024xbf16, #tpu.memory_space<vmem>>, vector<16x1024xbf16>,
    %c22_i32_133 = arith.constant 22 : i32
    %190 = tpu.dynamic_rotate %186 by %c22_i32_133 dim 1 : vector<16x1024xf32>, i32 -> vector<16x1024xf32>
    %191 = arith.truncf %190 : vector<16x1024xf32> to vector<16x1024xbf16>
    %c16_134 = arith.constant 16 : index
    %c0_135 = arith.constant 0 : index
    %192 = vector.load %arg7[%c16_134, %c0_135] : memref<160x1024xbf16, #tpu.memory_space<vmem>>, vector<16x1024xbf16>
    tpu.vector_store %arg7[%c16_134, %c0_135], %191 {strides = array<i32>} : memref<160x1024xbf16, #tpu.memory_space<vmem>>, vector<16x1024xbf16>,
    %c21_i32_136 = arith.constant 21 : i32
    %193 = tpu.dynamic_rotate %186 by %c21_i32_136 dim 1 : vector<16x1024xf32>, i32 -> vector<16x1024xf32>
    %194 = arith.truncf %193 : vector<16x1024xf32> to vector<16x1024xbf16>
    %c32_137 = arith.constant 32 : index
    %c0_138 = arith.constant 0 : index
    %195 = vector.load %arg7[%c32_137, %c0_138] : memref<160x1024xbf16, #tpu.memory_space<vmem>>, vector<16x1024xbf16>
    tpu.vector_store %arg7[%c32_137, %c0_138], %194 {strides = array<i32>} : memref<160x1024xbf16, #tpu.memory_space<vmem>>, vector<16x1024xbf16>,
    %c1_i32_139 = arith.constant 1 : i32
    %196 = tpu.dynamic_rotate %186 by %c1_i32_139 dim 1 : vector<16x1024xf32>, i32 -> vector<16x1024xf32>
    %197 = arith.truncf %196 : vector<16x1024xf32> to vector<16x1024xbf16>
    %c48_140 = arith.constant 48 : index
    %c0_141 = arith.constant 0 : index
    %198 = vector.load %arg7[%c48_140, %c0_141] : memref<160x1024xbf16, #tpu.memory_space<vmem>>, vector<16x1024xbf16>
    tpu.vector_store %arg7[%c48_140, %c0_141], %197 {strides = array<i32>} : memref<160x1024xbf16, #tpu.memory_space<vmem>>, vector<16x1024xbf16>,
    %199 = arith.truncf %186 : vector<16x1024xf32> to vector<16x1024xbf16>
    %c64_142 = arith.constant 64 : index
    %c0_143 = arith.constant 0 : index
    %200 = vector.load %arg7[%c64_142, %c0_143] : memref<160x1024xbf16, #tpu.memory_space<vmem>>, vector<16x1024xbf16>
    tpu.vector_store %arg7[%c64_142, %c0_143], %199 {strides = array<i32>} : memref<160x1024xbf16, #tpu.memory_space<vmem>>, vector<16x1024xbf16>,
    %c1023_i32_144 = arith.constant 1023 : i32
    %201 = tpu.dynamic_rotate %186 by %c1023_i32_144 dim 1 : vector<16x1024xf32>, i32 -> vector<16x1024xf32>
    %202 = arith.truncf %201 : vector<16x1024xf32> to vector<16x1024xbf16>
    %c80_145 = arith.constant 80 : index
    %c0_146 = arith.constant 0 : index
    %203 = vector.load %arg7[%c80_145, %c0_146] : memref<160x1024xbf16, #tpu.memory_space<vmem>>, vector<16x1024xbf16>
    tpu.vector_store %arg7[%c80_145, %c0_146], %202 {strides = array<i32>} : memref<160x1024xbf16, #tpu.memory_space<vmem>>, vector<16x1024xbf16>,
    %c1003_i32_147 = arith.constant 1003 : i32
    %204 = tpu.dynamic_rotate %186 by %c1003_i32_147 dim 1 : vector<16x1024xf32>, i32 -> vector<16x1024xf32>
    %205 = arith.truncf %204 : vector<16x1024xf32> to vector<16x1024xbf16>
    %c96_148 = arith.constant 96 : index
    %c0_149 = arith.constant 0 : index
    %206 = vector.load %arg7[%c96_148, %c0_149] : memref<160x1024xbf16, #tpu.memory_space<vmem>>, vector<16x1024xbf16>
    tpu.vector_store %arg7[%c96_148, %c0_149], %205 {strides = array<i32>} : memref<160x1024xbf16, #tpu.memory_space<vmem>>, vector<16x1024xbf16>,
    %c1002_i32_150 = arith.constant 1002 : i32
    %207 = tpu.dynamic_rotate %186 by %c1002_i32_150 dim 1 : vector<16x1024xf32>, i32 -> vector<16x1024xf32>
    %208 = arith.truncf %207 : vector<16x1024xf32> to vector<16x1024xbf16>
    %c112_151 = arith.constant 112 : index
    %c0_152 = arith.constant 0 : index
    %209 = vector.load %arg7[%c112_151, %c0_152] : memref<160x1024xbf16, #tpu.memory_space<vmem>>, vector<16x1024xbf16>
    tpu.vector_store %arg7[%c112_151, %c0_152], %208 {strides = array<i32>} : memref<160x1024xbf16, #tpu.memory_space<vmem>>, vector<16x1024xbf16>,
    %c1001_i32_153 = arith.constant 1001 : i32
    %210 = tpu.dynamic_rotate %186 by %c1001_i32_153 dim 1 : vector<16x1024xf32>, i32 -> vector<16x1024xf32>
    %211 = arith.truncf %210 : vector<16x1024xf32> to vector<16x1024xbf16>
    %c128_154 = arith.constant 128 : index
    %c0_155 = arith.constant 0 : index
    %212 = vector.load %arg7[%c128_154, %c0_155] : memref<160x1024xbf16, #tpu.memory_space<vmem>>, vector<16x1024xbf16>
    tpu.vector_store %arg7[%c128_154, %c0_155], %211 {strides = array<i32>} : memref<160x1024xbf16, #tpu.memory_space<vmem>>, vector<16x1024xbf16>,
    %c4 = arith.constant 4 : index
    %c0_156 = arith.constant 0 : index
    %c0_157 = arith.constant 0 : index
    %213 = vector.load %arg4[%c4, %c0_156, %c0_157] : memref<6x16x160xbf16, #tpu.memory_space<vmem>>, vector<1x16x160xbf16>
    %214 = vector.shape_cast %213 : vector<1x16x160xbf16> to vector<16x160xbf16>
    %c0_158 = arith.constant 0 : index
    %c0_159 = arith.constant 0 : index
    %215 = vector.load %arg7[%c0_158, %c0_159] : memref<160x1024xbf16, #tpu.memory_space<vmem>>, vector<160x1024xbf16>
    %cst_160 = arith.constant dense<0.000000e+00> : vector<16x1024xf32>
    %216 = tpu.matmul %214, %215, %cst_160 {dimension_numbers = #tpu.dot_dimension_numbers<[1], [0], [0], [1], [0, 0, 1, 1], [], []>} : vector<16x160xbf16>, vector<160x1024xbf16>, vector<16x1024xf32> -> vector<16x1024xf32>
    %217 = vector.broadcast %0 : vector<1x1024xf32> to vector<16x1024xf32>
    %218 = arith.mulf %216, %217 : vector<16x1024xf32>
    %cst_161 = arith.constant 0.000000e+00 : f32
    %219 = vector.broadcast %cst_161 : f32 to vector<16x1024xf32>
    %220 = arith.maximumf %218, %219 : vector<16x1024xf32>
    %c23_i32_162 = arith.constant 23 : i32
    %221 = tpu.dynamic_rotate %220 by %c23_i32_162 dim 1 : vector<16x1024xf32>, i32 -> vector<16x1024xf32>
    %222 = arith.truncf %221 : vector<16x1024xf32> to vector<16x1024xbf16>
    %c0_163 = arith.constant 0 : index
    %c0_164 = arith.constant 0 : index
    %223 = vector.load %arg7[%c0_163, %c0_164] : memref<160x1024xbf16, #tpu.memory_space<vmem>>, vector<16x1024xbf16>
    tpu.vector_store %arg7[%c0_163, %c0_164], %222 {strides = array<i32>} : memref<160x1024xbf16, #tpu.memory_space<vmem>>, vector<16x1024xbf16>,
    %c22_i32_165 = arith.constant 22 : i32
    %224 = tpu.dynamic_rotate %220 by %c22_i32_165 dim 1 : vector<16x1024xf32>, i32 -> vector<16x1024xf32>
    %225 = arith.truncf %224 : vector<16x1024xf32> to vector<16x1024xbf16>
    %c16_166 = arith.constant 16 : index
    %c0_167 = arith.constant 0 : index
    %226 = vector.load %arg7[%c16_166, %c0_167] : memref<160x1024xbf16, #tpu.memory_space<vmem>>, vector<16x1024xbf16>
    tpu.vector_store %arg7[%c16_166, %c0_167], %225 {strides = array<i32>} : memref<160x1024xbf16, #tpu.memory_space<vmem>>, vector<16x1024xbf16>,
    %c21_i32_168 = arith.constant 21 : i32
    %227 = tpu.dynamic_rotate %220 by %c21_i32_168 dim 1 : vector<16x1024xf32>, i32 -> vector<16x1024xf32>
    %228 = arith.truncf %227 : vector<16x1024xf32> to vector<16x1024xbf16>
    %c32_169 = arith.constant 32 : index
    %c0_170 = arith.constant 0 : index
    %229 = vector.load %arg7[%c32_169, %c0_170] : memref<160x1024xbf16, #tpu.memory_space<vmem>>, vector<16x1024xbf16>
    tpu.vector_store %arg7[%c32_169, %c0_170], %228 {strides = array<i32>} : memref<160x1024xbf16, #tpu.memory_space<vmem>>, vector<16x1024xbf16>,
    %c1_i32_171 = arith.constant 1 : i32
    %230 = tpu.dynamic_rotate %220 by %c1_i32_171 dim 1 : vector<16x1024xf32>, i32 -> vector<16x1024xf32>
    %231 = arith.truncf %230 : vector<16x1024xf32> to vector<16x1024xbf16>
    %c48_172 = arith.constant 48 : index
    %c0_173 = arith.constant 0 : index
    %232 = vector.load %arg7[%c48_172, %c0_173] : memref<160x1024xbf16, #tpu.memory_space<vmem>>, vector<16x1024xbf16>
    tpu.vector_store %arg7[%c48_172, %c0_173], %231 {strides = array<i32>} : memref<160x1024xbf16, #tpu.memory_space<vmem>>, vector<16x1024xbf16>,
    %233 = arith.truncf %220 : vector<16x1024xf32> to vector<16x1024xbf16>
    %c64_174 = arith.constant 64 : index
    %c0_175 = arith.constant 0 : index
    %234 = vector.load %arg7[%c64_174, %c0_175] : memref<160x1024xbf16, #tpu.memory_space<vmem>>, vector<16x1024xbf16>
    tpu.vector_store %arg7[%c64_174, %c0_175], %233 {strides = array<i32>} : memref<160x1024xbf16, #tpu.memory_space<vmem>>, vector<16x1024xbf16>,
    %c1023_i32_176 = arith.constant 1023 : i32
    %235 = tpu.dynamic_rotate %220 by %c1023_i32_176 dim 1 : vector<16x1024xf32>, i32 -> vector<16x1024xf32>
    %236 = arith.truncf %235 : vector<16x1024xf32> to vector<16x1024xbf16>
    %c80_177 = arith.constant 80 : index
    %c0_178 = arith.constant 0 : index
    %237 = vector.load %arg7[%c80_177, %c0_178] : memref<160x1024xbf16, #tpu.memory_space<vmem>>, vector<16x1024xbf16>
    tpu.vector_store %arg7[%c80_177, %c0_178], %236 {strides = array<i32>} : memref<160x1024xbf16, #tpu.memory_space<vmem>>, vector<16x1024xbf16>,
    %c1003_i32_179 = arith.constant 1003 : i32
    %238 = tpu.dynamic_rotate %220 by %c1003_i32_179 dim 1 : vector<16x1024xf32>, i32 -> vector<16x1024xf32>
    %239 = arith.truncf %238 : vector<16x1024xf32> to vector<16x1024xbf16>
    %c96_180 = arith.constant 96 : index
    %c0_181 = arith.constant 0 : index
    %240 = vector.load %arg7[%c96_180, %c0_181] : memref<160x1024xbf16, #tpu.memory_space<vmem>>, vector<16x1024xbf16>
    tpu.vector_store %arg7[%c96_180, %c0_181], %239 {strides = array<i32>} : memref<160x1024xbf16, #tpu.memory_space<vmem>>, vector<16x1024xbf16>,
    %c1002_i32_182 = arith.constant 1002 : i32
    %241 = tpu.dynamic_rotate %220 by %c1002_i32_182 dim 1 : vector<16x1024xf32>, i32 -> vector<16x1024xf32>
    %242 = arith.truncf %241 : vector<16x1024xf32> to vector<16x1024xbf16>
    %c112_183 = arith.constant 112 : index
    %c0_184 = arith.constant 0 : index
    %243 = vector.load %arg7[%c112_183, %c0_184] : memref<160x1024xbf16, #tpu.memory_space<vmem>>, vector<16x1024xbf16>
    tpu.vector_store %arg7[%c112_183, %c0_184], %242 {strides = array<i32>} : memref<160x1024xbf16, #tpu.memory_space<vmem>>, vector<16x1024xbf16>,
    %c1001_i32_185 = arith.constant 1001 : i32
    %244 = tpu.dynamic_rotate %220 by %c1001_i32_185 dim 1 : vector<16x1024xf32>, i32 -> vector<16x1024xf32>
    %245 = arith.truncf %244 : vector<16x1024xf32> to vector<16x1024xbf16>
    %c128_186 = arith.constant 128 : index
    %c0_187 = arith.constant 0 : index
    %246 = vector.load %arg7[%c128_186, %c0_187] : memref<160x1024xbf16, #tpu.memory_space<vmem>>, vector<16x1024xbf16>
    tpu.vector_store %arg7[%c128_186, %c0_187], %245 {strides = array<i32>} : memref<160x1024xbf16, #tpu.memory_space<vmem>>, vector<16x1024xbf16>,
    %c5 = arith.constant 5 : index
    %c0_188 = arith.constant 0 : index
    %c0_189 = arith.constant 0 : index
    %247 = vector.load %arg4[%c5, %c0_188, %c0_189] : memref<6x16x160xbf16, #tpu.memory_space<vmem>>, vector<1x16x160xbf16>
    %248 = vector.shape_cast %247 : vector<1x16x160xbf16> to vector<16x160xbf16>
    %c0_190 = arith.constant 0 : index
    %c0_191 = arith.constant 0 : index
    %249 = vector.load %arg7[%c0_190, %c0_191] : memref<160x1024xbf16, #tpu.memory_space<vmem>>, vector<160x1024xbf16>
    %cst_192 = arith.constant dense<0.000000e+00> : vector<16x1024xf32>
    %250 = tpu.matmul %248, %249, %cst_192 {dimension_numbers = #tpu.dot_dimension_numbers<[1], [0], [0], [1], [0, 0, 1, 1], [], []>} : vector<16x160xbf16>, vector<160x1024xbf16>, vector<16x1024xf32> -> vector<16x1024xf32>
    %251 = vector.broadcast %0 : vector<1x1024xf32> to vector<16x1024xf32>
    %252 = arith.mulf %250, %251 : vector<16x1024xf32>
    %253 = arith.addf %186, %252 : vector<16x1024xf32>
    %cst_193 = arith.constant 0.000000e+00 : f32
    %254 = vector.broadcast %cst_193 : f32 to vector<16x1024xf32>
    %255 = arith.maximumf %253, %254 : vector<16x1024xf32>
    %c0_194 = arith.constant 0 : index
    %c0_195 = arith.constant 0 : index
    %256 = vector.load %arg6[%c0_194, %c0_195] : memref<16x1024xf32, #tpu.memory_space<vmem>>, vector<16x1024xf32>
    tpu.vector_store %arg6[%c0_194, %c0_195], %255 {strides = array<i32>} : memref<16x1024xf32, #tpu.memory_space<vmem>>, vector<16x1024xf32>,
    return
  }
  func.func @transform_0(%arg0: i32) -> (i32, i32) {
    %c0_i32 = arith.constant 0 : i32
    %c0_i32_0 = arith.constant 0 : i32
    return %c0_i32, %arg0 : i32, i32
  }
  func.func @transform_1(%arg0: i32) -> (i32, i32) {
    %c0_i32 = arith.constant 0 : i32
    %c0_i32_0 = arith.constant 0 : i32
    %c0_i32_1 = arith.constant 0 : i32
    return %c0_i32, %c0_i32_0 : i32, i32
  }
  func.func @transform_2(%arg0: i32) -> (i32, i32) {
    %c0_i32 = arith.constant 0 : i32
    %c0_i32_0 = arith.constant 0 : i32
    %c0_i32_1 = arith.constant 0 : i32
    return %c0_i32, %c0_i32_0 : i32, i32
  }
  func.func @transform_3(%arg0: i32) -> (i32, i32, i32) {
    %c0_i32 = arith.constant 0 : i32
    %c0_i32_0 = arith.constant 0 : i32
    %c0_i32_1 = arith.constant 0 : i32
    %c0_i32_2 = arith.constant 0 : i32
    return %c0_i32, %c0_i32_0, %c0_i32_1 : i32, i32, i32
  }
  func.func @transform_4(%arg0: i32) -> (i32, i32) {
    %c0_i32 = arith.constant 0 : i32
    %c0_i32_0 = arith.constant 0 : i32
    %c0_i32_1 = arith.constant 0 : i32
    return %c0_i32, %c0_i32_0 : i32, i32
  }
  func.func @transform_5(%arg0: i32) -> (i32, i32) {
    %c0_i32 = arith.constant 0 : i32
    %c0_i32_0 = arith.constant 0 : i32
    return %c0_i32, %arg0 : i32, i32
  }
}

</mosaic_0001>

<llo_original>
// kernel: tpu_custom_call.1
$region0: #{tpu_custom_call.1}
  #allocation0 [shape = 'u32[]', space=smem, size = 0x4, offset = 0x4, fixed_abs, tag = 'smem constant byte address 0x4 - core index']
  #allocation1 [shape = 'u32[72,128]{1,0:T(1,128)}', space=vmem, size = 0x9000, scoped, tag = 'internal scratch']
  #allocation2 [shape = 'bf16[160,1024]{1,0:T(8,128)(2,1)}', space=vmem, size = 0x50000, scoped, tag = 'scratch operand']
  %s0 = inlined_call_operand.hbm [shape: f32[16,1024], index: 0, kind: input, shape index: {}]
  %s1 = inlined_call_operand.hbm [shape: f32[16,1024], index: 1, kind: input, shape index: {}]
  %s2 = inlined_call_operand.hbm [shape: f32[16,1024], index: 2, kind: input, shape index: {}]
  %s3 = inlined_call_operand.hbm [shape: bf16[6,16,160], index: 3, kind: input, shape index: {}]
  %s4 = inlined_call_operand.hbm [shape: f32[1,1024], index: 4, kind: input, shape index: {}]
  %s5 = inlined_call_operand.hbm [shape: f32[16,1024], index: 5, kind: output, shape index: {}]
  %s6 = sld [smem:[#allocation0]]
  $region50: #{tpu_custom_call.1} parent=0
    _
  %s8 = ssub.s32 1, %s6
  %s9 = scalar_select 0, %s8, %s6
  $region1: #{tpu_custom_call.1} parent=0
    #allocation3 [shape = 'u8[65536]{0}', space=vmem, size = 0x10000, scoped, tag = 'input window, operand 0, single buffered']
    #allocation4 [shape = 's32[1]{0}', space=sflag, size = 0x4, scoped, tag = 'scoped memory for tpu_custom_call.1']
    #allocation5 [shape = 's32[1]{0}', space=sflag, size = 0x4, scoped, tag = 'scoped memory for tpu_custom_call.1']
    #allocation6 [shape = 'u8[65536]{0}', space=vmem, size = 0x10000, scoped, tag = 'input window, operand 1, single buffered']
    #allocation7 [shape = 's32[1]{0}', space=sflag, size = 0x4, scoped, tag = 'scoped memory for tpu_custom_call.1']
    #allocation8 [shape = 'u8[65536]{0}', space=vmem, size = 0x10000, scoped, tag = 'input window, operand 2, single buffered']
    #allocation9 [shape = 'u8[49152]{0}', space=vmem, size = 0xc000, scoped, tag = 'input window, operand 3, single buffered']
    #allocation10 [shape = 's32[1]{0}', space=sflag, size = 0x4, scoped, tag = 'scoped memory for tpu_custom_call.1']
    #allocation11 [shape = 'u8[4096]{0}', space=vmem, size = 0x1000, scoped, tag = 'input window, operand 4, single buffered']
    #allocation12 [shape = 'u8[65536]{0}', space=vmem, size = 0x10000, scoped, tag = 'output window, operand 0, single buffered']
    %10 = vsyncpa [#allocation4], 0
    %11 = vsyncpa [#allocation7], 0
    %12 = vsyncpa [#allocation10], 0
    %13 = vsyncpa [#allocation5], 0
    // Predicated region
    $region2: #{tpu_custom_call.1} parent=1 // pred_check
      _
    $region3: #{tpu_custom_call.1} parent=1 // pred_check_branch
      %15 = sbr.rel (0) target = $region5
    $region4: #{tpu_custom_call.1} parent=1 // pred_region
      %17 = vsyncadd [#allocation4], 0
      %s18 = sshll.u32 %s0, 4
      %s19 = int_to_ptr.hbm [resolvable:$true] %s18
      %s20 = sshll.u32 [#allocation3], 4
      %s21 = int_to_ptr.vmem [resolvable:$true] %s20
      %26 = dma.hbm_to_vmem [thread:$0]  %s19, 2048, %s21, [#allocation4], 1024, 1024, 64
    $region5: #{tpu_custom_call.1} parent=1 // pred_fallthru
      _
    // Predicated region
    $region6: #{tpu_custom_call.1} parent=1 // pred_check
      _
    $region7: #{tpu_custom_call.1} parent=1 // pred_check_branch
      %28 = sbr.rel (0) target = $region9
    $region8: #{tpu_custom_call.1} parent=1 // pred_region
      %30 = vsyncadd [#allocation7], 0
      %s31 = sshll.u32 %s1, 4
      %s32 = int_to_ptr.hbm [resolvable:$true] %s31
      %s33 = sshll.u32 [#allocation6], 4
      %s34 = int_to_ptr.vmem [resolvable:$true] %s33
      %39 = dma.hbm_to_vmem [thread:$0]  %s32, 2048, %s34, [#allocation7], 1024, 1024, 64
    $region9: #{tpu_custom_call.1} parent=1 // pred_fallthru
      _
    // Predicated region
    $region10: #{tpu_custom_call.1} parent=1 // pred_check
      _
    $region11: #{tpu_custom_call.1} parent=1 // pred_check_branch
      %41 = sbr.rel (0) target = $region13
    $region12: #{tpu_custom_call.1} parent=1 // pred_region
      %43 = vsyncadd [#allocation7], 0
      %s44 = sshll.u32 %s2, 4
      %s45 = int_to_ptr.hbm [resolvable:$true] %s44
      %s46 = sshll.u32 [#allocation8], 4
      %s47 = int_to_ptr.vmem [resolvable:$true] %s46
      %52 = dma.hbm_to_vmem [thread:$0]  %s45, 2048, %s47, [#allocation7], 1024, 1024, 64
    $region13: #{tpu_custom_call.1} parent=1 // pred_fallthru
      _
    // Predicated region
    $region14: #{tpu_custom_call.1} parent=1 // pred_check
      _
    $region15: #{tpu_custom_call.1} parent=1 // pred_check_branch
      %54 = sbr.rel (0) target = $region17
    $region16: #{tpu_custom_call.1} parent=1 // pred_region
      %56 = vsyncadd [#allocation10], 0
      %s57 = sshll.u32 %s3, 4
      %s58 = int_to_ptr.hbm [resolvable:$true] %s57
      %s59 = sshll.u32 [#allocation9], 4
      %s60 = int_to_ptr.vmem [resolvable:$true] %s59
      %65 = dma.hbm_to_vmem [thread:$0]  %s58, 1536, %s60, [#allocation10], 128, 128, 8
    $region17: #{tpu_custom_call.1} parent=1 // pred_fallthru
      _
    // Predicated region
    $region18: #{tpu_custom_call.1} parent=1 // pred_check
      _
    $region19: #{tpu_custom_call.1} parent=1 // pred_check_branch
      %67 = sbr.rel (0) target = $region21
    $region20: #{tpu_custom_call.1} parent=1 // pred_region
      %69 = vsyncadd [#allocation10], 0
      %s71 = sshll.u32 %s4, 4
      %s72 = int_to_ptr.hbm [resolvable:$true] %s71
      %s73 = sshll.u32 [#allocation11], 4
      %s74 = int_to_ptr.vmem [resolvable:$true] %s73
      %76 = dma.hbm_to_vmem [thread:$0]  %s72, 128, %s74, [#allocation10]
    $region21: #{tpu_custom_call.1} parent=1 // pred_fallthru
      _
    // Predicated region
    $region22: #{tpu_custom_call.1} parent=1 // pred_check
      _
    $region23: #{tpu_custom_call.1} parent=1 // pred_check_branch
      %78 = sbr.rel (0) target = $region25
    $region24: #{tpu_custom_call.1} parent=1 // pred_region
      %80 = dma.done [#allocation4], 2048
    $region25: #{tpu_custom_call.1} parent=1 // pred_fallthru
      _
    // Predicated region
    $region26: #{tpu_custom_call.1} parent=1 // pred_check
      _
    $region27: #{tpu_custom_call.1} parent=1 // pred_check_branch
      %82 = sbr.rel (0) target = $region29
    $region28: #{tpu_custom_call.1} parent=1 // pred_region
      %84 = dma.done [#allocation7], 2048
    $region29: #{tpu_custom_call.1} parent=1 // pred_fallthru
      _
    // Predicated region
    $region30: #{tpu_custom_call.1} parent=1 // pred_check
      _
    $region31: #{tpu_custom_call.1} parent=1 // pred_check_branch
      %86 = sbr.rel (0) target = $region33
    $region32: #{tpu_custom_call.1} parent=1 // pred_region
      %88 = dma.done [#allocation7], 2048
    $region33: #{tpu_custom_call.1} parent=1 // pred_fallthru
      _
    // Predicated region
    $region34: #{tpu_custom_call.1} parent=1 // pred_check
      _
    $region35: #{tpu_custom_call.1} parent=1 // pred_check_branch
      %90 = sbr.rel (0) target = $region37
    $region36: #{tpu_custom_call.1} parent=1 // pred_region
      %92 = dma.done [#allocation10], 1536
    $region37: #{tpu_custom_call.1} parent=1 // pred_fallthru
      _
    // Predicated region
    $region38: #{tpu_custom_call.1} parent=1 // pred_check
      _
    $region39: #{tpu_custom_call.1} parent=1 // pred_check_branch
      %94 = sbr.rel (0) target = $region41
    $region40: #{tpu_custom_call.1} parent=1 // pred_region
      %96 = dma.done [#allocation10], 128
    $region41: #{tpu_custom_call.1} parent=1 // pred_fallthru
      _
    %v98 = vld [vmem:[#allocation11] sm:$0xff]
    %v99 = vld [vmem:[#allocation3] sm:$0xff]
    %v100 = vld [vmem:[#allocation3 + $0x8] sm:$0xff]
    %v101 = vld [vmem:[#allocation3 + $0x10] sm:$0xff]
    %v102 = vld [vmem:[#allocation3 + $0x18] sm:$0xff]
    %v103 = vld [vmem:[#allocation3 + $0x20] sm:$0xff]
    %v104 = vld [vmem:[#allocation3 + $0x28] sm:$0xff]
    %v105 = vld [vmem:[#allocation3 + $0x30] sm:$0xff]
    %v106 = vld [vmem:[#allocation3 + $0x38] sm:$0xff]
    %v107 = vld [vmem:[#allocation3 + $0x40] sm:$0xff]
    %v108 = vld [vmem:[#allocation3 + $0x48] sm:$0xff]
    %v109 = vld [vmem:[#allocation3 + $0x50] sm:$0xff]
    %v110 = vld [vmem:[#allocation3 + $0x58] sm:$0xff]
    %v111 = vld [vmem:[#allocation3 + $0x60] sm:$0xff]
    %v112 = vld [vmem:[#allocation3 + $0x68] sm:$0xff]
    %v113 = vld [vmem:[#allocation3 + $0x70] sm:$0xff]
    %v114 = vld [vmem:[#allocation3 + $0x78] sm:$0xff]
    %v115 = vadd.f32 %v99, %v100
    %v116 = vadd.f32 %v115, %v101
    %v117 = vadd.f32 %v116, %v102
    %118 = vadd.xlane.f32.xlu0 %v117
    %v119 = vpop.xlane.xlu0 %118
    %v120 = vadd.f32 %v107, %v108
    %v121 = vadd.f32 %v120, %v109
    %v122 = vadd.f32 %v121, %v110
    %123 = vadd.xlane.f32.xlu0 %v122
    %v124 = vpop.xlane.xlu0 %123
    %v125 = vmul.f32 %v119, 0.0025
    %v126 = vmul.f32 %v124, 0.0025
    %v127 = vmul.f32 %v99, %v99
    %v128 = vmul.f32 %v100, %v100
    %v129 = vmul.f32 %v101, %v101
    %v130 = vmul.f32 %v102, %v102
    %v131 = vmul.f32 %v107, %v107
    %v132 = vmul.f32 %v108, %v108
    %v133 = vmul.f32 %v109, %v109
    %v134 = vmul.f32 %v110, %v110
    %v135 = vadd.f32 %v127, %v128
    %v136 = vadd.f32 %v135, %v129
    %v137 = vadd.f32 %v136, %v130
    %138 = vadd.xlane.f32.xlu0 %v137
    %v139 = vpop.xlane.xlu0 %138
    %v140 = vadd.f32 %v131, %v132
    %v141 = vadd.f32 %v140, %v133
    %v142 = vadd.f32 %v141, %v134
    %143 = vadd.xlane.f32.xlu0 %v142
    %v144 = vpop.xlane.xlu0 %143
    %v145 = vmul.f32 %v139, 0.0025
    %v146 = vmul.f32 %v144, 0.0025
    %v147 = vmul.f32 %v125, %v125
    %v148 = vmul.f32 %v126, %v126
    %v149 = vsub.f32 %v145, %v147
    %v150 = vsub.f32 %v146, %v148
    %v151 = vsub.f32 %v99, %v125
    %v152 = vsub.f32 %v100, %v125
    %v153 = vsub.f32 %v101, %v125
    %v154 = vsub.f32 %v102, %v125
    %v155 = vsub.f32 %v107, %v126
    %v156 = vsub.f32 %v108, %v126
    %v157 = vsub.f32 %v109, %v126
    %v158 = vsub.f32 %v110, %v126
    %v159 = vadd.f32 %v149, 1e-05
    %v160 = vadd.f32 %v150, 1e-05
    %v161 = vrsqrt.pop %v159
    %v162 = vmul.f32 %v161, %v159
    %v163 = vmul.f32 %v162, %v161
    %v164 = vmul.f32 0.5, %v163
    %v165 = vsub.f32 1.5, %v164
    %v166 = vmul.f32 %v161, %v165
    %vm167 = vweird.f32 %v159
    %vm168 = vweird.f32 %v161
    %vm169 = vmor %vm167, %vm168
    %v170 = vsel %vm169, %v161, %v166
    %v171 = vrsqrt.pop %v160
    %v172 = vmul.f32 %v171, %v160
    %v173 = vmul.f32 %v172, %v171
    %v174 = vmul.f32 0.5, %v173
    %v175 = vsub.f32 1.5, %v174
    %v176 = vmul.f32 %v171, %v175
    %vm177 = vweird.f32 %v160
    %vm178 = vweird.f32 %v171
    %vm179 = vmor %vm177, %vm178
    %v180 = vsel %vm179, %v171, %v176
    %v181 = vmul.f32 %v151, %v170
    %v182 = vmul.f32 %v152, %v170
    %v183 = vmul.f32 %v153, %v170
    %v184 = vmul.f32 %v154, %v170
    %v185 = vmul.f32 %v155, %v180
    %v186 = vmul.f32 %v156, %v180
    %v187 = vmul.f32 %v157, %v180
    %v188 = vmul.f32 %v158, %v180
    %v189 = vadd.f32 %v103, %v104
    %v190 = vadd.f32 %v189, %v105
    %v191 = vadd.f32 %v190, %v106
    %192 = vadd.xlane.f32.xlu0 %v191
    %v193 = vpop.xlane.xlu0 %192
    %v194 = vadd.f32 %v111, %v112
    %v195 = vadd.f32 %v194, %v113
    %v196 = vadd.f32 %v195, %v114
    %197 = vadd.xlane.f32.xlu0 %v196
    %v198 = vpop.xlane.xlu0 %197
    %v199 = vmul.f32 %v193, 0.0025
    %v200 = vmul.f32 %v198, 0.0025
    %v201 = vmul.f32 %v103, %v103
    %v202 = vmul.f32 %v104, %v104
    %v203 = vmul.f32 %v105, %v105
    %v204 = vmul.f32 %v106, %v106
    %v205 = vmul.f32 %v111, %v111
    %v206 = vmul.f32 %v112, %v112
    %v207 = vmul.f32 %v113, %v113
    %v208 = vmul.f32 %v114, %v114
    %v209 = vadd.f32 %v201, %v202
    %v210 = vadd.f32 %v209, %v203
    %v211 = vadd.f32 %v210, %v204
    %212 = vadd.xlane.f32.xlu0 %v211
    %v213 = vpop.xlane.xlu0 %212
    %v214 = vadd.f32 %v205, %v206
    %v215 = vadd.f32 %v214, %v207
    %v216 = vadd.f32 %v215, %v208
    %217 = vadd.xlane.f32.xlu0 %v216
    %v218 = vpop.xlane.xlu0 %217
    %v219 = vmul.f32 %v213, 0.0025
    %v220 = vmul.f32 %v218, 0.0025
    %v221 = vmul.f32 %v199, %v199
    %v222 = vmul.f32 %v200, %v200
    %v223 = vsub.f32 %v219, %v221
    %v224 = vsub.f32 %v220, %v222
    %v225 = vsub.f32 %v103, %v199
    %v226 = vsub.f32 %v104, %v199
    %v227 = vsub.f32 %v105, %v199
    %v228 = vsub.f32 %v106, %v199
    %v229 = vsub.f32 %v111, %v200
    %v230 = vsub.f32 %v112, %v200
    %v231 = vsub.f32 %v113, %v200
    %v232 = vsub.f32 %v114, %v200
    %v233 = vadd.f32 %v223, 1e-05
    %v234 = vadd.f32 %v224, 1e-05
    %v235 = vrsqrt.pop %v233
    %v236 = vmul.f32 %v235, %v233
    %v237 = vmul.f32 %v236, %v235
    %v238 = vmul.f32 0.5, %v237
    %v239 = vsub.f32 1.5, %v238
    %v240 = vmul.f32 %v235, %v239
    %vm241 = vweird.f32 %v233
    %vm242 = vweird.f32 %v235
    %vm243 = vmor %vm241, %vm242
    %v244 = vsel %vm243, %v235, %v240
    %v245 = vrsqrt.pop %v234
    %v246 = vmul.f32 %v245, %v234
    %v247 = vmul.f32 %v246, %v245
    %v248 = vmul.f32 0.5, %v247
    %v249 = vsub.f32 1.5, %v248
    %v250 = vmul.f32 %v245, %v249
    %vm251 = vweird.f32 %v234
    %vm252 = vweird.f32 %v245
    %vm253 = vmor %vm251, %vm252
    %v254 = vsel %vm253, %v245, %v250
    %v255 = vmul.f32 %v225, %v244
    %v256 = vmul.f32 %v226, %v244
    %v257 = vmul.f32 %v227, %v244
    %v258 = vmul.f32 %v228, %v244
    %v259 = vmul.f32 %v229, %v254
    %v260 = vmul.f32 %v230, %v254
    %v261 = vmul.f32 %v231, %v254
    %v262 = vmul.f32 %v232, %v254
    %v263 = vld [vmem:[#allocation6] sm:$0xff]
    %v264 = vld [vmem:[#allocation6 + $0x8] sm:$0xff]
    %v265 = vld [vmem:[#allocation6 + $0x10] sm:$0xff]
    %v266 = vld [vmem:[#allocation6 + $0x18] sm:$0xff]
    %v267 = vld [vmem:[#allocation6 + $0x20] sm:$0xff]
    %v268 = vld [vmem:[#allocation6 + $0x28] sm:$0xff]
    %v269 = vld [vmem:[#allocation6 + $0x30] sm:$0xff]
    %v270 = vld [vmem:[#allocation6 + $0x38] sm:$0xff]
    %v271 = vld [vmem:[#allocation6 + $0x40] sm:$0xff]
    %v272 = vld [vmem:[#allocation6 + $0x48] sm:$0xff]
    %v273 = vld [vmem:[#allocation6 + $0x50] sm:$0xff]
    %v274 = vld [vmem:[#allocation6 + $0x58] sm:$0xff]
    %v275 = vld [vmem:[#allocation6 + $0x60] sm:$0xff]
    %v276 = vld [vmem:[#allocation6 + $0x68] sm:$0xff]
    %v277 = vld [vmem:[#allocation6 + $0x70] sm:$0xff]
    %v278 = vld [vmem:[#allocation6 + $0x78] sm:$0xff]
    %v279 = vmul.f32 %v181, %v263
    %v280 = vmul.f32 %v182, %v264
    %v281 = vmul.f32 %v183, %v265
    %v282 = vmul.f32 %v184, %v266
    %v283 = vmul.f32 %v255, %v267
    %v284 = vmul.f32 %v256, %v268
    %v285 = vmul.f32 %v257, %v269
    %v286 = vmul.f32 %v258, %v270
    %v287 = vmul.f32 %v185, %v271
    %v288 = vmul.f32 %v186, %v272
    %v289 = vmul.f32 %v187, %v273
    %v290 = vmul.f32 %v188, %v274
    %v291 = vmul.f32 %v259, %v275
    %v292 = vmul.f32 %v260, %v276
    %v293 = vmul.f32 %v261, %v277
    %v294 = vmul.f32 %v262, %v278
    %v295 = vld [vmem:[#allocation8] sm:$0xff]
    %v296 = vld [vmem:[#allocation8 + $0x8] sm:$0xff]
    %v297 = vld [vmem:[#allocation8 + $0x10] sm:$0xff]
    %v298 = vld [vmem:[#allocation8 + $0x18] sm:$0xff]
    %v299 = vld [vmem:[#allocation8 + $0x20] sm:$0xff]
    %v300 = vld [vmem:[#allocation8 + $0x28] sm:$0xff]
    %v301 = vld [vmem:[#allocation8 + $0x30] sm:$0xff]
    %v302 = vld [vmem:[#allocation8 + $0x38] sm:$0xff]
    %v303 = vld [vmem:[#allocation8 + $0x40] sm:$0xff]
    %v304 = vld [vmem:[#allocation8 + $0x48] sm:$0xff]
    %v305 = vld [vmem:[#allocation8 + $0x50] sm:$0xff]
    %v306 = vld [vmem:[#allocation8 + $0x58] sm:$0xff]
    %v307 = vld [vmem:[#allocation8 + $0x60] sm:$0xff]
    %v308 = vld [vmem:[#allocation8 + $0x68] sm:$0xff]
    %v309 = vld [vmem:[#allocation8 + $0x70] sm:$0xff]
    %v310 = vld [vmem:[#allocation8 + $0x78] sm:$0xff]
    %v311 = vadd.f32 %v279, %v295
    %v312 = vadd.f32 %v280, %v296
    %v313 = vadd.f32 %v281, %v297
    %v314 = vadd.f32 %v282, %v298
    %v315 = vadd.f32 %v283, %v299
    %v316 = vadd.f32 %v284, %v300
    %v317 = vadd.f32 %v285, %v301
    %v318 = vadd.f32 %v286, %v302
    %v319 = vadd.f32 %v287, %v303
    %v320 = vadd.f32 %v288, %v304
    %v321 = vadd.f32 %v289, %v305
    %v322 = vadd.f32 %v290, %v306
    %v323 = vadd.f32 %v291, %v307
    %v324 = vadd.f32 %v292, %v308
    %v325 = vadd.f32 %v293, %v309
    %v326 = vadd.f32 %v294, %v310
    %v328 = vperm.slane %v98, 0
    %v329 = vperm.slane %v98, 1
    %v330 = vperm.slane %v98, 2
    %v331 = vperm.slane %v98, 3
    %v332 = vperm.slane %v98, 4
    %v333 = vperm.slane %v98, 5
    %v334 = vperm.slane %v98, 6
    %v335 = vperm.slane %v98, 7
    %v344 = vpack.c.bf16 %v329, %v328
    %v345 = vpack.c.bf16 %v331, %v330
    %v346 = vpack.c.bf16 %v333, %v332
    %v347 = vpack.c.bf16 %v335, %v334
    %348 = vst [vmem:[#allocation2 + $0x240] sm:$0xff] %v344
    %349 = vst [vmem:[#allocation2 + $0x248] sm:$0xff] %v345
    %350 = vst [vmem:[#allocation2 + $0x250] sm:$0xff] %v346
    %351 = vst [vmem:[#allocation2 + $0x258] sm:$0xff] %v347
    %352 = vst [vmem:[#allocation2 + $0x260] sm:$0xff] %v344
    %353 = vst [vmem:[#allocation2 + $0x268] sm:$0xff] %v345
    %354 = vst [vmem:[#allocation2 + $0x270] sm:$0xff] %v346
    %355 = vst [vmem:[#allocation2 + $0x278] sm:$0xff] %v347
    %356 = vrot.lane.b32.xlu0 %v311, 23
    %v357 = vpop.permute.xlu0 %356
    %358 = vrot.lane.b32.xlu0 %v319, 23
    %v359 = vpop.permute.xlu0 %358
    %360 = vrot.lane.b32.xlu0 %v312, 23
    %v361 = vpop.permute.xlu0 %360
    %362 = vrot.lane.b32.xlu0 %v320, 23
    %v363 = vpop.permute.xlu0 %362
    %364 = vrot.lane.b32.xlu0 %v313, 23
    %v365 = vpop.permute.xlu0 %364
    %366 = vrot.lane.b32.xlu0 %v321, 23
    %v367 = vpop.permute.xlu0 %366
    %368 = vrot.lane.b32.xlu0 %v314, 23
    %v369 = vpop.permute.xlu0 %368
    %370 = vrot.lane.b32.xlu0 %v322, 23
    %v371 = vpop.permute.xlu0 %370
    %372 = vrot.lane.b32.xlu0 %v315, 23
    %v373 = vpop.permute.xlu0 %372
    %374 = vrot.lane.b32.xlu0 %v323, 23
    %v375 = vpop.permute.xlu0 %374
    %376 = vrot.lane.b32.xlu0 %v316, 23
    %v377 = vpop.permute.xlu0 %376
    %378 = vrot.lane.b32.xlu0 %v324, 23
    %v379 = vpop.permute.xlu0 %378
    %380 = vrot.lane.b32.xlu0 %v317, 23
    %v381 = vpop.permute.xlu0 %380
    %382 = vrot.lane.b32.xlu0 %v325, 23
    %v383 = vpop.permute.xlu0 %382
    %384 = vrot.lane.b32.xlu0 %v318, 23
    %v385 = vpop.permute.xlu0 %384
    %386 = vrot.lane.b32.xlu0 %v326, 23
    %v387 = vpop.permute.xlu0 %386
    %v388 = vlaneseq
    %v389 = vand.u32 %v388, 127
    %vm390 = vcmp.lt.s32.totalorder %v389, 23
    %v391 = vsel %vm390, %v381, %v385
    %v392 = vsel %vm390, %v383, %v387
    %v393 = vsel %vm390, %v377, %v381
    %v394 = vsel %vm390, %v379, %v383
    %v395 = vsel %vm390, %v373, %v377
    %v396 = vsel %vm390, %v375, %v379
    %v397 = vsel %vm390, %v369, %v373
    %v398 = vsel %vm390, %v371, %v375
    %v399 = vsel %vm390, %v365, %v369
    %v400 = vsel %vm390, %v367, %v371
    %v401 = vsel %vm390, %v361, %v365
    %v402 = vsel %vm390, %v363, %v367
    %v403 = vsel %vm390, %v357, %v361
    %v404 = vsel %vm390, %v359, %v363
    %v405 = vsel %vm390, %v385, %v357
    %v406 = vsel %vm390, %v387, %v359
    %v407 = vpack.c.bf16 %v403, %v405
    %v408 = vpack.c.bf16 %v399, %v401
    %v409 = vpack.c.bf16 %v395, %v397
    %v410 = vpack.c.bf16 %v391, %v393
    %v411 = vpack.c.bf16 %v404, %v406
    %v412 = vpack.c.bf16 %v400, %v402
    %v413 = vpack.c.bf16 %v396, %v398
    %v414 = vpack.c.bf16 %v392, %v394
    %415 = vst [vmem:[#allocation2] sm:$0xff] %v407
    %416 = vst [vmem:[#allocation2 + $0x8] sm:$0xff] %v408
    %417 = vst [vmem:[#allocation2 + $0x10] sm:$0xff] %v409
    %418 = vst [vmem:[#allocation2 + $0x18] sm:$0xff] %v410
    %419 = vst [vmem:[#allocation2 + $0x20] sm:$0xff] %v411
    %420 = vst [vmem:[#allocation2 + $0x28] sm:$0xff] %v412
    %421 = vst [vmem:[#allocation2 + $0x30] sm:$0xff] %v413
    %422 = vst [vmem:[#allocation2 + $0x38] sm:$0xff] %v414
    %423 = vrot.lane.b32.xlu0 %v311, 22
    %v424 = vpop.permute.xlu0 %423
    %425 = vrot.lane.b32.xlu0 %v319, 22
    %v426 = vpop.permute.xlu0 %425
    %427 = vrot.lane.b32.xlu0 %v312, 22
    %v428 = vpop.permute.xlu0 %427
    %429 = vrot.lane.b32.xlu0 %v320, 22
    %v430 = vpop.permute.xlu0 %429
    %431 = vrot.lane.b32.xlu0 %v313, 22
    %v432 = vpop.permute.xlu0 %431
    %433 = vrot.lane.b32.xlu0 %v321, 22
    %v434 = vpop.permute.xlu0 %433
    %435 = vrot.lane.b32.xlu0 %v314, 22
    %v436 = vpop.permute.xlu0 %435
    %437 = vrot.lane.b32.xlu0 %v322, 22
    %v438 = vpop.permute.xlu0 %437
    %439 = vrot.lane.b32.xlu0 %v315, 22
    %v440 = vpop.permute.xlu0 %439
    %441 = vrot.lane.b32.xlu0 %v323, 22
    %v442 = vpop.permute.xlu0 %441
    %443 = vrot.lane.b32.xlu0 %v316, 22
    %v444 = vpop.permute.xlu0 %443
    %445 = vrot.lane.b32.xlu0 %v324, 22
    %v446 = vpop.permute.xlu0 %445
    %447 = vrot.lane.b32.xlu0 %v317, 22
    %v448 = vpop.permute.xlu0 %447
    %449 = vrot.lane.b32.xlu0 %v325, 22
    %v450 = vpop.permute.xlu0 %449
    %451 = vrot.lane.b32.xlu0 %v318, 22
    %v452 = vpop.permute.xlu0 %451
    %453 = vrot.lane.b32.xlu0 %v326, 22
    %v454 = vpop.permute.xlu0 %453
    %vm455 = vcmp.lt.s32.totalorder %v389, 22
    %v456 = vsel %vm455, %v448, %v452
    %v457 = vsel %vm455, %v450, %v454
    %v458 = vsel %vm455, %v444, %v448
    %v459 = vsel %vm455, %v446, %v450
    %v460 = vsel %vm455, %v440, %v444
    %v461 = vsel %vm455, %v442, %v446
    %v462 = vsel %vm455, %v436, %v440
    %v463 = vsel %vm455, %v438, %v442
    %v464 = vsel %vm455, %v432, %v436
    %v465 = vsel %vm455, %v434, %v438
    %v466 = vsel %vm455, %v428, %v432
    %v467 = vsel %vm455, %v430, %v434
    %v468 = vsel %vm455, %v424, %v428
    %v469 = vsel %vm455, %v426, %v430
    %v470 = vsel %vm455, %v452, %v424
    %v471 = vsel %vm455, %v454, %v426
    %v472 = vpack.c.bf16 %v468, %v470
    %v473 = vpack.c.bf16 %v464, %v466
    %v474 = vpack.c.bf16 %v460, %v462
    %v475 = vpack.c.bf16 %v456, %v458
    %v476 = vpack.c.bf16 %v469, %v471
    %v477 = vpack.c.bf16 %v465, %v467
    %v478 = vpack.c.bf16 %v461, %v463
    %v479 = vpack.c.bf16 %v457, %v459
    %480 = vst [vmem:[#allocation2 + $0x40] sm:$0xff] %v472
    %481 = vst [vmem:[#allocation2 + $0x48] sm:$0xff] %v473
    %482 = vst [vmem:[#allocation2 + $0x50] sm:$0xff] %v474
    %483 = vst [vmem:[#allocation2 + $0x58] sm:$0xff] %v475
    %484 = vst [vmem:[#allocation2 + $0x60] sm:$0xff] %v476
    %485 = vst [vmem:[#allocation2 + $0x68] sm:$0xff] %v477
    %486 = vst [vmem:[#allocation2 + $0x70] sm:$0xff] %v478
    %487 = vst [vmem:[#allocation2 + $0x78] sm:$0xff] %v479
    %488 = vrot.lane.b32.xlu0 %v311, 21
    %v489 = vpop.permute.xlu0 %488
    %490 = vrot.lane.b32.xlu0 %v319, 21
    %v491 = vpop.permute.xlu0 %490
    %492 = vrot.lane.b32.xlu0 %v312, 21
    %v493 = vpop.permute.xlu0 %492
    %494 = vrot.lane.b32.xlu0 %v320, 21
    %v495 = vpop.permute.xlu0 %494
    %496 = vrot.lane.b32.xlu0 %v313, 21
    %v497 = vpop.permute.xlu0 %496
    %498 = vrot.lane.b32.xlu0 %v321, 21
    %v499 = vpop.permute.xlu0 %498
    %500 = vrot.lane.b32.xlu0 %v314, 21
    %v501 = vpop.permute.xlu0 %500
    %502 = vrot.lane.b32.xlu0 %v322, 21
    %v503 = vpop.permute.xlu0 %502
    %504 = vrot.lane.b32.xlu0 %v315, 21
    %v505 = vpop.permute.xlu0 %504
    %506 = vrot.lane.b32.xlu0 %v323, 21
    %v507 = vpop.permute.xlu0 %506
    %508 = vrot.lane.b32.xlu0 %v316, 21
    %v509 = vpop.permute.xlu0 %508
    %510 = vrot.lane.b32.xlu0 %v324, 21
    %v511 = vpop.permute.xlu0 %510
    %512 = vrot.lane.b32.xlu0 %v317, 21
    %v513 = vpop.permute.xlu0 %512
    %514 = vrot.lane.b32.xlu0 %v325, 21
    %v515 = vpop.permute.xlu0 %514
    %516 = vrot.lane.b32.xlu0 %v318, 21
    %v517 = vpop.permute.xlu0 %516
    %518 = vrot.lane.b32.xlu0 %v326, 21
    %v519 = vpop.permute.xlu0 %518
    %vm520 = vcmp.lt.s32.totalorder %v389, 21
    %v521 = vsel %vm520, %v513, %v517
    %v522 = vsel %vm520, %v515, %v519
    %v523 = vsel %vm520, %v509, %v513
    %v524 = vsel %vm520, %v511, %v515
    %v525 = vsel %vm520, %v505, %v509
    %v526 = vsel %vm520, %v507, %v511
    %v527 = vsel %vm520, %v501, %v505
    %v528 = vsel %vm520, %v503, %v507
    %v529 = vsel %vm520, %v497, %v501
    %v530 = vsel %vm520, %v499, %v503
    %v531 = vsel %vm520, %v493, %v497
    %v532 = vsel %vm520, %v495, %v499
    %v533 = vsel %vm520, %v489, %v493
    %v534 = vsel %vm520, %v491, %v495
    %v535 = vsel %vm520, %v517, %v489
    %v536 = vsel %vm520, %v519, %v491
    %v537 = vpack.c.bf16 %v533, %v535
    %v538 = vpack.c.bf16 %v529, %v531
    %v539 = vpack.c.bf16 %v525, %v527
    %v540 = vpack.c.bf16 %v521, %v523
    %v541 = vpack.c.bf16 %v534, %v536
    %v542 = vpack.c.bf16 %v530, %v532
    %v543 = vpack.c.bf16 %v526, %v528
    %v544 = vpack.c.bf16 %v522, %v524
    %545 = vst [vmem:[#allocation2 + $0x80] sm:$0xff] %v537
    %546 = vst [vmem:[#allocation2 + $0x88] sm:$0xff] %v538
    %547 = vst [vmem:[#allocation2 + $0x90] sm:$0xff] %v539
    %548 = vst [vmem:[#allocation2 + $0x98] sm:$0xff] %v540
    %549 = vst [vmem:[#allocation2 + $0xa0] sm:$0xff] %v541
    %550 = vst [vmem:[#allocation2 + $0xa8] sm:$0xff] %v542
    %551 = vst [vmem:[#allocation2 + $0xb0] sm:$0xff] %v543
    %552 = vst [vmem:[#allocation2 + $0xb8] sm:$0xff] %v544
    %553 = vrot.lane.b32.xlu0 %v311, 1
    %v554 = vpop.permute.xlu0 %553
    %555 = vrot.lane.b32.xlu0 %v319, 1
    %v556 = vpop.permute.xlu0 %555
    %557 = vrot.lane.b32.xlu0 %v312, 1
    %v558 = vpop.permute.xlu0 %557
    %559 = vrot.lane.b32.xlu0 %v320, 1
    %v560 = vpop.permute.xlu0 %559
    %561 = vrot.lane.b32.xlu0 %v313, 1
    %v562 = vpop.permute.xlu0 %561
    %563 = vrot.lane.b32.xlu0 %v321, 1
    %v564 = vpop.permute.xlu0 %563
    %565 = vrot.lane.b32.xlu0 %v314, 1
    %v566 = vpop.permute.xlu0 %565
    %567 = vrot.lane.b32.xlu0 %v322, 1
    %v568 = vpop.permute.xlu0 %567
    %569 = vrot.lane.b32.xlu0 %v315, 1
    %v570 = vpop.permute.xlu0 %569
    %571 = vrot.lane.b32.xlu0 %v323, 1
    %v572 = vpop.permute.xlu0 %571
    %573 = vrot.lane.b32.xlu0 %v316, 1
    %v574 = vpop.permute.xlu0 %573
    %575 = vrot.lane.b32.xlu0 %v324, 1
    %v576 = vpop.permute.xlu0 %575
    %577 = vrot.lane.b32.xlu0 %v317, 1
    %v578 = vpop.permute.xlu0 %577
    %579 = vrot.lane.b32.xlu0 %v325, 1
    %v580 = vpop.permute.xlu0 %579
    %581 = vrot.lane.b32.xlu0 %v318, 1
    %v582 = vpop.permute.xlu0 %581
    %583 = vrot.lane.b32.xlu0 %v326, 1
    %v584 = vpop.permute.xlu0 %583
    %vm585 = vcmp.lt.s32.totalorder %v389, 1
    %v586 = vsel %vm585, %v578, %v582
    %v587 = vsel %vm585, %v580, %v584
    %v588 = vsel %vm585, %v574, %v578
    %v589 = vsel %vm585, %v576, %v580
    %v590 = vsel %vm585, %v570, %v574
    %v591 = vsel %vm585, %v572, %v576
    %v592 = vsel %vm585, %v566, %v570
    %v593 = vsel %vm585, %v568, %v572
    %v594 = vsel %vm585, %v562, %v566
    %v595 = vsel %vm585, %v564, %v568
    %v596 = vsel %vm585, %v558, %v562
    %v597 = vsel %vm585, %v560, %v564
    %v598 = vsel %vm585, %v554, %v558
    %v599 = vsel %vm585, %v556, %v560
    %v600 = vsel %vm585, %v582, %v554
    %v601 = vsel %vm585, %v584, %v556
    %v602 = vpack.c.bf16 %v598, %v600
    %v603 = vpack.c.bf16 %v594, %v596
    %v604 = vpack.c.bf16 %v590, %v592
    %v605 = vpack.c.bf16 %v586, %v588
    %v606 = vpack.c.bf16 %v599, %v601
    %v607 = vpack.c.bf16 %v595, %v597
    %v608 = vpack.c.bf16 %v591, %v593
    %v609 = vpack.c.bf16 %v587, %v589
    %610 = vst [vmem:[#allocation2 + $0xc0] sm:$0xff] %v602
    %611 = vst [vmem:[#allocation2 + $0xc8] sm:$0xff] %v603
    %612 = vst [vmem:[#allocation2 + $0xd0] sm:$0xff] %v604
    %613 = vst [vmem:[#allocation2 + $0xd8] sm:$0xff] %v605
    %614 = vst [vmem:[#allocation2 + $0xe0] sm:$0xff] %v606
    %615 = vst [vmem:[#allocation2 + $0xe8] sm:$0xff] %v607
    %616 = vst [vmem:[#allocation2 + $0xf0] sm:$0xff] %v608
    %617 = vst [vmem:[#allocation2 + $0xf8] sm:$0xff] %v609
    %v618 = vpack.c.bf16 %v312, %v311
    %v619 = vpack.c.bf16 %v314, %v313
    %v620 = vpack.c.bf16 %v316, %v315
    %v621 = vpack.c.bf16 %v318, %v317
    %v622 = vpack.c.bf16 %v320, %v319
    %v623 = vpack.c.bf16 %v322, %v321
    %v624 = vpack.c.bf16 %v324, %v323
    %v625 = vpack.c.bf16 %v326, %v325
    %626 = vst [vmem:[#allocation2 + $0x100] sm:$0xff] %v618
    %627 = vst [vmem:[#allocation2 + $0x108] sm:$0xff] %v619
    %628 = vst [vmem:[#allocation2 + $0x110] sm:$0xff] %v620
    %629 = vst [vmem:[#allocation2 + $0x118] sm:$0xff] %v621
    %630 = vst [vmem:[#allocation2 + $0x120] sm:$0xff] %v622
    %631 = vst [vmem:[#allocation2 + $0x128] sm:$0xff] %v623
    %632 = vst [vmem:[#allocation2 + $0x130] sm:$0xff] %v624
    %633 = vst [vmem:[#allocation2 + $0x138] sm:$0xff] %v625
    %634 = vrot.lane.b32.xlu0 %v311, 127
    %v635 = vpop.permute.xlu0 %634
    %636 = vrot.lane.b32.xlu0 %v319, 127
    %v637 = vpop.permute.xlu0 %636
    %638 = vrot.lane.b32.xlu0 %v312, 127
    %v639 = vpop.permute.xlu0 %638
    %640 = vrot.lane.b32.xlu0 %v320, 127
    %v641 = vpop.permute.xlu0 %640
    %642 = vrot.lane.b32.xlu0 %v313, 127
    %v643 = vpop.permute.xlu0 %642
    %644 = vrot.lane.b32.xlu0 %v321, 127
    %v645 = vpop.permute.xlu0 %644
    %646 = vrot.lane.b32.xlu0 %v314, 127
    %v647 = vpop.permute.xlu0 %646
    %648 = vrot.lane.b32.xlu0 %v322, 127
    %v649 = vpop.permute.xlu0 %648
    %650 = vrot.lane.b32.xlu0 %v315, 127
    %v651 = vpop.permute.xlu0 %650
    %652 = vrot.lane.b32.xlu0 %v323, 127
    %v653 = vpop.permute.xlu0 %652
    %654 = vrot.lane.b32.xlu0 %v316, 127
    %v655 = vpop.permute.xlu0 %654
    %656 = vrot.lane.b32.xlu0 %v324, 127
    %v657 = vpop.permute.xlu0 %656
    %658 = vrot.lane.b32.xlu0 %v317, 127
    %v659 = vpop.permute.xlu0 %658
    %660 = vrot.lane.b32.xlu0 %v325, 127
    %v661 = vpop.permute.xlu0 %660
    %662 = vrot.lane.b32.xlu0 %v318, 127
    %v663 = vpop.permute.xlu0 %662
    %664 = vrot.lane.b32.xlu0 %v326, 127
    %v665 = vpop.permute.xlu0 %664
    %vm666 = vcmp.lt.s32.totalorder %v389, 127
    %v667 = vsel %vm666, %v659, %v663
    %v668 = vsel %vm666, %v661, %v665
    %v669 = vsel %vm666, %v655, %v659
    %v670 = vsel %vm666, %v657, %v661
    %v671 = vsel %vm666, %v651, %v655
    %v672 = vsel %vm666, %v653, %v657
    %v673 = vsel %vm666, %v647, %v651
    %v674 = vsel %vm666, %v649, %v653
    %v675 = vsel %vm666, %v643, %v647
    %v676 = vsel %vm666, %v645, %v649
    %v677 = vsel %vm666, %v639, %v643
    %v678 = vsel %vm666, %v641, %v645
    %v679 = vsel %vm666, %v635, %v639
    %v680 = vsel %vm666, %v637, %v641
    %v681 = vsel %vm666, %v663, %v635
    %v682 = vsel %vm666, %v665, %v637
    %v683 = vpack.c.bf16 %v677, %v679
    %v684 = vpack.c.bf16 %v673, %v675
    %v685 = vpack.c.bf16 %v669, %v671
    %v686 = vpack.c.bf16 %v681, %v667
    %v687 = vpack.c.bf16 %v678, %v680
    %v688 = vpack.c.bf16 %v674, %v676
    %v689 = vpack.c.bf16 %v670, %v672
    %v690 = vpack.c.bf16 %v682, %v668
    %691 = vst [vmem:[#allocation2 + $0x140] sm:$0xff] %v683
    %692 = vst [vmem:[#allocation2 + $0x148] sm:$0xff] %v684
    %693 = vst [vmem:[#allocation2 + $0x150] sm:$0xff] %v685
    %694 = vst [vmem:[#allocation2 + $0x158] sm:$0xff] %v686
    %695 = vst [vmem:[#allocation2 + $0x160] sm:$0xff] %v687
    %696 = vst [vmem:[#allocation2 + $0x168] sm:$0xff] %v688
    %697 = vst [vmem:[#allocation2 + $0x170] sm:$0xff] %v689
    %698 = vst [vmem:[#allocation2 + $0x178] sm:$0xff] %v690
    %699 = vrot.lane.b32.xlu0 %v311, 107
    %v700 = vpop.permute.xlu0 %699
    %701 = vrot.lane.b32.xlu0 %v319, 107
    %v702 = vpop.permute.xlu0 %701
    %703 = vrot.lane.b32.xlu0 %v312, 107
    %v704 = vpop.permute.xlu0 %703
    %705 = vrot.lane.b32.xlu0 %v320, 107
    %v706 = vpop.permute.xlu0 %705
    %707 = vrot.lane.b32.xlu0 %v313, 107
    %v708 = vpop.permute.xlu0 %707
    %709 = vrot.lane.b32.xlu0 %v321, 107
    %v710 = vpop.permute.xlu0 %709
    %711 = vrot.lane.b32.xlu0 %v314, 107
    %v712 = vpop.permute.xlu0 %711
    %713 = vrot.lane.b32.xlu0 %v322, 107
    %v714 = vpop.permute.xlu0 %713
    %715 = vrot.lane.b32.xlu0 %v315, 107
    %v716 = vpop.permute.xlu0 %715
    %717 = vrot.lane.b32.xlu0 %v323, 107
    %v718 = vpop.permute.xlu0 %717
    %719 = vrot.lane.b32.xlu0 %v316, 107
    %v720 = vpop.permute.xlu0 %719
    %721 = vrot.lane.b32.xlu0 %v324, 107
    %v722 = vpop.permute.xlu0 %721
    %723 = vrot.lane.b32.xlu0 %v317, 107
    %v724 = vpop.permute.xlu0 %723
    %725 = vrot.lane.b32.xlu0 %v325, 107
    %v726 = vpop.permute.xlu0 %725
    %727 = vrot.lane.b32.xlu0 %v318, 107
    %v728 = vpop.permute.xlu0 %727
    %729 = vrot.lane.b32.xlu0 %v326, 107
    %v730 = vpop.permute.xlu0 %729
    %vm731 = vcmp.lt.s32.totalorder %v389, 107
    %v732 = vsel %vm731, %v724, %v728
    %v733 = vsel %vm731, %v726, %v730
    %v734 = vsel %vm731, %v720, %v724
    %v735 = vsel %vm731, %v722, %v726
    %v736 = vsel %vm731, %v716, %v720
    %v737 = vsel %vm731, %v718, %v722
    %v738 = vsel %vm731, %v712, %v716
    %v739 = vsel %vm731, %v714, %v718
    %v740 = vsel %vm731, %v708, %v712
    %v741 = vsel %vm731, %v710, %v714
    %v742 = vsel %vm731, %v704, %v708
    %v743 = vsel %vm731, %v706, %v710
    %v744 = vsel %vm731, %v700, %v704
    %v745 = vsel %vm731, %v702, %v706
    %v746 = vsel %vm731, %v728, %v700
    %v747 = vsel %vm731, %v730, %v702
    %v748 = vpack.c.bf16 %v742, %v744
    %v749 = vpack.c.bf16 %v738, %v740
    %v750 = vpack.c.bf16 %v734, %v736
    %v751 = vpack.c.bf16 %v746, %v732
    %v752 = vpack.c.bf16 %v743, %v745
    %v753 = vpack.c.bf16 %v739, %v741
    %v754 = vpack.c.bf16 %v735, %v737
    %v755 = vpack.c.bf16 %v747, %v733
    %756 = vst [vmem:[#allocation2 + $0x180] sm:$0xff] %v748
    %757 = vst [vmem:[#allocation2 + $0x188] sm:$0xff] %v749
    %758 = vst [vmem:[#allocation2 + $0x190] sm:$0xff] %v750
    %759 = vst [vmem:[#allocation2 + $0x198] sm:$0xff] %v751
    %760 = vst [vmem:[#allocation2 + $0x1a0] sm:$0xff] %v752
    %761 = vst [vmem:[#allocation2 + $0x1a8] sm:$0xff] %v753
    %762 = vst [vmem:[#allocation2 + $0x1b0] sm:$0xff] %v754
    %763 = vst [vmem:[#allocation2 + $0x1b8] sm:$0xff] %v755
    %764 = vrot.lane.b32.xlu0 %v311, 106
    %v765 = vpop.permute.xlu0 %764
    %766 = vrot.lane.b32.xlu0 %v319, 106
    %v767 = vpop.permute.xlu0 %766
    %768 = vrot.lane.b32.xlu0 %v312, 106
    %v769 = vpop.permute.xlu0 %768
    %770 = vrot.lane.b32.xlu0 %v320, 106
    %v771 = vpop.permute.xlu0 %770
    %772 = vrot.lane.b32.xlu0 %v313, 106
    %v773 = vpop.permute.xlu0 %772
    %774 = vrot.lane.b32.xlu0 %v321, 106
    %v775 = vpop.permute.xlu0 %774
    %776 = vrot.lane.b32.xlu0 %v314, 106
    %v777 = vpop.permute.xlu0 %776
    %778 = vrot.lane.b32.xlu0 %v322, 106
    %v779 = vpop.permute.xlu0 %778
    %780 = vrot.lane.b32.xlu0 %v315, 106
    %v781 = vpop.permute.xlu0 %780
    %782 = vrot.lane.b32.xlu0 %v323, 106
    %v783 = vpop.permute.xlu0 %782
    %784 = vrot.lane.b32.xlu0 %v316, 106
    %v785 = vpop.permute.xlu0 %784
    %786 = vrot.lane.b32.xlu0 %v324, 106
    %v787 = vpop.permute.xlu0 %786
    %788 = vrot.lane.b32.xlu0 %v317, 106
    %v789 = vpop.permute.xlu0 %788
    %790 = vrot.lane.b32.xlu0 %v325, 106
    %v791 = vpop.permute.xlu0 %790
    %792 = vrot.lane.b32.xlu0 %v318, 106
    %v793 = vpop.permute.xlu0 %792
    %794 = vrot.lane.b32.xlu0 %v326, 106
    %v795 = vpop.permute.xlu0 %794
    %vm796 = vcmp.lt.s32.totalorder %v389, 106
    %v797 = vsel %vm796, %v789, %v793
    %v798 = vsel %vm796, %v791, %v795
    %v799 = vsel %vm796, %v785, %v789
    %v800 = vsel %vm796, %v787, %v791
    %v801 = vsel %vm796, %v781, %v785
    %v802 = vsel %vm796, %v783, %v787
    %v803 = vsel %vm796, %v777, %v781
    %v804 = vsel %vm796, %v779, %v783
    %v805 = vsel %vm796, %v773, %v777
    %v806 = vsel %vm796, %v775, %v779
    %v807 = vsel %vm796, %v769, %v773
    %v808 = vsel %vm796, %v771, %v775
    %v809 = vsel %vm796, %v765, %v769
    %v810 = vsel %vm796, %v767, %v771
    %v811 = vsel %vm796, %v793, %v765
    %v812 = vsel %vm796, %v795, %v767
    %v813 = vpack.c.bf16 %v807, %v809
    %v814 = vpack.c.bf16 %v803, %v805
    %v815 = vpack.c.bf16 %v799, %v801
    %v816 = vpack.c.bf16 %v811, %v797
    %v817 = vpack.c.bf16 %v808, %v810
    %v818 = vpack.c.bf16 %v804, %v806
    %v819 = vpack.c.bf16 %v800, %v802
    %v820 = vpack.c.bf16 %v812, %v798
    %821 = vst [vmem:[#allocation2 + $0x1c0] sm:$0xff] %v813
    %822 = vst [vmem:[#allocation2 + $0x1c8] sm:$0xff] %v814
    %823 = vst [vmem:[#allocation2 + $0x1d0] sm:$0xff] %v815
    %824 = vst [vmem:[#allocation2 + $0x1d8] sm:$0xff] %v816
    %825 = vst [vmem:[#allocation2 + $0x1e0] sm:$0xff] %v817
    %826 = vst [vmem:[#allocation2 + $0x1e8] sm:$0xff] %v818
    %827 = vst [vmem:[#allocation2 + $0x1f0] sm:$0xff] %v819
    %828 = vst [vmem:[#allocation2 + $0x1f8] sm:$0xff] %v820
    %829 = vrot.lane.b32.xlu0 %v311, 105
    %v830 = vpop.permute.xlu0 %829
    %831 = vrot.lane.b32.xlu0 %v319, 105
    %v832 = vpop.permute.xlu0 %831
    %833 = vrot.lane.b32.xlu0 %v312, 105
    %v834 = vpop.permute.xlu0 %833
    %835 = vrot.lane.b32.xlu0 %v320, 105
    %v836 = vpop.permute.xlu0 %835
    %837 = vrot.lane.b32.xlu0 %v313, 105
    %v838 = vpop.permute.xlu0 %837
    %839 = vrot.lane.b32.xlu0 %v321, 105
    %v840 = vpop.permute.xlu0 %839
    %841 = vrot.lane.b32.xlu0 %v314, 105
    %v842 = vpop.permute.xlu0 %841
    %843 = vrot.lane.b32.xlu0 %v322, 105
    %v844 = vpop.permute.xlu0 %843
    %845 = vrot.lane.b32.xlu0 %v315, 105
    %v846 = vpop.permute.xlu0 %845
    %847 = vrot.lane.b32.xlu0 %v323, 105
    %v848 = vpop.permute.xlu0 %847
    %849 = vrot.lane.b32.xlu0 %v316, 105
    %v850 = vpop.permute.xlu0 %849
    %851 = vrot.lane.b32.xlu0 %v324, 105
    %v852 = vpop.permute.xlu0 %851
    %853 = vrot.lane.b32.xlu0 %v317, 105
    %v854 = vpop.permute.xlu0 %853
    %855 = vrot.lane.b32.xlu0 %v325, 105
    %v856 = vpop.permute.xlu0 %855
    %857 = vrot.lane.b32.xlu0 %v318, 105
    %v858 = vpop.permute.xlu0 %857
    %859 = vrot.lane.b32.xlu0 %v326, 105
    %v860 = vpop.permute.xlu0 %859
    %vm861 = vcmp.lt.s32.totalorder %v389, 105
    %v862 = vsel %vm861, %v854, %v858
    %v863 = vsel %vm861, %v856, %v860
    %v864 = vsel %vm861, %v850, %v854
    %v865 = vsel %vm861, %v852, %v856
    %v866 = vsel %vm861, %v846, %v850
    %v867 = vsel %vm861, %v848, %v852
    %v868 = vsel %vm861, %v842, %v846
    %v869 = vsel %vm861, %v844, %v848
    %v870 = vsel %vm861, %v838, %v842
    %v871 = vsel %vm861, %v840, %v844
    %v872 = vsel %vm861, %v834, %v838
    %v873 = vsel %vm861, %v836, %v840
    %v874 = vsel %vm861, %v830, %v834
    %v875 = vsel %vm861, %v832, %v836
    %v876 = vsel %vm861, %v858, %v830
    %v877 = vsel %vm861, %v860, %v832
    %v878 = vpack.c.bf16 %v872, %v874
    %v879 = vpack.c.bf16 %v868, %v870
    %v880 = vpack.c.bf16 %v864, %v866
    %v881 = vpack.c.bf16 %v876, %v862
    %v882 = vpack.c.bf16 %v873, %v875
    %v883 = vpack.c.bf16 %v869, %v871
    %v884 = vpack.c.bf16 %v865, %v867
    %v885 = vpack.c.bf16 %v877, %v863
    %886 = vst [vmem:[#allocation2 + $0x200] sm:$0xff] %v878
    %887 = vst [vmem:[#allocation2 + $0x208] sm:$0xff] %v879
    %888 = vst [vmem:[#allocation2 + $0x210] sm:$0xff] %v880
    %889 = vst [vmem:[#allocation2 + $0x218] sm:$0xff] %v881
    %890 = vst [vmem:[#allocation2 + $0x220] sm:$0xff] %v882
    %891 = vst [vmem:[#allocation2 + $0x228] sm:$0xff] %v883
    %892 = vst [vmem:[#allocation2 + $0x230] sm:$0xff] %v884
    %893 = vst [vmem:[#allocation2 + $0x238] sm:$0xff] %v885
    %v894 = vld [vmem:[#allocation9] sm:$0xff]
    %v895 = vld [vmem:[#allocation9 + $0x8] sm:$0xff]
    %v896 = vld [vmem:[#allocation2] sm:$0xff]
    %v897 = vld [vmem:[#allocation2 + $0x8] sm:$0xff]
    %v898 = vld [vmem:[#allocation2 + $0x10] sm:$0xff]
    %v899 = vld [vmem:[#allocation2 + $0x18] sm:$0xff]
    %v900 = vld [vmem:[#allocation2 + $0x20] sm:$0xff]
    %v901 = vld [vmem:[#allocation2 + $0x28] sm:$0xff]
    %v902 = vld [vmem:[#allocation2 + $0x30] sm:$0xff]
    %v903 = vld [vmem:[#allocation2 + $0x38] sm:$0xff]
    %v904 = vld [vmem:[#allocation2 + $0x40] sm:$0xff]
    %v905 = vld [vmem:[#allocation2 + $0x48] sm:$0xff]
    %v906 = vld [vmem:[#allocation2 + $0x50] sm:$0xff]
    %v907 = vld [vmem:[#allocation2 + $0x58] sm:$0xff]
    %v908 = vld [vmem:[#allocation2 + $0x60] sm:$0xff]
    %v909 = vld [vmem:[#allocation2 + $0x68] sm:$0xff]
    %v910 = vld [vmem:[#allocation2 + $0x70] sm:$0xff]
    %v911 = vld [vmem:[#allocation2 + $0x78] sm:$0xff]
    %v912 = vld [vmem:[#allocation2 + $0x80] sm:$0xff]
    %v913 = vld [vmem:[#allocation2 + $0x88] sm:$0xff]
    %v914 = vld [vmem:[#allocation2 + $0x90] sm:$0xff]
    %v915 = vld [vmem:[#allocation2 + $0x98] sm:$0xff]
    %v916 = vld [vmem:[#allocation2 + $0xa0] sm:$0xff]
    %v917 = vld [vmem:[#allocation2 + $0xa8] sm:$0xff]
    %v918 = vld [vmem:[#allocation2 + $0xb0] sm:$0xff]
    %v919 = vld [vmem:[#allocation2 + $0xb8] sm:$0xff]
    %v920 = vld [vmem:[#allocation2 + $0xc0] sm:$0xff]
    %v921 = vld [vmem:[#allocation2 + $0xc8] sm:$0xff]
    %v922 = vld [vmem:[#allocation2 + $0xd0] sm:$0xff]
    %v923 = vld [vmem:[#allocation2 + $0xd8] sm:$0xff]
    %v924 = vld [vmem:[#allocation2 + $0xe0] sm:$0xff]
    %v925 = vld [vmem:[#allocation2 + $0xe8] sm:$0xff]
    %v926 = vld [vmem:[#allocation2 + $0xf0] sm:$0xff]
    %v927 = vld [vmem:[#allocation2 + $0xf8] sm:$0xff]
    %v928 = vld [vmem:[#allocation2 + $0x100] sm:$0xff]
    %v929 = vld [vmem:[#allocation2 + $0x108] sm:$0xff]
    %v930 = vld [vmem:[#allocation2 + $0x110] sm:$0xff]
    %v931 = vld [vmem:[#allocation2 + $0x118] sm:$0xff]
    %v932 = vld [vmem:[#allocation2 + $0x120] sm:$0xff]
    %v933 = vld [vmem:[#allocation2 + $0x128] sm:$0xff]
    %v934 = vld [vmem:[#allocation2 + $0x130] sm:$0xff]
    %v935 = vld [vmem:[#allocation2 + $0x138] sm:$0xff]
    %v936 = vld [vmem:[#allocation2 + $0x140] sm:$0xff]
    %v937 = vld [vmem:[#allocation2 + $0x148] sm:$0xff]
    %v938 = vld [vmem:[#allocation2 + $0x150] sm:$0xff]
    %v939 = vld [vmem:[#allocation2 + $0x158] sm:$0xff]
    %v940 = vld [vmem:[#allocation2 + $0x160] sm:$0xff]
    %v941 = vld [vmem:[#allocation2 + $0x168] sm:$0xff]
    %v942 = vld [vmem:[#allocation2 + $0x170] sm:$0xff]
    %v943 = vld [vmem:[#allocation2 + $0x178] sm:$0xff]
    %v944 = vld [vmem:[#allocation2 + $0x180] sm:$0xff]
    %v945 = vld [vmem:[#allocation2 + $0x188] sm:$0xff]
    %v946 = vld [vmem:[#allocation2 + $0x190] sm:$0xff]
    %v947 = vld [vmem:[#allocation2 + $0x198] sm:$0xff]
    %v948 = vld [vmem:[#allocation2 + $0x1a0] sm:$0xff]
    %v949 = vld [vmem:[#allocation2 + $0x1a8] sm:$0xff]
    %v950 = vld [vmem:[#allocation2 + $0x1b0] sm:$0xff]
    %v951 = vld [vmem:[#allocation2 + $0x1b8] sm:$0xff]
    %v952 = vld [vmem:[#allocation2 + $0x1c0] sm:$0xff]
    %v953 = vld [vmem:[#allocation2 + $0x1c8] sm:$0xff]
    %v954 = vld [vmem:[#allocation2 + $0x1d0] sm:$0xff]
    %v955 = vld [vmem:[#allocation2 + $0x1d8] sm:$0xff]
    %v956 = vld [vmem:[#allocation2 + $0x1e0] sm:$0xff]
    %v957 = vld [vmem:[#allocation2 + $0x1e8] sm:$0xff]
    %v958 = vld [vmem:[#allocation2 + $0x1f0] sm:$0xff]
    %v959 = vld [vmem:[#allocation2 + $0x1f8] sm:$0xff]
    %v960 = vld [vmem:[#allocation2 + $0x200] sm:$0xff]
    %v961 = vld [vmem:[#allocation2 + $0x208] sm:$0xff]
    %v962 = vld [vmem:[#allocation2 + $0x210] sm:$0xff]
    %v963 = vld [vmem:[#allocation2 + $0x218] sm:$0xff]
    %v964 = vld [vmem:[#allocation2 + $0x220] sm:$0xff]
    %v965 = vld [vmem:[#allocation2 + $0x228] sm:$0xff]
    %v966 = vld [vmem:[#allocation2 + $0x230] sm:$0xff]
    %v967 = vld [vmem:[#allocation2 + $0x238] sm:$0xff]
    %v968 = vld [vmem:[#allocation2 + $0x240] sm:$0xff]
    %v969 = vld [vmem:[#allocation2 + $0x248] sm:$0xff]
    %v970 = vld [vmem:[#allocation2 + $0x250] sm:$0xff]
    %v971 = vld [vmem:[#allocation2 + $0x258] sm:$0xff]
    %v972 = vld [vmem:[#allocation2 + $0x260] sm:$0xff]
    %v973 = vld [vmem:[#allocation2 + $0x268] sm:$0xff]
    %v974 = vld [vmem:[#allocation2 + $0x270] sm:$0xff]
    %v975 = vld [vmem:[#allocation2 + $0x278] sm:$0xff]
    %v978 = vunpack.c.l.b16 %v894
    %v979 = vunpack.c.h.b16 %v894
    %v980 = vunpack.c.l.b16 %v895
    %v981 = vunpack.c.h.b16 %v895
    %v982 = vpack.c.b16 %v980, %v978
    %v983 = vpack.c.b16 %v981, %v979
    %v1065 = vunpack.c.l.b16 %v896
    %v1066 = vunpack.c.h.b16 %v896
    %v1067 = vunpack.c.l.b16 %v897
    %v1068 = vunpack.c.h.b16 %v897
    %v1069 = vunpack.c.l.b16 %v898
    %v1070 = vunpack.c.h.b16 %v898
    %v1071 = vunpack.c.l.b16 %v899
    %v1072 = vunpack.c.h.b16 %v899
    %v1073 = vunpack.c.l.b16 %v900
    %v1074 = vunpack.c.h.b16 %v900
    %v1075 = vunpack.c.l.b16 %v901
    %v1076 = vunpack.c.h.b16 %v901
    %v1077 = vunpack.c.l.b16 %v902
    %v1078 = vunpack.c.h.b16 %v902
    %v1079 = vunpack.c.l.b16 %v903
    %v1080 = vunpack.c.h.b16 %v903
    %v1081 = vunpack.c.l.b16 %v904
    %v1082 = vunpack.c.h.b16 %v904
    %v1083 = vunpack.c.l.b16 %v905
    %v1084 = vunpack.c.h.b16 %v905
    %v1085 = vunpack.c.l.b16 %v906
    %v1086 = vunpack.c.h.b16 %v906
    %v1087 = vunpack.c.l.b16 %v907
    %v1088 = vunpack.c.h.b16 %v907
    %v1089 = vunpack.c.l.b16 %v908
    %v1090 = vunpack.c.h.b16 %v908
    %v1091 = vunpack.c.l.b16 %v909
    %v1092 = vunpack.c.h.b16 %v909
    %v1093 = vunpack.c.l.b16 %v910
    %v1094 = vunpack.c.h.b16 %v910
    %v1095 = vunpack.c.l.b16 %v911
    %v1096 = vunpack.c.h.b16 %v911
    %v1097 = vunpack.c.l.b16 %v912
    %v1098 = vunpack.c.h.b16 %v912
    %v1099 = vunpack.c.l.b16 %v913
    %v1100 = vunpack.c.h.b16 %v913
    %v1101 = vunpack.c.l.b16 %v914
    %v1102 = vunpack.c.h.b16 %v914
    %v1103 = vunpack.c.l.b16 %v915
    %v1104 = vunpack.c.h.b16 %v915
    %v1105 = vunpack.c.l.b16 %v916
    %v1106 = vunpack.c.h.b16 %v916
    %v1107 = vunpack.c.l.b16 %v917
    %v1108 = vunpack.c.h.b16 %v917
    %v1109 = vunpack.c.l.b16 %v918
    %v1110 = vunpack.c.h.b16 %v918
    %v1111 = vunpack.c.l.b16 %v919
    %v1112 = vunpack.c.h.b16 %v919
    %v1113 = vunpack.c.l.b16 %v920
    %v1114 = vunpack.c.h.b16 %v920
    %v1115 = vunpack.c.l.b16 %v921
    %v1116 = vunpack.c.h.b16 %v921
    %v1117 = vunpack.c.l.b16 %v922
    %v1118 = vunpack.c.h.b16 %v922
    %v1119 = vunpack.c.l.b16 %v923
    %v1120 = vunpack.c.h.b16 %v923
    %v1121 = vunpack.c.l.b16 %v924
    %v1122 = vunpack.c.h.b16 %v924
    %v1123 = vunpack.c.l.b16 %v925
    %v1124 = vunpack.c.h.b16 %v925
    %v1125 = vunpack.c.l.b16 %v926
    %v1126 = vunpack.c.h.b16 %v926
    %v1127 = vunpack.c.l.b16 %v927
    %v1128 = vunpack.c.h.b16 %v927
    %v1129 = vunpack.c.l.b16 %v928
    %v1130 = vunpack.c.h.b16 %v928
    %v1131 = vunpack.c.l.b16 %v929
    %v1132 = vunpack.c.h.b16 %v929
    %v1133 = vunpack.c.l.b16 %v930
    %v1134 = vunpack.c.h.b16 %v930
    %v1135 = vunpack.c.l.b16 %v931
    %v1136 = vunpack.c.h.b16 %v931
    %v1137 = vunpack.c.l.b16 %v932
    %v1138 = vunpack.c.h.b16 %v932
    %v1139 = vunpack.c.l.b16 %v933
    %v1140 = vunpack.c.h.b16 %v933
    %v1141 = vunpack.c.l.b16 %v934
    %v1142 = vunpack.c.h.b16 %v934
    %v1143 = vunpack.c.l.b16 %v935
    %v1144 = vunpack.c.h.b16 %v935
    %v1145 = vunpack.c.l.b16 %v936
    %v1146 = vunpack.c.h.b16 %v936
    %v1147 = vunpack.c.l.b16 %v937
    %v1148 = vunpack.c.h.b16 %v937
    %v1149 = vunpack.c.l.b16 %v938
    %v1150 = vunpack.c.h.b16 %v938
    %v1151 = vunpack.c.l.b16 %v939
    %v1152 = vunpack.c.h.b16 %v939
    %v1153 = vunpack.c.l.b16 %v940
    %v1154 = vunpack.c.h.b16 %v940
    %v1155 = vunpack.c.l.b16 %v941
    %v1156 = vunpack.c.h.b16 %v941
    %v1157 = vunpack.c.l.b16 %v942
    %v1158 = vunpack.c.h.b16 %v942
    %v1159 = vunpack.c.l.b16 %v943
    %v1160 = vunpack.c.h.b16 %v943
    %v1161 = vunpack.c.l.b16 %v944
    %v1162 = vunpack.c.h.b16 %v944
    %v1163 = vunpack.c.l.b16 %v945
    %v1164 = vunpack.c.h.b16 %v945
    %v1165 = vunpack.c.l.b16 %v946
    %v1166 = vunpack.c.h.b16 %v946
    %v1167 = vunpack.c.l.b16 %v947
    %v1168 = vunpack.c.h.b16 %v947
    %v1169 = vunpack.c.l.b16 %v948
    %v1170 = vunpack.c.h.b16 %v948
    %v1171 = vunpack.c.l.b16 %v949
    %v1172 = vunpack.c.h.b16 %v949
    %v1173 = vunpack.c.l.b16 %v950
    %v1174 = vunpack.c.h.b16 %v950
    %v1175 = vunpack.c.l.b16 %v951
    %v1176 = vunpack.c.h.b16 %v951
    %v1177 = vunpack.c.l.b16 %v952
    %v1178 = vunpack.c.h.b16 %v952
    %v1179 = vunpack.c.l.b16 %v953
    %v1180 = vunpack.c.h.b16 %v953
    %v1181 = vunpack.c.l.b16 %v954
    %v1182 = vunpack.c.h.b16 %v954
    %v1183 = vunpack.c.l.b16 %v955
    %v1184 = vunpack.c.h.b16 %v955
    %v1185 = vunpack.c.l.b16 %v956
    %v1186 = vunpack.c.h.b16 %v956
    %v1187 = vunpack.c.l.b16 %v957
    %v1188 = vunpack.c.h.b16 %v957
    %v1189 = vunpack.c.l.b16 %v958
    %v1190 = vunpack.c.h.b16 %v958
    %v1191 = vunpack.c.l.b16 %v959
    %v1192 = vunpack.c.h.b16 %v959
    %v1193 = vunpack.c.l.b16 %v960
    %v1194 = vunpack.c.h.b16 %v960
    %v1195 = vunpack.c.l.b16 %v961
    %v1196 = vunpack.c.h.b16 %v961
    %v1197 = vunpack.c.l.b16 %v962
    %v1198 = vunpack.c.h.b16 %v962
    %v1199 = vunpack.c.l.b16 %v963
    %v1200 = vunpack.c.h.b16 %v963
    %v1201 = vunpack.c.l.b16 %v964
    %v1202 = vunpack.c.h.b16 %v964
    %v1203 = vunpack.c.l.b16 %v965
    %v1204 = vunpack.c.h.b16 %v965
    %v1205 = vunpack.c.l.b16 %v966
    %v1206 = vunpack.c.h.b16 %v966
    %v1207 = vunpack.c.l.b16 %v967
    %v1208 = vunpack.c.h.b16 %v967
    %v1209 = vunpack.c.l.b16 %v968
    %v1210 = vunpack.c.h.b16 %v968
    %v1211 = vunpack.c.l.b16 %v969
    %v1212 = vunpack.c.h.b16 %v969
    %v1213 = vunpack.c.l.b16 %v970
    %v1214 = vunpack.c.h.b16 %v970
    %v1215 = vunpack.c.l.b16 %v971
    %v1216 = vunpack.c.h.b16 %v971
    %v1217 = vunpack.c.l.b16 %v972
    %v1218 = vunpack.c.h.b16 %v972
    %v1219 = vunpack.c.l.b16 %v973
    %v1220 = vunpack.c.h.b16 %v973
    %v1221 = vunpack.c.l.b16 %v974
    %v1222 = vunpack.c.h.b16 %v974
    %v1223 = vunpack.c.l.b16 %v975
    %v1224 = vunpack.c.h.b16 %v975
    %v1225 = vpack.c.b16 %v1073, %v1065
    %v1226 = vpack.c.b16 %v1074, %v1066
    %v1227 = vpack.c.b16 %v1075, %v1067
    %v1228 = vpack.c.b16 %v1076, %v1068
    %v1229 = vpack.c.b16 %v1077, %v1069
    %v1230 = vpack.c.b16 %v1078, %v1070
    %v1231 = vpack.c.b16 %v1079, %v1071
    %v1232 = vpack.c.b16 %v1080, %v1072
    %v1233 = vpack.c.b16 %v1089, %v1081
    %v1234 = vpack.c.b16 %v1090, %v1082
    %v1235 = vpack.c.b16 %v1091, %v1083
    %v1236 = vpack.c.b16 %v1092, %v1084
    %v1237 = vpack.c.b16 %v1093, %v1085
    %v1238 = vpack.c.b16 %v1094, %v1086
    %v1239 = vpack.c.b16 %v1095, %v1087
    %v1240 = vpack.c.b16 %v1096, %v1088
    %v1241 = vpack.c.b16 %v1105, %v1097
    %v1242 = vpack.c.b16 %v1106, %v1098
    %v1243 = vpack.c.b16 %v1107, %v1099
    %v1244 = vpack.c.b16 %v1108, %v1100
    %v1245 = vpack.c.b16 %v1109, %v1101
    %v1246 = vpack.c.b16 %v1110, %v1102
    %v1247 = vpack.c.b16 %v1111, %v1103
    %v1248 = vpack.c.b16 %v1112, %v1104
    %v1249 = vpack.c.b16 %v1121, %v1113
    %v1250 = vpack.c.b16 %v1122, %v1114
    %v1251 = vpack.c.b16 %v1123, %v1115
    %v1252 = vpack.c.b16 %v1124, %v1116
    %v1253 = vpack.c.b16 %v1125, %v1117
    %v1254 = vpack.c.b16 %v1126, %v1118
    %v1255 = vpack.c.b16 %v1127, %v1119
    %v1256 = vpack.c.b16 %v1128, %v1120
    %v1257 = vpack.c.b16 %v1137, %v1129
    %v1258 = vpack.c.b16 %v1138, %v1130
    %v1259 = vpack.c.b16 %v1139, %v1131
    %v1260 = vpack.c.b16 %v1140, %v1132
    %v1261 = vpack.c.b16 %v1141, %v1133
    %v1262 = vpack.c.b16 %v1142, %v1134
    %v1263 = vpack.c.b16 %v1143, %v1135
    %v1264 = vpack.c.b16 %v1144, %v1136
    %v1265 = vpack.c.b16 %v1153, %v1145
    %v1266 = vpack.c.b16 %v1154, %v1146
    %v1267 = vpack.c.b16 %v1155, %v1147
    %v1268 = vpack.c.b16 %v1156, %v1148
    %v1269 = vpack.c.b16 %v1157, %v1149
    %v1270 = vpack.c.b16 %v1158, %v1150
    %v1271 = vpack.c.b16 %v1159, %v1151
    %v1272 = vpack.c.b16 %v1160, %v1152
    %v1273 = vpack.c.b16 %v1169, %v1161
    %v1274 = vpack.c.b16 %v1170, %v1162
    %v1275 = vpack.c.b16 %v1171, %v1163
    %v1276 = vpack.c.b16 %v1172, %v1164
    %v1277 = vpack.c.b16 %v1173, %v1165
    %v1278 = vpack.c.b16 %v1174, %v1166
    %v1279 = vpack.c.b16 %v1175, %v1167
    %v1280 = vpack.c.b16 %v1176, %v1168
    %v1281 = vpack.c.b16 %v1185, %v1177
    %v1282 = vpack.c.b16 %v1186, %v1178
    %v1283 = vpack.c.b16 %v1187, %v1179
    %v1284 = vpack.c.b16 %v1188, %v1180
    %v1285 = vpack.c.b16 %v1189, %v1181
    %v1286 = vpack.c.b16 %v1190, %v1182
    %v1287 = vpack.c.b16 %v1191, %v1183
    %v1288 = vpack.c.b16 %v1192, %v1184
    %v1289 = vpack.c.b16 %v1201, %v1193
    %v1290 = vpack.c.b16 %v1202, %v1194
    %v1291 = vpack.c.b16 %v1203, %v1195
    %v1292 = vpack.c.b16 %v1204, %v1196
    %v1293 = vpack.c.b16 %v1205, %v1197
    %v1294 = vpack.c.b16 %v1206, %v1198
    %v1295 = vpack.c.b16 %v1207, %v1199
    %v1296 = vpack.c.b16 %v1208, %v1200
    %v1297 = vpack.c.b16 %v1217, %v1209
    %v1298 = vpack.c.b16 %v1218, %v1210
    %v1299 = vpack.c.b16 %v1219, %v1211
    %v1300 = vpack.c.b16 %v1220, %v1212
    %v1301 = vpack.c.b16 %v1221, %v1213
    %v1302 = vpack.c.b16 %v1222, %v1214
    %v1303 = vpack.c.b16 %v1223, %v1215
    %v1304 = vpack.c.b16 %v1224, %v1216
    %vm1385 = vcmask 261120
    %v1387 = vsel %vm1385, %v983, 0
    %1389 = vmatpush.bf16.msra.mxu0 %v1281
    %1390 = vmatpush.bf16.msra.mxu0 %v1273
    %1391 = vmatpush.bf16.msra.mxu0 %v1265
    %1392 = vmatpush.bf16.msra.mxu0 %v1257
    %1393 = vmatpush.bf16.msra.mxu0 %v1249
    %1394 = vmatpush.bf16.msra.mxu0 %v1241
    %1395 = vmatpush.bf16.msra.mxu0 %v1233
    %1396 = vmatpush.bf16.msra.mxu0 %v1225
    %1397 = vmatmul.bf16.gmra.mxu0 %v982
    %v1398 = vpop.f32.mrf.mxu0
    %v1399 = vadd.f32 0.0, %v1398
    %v1400 = vpop.f32.mrf.mxu0
    %v1401 = vadd.f32 0.0, %v1400
    %1402 = vdwg.mxu0
    %1403 = vmatpush.bf16.msra.mxu0 0
    %1404 = vmatpush.bf16.msra.mxu0 0
    %1405 = vmatpush.bf16.msra.mxu0 0
    %1406 = vmatpush.bf16.msra.mxu0 0
    %1407 = vmatpush.bf16.msra.mxu0 0
    %1408 = vmatpush.bf16.msra.mxu0 0
    %1409 = vmatpush.bf16.msra.mxu0 %v1297
    %1410 = vmatpush.bf16.msra.mxu0 %v1289
    %1411 = vmatmul.bf16.gmra.mxu0 %v1387
    %v1412 = vpop.f32.mrf.mxu0
    %v1413 = vadd.f32 %v1399, %v1412
    %v1414 = vpop.f32.mrf.mxu0
    %v1415 = vadd.f32 %v1401, %v1414
    %1416 = vdwg.mxu0
    %1417 = vmatpush.bf16.msra.mxu0 %v1282
    %1418 = vmatpush.bf16.msra.mxu0 %v1274
    %1419 = vmatpush.bf16.msra.mxu0 %v1266
    %1420 = vmatpush.bf16.msra.mxu0 %v1258
    %1421 = vmatpush.bf16.msra.mxu0 %v1250
    %1422 = vmatpush.bf16.msra.mxu0 %v1242
    %1423 = vmatpush.bf16.msra.mxu0 %v1234
    %1424 = vmatpush.bf16.msra.mxu0 %v1226
    %1425 = vmatmul.bf16.gmra.mxu0 %v982
    %v1426 = vpop.f32.mrf.mxu0
    %v1427 = vadd.f32 0.0, %v1426
    %v1428 = vpop.f32.mrf.mxu0
    %v1429 = vadd.f32 0.0, %v1428
    %1430 = vdwg.mxu0
    %1431 = vmatpush.bf16.msra.mxu0 0
    %1432 = vmatpush.bf16.msra.mxu0 0
    %1433 = vmatpush.bf16.msra.mxu0 0
    %1434 = vmatpush.bf16.msra.mxu0 0
    %1435 = vmatpush.bf16.msra.mxu0 0
    %1436 = vmatpush.bf16.msra.mxu0 0
    %1437 = vmatpush.bf16.msra.mxu0 %v1298
    %1438 = vmatpush.bf16.msra.mxu0 %v1290
    %1439 = vmatmul.bf16.gmra.mxu0 %v1387
    %v1440 = vpop.f32.mrf.mxu0
    %v1441 = vadd.f32 %v1427, %v1440
    %v1442 = vpop.f32.mrf.mxu0
    %v1443 = vadd.f32 %v1429, %v1442
    %1444 = vdwg.mxu0
    %1445 = vmatpush.bf16.msra.mxu0 %v1283
    %1446 = vmatpush.bf16.msra.mxu0 %v1275
    %1447 = vmatpush.bf16.msra.mxu0 %v1267
    %1448 = vmatpush.bf16.msra.mxu0 %v1259
    %1449 = vmatpush.bf16.msra.mxu0 %v1251
    %1450 = vmatpush.bf16.msra.mxu0 %v1243
    %1451 = vmatpush.bf16.msra.mxu0 %v1235
    %1452 = vmatpush.bf16.msra.mxu0 %v1227
    %1453 = vmatmul.bf16.gmra.mxu0 %v982
    %v1454 = vpop.f32.mrf.mxu0
    %v1455 = vadd.f32 0.0, %v1454
    %v1456 = vpop.f32.mrf.mxu0
    %v1457 = vadd.f32 0.0, %v1456
    %1458 = vdwg.mxu0
    %1459 = vmatpush.bf16.msra.mxu0 0
    %1460 = vmatpush.bf16.msra.mxu0 0
    %1461 = vmatpush.bf16.msra.mxu0 0
    %1462 = vmatpush.bf16.msra.mxu0 0
    %1463 = vmatpush.bf16.msra.mxu0 0
    %1464 = vmatpush.bf16.msra.mxu0 0
    %1465 = vmatpush.bf16.msra.mxu0 %v1299
    %1466 = vmatpush.bf16.msra.mxu0 %v1291
    %1467 = vmatmul.bf16.gmra.mxu0 %v1387
    %v1468 = vpop.f32.mrf.mxu0
    %v1469 = vadd.f32 %v1455, %v1468
    %v1470 = vpop.f32.mrf.mxu0
    %v1471 = vadd.f32 %v1457, %v1470
    %1472 = vdwg.mxu0
    %1473 = vmatpush.bf16.msra.mxu0 %v1284
    %1474 = vmatpush.bf16.msra.mxu0 %v1276
    %1475 = vmatpush.bf16.msra.mxu0 %v1268
    %1476 = vmatpush.bf16.msra.mxu0 %v1260
    %1477 = vmatpush.bf16.msra.mxu0 %v1252
    %1478 = vmatpush.bf16.msra.mxu0 %v1244
    %1479 = vmatpush.bf16.msra.mxu0 %v1236
    %1480 = vmatpush.bf16.msra.mxu0 %v1228
    %1481 = vmatmul.bf16.gmra.mxu0 %v982
    %v1482 = vpop.f32.mrf.mxu0
    %v1483 = vadd.f32 0.0, %v1482
    %v1484 = vpop.f32.mrf.mxu0
    %v1485 = vadd.f32 0.0, %v1484
    %1486 = vdwg.mxu0
    %1487 = vmatpush.bf16.msra.mxu0 0
    %1488 = vmatpush.bf16.msra.mxu0 0
    %1489 = vmatpush.bf16.msra.mxu0 0
    %1490 = vmatpush.bf16.msra.mxu0 0
    %1491 = vmatpush.bf16.msra.mxu0 0
    %1492 = vmatpush.bf16.msra.mxu0 0
    %1493 = vmatpush.bf16.msra.mxu0 %v1300
    %1494 = vmatpush.bf16.msra.mxu0 %v1292
    %1495 = vmatmul.bf16.gmra.mxu0 %v1387
    %v1496 = vpop.f32.mrf.mxu0
    %v1497 = vadd.f32 %v1483, %v1496
    %v1498 = vpop.f32.mrf.mxu0
    %v1499 = vadd.f32 %v1485, %v1498
    %1500 = vdwg.mxu0
    %1501 = vmatpush.bf16.msra.mxu0 %v1285
    %1502 = vmatpush.bf16.msra.mxu0 %v1277
    %1503 = vmatpush.bf16.msra.mxu0 %v1269
    %1504 = vmatpush.bf16.msra.mxu0 %v1261
    %1505 = vmatpush.bf16.msra.mxu0 %v1253
    %1506 = vmatpush.bf16.msra.mxu0 %v1245
    %1507 = vmatpush.bf16.msra.mxu0 %v1237
    %1508 = vmatpush.bf16.msra.mxu0 %v1229
    %1509 = vmatmul.bf16.gmra.mxu0 %v982
    %v1510 = vpop.f32.mrf.mxu0
    %v1511 = vadd.f32 0.0, %v1510
    %v1512 = vpop.f32.mrf.mxu0
    %v1513 = vadd.f32 0.0, %v1512
    %1514 = vdwg.mxu0
    %1515 = vmatpush.bf16.msra.mxu0 0
    %1516 = vmatpush.bf16.msra.mxu0 0
    %1517 = vmatpush.bf16.msra.mxu0 0
    %1518 = vmatpush.bf16.msra.mxu0 0
    %1519 = vmatpush.bf16.msra.mxu0 0
    %1520 = vmatpush.bf16.msra.mxu0 0
    %1521 = vmatpush.bf16.msra.mxu0 %v1301
    %1522 = vmatpush.bf16.msra.mxu0 %v1293
    %1523 = vmatmul.bf16.gmra.mxu0 %v1387
    %v1524 = vpop.f32.mrf.mxu0
    %v1525 = vadd.f32 %v1511, %v1524
    %v1526 = vpop.f32.mrf.mxu0
    %v1527 = vadd.f32 %v1513, %v1526
    %1528 = vdwg.mxu0
    %1529 = vmatpush.bf16.msra.mxu0 %v1286
    %1530 = vmatpush.bf16.msra.mxu0 %v1278
    %1531 = vmatpush.bf16.msra.mxu0 %v1270
    %1532 = vmatpush.bf16.msra.mxu0 %v1262
    %1533 = vmatpush.bf16.msra.mxu0 %v1254
    %1534 = vmatpush.bf16.msra.mxu0 %v1246
    %1535 = vmatpush.bf16.msra.mxu0 %v1238
    %1536 = vmatpush.bf16.msra.mxu0 %v1230
    %1537 = vmatmul.bf16.gmra.mxu0 %v982
    %v1538 = vpop.f32.mrf.mxu0
    %v1539 = vadd.f32 0.0, %v1538
    %v1540 = vpop.f32.mrf.mxu0
    %v1541 = vadd.f32 0.0, %v1540
    %1542 = vdwg.mxu0
    %1543 = vmatpush.bf16.msra.mxu0 0
    %1544 = vmatpush.bf16.msra.mxu0 0
    %1545 = vmatpush.bf16.msra.mxu0 0
    %1546 = vmatpush.bf16.msra.mxu0 0
    %1547 = vmatpush.bf16.msra.mxu0 0
    %1548 = vmatpush.bf16.msra.mxu0 0
    %1549 = vmatpush.bf16.msra.mxu0 %v1302
    %1550 = vmatpush.bf16.msra.mxu0 %v1294
    %1551 = vmatmul.bf16.gmra.mxu0 %v1387
    %v1552 = vpop.f32.mrf.mxu0
    %v1553 = vadd.f32 %v1539, %v1552
    %v1554 = vpop.f32.mrf.mxu0
    %v1555 = vadd.f32 %v1541, %v1554
    %1556 = vdwg.mxu0
    %1557 = vmatpush.bf16.msra.mxu0 %v1287
    %1558 = vmatpush.bf16.msra.mxu0 %v1279
    %1559 = vmatpush.bf16.msra.mxu0 %v1271
    %1560 = vmatpush.bf16.msra.mxu0 %v1263
    %1561 = vmatpush.bf16.msra.mxu0 %v1255
    %1562 = vmatpush.bf16.msra.mxu0 %v1247
    %1563 = vmatpush.bf16.msra.mxu0 %v1239
    %1564 = vmatpush.bf16.msra.mxu0 %v1231
    %1565 = vmatmul.bf16.gmra.mxu0 %v982
    %v1566 = vpop.f32.mrf.mxu0
    %v1567 = vadd.f32 0.0, %v1566
    %v1568 = vpop.f32.mrf.mxu0
    %v1569 = vadd.f32 0.0, %v1568
    %1570 = vdwg.mxu0
    %1571 = vmatpush.bf16.msra.mxu0 0
    %1572 = vmatpush.bf16.msra.mxu0 0
    %1573 = vmatpush.bf16.msra.mxu0 0
    %1574 = vmatpush.bf16.msra.mxu0 0
    %1575 = vmatpush.bf16.msra.mxu0 0
    %1576 = vmatpush.bf16.msra.mxu0 0
    %1577 = vmatpush.bf16.msra.mxu0 %v1303
    %1578 = vmatpush.bf16.msra.mxu0 %v1295
    %1579 = vmatmul.bf16.gmra.mxu0 %v1387
    %v1580 = vpop.f32.mrf.mxu0
    %v1581 = vadd.f32 %v1567, %v1580
    %v1582 = vpop.f32.mrf.mxu0
    %v1583 = vadd.f32 %v1569, %v1582
    %1584 = vdwg.mxu0
    %1585 = vmatpush.bf16.msra.mxu0 %v1288
    %1586 = vmatpush.bf16.msra.mxu0 %v1280
    %1587 = vmatpush.bf16.msra.mxu0 %v1272
    %1588 = vmatpush.bf16.msra.mxu0 %v1264
    %1589 = vmatpush.bf16.msra.mxu0 %v1256
    %1590 = vmatpush.bf16.msra.mxu0 %v1248
    %1591 = vmatpush.bf16.msra.mxu0 %v1240
    %1592 = vmatpush.bf16.msra.mxu0 %v1232
    %1593 = vmatmul.bf16.gmra.mxu0 %v982
    %v1594 = vpop.f32.mrf.mxu0
    %v1595 = vadd.f32 0.0, %v1594
    %v1596 = vpop.f32.mrf.mxu0
    %v1597 = vadd.f32 0.0, %v1596
    %1598 = vdwg.mxu0
    %1599 = vmatpush.bf16.msra.mxu0 0
    %1600 = vmatpush.bf16.msra.mxu0 0
    %1601 = vmatpush.bf16.msra.mxu0 0
    %1602 = vmatpush.bf16.msra.mxu0 0
    %1603 = vmatpush.bf16.msra.mxu0 0
    %1604 = vmatpush.bf16.msra.mxu0 0
    %1605 = vmatpush.bf16.msra.mxu0 %v1304
    %1606 = vmatpush.bf16.msra.mxu0 %v1296
    %1607 = vmatmul.bf16.gmra.mxu0 %v1387
    %v1608 = vpop.f32.mrf.mxu0
    %v1609 = vadd.f32 %v1595, %v1608
    %v1610 = vpop.f32.mrf.mxu0
    %v1611 = vadd.f32 %v1597, %v1610
    %1612 = vdwg.mxu0
    %v1613 = vmul.f32 %v1413, %v328
    %v1614 = vmul.f32 %v1441, %v329
    %v1615 = vmul.f32 %v1469, %v330
    %v1616 = vmul.f32 %v1497, %v331
    %v1617 = vmul.f32 %v1525, %v332
    %v1618 = vmul.f32 %v1553, %v333
    %v1619 = vmul.f32 %v1581, %v334
    %v1620 = vmul.f32 %v1609, %v335
    %v1621 = vmul.f32 %v1415, %v328
    %v1622 = vmul.f32 %v1443, %v329
    %v1623 = vmul.f32 %v1471, %v330
    %v1624 = vmul.f32 %v1499, %v331
    %v1625 = vmul.f32 %v1527, %v332
    %v1626 = vmul.f32 %v1555, %v333
    %v1627 = vmul.f32 %v1583, %v334
    %v1628 = vmul.f32 %v1611, %v335
    %v1629 = vmax.f32 %v1613, 0.0
    %v1630 = vmax.f32 %v1614, 0.0
    %v1631 = vmax.f32 %v1615, 0.0
    %v1632 = vmax.f32 %v1616, 0.0
    %v1633 = vmax.f32 %v1617, 0.0
    %v1634 = vmax.f32 %v1618, 0.0
    %v1635 = vmax.f32 %v1619, 0.0
    %v1636 = vmax.f32 %v1620, 0.0
    %v1637 = vmax.f32 %v1621, 0.0
    %v1638 = vmax.f32 %v1622, 0.0
    %v1639 = vmax.f32 %v1623, 0.0
    %v1640 = vmax.f32 %v1624, 0.0
    %v1641 = vmax.f32 %v1625, 0.0
    %v1642 = vmax.f32 %v1626, 0.0
    %v1643 = vmax.f32 %v1627, 0.0
    %v1644 = vmax.f32 %v1628, 0.0
    %1645 = vrot.lane.b32.xlu0 %v1629, 23
    %v1646 = vpop.permute.xlu0 %1645
    %1647 = vrot.lane.b32.xlu0 %v1637, 23
    %v1648 = vpop.permute.xlu0 %1647
    %1649 = vrot.lane.b32.xlu0 %v1630, 23
    %v1650 = vpop.permute.xlu0 %1649
    %1651 = vrot.lane.b32.xlu0 %v1638, 23
    %v1652 = vpop.permute.xlu0 %1651
    %1653 = vrot.lane.b32.xlu0 %v1631, 23
    %v1654 = vpop.permute.xlu0 %1653
    %1655 = vrot.lane.b32.xlu0 %v1639, 23
    %v1656 = vpop.permute.xlu0 %1655
    %1657 = vrot.lane.b32.xlu0 %v1632, 23
    %v1658 = vpop.permute.xlu0 %1657
    %1659 = vrot.lane.b32.xlu0 %v1640, 23
    %v1660 = vpop.permute.xlu0 %1659
    %1661 = vrot.lane.b32.xlu0 %v1633, 23
    %v1662 = vpop.permute.xlu0 %1661
    %1663 = vrot.lane.b32.xlu0 %v1641, 23
    %v1664 = vpop.permute.xlu0 %1663
    %1665 = vrot.lane.b32.xlu0 %v1634, 23
    %v1666 = vpop.permute.xlu0 %1665
    %1667 = vrot.lane.b32.xlu0 %v1642, 23
    %v1668 = vpop.permute.xlu0 %1667
    %1669 = vrot.lane.b32.xlu0 %v1635, 23
    %v1670 = vpop.permute.xlu0 %1669
    %1671 = vrot.lane.b32.xlu0 %v1643, 23
    %v1672 = vpop.permute.xlu0 %1671
    %1673 = vrot.lane.b32.xlu0 %v1636, 23
    %v1674 = vpop.permute.xlu0 %1673
    %1675 = vrot.lane.b32.xlu0 %v1644, 23
    %v1676 = vpop.permute.xlu0 %1675
    %v1677 = vsel %vm390, %v1670, %v1674
    %v1678 = vsel %vm390, %v1672, %v1676
    %v1679 = vsel %vm390, %v1666, %v1670
    %v1680 = vsel %vm390, %v1668, %v1672
    %v1681 = vsel %vm390, %v1662, %v1666
    %v1682 = vsel %vm390, %v1664, %v1668
    %v1683 = vsel %vm390, %v1658, %v1662
    %v1684 = vsel %vm390, %v1660, %v1664
    %v1685 = vsel %vm390, %v1654, %v1658
    %v1686 = vsel %vm390, %v1656, %v1660
    %v1687 = vsel %vm390, %v1650, %v1654
    %v1688 = vsel %vm390, %v1652, %v1656
    %v1689 = vsel %vm390, %v1646, %v1650
    %v1690 = vsel %vm390, %v1648, %v1652
    %v1691 = vsel %vm390, %v1674, %v1646
    %v1692 = vsel %vm390, %v1676, %v1648
    %v1693 = vpack.c.bf16 %v1689, %v1691
    %v1694 = vpack.c.bf16 %v1685, %v1687
    %v1695 = vpack.c.bf16 %v1681, %v1683
    %v1696 = vpack.c.bf16 %v1677, %v1679
    %v1697 = vpack.c.bf16 %v1690, %v1692
    %v1698 = vpack.c.bf16 %v1686, %v1688
    %v1699 = vpack.c.bf16 %v1682, %v1684
    %v1700 = vpack.c.bf16 %v1678, %v1680
    %1701 = vst [vmem:[#allocation2] sm:$0xff] %v1693
    %1702 = vst [vmem:[#allocation2 + $0x8] sm:$0xff] %v1694
    %1703 = vst [vmem:[#allocation2 + $0x10] sm:$0xff] %v1695
    %1704 = vst [vmem:[#allocation2 + $0x18] sm:$0xff] %v1696
    %1705 = vst [vmem:[#allocation2 + $0x20] sm:$0xff] %v1697
    %1706 = vst [vmem:[#allocation2 + $0x28] sm:$0xff] %v1698
    %1707 = vst [vmem:[#allocation2 + $0x30] sm:$0xff] %v1699
    %1708 = vst [vmem:[#allocation2 + $0x38] sm:$0xff] %v1700
    %1709 = vrot.lane.b32.xlu0 %v1629, 22
    %v1710 = vpop.permute.xlu0 %1709
    %1711 = vrot.lane.b32.xlu0 %v1637, 22
    %v1712 = vpop.permute.xlu0 %1711
    %1713 = vrot.lane.b32.xlu0 %v1630, 22
    %v1714 = vpop.permute.xlu0 %1713
    %1715 = vrot.lane.b32.xlu0 %v1638, 22
    %v1716 = vpop.permute.xlu0 %1715
    %1717 = vrot.lane.b32.xlu0 %v1631, 22
    %v1718 = vpop.permute.xlu0 %1717
    %1719 = vrot.lane.b32.xlu0 %v1639, 22
    %v1720 = vpop.permute.xlu0 %1719
    %1721 = vrot.lane.b32.xlu0 %v1632, 22
    %v1722 = vpop.permute.xlu0 %1721
    %1723 = vrot.lane.b32.xlu0 %v1640, 22
    %v1724 = vpop.permute.xlu0 %1723
    %1725 = vrot.lane.b32.xlu0 %v1633, 22
    %v1726 = vpop.permute.xlu0 %1725
    %1727 = vrot.lane.b32.xlu0 %v1641, 22
    %v1728 = vpop.permute.xlu0 %1727
    %1729 = vrot.lane.b32.xlu0 %v1634, 22
    %v1730 = vpop.permute.xlu0 %1729
    %1731 = vrot.lane.b32.xlu0 %v1642, 22
    %v1732 = vpop.permute.xlu0 %1731
    %1733 = vrot.lane.b32.xlu0 %v1635, 22
    %v1734 = vpop.permute.xlu0 %1733
    %1735 = vrot.lane.b32.xlu0 %v1643, 22
    %v1736 = vpop.permute.xlu0 %1735
    %1737 = vrot.lane.b32.xlu0 %v1636, 22
    %v1738 = vpop.permute.xlu0 %1737
    %1739 = vrot.lane.b32.xlu0 %v1644, 22
    %v1740 = vpop.permute.xlu0 %1739
    %v1741 = vsel %vm455, %v1734, %v1738
    %v1742 = vsel %vm455, %v1736, %v1740
    %v1743 = vsel %vm455, %v1730, %v1734
    %v1744 = vsel %vm455, %v1732, %v1736
    %v1745 = vsel %vm455, %v1726, %v1730
    %v1746 = vsel %vm455, %v1728, %v1732
    %v1747 = vsel %vm455, %v1722, %v1726
    %v1748 = vsel %vm455, %v1724, %v1728
    %v1749 = vsel %vm455, %v1718, %v1722
    %v1750 = vsel %vm455, %v1720, %v1724
    %v1751 = vsel %vm455, %v1714, %v1718
    %v1752 = vsel %vm455, %v1716, %v1720
    %v1753 = vsel %vm455, %v1710, %v1714
    %v1754 = vsel %vm455, %v1712, %v1716
    %v1755 = vsel %vm455, %v1738, %v1710
    %v1756 = vsel %vm455, %v1740, %v1712
    %v1757 = vpack.c.bf16 %v1753, %v1755
    %v1758 = vpack.c.bf16 %v1749, %v1751
    %v1759 = vpack.c.bf16 %v1745, %v1747
    %v1760 = vpack.c.bf16 %v1741, %v1743
    %v1761 = vpack.c.bf16 %v1754, %v1756
    %v1762 = vpack.c.bf16 %v1750, %v1752
    %v1763 = vpack.c.bf16 %v1746, %v1748
    %v1764 = vpack.c.bf16 %v1742, %v1744
    %1765 = vst [vmem:[#allocation2 + $0x40] sm:$0xff] %v1757
    %1766 = vst [vmem:[#allocation2 + $0x48] sm:$0xff] %v1758
    %1767 = vst [vmem:[#allocation2 + $0x50] sm:$0xff] %v1759
    %1768 = vst [vmem:[#allocation2 + $0x58] sm:$0xff] %v1760
    %1769 = vst [vmem:[#allocation2 + $0x60] sm:$0xff] %v1761
    %1770 = vst [vmem:[#allocation2 + $0x68] sm:$0xff] %v1762
    %1771 = vst [vmem:[#allocation2 + $0x70] sm:$0xff] %v1763
    %1772 = vst [vmem:[#allocation2 + $0x78] sm:$0xff] %v1764
    %1773 = vrot.lane.b32.xlu0 %v1629, 21
    %v1774 = vpop.permute.xlu0 %1773
    %1775 = vrot.lane.b32.xlu0 %v1637, 21
    %v1776 = vpop.permute.xlu0 %1775
    %1777 = vrot.lane.b32.xlu0 %v1630, 21
    %v1778 = vpop.permute.xlu0 %1777
    %1779 = vrot.lane.b32.xlu0 %v1638, 21
    %v1780 = vpop.permute.xlu0 %1779
    %1781 = vrot.lane.b32.xlu0 %v1631, 21
    %v1782 = vpop.permute.xlu0 %1781
    %1783 = vrot.lane.b32.xlu0 %v1639, 21
    %v1784 = vpop.permute.xlu0 %1783
    %1785 = vrot.lane.b32.xlu0 %v1632, 21
    %v1786 = vpop.permute.xlu0 %1785
    %1787 = vrot.lane.b32.xlu0 %v1640, 21
    %v1788 = vpop.permute.xlu0 %1787
    %1789 = vrot.lane.b32.xlu0 %v1633, 21
    %v1790 = vpop.permute.xlu0 %1789
    %1791 = vrot.lane.b32.xlu0 %v1641, 21
    %v1792 = vpop.permute.xlu0 %1791
    %1793 = vrot.lane.b32.xlu0 %v1634, 21
    %v1794 = vpop.permute.xlu0 %1793
    %1795 = vrot.lane.b32.xlu0 %v1642, 21
    %v1796 = vpop.permute.xlu0 %1795
    %1797 = vrot.lane.b32.xlu0 %v1635, 21
    %v1798 = vpop.permute.xlu0 %1797
    %1799 = vrot.lane.b32.xlu0 %v1643, 21
    %v1800 = vpop.permute.xlu0 %1799
    %1801 = vrot.lane.b32.xlu0 %v1636, 21
    %v1802 = vpop.permute.xlu0 %1801
    %1803 = vrot.lane.b32.xlu0 %v1644, 21
    %v1804 = vpop.permute.xlu0 %1803
    %v1805 = vsel %vm520, %v1798, %v1802
    %v1806 = vsel %vm520, %v1800, %v1804
    %v1807 = vsel %vm520, %v1794, %v1798
    %v1808 = vsel %vm520, %v1796, %v1800
    %v1809 = vsel %vm520, %v1790, %v1794
    %v1810 = vsel %vm520, %v1792, %v1796
    %v1811 = vsel %vm520, %v1786, %v1790
    %v1812 = vsel %vm520, %v1788, %v1792
    %v1813 = vsel %vm520, %v1782, %v1786
    %v1814 = vsel %vm520, %v1784, %v1788
    %v1815 = vsel %vm520, %v1778, %v1782
    %v1816 = vsel %vm520, %v1780, %v1784
    %v1817 = vsel %vm520, %v1774, %v1778
    %v1818 = vsel %vm520, %v1776, %v1780
    %v1819 = vsel %vm520, %v1802, %v1774
    %v1820 = vsel %vm520, %v1804, %v1776
    %v1821 = vpack.c.bf16 %v1817, %v1819
    %v1822 = vpack.c.bf16 %v1813, %v1815
    %v1823 = vpack.c.bf16 %v1809, %v1811
    %v1824 = vpack.c.bf16 %v1805, %v1807
    %v1825 = vpack.c.bf16 %v1818, %v1820
    %v1826 = vpack.c.bf16 %v1814, %v1816
    %v1827 = vpack.c.bf16 %v1810, %v1812
    %v1828 = vpack.c.bf16 %v1806, %v1808
    %1829 = vst [vmem:[#allocation2 + $0x80] sm:$0xff] %v1821
    %1830 = vst [vmem:[#allocation2 + $0x88] sm:$0xff] %v1822
    %1831 = vst [vmem:[#allocation2 + $0x90] sm:$0xff] %v1823
    %1832 = vst [vmem:[#allocation2 + $0x98] sm:$0xff] %v1824
    %1833 = vst [vmem:[#allocation2 + $0xa0] sm:$0xff] %v1825
    %1834 = vst [vmem:[#allocation2 + $0xa8] sm:$0xff] %v1826
    %1835 = vst [vmem:[#allocation2 + $0xb0] sm:$0xff] %v1827
    %1836 = vst [vmem:[#allocation2 + $0xb8] sm:$0xff] %v1828
    %1837 = vrot.lane.b32.xlu0 %v1629, 1
    %v1838 = vpop.permute.xlu0 %1837
    %1839 = vrot.lane.b32.xlu0 %v1637, 1
    %v1840 = vpop.permute.xlu0 %1839
    %1841 = vrot.lane.b32.xlu0 %v1630, 1
    %v1842 = vpop.permute.xlu0 %1841
    %1843 = vrot.lane.b32.xlu0 %v1638, 1
    %v1844 = vpop.permute.xlu0 %1843
    %1845 = vrot.lane.b32.xlu0 %v1631, 1
    %v1846 = vpop.permute.xlu0 %1845
    %1847 = vrot.lane.b32.xlu0 %v1639, 1
    %v1848 = vpop.permute.xlu0 %1847
    %1849 = vrot.lane.b32.xlu0 %v1632, 1
    %v1850 = vpop.permute.xlu0 %1849
    %1851 = vrot.lane.b32.xlu0 %v1640, 1
    %v1852 = vpop.permute.xlu0 %1851
    %1853 = vrot.lane.b32.xlu0 %v1633, 1
    %v1854 = vpop.permute.xlu0 %1853
    %1855 = vrot.lane.b32.xlu0 %v1641, 1
    %v1856 = vpop.permute.xlu0 %1855
    %1857 = vrot.lane.b32.xlu0 %v1634, 1
    %v1858 = vpop.permute.xlu0 %1857
    %1859 = vrot.lane.b32.xlu0 %v1642, 1
    %v1860 = vpop.permute.xlu0 %1859
    %1861 = vrot.lane.b32.xlu0 %v1635, 1
    %v1862 = vpop.permute.xlu0 %1861
    %1863 = vrot.lane.b32.xlu0 %v1643, 1
    %v1864 = vpop.permute.xlu0 %1863
    %1865 = vrot.lane.b32.xlu0 %v1636, 1
    %v1866 = vpop.permute.xlu0 %1865
    %1867 = vrot.lane.b32.xlu0 %v1644, 1
    %v1868 = vpop.permute.xlu0 %1867
    %v1869 = vsel %vm585, %v1862, %v1866
    %v1870 = vsel %vm585, %v1864, %v1868
    %v1871 = vsel %vm585, %v1858, %v1862
    %v1872 = vsel %vm585, %v1860, %v1864
    %v1873 = vsel %vm585, %v1854, %v1858
    %v1874 = vsel %vm585, %v1856, %v1860
    %v1875 = vsel %vm585, %v1850, %v1854
    %v1876 = vsel %vm585, %v1852, %v1856
    %v1877 = vsel %vm585, %v1846, %v1850
    %v1878 = vsel %vm585, %v1848, %v1852
    %v1879 = vsel %vm585, %v1842, %v1846
    %v1880 = vsel %vm585, %v1844, %v1848
    %v1881 = vsel %vm585, %v1838, %v1842
    %v1882 = vsel %vm585, %v1840, %v1844
    %v1883 = vsel %vm585, %v1866, %v1838
    %v1884 = vsel %vm585, %v1868, %v1840
    %v1885 = vpack.c.bf16 %v1881, %v1883
    %v1886 = vpack.c.bf16 %v1877, %v1879
    %v1887 = vpack.c.bf16 %v1873, %v1875
    %v1888 = vpack.c.bf16 %v1869, %v1871
    %v1889 = vpack.c.bf16 %v1882, %v1884
    %v1890 = vpack.c.bf16 %v1878, %v1880
    %v1891 = vpack.c.bf16 %v1874, %v1876
    %v1892 = vpack.c.bf16 %v1870, %v1872
    %1893 = vst [vmem:[#allocation2 + $0xc0] sm:$0xff] %v1885
    %1894 = vst [vmem:[#allocation2 + $0xc8] sm:$0xff] %v1886
    %1895 = vst [vmem:[#allocation2 + $0xd0] sm:$0xff] %v1887
    %1896 = vst [vmem:[#allocation2 + $0xd8] sm:$0xff] %v1888
    %1897 = vst [vmem:[#allocation2 + $0xe0] sm:$0xff] %v1889
    %1898 = vst [vmem:[#allocation2 + $0xe8] sm:$0xff] %v1890
    %1899 = vst [vmem:[#allocation2 + $0xf0] sm:$0xff] %v1891
    %1900 = vst [vmem:[#allocation2 + $0xf8] sm:$0xff] %v1892
    %v1901 = vpack.c.bf16 %v1630, %v1629
    %v1902 = vpack.c.bf16 %v1632, %v1631
    %v1903 = vpack.c.bf16 %v1634, %v1633
    %v1904 = vpack.c.bf16 %v1636, %v1635
    %v1905 = vpack.c.bf16 %v1638, %v1637
    %v1906 = vpack.c.bf16 %v1640, %v1639
    %v1907 = vpack.c.bf16 %v1642, %v1641
    %v1908 = vpack.c.bf16 %v1644, %v1643
    %1909 = vst [vmem:[#allocation2 + $0x100] sm:$0xff] %v1901
    %1910 = vst [vmem:[#allocation2 + $0x108] sm:$0xff] %v1902
    %1911 = vst [vmem:[#allocation2 + $0x110] sm:$0xff] %v1903
    %1912 = vst [vmem:[#allocation2 + $0x118] sm:$0xff] %v1904
    %1913 = vst [vmem:[#allocation2 + $0x120] sm:$0xff] %v1905
    %1914 = vst [vmem:[#allocation2 + $0x128] sm:$0xff] %v1906
    %1915 = vst [vmem:[#allocation2 + $0x130] sm:$0xff] %v1907
    %1916 = vst [vmem:[#allocation2 + $0x138] sm:$0xff] %v1908
    %1917 = vrot.lane.b32.xlu0 %v1629, 127
    %v1918 = vpop.permute.xlu0 %1917
    %1919 = vrot.lane.b32.xlu0 %v1637, 127
    %v1920 = vpop.permute.xlu0 %1919
    %1921 = vrot.lane.b32.xlu0 %v1630, 127
    %v1922 = vpop.permute.xlu0 %1921
    %1923 = vrot.lane.b32.xlu0 %v1638, 127
    %v1924 = vpop.permute.xlu0 %1923
    %1925 = vrot.lane.b32.xlu0 %v1631, 127
    %v1926 = vpop.permute.xlu0 %1925
    %1927 = vrot.lane.b32.xlu0 %v1639, 127
    %v1928 = vpop.permute.xlu0 %1927
    %1929 = vrot.lane.b32.xlu0 %v1632, 127
    %v1930 = vpop.permute.xlu0 %1929
    %1931 = vrot.lane.b32.xlu0 %v1640, 127
    %v1932 = vpop.permute.xlu0 %1931
    %1933 = vrot.lane.b32.xlu0 %v1633, 127
    %v1934 = vpop.permute.xlu0 %1933
    %1935 = vrot.lane.b32.xlu0 %v1641, 127
    %v1936 = vpop.permute.xlu0 %1935
    %1937 = vrot.lane.b32.xlu0 %v1634, 127
    %v1938 = vpop.permute.xlu0 %1937
    %1939 = vrot.lane.b32.xlu0 %v1642, 127
    %v1940 = vpop.permute.xlu0 %1939
    %1941 = vrot.lane.b32.xlu0 %v1635, 127
    %v1942 = vpop.permute.xlu0 %1941
    %1943 = vrot.lane.b32.xlu0 %v1643, 127
    %v1944 = vpop.permute.xlu0 %1943
    %1945 = vrot.lane.b32.xlu0 %v1636, 127
    %v1946 = vpop.permute.xlu0 %1945
    %1947 = vrot.lane.b32.xlu0 %v1644, 127
    %v1948 = vpop.permute.xlu0 %1947
    %v1949 = vsel %vm666, %v1942, %v1946
    %v1950 = vsel %vm666, %v1944, %v1948
    %v1951 = vsel %vm666, %v1938, %v1942
    %v1952 = vsel %vm666, %v1940, %v1944
    %v1953 = vsel %vm666, %v1934, %v1938
    %v1954 = vsel %vm666, %v1936, %v1940
    %v1955 = vsel %vm666, %v1930, %v1934
    %v1956 = vsel %vm666, %v1932, %v1936
    %v1957 = vsel %vm666, %v1926, %v1930
    %v1958 = vsel %vm666, %v1928, %v1932
    %v1959 = vsel %vm666, %v1922, %v1926
    %v1960 = vsel %vm666, %v1924, %v1928
    %v1961 = vsel %vm666, %v1918, %v1922
    %v1962 = vsel %vm666, %v1920, %v1924
    %v1963 = vsel %vm666, %v1946, %v1918
    %v1964 = vsel %vm666, %v1948, %v1920
    %v1965 = vpack.c.bf16 %v1959, %v1961
    %v1966 = vpack.c.bf16 %v1955, %v1957
    %v1967 = vpack.c.bf16 %v1951, %v1953
    %v1968 = vpack.c.bf16 %v1963, %v1949
    %v1969 = vpack.c.bf16 %v1960, %v1962
    %v1970 = vpack.c.bf16 %v1956, %v1958
    %v1971 = vpack.c.bf16 %v1952, %v1954
    %v1972 = vpack.c.bf16 %v1964, %v1950
    %1973 = vst [vmem:[#allocation2 + $0x140] sm:$0xff] %v1965
    %1974 = vst [vmem:[#allocation2 + $0x148] sm:$0xff] %v1966
    %1975 = vst [vmem:[#allocation2 + $0x150] sm:$0xff] %v1967
    %1976 = vst [vmem:[#allocation2 + $0x158] sm:$0xff] %v1968
    %1977 = vst [vmem:[#allocation2 + $0x160] sm:$0xff] %v1969
    %1978 = vst [vmem:[#allocation2 + $0x168] sm:$0xff] %v1970
    %1979 = vst [vmem:[#allocation2 + $0x170] sm:$0xff] %v1971
    %1980 = vst [vmem:[#allocation2 + $0x178] sm:$0xff] %v1972
    %1981 = vrot.lane.b32.xlu0 %v1629, 107
    %v1982 = vpop.permute.xlu0 %1981
    %1983 = vrot.lane.b32.xlu0 %v1637, 107
    %v1984 = vpop.permute.xlu0 %1983
    %1985 = vrot.lane.b32.xlu0 %v1630, 107
    %v1986 = vpop.permute.xlu0 %1985
    %1987 = vrot.lane.b32.xlu0 %v1638, 107
    %v1988 = vpop.permute.xlu0 %1987
    %1989 = vrot.lane.b32.xlu0 %v1631, 107
    %v1990 = vpop.permute.xlu0 %1989
    %1991 = vrot.lane.b32.xlu0 %v1639, 107
    %v1992 = vpop.permute.xlu0 %1991
    %1993 = vrot.lane.b32.xlu0 %v1632, 107
    %v1994 = vpop.permute.xlu0 %1993
    %1995 = vrot.lane.b32.xlu0 %v1640, 107
    %v1996 = vpop.permute.xlu0 %1995
    %1997 = vrot.lane.b32.xlu0 %v1633, 107
    %v1998 = vpop.permute.xlu0 %1997
    %1999 = vrot.lane.b32.xlu0 %v1641, 107
    %v2000 = vpop.permute.xlu0 %1999
    %2001 = vrot.lane.b32.xlu0 %v1634, 107
    %v2002 = vpop.permute.xlu0 %2001
    %2003 = vrot.lane.b32.xlu0 %v1642, 107
    %v2004 = vpop.permute.xlu0 %2003
    %2005 = vrot.lane.b32.xlu0 %v1635, 107
    %v2006 = vpop.permute.xlu0 %2005
    %2007 = vrot.lane.b32.xlu0 %v1643, 107
    %v2008 = vpop.permute.xlu0 %2007
    %2009 = vrot.lane.b32.xlu0 %v1636, 107
    %v2010 = vpop.permute.xlu0 %2009
    %2011 = vrot.lane.b32.xlu0 %v1644, 107
    %v2012 = vpop.permute.xlu0 %2011
    %v2013 = vsel %vm731, %v2006, %v2010
    %v2014 = vsel %vm731, %v2008, %v2012
    %v2015 = vsel %vm731, %v2002, %v2006
    %v2016 = vsel %vm731, %v2004, %v2008
    %v2017 = vsel %vm731, %v1998, %v2002
    %v2018 = vsel %vm731, %v2000, %v2004
    %v2019 = vsel %vm731, %v1994, %v1998
    %v2020 = vsel %vm731, %v1996, %v2000
    %v2021 = vsel %vm731, %v1990, %v1994
    %v2022 = vsel %vm731, %v1992, %v1996
    %v2023 = vsel %vm731, %v1986, %v1990
    %v2024 = vsel %vm731, %v1988, %v1992
    %v2025 = vsel %vm731, %v1982, %v1986
    %v2026 = vsel %vm731, %v1984, %v1988
    %v2027 = vsel %vm731, %v2010, %v1982
    %v2028 = vsel %vm731, %v2012, %v1984
    %v2029 = vpack.c.bf16 %v2023, %v2025
    %v2030 = vpack.c.bf16 %v2019, %v2021
    %v2031 = vpack.c.bf16 %v2015, %v2017
    %v2032 = vpack.c.bf16 %v2027, %v2013
    %v2033 = vpack.c.bf16 %v2024, %v2026
    %v2034 = vpack.c.bf16 %v2020, %v2022
    %v2035 = vpack.c.bf16 %v2016, %v2018
    %v2036 = vpack.c.bf16 %v2028, %v2014
    %2037 = vst [vmem:[#allocation2 + $0x180] sm:$0xff] %v2029
    %2038 = vst [vmem:[#allocation2 + $0x188] sm:$0xff] %v2030
    %2039 = vst [vmem:[#allocation2 + $0x190] sm:$0xff] %v2031
    %2040 = vst [vmem:[#allocation2 + $0x198] sm:$0xff] %v2032
    %2041 = vst [vmem:[#allocation2 + $0x1a0] sm:$0xff] %v2033
    %2042 = vst [vmem:[#allocation2 + $0x1a8] sm:$0xff] %v2034
    %2043 = vst [vmem:[#allocation2 + $0x1b0] sm:$0xff] %v2035
    %2044 = vst [vmem:[#allocation2 + $0x1b8] sm:$0xff] %v2036
    %2045 = vrot.lane.b32.xlu0 %v1629, 106
    %v2046 = vpop.permute.xlu0 %2045
    %2047 = vrot.lane.b32.xlu0 %v1637, 106
    %v2048 = vpop.permute.xlu0 %2047
    %2049 = vrot.lane.b32.xlu0 %v1630, 106
    %v2050 = vpop.permute.xlu0 %2049
    %2051 = vrot.lane.b32.xlu0 %v1638, 106
    %v2052 = vpop.permute.xlu0 %2051
    %2053 = vrot.lane.b32.xlu0 %v1631, 106
    %v2054 = vpop.permute.xlu0 %2053
    %2055 = vrot.lane.b32.xlu0 %v1639, 106
    %v2056 = vpop.permute.xlu0 %2055
    %2057 = vrot.lane.b32.xlu0 %v1632, 106
    %v2058 = vpop.permute.xlu0 %2057
    %2059 = vrot.lane.b32.xlu0 %v1640, 106
    %v2060 = vpop.permute.xlu0 %2059
    %2061 = vrot.lane.b32.xlu0 %v1633, 106
    %v2062 = vpop.permute.xlu0 %2061
    %2063 = vrot.lane.b32.xlu0 %v1641, 106
    %v2064 = vpop.permute.xlu0 %2063
    %2065 = vrot.lane.b32.xlu0 %v1634, 106
    %v2066 = vpop.permute.xlu0 %2065
    %2067 = vrot.lane.b32.xlu0 %v1642, 106
    %v2068 = vpop.permute.xlu0 %2067
    %2069 = vrot.lane.b32.xlu0 %v1635, 106
    %v2070 = vpop.permute.xlu0 %2069
    %2071 = vrot.lane.b32.xlu0 %v1643, 106
    %v2072 = vpop.permute.xlu0 %2071
    %2073 = vrot.lane.b32.xlu0 %v1636, 106
    %v2074 = vpop.permute.xlu0 %2073
    %2075 = vrot.lane.b32.xlu0 %v1644, 106
    %v2076 = vpop.permute.xlu0 %2075
    %v2077 = vsel %vm796, %v2070, %v2074
    %v2078 = vsel %vm796, %v2072, %v2076
    %v2079 = vsel %vm796, %v2066, %v2070
    %v2080 = vsel %vm796, %v2068, %v2072
    %v2081 = vsel %vm796, %v2062, %v2066
    %v2082 = vsel %vm796, %v2064, %v2068
    %v2083 = vsel %vm796, %v2058, %v2062
    %v2084 = vsel %vm796, %v2060, %v2064
    %v2085 = vsel %vm796, %v2054, %v2058
    %v2086 = vsel %vm796, %v2056, %v2060
    %v2087 = vsel %vm796, %v2050, %v2054
    %v2088 = vsel %vm796, %v2052, %v2056
    %v2089 = vsel %vm796, %v2046, %v2050
    %v2090 = vsel %vm796, %v2048, %v2052
    %v2091 = vsel %vm796, %v2074, %v2046
    %v2092 = vsel %vm796, %v2076, %v2048
    %v2093 = vpack.c.bf16 %v2087, %v2089
    %v2094 = vpack.c.bf16 %v2083, %v2085
    %v2095 = vpack.c.bf16 %v2079, %v2081
    %v2096 = vpack.c.bf16 %v2091, %v2077
    %v2097 = vpack.c.bf16 %v2088, %v2090
    %v2098 = vpack.c.bf16 %v2084, %v2086
    %v2099 = vpack.c.bf16 %v2080, %v2082
    %v2100 = vpack.c.bf16 %v2092, %v2078
    %2101 = vst [vmem:[#allocation2 + $0x1c0] sm:$0xff] %v2093
    %2102 = vst [vmem:[#allocation2 + $0x1c8] sm:$0xff] %v2094
    %2103 = vst [vmem:[#allocation2 + $0x1d0] sm:$0xff] %v2095
    %2104 = vst [vmem:[#allocation2 + $0x1d8] sm:$0xff] %v2096
    %2105 = vst [vmem:[#allocation2 + $0x1e0] sm:$0xff] %v2097
    %2106 = vst [vmem:[#allocation2 + $0x1e8] sm:$0xff] %v2098
    %2107 = vst [vmem:[#allocation2 + $0x1f0] sm:$0xff] %v2099
    %2108 = vst [vmem:[#allocation2 + $0x1f8] sm:$0xff] %v2100
    %2109 = vrot.lane.b32.xlu0 %v1629, 105
    %v2110 = vpop.permute.xlu0 %2109
    %2111 = vrot.lane.b32.xlu0 %v1637, 105
    %v2112 = vpop.permute.xlu0 %2111
    %2113 = vrot.lane.b32.xlu0 %v1630, 105
    %v2114 = vpop.permute.xlu0 %2113
    %2115 = vrot.lane.b32.xlu0 %v1638, 105
    %v2116 = vpop.permute.xlu0 %2115
    %2117 = vrot.lane.b32.xlu0 %v1631, 105
    %v2118 = vpop.permute.xlu0 %2117
    %2119 = vrot.lane.b32.xlu0 %v1639, 105
    %v2120 = vpop.permute.xlu0 %2119
    %2121 = vrot.lane.b32.xlu0 %v1632, 105
    %v2122 = vpop.permute.xlu0 %2121
    %2123 = vrot.lane.b32.xlu0 %v1640, 105
    %v2124 = vpop.permute.xlu0 %2123
    %2125 = vrot.lane.b32.xlu0 %v1633, 105
    %v2126 = vpop.permute.xlu0 %2125
    %2127 = vrot.lane.b32.xlu0 %v1641, 105
    %v2128 = vpop.permute.xlu0 %2127
    %2129 = vrot.lane.b32.xlu0 %v1634, 105
    %v2130 = vpop.permute.xlu0 %2129
    %2131 = vrot.lane.b32.xlu0 %v1642, 105
    %v2132 = vpop.permute.xlu0 %2131
    %2133 = vrot.lane.b32.xlu0 %v1635, 105
    %v2134 = vpop.permute.xlu0 %2133
    %2135 = vrot.lane.b32.xlu0 %v1643, 105
    %v2136 = vpop.permute.xlu0 %2135
    %2137 = vrot.lane.b32.xlu0 %v1636, 105
    %v2138 = vpop.permute.xlu0 %2137
    %2139 = vrot.lane.b32.xlu0 %v1644, 105
    %v2140 = vpop.permute.xlu0 %2139
    %v2141 = vsel %vm861, %v2134, %v2138
    %v2142 = vsel %vm861, %v2136, %v2140
    %v2143 = vsel %vm861, %v2130, %v2134
    %v2144 = vsel %vm861, %v2132, %v2136
    %v2145 = vsel %vm861, %v2126, %v2130
    %v2146 = vsel %vm861, %v2128, %v2132
    %v2147 = vsel %vm861, %v2122, %v2126
    %v2148 = vsel %vm861, %v2124, %v2128
    %v2149 = vsel %vm861, %v2118, %v2122
    %v2150 = vsel %vm861, %v2120, %v2124
    %v2151 = vsel %vm861, %v2114, %v2118
    %v2152 = vsel %vm861, %v2116, %v2120
    %v2153 = vsel %vm861, %v2110, %v2114
    %v2154 = vsel %vm861, %v2112, %v2116
    %v2155 = vsel %vm861, %v2138, %v2110
    %v2156 = vsel %vm861, %v2140, %v2112
    %v2157 = vpack.c.bf16 %v2151, %v2153
    %v2158 = vpack.c.bf16 %v2147, %v2149
    %v2159 = vpack.c.bf16 %v2143, %v2145
    %v2160 = vpack.c.bf16 %v2155, %v2141
    %v2161 = vpack.c.bf16 %v2152, %v2154
    %v2162 = vpack.c.bf16 %v2148, %v2150
    %v2163 = vpack.c.bf16 %v2144, %v2146
    %v2164 = vpack.c.bf16 %v2156, %v2142
    %2165 = vst [vmem:[#allocation2 + $0x200] sm:$0xff] %v2157
    %2166 = vst [vmem:[#allocation2 + $0x208] sm:$0xff] %v2158
    %2167 = vst [vmem:[#allocation2 + $0x210] sm:$0xff] %v2159
    %2168 = vst [vmem:[#allocation2 + $0x218] sm:$0xff] %v2160
    %2169 = vst [vmem:[#allocation2 + $0x220] sm:$0xff] %v2161
    %2170 = vst [vmem:[#allocation2 + $0x228] sm:$0xff] %v2162
    %2171 = vst [vmem:[#allocation2 + $0x230] sm:$0xff] %v2163
    %2172 = vst [vmem:[#allocation2 + $0x238] sm:$0xff] %v2164
    %s2173 = scalar_lea.vmem [#allocation9], 16
    %v2174 = vld [vmem:[%s2173] sm:$0xff]
    %v2175 = vld [vmem:[%s2173 + $0x8] sm:$0xff]
    %v2176 = vld [vmem:[#allocation2] sm:$0xff]
    %v2177 = vld [vmem:[#allocation2 + $0x8] sm:$0xff]
    %v2178 = vld [vmem:[#allocation2 + $0x10] sm:$0xff]
    %v2179 = vld [vmem:[#allocation2 + $0x18] sm:$0xff]
    %v2180 = vld [vmem:[#allocation2 + $0x20] sm:$0xff]
    %v2181 = vld [vmem:[#allocation2 + $0x28] sm:$0xff]
    %v2182 = vld [vmem:[#allocation2 + $0x30] sm:$0xff]
    %v2183 = vld [vmem:[#allocation2 + $0x38] sm:$0xff]
    %v2184 = vld [vmem:[#allocation2 + $0x40] sm:$0xff]
    %v2185 = vld [vmem:[#allocation2 + $0x48] sm:$0xff]
    %v2186 = vld [vmem:[#allocation2 + $0x50] sm:$0xff]
    %v2187 = vld [vmem:[#allocation2 + $0x58] sm:$0xff]
    %v2188 = vld [vmem:[#allocation2 + $0x60] sm:$0xff]
    %v2189 = vld [vmem:[#allocation2 + $0x68] sm:$0xff]
    %v2190 = vld [vmem:[#allocation2 + $0x70] sm:$0xff]
    %v2191 = vld [vmem:[#allocation2 + $0x78] sm:$0xff]
    %v2192 = vld [vmem:[#allocation2 + $0x80] sm:$0xff]
    %v2193 = vld [vmem:[#allocation2 + $0x88] sm:$0xff]
    %v2194 = vld [vmem:[#allocation2 + $0x90] sm:$0xff]
    %v2195 = vld [vmem:[#allocation2 + $0x98] sm:$0xff]
    %v2196 = vld [vmem:[#allocation2 + $0xa0] sm:$0xff]
    %v2197 = vld [vmem:[#allocation2 + $0xa8] sm:$0xff]
    %v2198 = vld [vmem:[#allocation2 + $0xb0] sm:$0xff]
    %v2199 = vld [vmem:[#allocation2 + $0xb8] sm:$0xff]
    %v2200 = vld [vmem:[#allocation2 + $0xc0] sm:$0xff]
    %v2201 = vld [vmem:[#allocation2 + $0xc8] sm:$0xff]
    %v2202 = vld [vmem:[#allocation2 + $0xd0] sm:$0xff]
    %v2203 = vld [vmem:[#allocation2 + $0xd8] sm:$0xff]
    %v2204 = vld [vmem:[#allocation2 + $0xe0] sm:$0xff]
    %v2205 = vld [vmem:[#allocation2 + $0xe8] sm:$0xff]
    %v2206 = vld [vmem:[#allocation2 + $0xf0] sm:$0xff]
    %v2207 = vld [vmem:[#allocation2 + $0xf8] sm:$0xff]
    %v2208 = vld [vmem:[#allocation2 + $0x100] sm:$0xff]
    %v2209 = vld [vmem:[#allocation2 + $0x108] sm:$0xff]
    %v2210 = vld [vmem:[#allocation2 + $0x110] sm:$0xff]
    %v2211 = vld [vmem:[#allocation2 + $0x118] sm:$0xff]
    %v2212 = vld [vmem:[#allocation2 + $0x120] sm:$0xff]
    %v2213 = vld [vmem:[#allocation2 + $0x128] sm:$0xff]
    %v2214 = vld [vmem:[#allocation2 + $0x130] sm:$0xff]
    %v2215 = vld [vmem:[#allocation2 + $0x138] sm:$0xff]
    %v2216 = vld [vmem:[#allocation2 + $0x140] sm:$0xff]
    %v2217 = vld [vmem:[#allocation2 + $0x148] sm:$0xff]
    %v2218 = vld [vmem:[#allocation2 + $0x150] sm:$0xff]
    %v2219 = vld [vmem:[#allocation2 + $0x158] sm:$0xff]
    %v2220 = vld [vmem:[#allocation2 + $0x160] sm:$0xff]
    %v2221 = vld [vmem:[#allocation2 + $0x168] sm:$0xff]
    %v2222 = vld [vmem:[#allocation2 + $0x170] sm:$0xff]
    %v2223 = vld [vmem:[#allocation2 + $0x178] sm:$0xff]
    %v2224 = vld [vmem:[#allocation2 + $0x180] sm:$0xff]
    %v2225 = vld [vmem:[#allocation2 + $0x188] sm:$0xff]
    %v2226 = vld [vmem:[#allocation2 + $0x190] sm:$0xff]
    %v2227 = vld [vmem:[#allocation2 + $0x198] sm:$0xff]
    %v2228 = vld [vmem:[#allocation2 + $0x1a0] sm:$0xff]
    %v2229 = vld [vmem:[#allocation2 + $0x1a8] sm:$0xff]
    %v2230 = vld [vmem:[#allocation2 + $0x1b0] sm:$0xff]
    %v2231 = vld [vmem:[#allocation2 + $0x1b8] sm:$0xff]
    %v2232 = vld [vmem:[#allocation2 + $0x1c0] sm:$0xff]
    %v2233 = vld [vmem:[#allocation2 + $0x1c8] sm:$0xff]
    %v2234 = vld [vmem:[#allocation2 + $0x1d0] sm:$0xff]
    %v2235 = vld [vmem:[#allocation2 + $0x1d8] sm:$0xff]
    %v2236 = vld [vmem:[#allocation2 + $0x1e0] sm:$0xff]
    %v2237 = vld [vmem:[#allocation2 + $0x1e8] sm:$0xff]
    %v2238 = vld [vmem:[#allocation2 + $0x1f0] sm:$0xff]
    %v2239 = vld [vmem:[#allocation2 + $0x1f8] sm:$0xff]
    %v2240 = vld [vmem:[#allocation2 + $0x200] sm:$0xff]
    %v2241 = vld [vmem:[#allocation2 + $0x208] sm:$0xff]
    %v2242 = vld [vmem:[#allocation2 + $0x210] sm:$0xff]
    %v2243 = vld [vmem:[#allocation2 + $0x218] sm:$0xff]
    %v2244 = vld [vmem:[#allocation2 + $0x220] sm:$0xff]
    %v2245 = vld [vmem:[#allocation2 + $0x228] sm:$0xff]
    %v2246 = vld [vmem:[#allocation2 + $0x230] sm:$0xff]
    %v2247 = vld [vmem:[#allocation2 + $0x238] sm:$0xff]
    %v2248 = vld [vmem:[#allocation2 + $0x240] sm:$0xff]
    %v2249 = vld [vmem:[#allocation2 + $0x248] sm:$0xff]
    %v2250 = vld [vmem:[#allocation2 + $0x250] sm:$0xff]
    %v2251 = vld [vmem:[#allocation2 + $0x258] sm:$0xff]
    %v2252 = vld [vmem:[#allocation2 + $0x260] sm:$0xff]
    %v2253 = vld [vmem:[#allocation2 + $0x268] sm:$0xff]
    %v2254 = vld [vmem:[#allocation2 + $0x270] sm:$0xff]
    %v2255 = vld [vmem:[#allocation2 + $0x278] sm:$0xff]
    %v2258 = vunpack.c.l.b16 %v2174
    %v2259 = vunpack.c.h.b16 %v2174
    %v2260 = vunpack.c.l.b16 %v2175
    %v2261 = vunpack.c.h.b16 %v2175
    %v2262 = vpack.c.b16 %v2260, %v2258
    %v2263 = vpack.c.b16 %v2261, %v2259
    %v2345 = vunpack.c.l.b16 %v2176
    %v2346 = vunpack.c.h.b16 %v2176
    %v2347 = vunpack.c.l.b16 %v2177
    %v2348 = vunpack.c.h.b16 %v2177
    %v2349 = vunpack.c.l.b16 %v2178
    %v2350 = vunpack.c.h.b16 %v2178
    %v2351 = vunpack.c.l.b16 %v2179
    %v2352 = vunpack.c.h.b16 %v2179
    %v2353 = vunpack.c.l.b16 %v2180
    %v2354 = vunpack.c.h.b16 %v2180
    %v2355 = vunpack.c.l.b16 %v2181
    %v2356 = vunpack.c.h.b16 %v2181
    %v2357 = vunpack.c.l.b16 %v2182
    %v2358 = vunpack.c.h.b16 %v2182
    %v2359 = vunpack.c.l.b16 %v2183
    %v2360 = vunpack.c.h.b16 %v2183
    %v2361 = vunpack.c.l.b16 %v2184
    %v2362 = vunpack.c.h.b16 %v2184
    %v2363 = vunpack.c.l.b16 %v2185
    %v2364 = vunpack.c.h.b16 %v2185
    %v2365 = vunpack.c.l.b16 %v2186
    %v2366 = vunpack.c.h.b16 %v2186
    %v2367 = vunpack.c.l.b16 %v2187
    %v2368 = vunpack.c.h.b16 %v2187
    %v2369 = vunpack.c.l.b16 %v2188
    %v2370 = vunpack.c.h.b16 %v2188
    %v2371 = vunpack.c.l.b16 %v2189
    %v2372 = vunpack.c.h.b16 %v2189
    %v2373 = vunpack.c.l.b16 %v2190
    %v2374 = vunpack.c.h.b16 %v2190
    %v2375 = vunpack.c.l.b16 %v2191
    %v2376 = vunpack.c.h.b16 %v2191
    %v2377 = vunpack.c.l.b16 %v2192
    %v2378 = vunpack.c.h.b16 %v2192
    %v2379 = vunpack.c.l.b16 %v2193
    %v2380 = vunpack.c.h.b16 %v2193
    %v2381 = vunpack.c.l.b16 %v2194
    %v2382 = vunpack.c.h.b16 %v2194
    %v2383 = vunpack.c.l.b16 %v2195
    %v2384 = vunpack.c.h.b16 %v2195
    %v2385 = vunpack.c.l.b16 %v2196
    %v2386 = vunpack.c.h.b16 %v2196
    %v2387 = vunpack.c.l.b16 %v2197
    %v2388 = vunpack.c.h.b16 %v2197
    %v2389 = vunpack.c.l.b16 %v2198
    %v2390 = vunpack.c.h.b16 %v2198
    %v2391 = vunpack.c.l.b16 %v2199
    %v2392 = vunpack.c.h.b16 %v2199
    %v2393 = vunpack.c.l.b16 %v2200
    %v2394 = vunpack.c.h.b16 %v2200
    %v2395 = vunpack.c.l.b16 %v2201
    %v2396 = vunpack.c.h.b16 %v2201
    %v2397 = vunpack.c.l.b16 %v2202
    %v2398 = vunpack.c.h.b16 %v2202
    %v2399 = vunpack.c.l.b16 %v2203
    %v2400 = vunpack.c.h.b16 %v2203
    %v2401 = vunpack.c.l.b16 %v2204
    %v2402 = vunpack.c.h.b16 %v2204
    %v2403 = vunpack.c.l.b16 %v2205
    %v2404 = vunpack.c.h.b16 %v2205
    %v2405 = vunpack.c.l.b16 %v2206
    %v2406 = vunpack.c.h.b16 %v2206
    %v2407 = vunpack.c.l.b16 %v2207
    %v2408 = vunpack.c.h.b16 %v2207
    %v2409 = vunpack.c.l.b16 %v2208
    %v2410 = vunpack.c.h.b16 %v2208
    %v2411 = vunpack.c.l.b16 %v2209
    %v2412 = vunpack.c.h.b16 %v2209
    %v2413 = vunpack.c.l.b16 %v2210
    %v2414 = vunpack.c.h.b16 %v2210
    %v2415 = vunpack.c.l.b16 %v2211
    %v2416 = vunpack.c.h.b16 %v2211
    %v2417 = vunpack.c.l.b16 %v2212
    %v2418 = vunpack.c.h.b16 %v2212
    %v2419 = vunpack.c.l.b16 %v2213
    %v2420 = vunpack.c.h.b16 %v2213
    %v2421 = vunpack.c.l.b16 %v2214
    %v2422 = vunpack.c.h.b16 %v2214
    %v2423 = vunpack.c.l.b16 %v2215
    %v2424 = vunpack.c.h.b16 %v2215
    %v2425 = vunpack.c.l.b16 %v2216
    %v2426 = vunpack.c.h.b16 %v2216
    %v2427 = vunpack.c.l.b16 %v2217
    %v2428 = vunpack.c.h.b16 %v2217
    %v2429 = vunpack.c.l.b16 %v2218
    %v2430 = vunpack.c.h.b16 %v2218
    %v2431 = vunpack.c.l.b16 %v2219
    %v2432 = vunpack.c.h.b16 %v2219
    %v2433 = vunpack.c.l.b16 %v2220
    %v2434 = vunpack.c.h.b16 %v2220
    %v2435 = vunpack.c.l.b16 %v2221
    %v2436 = vunpack.c.h.b16 %v2221
    %v2437 = vunpack.c.l.b16 %v2222
    %v2438 = vunpack.c.h.b16 %v2222
    %v2439 = vunpack.c.l.b16 %v2223
    %v2440 = vunpack.c.h.b16 %v2223
    %v2441 = vunpack.c.l.b16 %v2224
    %v2442 = vunpack.c.h.b16 %v2224
    %v2443 = vunpack.c.l.b16 %v2225
    %v2444 = vunpack.c.h.b16 %v2225
    %v2445 = vunpack.c.l.b16 %v2226
    %v2446 = vunpack.c.h.b16 %v2226
    %v2447 = vunpack.c.l.b16 %v2227
    %v2448 = vunpack.c.h.b16 %v2227
    %v2449 = vunpack.c.l.b16 %v2228
    %v2450 = vunpack.c.h.b16 %v2228
    %v2451 = vunpack.c.l.b16 %v2229
    %v2452 = vunpack.c.h.b16 %v2229
    %v2453 = vunpack.c.l.b16 %v2230
    %v2454 = vunpack.c.h.b16 %v2230
    %v2455 = vunpack.c.l.b16 %v2231
    %v2456 = vunpack.c.h.b16 %v2231
    %v2457 = vunpack.c.l.b16 %v2232
    %v2458 = vunpack.c.h.b16 %v2232
    %v2459 = vunpack.c.l.b16 %v2233
    %v2460 = vunpack.c.h.b16 %v2233
    %v2461 = vunpack.c.l.b16 %v2234
    %v2462 = vunpack.c.h.b16 %v2234
    %v2463 = vunpack.c.l.b16 %v2235
    %v2464 = vunpack.c.h.b16 %v2235
    %v2465 = vunpack.c.l.b16 %v2236
    %v2466 = vunpack.c.h.b16 %v2236
    %v2467 = vunpack.c.l.b16 %v2237
    %v2468 = vunpack.c.h.b16 %v2237
    %v2469 = vunpack.c.l.b16 %v2238
    %v2470 = vunpack.c.h.b16 %v2238
    %v2471 = vunpack.c.l.b16 %v2239
    %v2472 = vunpack.c.h.b16 %v2239
    %v2473 = vunpack.c.l.b16 %v2240
    %v2474 = vunpack.c.h.b16 %v2240
    %v2475 = vunpack.c.l.b16 %v2241
    %v2476 = vunpack.c.h.b16 %v2241
    %v2477 = vunpack.c.l.b16 %v2242
    %v2478 = vunpack.c.h.b16 %v2242
    %v2479 = vunpack.c.l.b16 %v2243
    %v2480 = vunpack.c.h.b16 %v2243
    %v2481 = vunpack.c.l.b16 %v2244
    %v2482 = vunpack.c.h.b16 %v2244
    %v2483 = vunpack.c.l.b16 %v2245
    %v2484 = vunpack.c.h.b16 %v2245
    %v2485 = vunpack.c.l.b16 %v2246
    %v2486 = vunpack.c.h.b16 %v2246
    %v2487 = vunpack.c.l.b16 %v2247
    %v2488 = vunpack.c.h.b16 %v2247
    %v2489 = vunpack.c.l.b16 %v2248
    %v2490 = vunpack.c.h.b16 %v2248
    %v2491 = vunpack.c.l.b16 %v2249
    %v2492 = vunpack.c.h.b16 %v2249
    %v2493 = vunpack.c.l.b16 %v2250
    %v2494 = vunpack.c.h.b16 %v2250
    %v2495 = vunpack.c.l.b16 %v2251
    %v2496 = vunpack.c.h.b16 %v2251
    %v2497 = vunpack.c.l.b16 %v2252
    %v2498 = vunpack.c.h.b16 %v2252
    %v2499 = vunpack.c.l.b16 %v2253
    %v2500 = vunpack.c.h.b16 %v2253
    %v2501 = vunpack.c.l.b16 %v2254
    %v2502 = vunpack.c.h.b16 %v2254
    %v2503 = vunpack.c.l.b16 %v2255
    %v2504 = vunpack.c.h.b16 %v2255
    %v2505 = vpack.c.b16 %v2353, %v2345
    %v2506 = vpack.c.b16 %v2354, %v2346
    %v2507 = vpack.c.b16 %v2355, %v2347
    %v2508 = vpack.c.b16 %v2356, %v2348
    %v2509 = vpack.c.b16 %v2357, %v2349
    %v2510 = vpack.c.b16 %v2358, %v2350
    %v2511 = vpack.c.b16 %v2359, %v2351
    %v2512 = vpack.c.b16 %v2360, %v2352
    %v2513 = vpack.c.b16 %v2369, %v2361
    %v2514 = vpack.c.b16 %v2370, %v2362
    %v2515 = vpack.c.b16 %v2371, %v2363
    %v2516 = vpack.c.b16 %v2372, %v2364
    %v2517 = vpack.c.b16 %v2373, %v2365
    %v2518 = vpack.c.b16 %v2374, %v2366
    %v2519 = vpack.c.b16 %v2375, %v2367
    %v2520 = vpack.c.b16 %v2376, %v2368
    %v2521 = vpack.c.b16 %v2385, %v2377
    %v2522 = vpack.c.b16 %v2386, %v2378
    %v2523 = vpack.c.b16 %v2387, %v2379
    %v2524 = vpack.c.b16 %v2388, %v2380
    %v2525 = vpack.c.b16 %v2389, %v2381
    %v2526 = vpack.c.b16 %v2390, %v2382
    %v2527 = vpack.c.b16 %v2391, %v2383
    %v2528 = vpack.c.b16 %v2392, %v2384
    %v2529 = vpack.c.b16 %v2401, %v2393
    %v2530 = vpack.c.b16 %v2402, %v2394
    %v2531 = vpack.c.b16 %v2403, %v2395
    %v2532 = vpack.c.b16 %v2404, %v2396
    %v2533 = vpack.c.b16 %v2405, %v2397
    %v2534 = vpack.c.b16 %v2406, %v2398
    %v2535 = vpack.c.b16 %v2407, %v2399
    %v2536 = vpack.c.b16 %v2408, %v2400
    %v2537 = vpack.c.b16 %v2417, %v2409
    %v2538 = vpack.c.b16 %v2418, %v2410
    %v2539 = vpack.c.b16 %v2419, %v2411
    %v2540 = vpack.c.b16 %v2420, %v2412
    %v2541 = vpack.c.b16 %v2421, %v2413
    %v2542 = vpack.c.b16 %v2422, %v2414
    %v2543 = vpack.c.b16 %v2423, %v2415
    %v2544 = vpack.c.b16 %v2424, %v2416
    %v2545 = vpack.c.b16 %v2433, %v2425
    %v2546 = vpack.c.b16 %v2434, %v2426
    %v2547 = vpack.c.b16 %v2435, %v2427
    %v2548 = vpack.c.b16 %v2436, %v2428
    %v2549 = vpack.c.b16 %v2437, %v2429
    %v2550 = vpack.c.b16 %v2438, %v2430
    %v2551 = vpack.c.b16 %v2439, %v2431
    %v2552 = vpack.c.b16 %v2440, %v2432
    %v2553 = vpack.c.b16 %v2449, %v2441
    %v2554 = vpack.c.b16 %v2450, %v2442
    %v2555 = vpack.c.b16 %v2451, %v2443
    %v2556 = vpack.c.b16 %v2452, %v2444
    %v2557 = vpack.c.b16 %v2453, %v2445
    %v2558 = vpack.c.b16 %v2454, %v2446
    %v2559 = vpack.c.b16 %v2455, %v2447
    %v2560 = vpack.c.b16 %v2456, %v2448
    %v2561 = vpack.c.b16 %v2465, %v2457
    %v2562 = vpack.c.b16 %v2466, %v2458
    %v2563 = vpack.c.b16 %v2467, %v2459
    %v2564 = vpack.c.b16 %v2468, %v2460
    %v2565 = vpack.c.b16 %v2469, %v2461
    %v2566 = vpack.c.b16 %v2470, %v2462
    %v2567 = vpack.c.b16 %v2471, %v2463
    %v2568 = vpack.c.b16 %v2472, %v2464
    %v2569 = vpack.c.b16 %v2481, %v2473
    %v2570 = vpack.c.b16 %v2482, %v2474
    %v2571 = vpack.c.b16 %v2483, %v2475
    %v2572 = vpack.c.b16 %v2484, %v2476
    %v2573 = vpack.c.b16 %v2485, %v2477
    %v2574 = vpack.c.b16 %v2486, %v2478
    %v2575 = vpack.c.b16 %v2487, %v2479
    %v2576 = vpack.c.b16 %v2488, %v2480
    %v2577 = vpack.c.b16 %v2497, %v2489
    %v2578 = vpack.c.b16 %v2498, %v2490
    %v2579 = vpack.c.b16 %v2499, %v2491
    %v2580 = vpack.c.b16 %v2500, %v2492
    %v2581 = vpack.c.b16 %v2501, %v2493
    %v2582 = vpack.c.b16 %v2502, %v2494
    %v2583 = vpack.c.b16 %v2503, %v2495
    %v2584 = vpack.c.b16 %v2504, %v2496
    %v2666 = vsel %vm1385, %v2263, 0
    %2668 = vmatpush.bf16.msra.mxu0 %v2561
    %2669 = vmatpush.bf16.msra.mxu0 %v2553
    %2670 = vmatpush.bf16.msra.mxu0 %v2545
    %2671 = vmatpush.bf16.msra.mxu0 %v2537
    %2672 = vmatpush.bf16.msra.mxu0 %v2529
    %2673 = vmatpush.bf16.msra.mxu0 %v2521
    %2674 = vmatpush.bf16.msra.mxu0 %v2513
    %2675 = vmatpush.bf16.msra.mxu0 %v2505
    %2676 = vmatmul.bf16.gmra.mxu0 %v2262
    %v2677 = vpop.f32.mrf.mxu0
    %v2678 = vadd.f32 0.0, %v2677
    %v2679 = vpop.f32.mrf.mxu0
    %v2680 = vadd.f32 0.0, %v2679
    %2681 = vdwg.mxu0
    %2682 = vmatpush.bf16.msra.mxu0 0
    %2683 = vmatpush.bf16.msra.mxu0 0
    %2684 = vmatpush.bf16.msra.mxu0 0
    %2685 = vmatpush.bf16.msra.mxu0 0
    %2686 = vmatpush.bf16.msra.mxu0 0
    %2687 = vmatpush.bf16.msra.mxu0 0
    %2688 = vmatpush.bf16.msra.mxu0 %v2577
    %2689 = vmatpush.bf16.msra.mxu0 %v2569
    %2690 = vmatmul.bf16.gmra.mxu0 %v2666
    %v2691 = vpop.f32.mrf.mxu0
    %v2692 = vadd.f32 %v2678, %v2691
    %v2693 = vpop.f32.mrf.mxu0
    %v2694 = vadd.f32 %v2680, %v2693
    %2695 = vdwg.mxu0
    %2696 = vmatpush.bf16.msra.mxu0 %v2562
    %2697 = vmatpush.bf16.msra.mxu0 %v2554
    %2698 = vmatpush.bf16.msra.mxu0 %v2546
    %2699 = vmatpush.bf16.msra.mxu0 %v2538
    %2700 = vmatpush.bf16.msra.mxu0 %v2530
    %2701 = vmatpush.bf16.msra.mxu0 %v2522
    %2702 = vmatpush.bf16.msra.mxu0 %v2514
    %2703 = vmatpush.bf16.msra.mxu0 %v2506
    %2704 = vmatmul.bf16.gmra.mxu0 %v2262
    %v2705 = vpop.f32.mrf.mxu0
    %v2706 = vadd.f32 0.0, %v2705
    %v2707 = vpop.f32.mrf.mxu0
    %v2708 = vadd.f32 0.0, %v2707
    %2709 = vdwg.mxu0
    %2710 = vmatpush.bf16.msra.mxu0 0
    %2711 = vmatpush.bf16.msra.mxu0 0
    %2712 = vmatpush.bf16.msra.mxu0 0
    %2713 = vmatpush.bf16.msra.mxu0 0
    %2714 = vmatpush.bf16.msra.mxu0 0
    %2715 = vmatpush.bf16.msra.mxu0 0
    %2716 = vmatpush.bf16.msra.mxu0 %v2578
    %2717 = vmatpush.bf16.msra.mxu0 %v2570
    %2718 = vmatmul.bf16.gmra.mxu0 %v2666
    %v2719 = vpop.f32.mrf.mxu0
    %v2720 = vadd.f32 %v2706, %v2719
    %v2721 = vpop.f32.mrf.mxu0
    %v2722 = vadd.f32 %v2708, %v2721
    %2723 = vdwg.mxu0
    %2724 = vmatpush.bf16.msra.mxu0 %v2563
    %2725 = vmatpush.bf16.msra.mxu0 %v2555
    %2726 = vmatpush.bf16.msra.mxu0 %v2547
    %2727 = vmatpush.bf16.msra.mxu0 %v2539
    %2728 = vmatpush.bf16.msra.mxu0 %v2531
    %2729 = vmatpush.bf16.msra.mxu0 %v2523
    %2730 = vmatpush.bf16.msra.mxu0 %v2515
    %2731 = vmatpush.bf16.msra.mxu0 %v2507
    %2732 = vmatmul.bf16.gmra.mxu0 %v2262
    %v2733 = vpop.f32.mrf.mxu0
    %v2734 = vadd.f32 0.0, %v2733
    %v2735 = vpop.f32.mrf.mxu0
    %v2736 = vadd.f32 0.0, %v2735
    %2737 = vdwg.mxu0
    %2738 = vmatpush.bf16.msra.mxu0 0
    %2739 = vmatpush.bf16.msra.mxu0 0
    %2740 = vmatpush.bf16.msra.mxu0 0
    %2741 = vmatpush.bf16.msra.mxu0 0
    %2742 = vmatpush.bf16.msra.mxu0 0
    %2743 = vmatpush.bf16.msra.mxu0 0
    %2744 = vmatpush.bf16.msra.mxu0 %v2579
    %2745 = vmatpush.bf16.msra.mxu0 %v2571
    %2746 = vmatmul.bf16.gmra.mxu0 %v2666
    %v2747 = vpop.f32.mrf.mxu0
    %v2748 = vadd.f32 %v2734, %v2747
    %v2749 = vpop.f32.mrf.mxu0
    %v2750 = vadd.f32 %v2736, %v2749
    %2751 = vdwg.mxu0
    %2752 = vmatpush.bf16.msra.mxu0 %v2564
    %2753 = vmatpush.bf16.msra.mxu0 %v2556
    %2754 = vmatpush.bf16.msra.mxu0 %v2548
    %2755 = vmatpush.bf16.msra.mxu0 %v2540
    %2756 = vmatpush.bf16.msra.mxu0 %v2532
    %2757 = vmatpush.bf16.msra.mxu0 %v2524
    %2758 = vmatpush.bf16.msra.mxu0 %v2516
    %2759 = vmatpush.bf16.msra.mxu0 %v2508
    %2760 = vmatmul.bf16.gmra.mxu0 %v2262
    %v2761 = vpop.f32.mrf.mxu0
    %v2762 = vadd.f32 0.0, %v2761
    %v2763 = vpop.f32.mrf.mxu0
    %v2764 = vadd.f32 0.0, %v2763
    %2765 = vdwg.mxu0
    %2766 = vmatpush.bf16.msra.mxu0 0
    %2767 = vmatpush.bf16.msra.mxu0 0
    %2768 = vmatpush.bf16.msra.mxu0 0
    %2769 = vmatpush.bf16.msra.mxu0 0
    %2770 = vmatpush.bf16.msra.mxu0 0
    %2771 = vmatpush.bf16.msra.mxu0 0
    %2772 = vmatpush.bf16.msra.mxu0 %v2580
    %2773 = vmatpush.bf16.msra.mxu0 %v2572
    %2774 = vmatmul.bf16.gmra.mxu0 %v2666
    %v2775 = vpop.f32.mrf.mxu0
    %v2776 = vadd.f32 %v2762, %v2775
    %v2777 = vpop.f32.mrf.mxu0
    %v2778 = vadd.f32 %v2764, %v2777
    %2779 = vdwg.mxu0
    %2780 = vmatpush.bf16.msra.mxu0 %v2565
    %2781 = vmatpush.bf16.msra.mxu0 %v2557
    %2782 = vmatpush.bf16.msra.mxu0 %v2549
    %2783 = vmatpush.bf16.msra.mxu0 %v2541
    %2784 = vmatpush.bf16.msra.mxu0 %v2533
    %2785 = vmatpush.bf16.msra.mxu0 %v2525
    %2786 = vmatpush.bf16.msra.mxu0 %v2517
    %2787 = vmatpush.bf16.msra.mxu0 %v2509
    %2788 = vmatmul.bf16.gmra.mxu0 %v2262
    %v2789 = vpop.f32.mrf.mxu0
    %v2790 = vadd.f32 0.0, %v2789
    %v2791 = vpop.f32.mrf.mxu0
    %v2792 = vadd.f32 0.0, %v2791
    %2793 = vdwg.mxu0
    %2794 = vmatpush.bf16.msra.mxu0 0
    %2795 = vmatpush.bf16.msra.mxu0 0
    %2796 = vmatpush.bf16.msra.mxu0 0
    %2797 = vmatpush.bf16.msra.mxu0 0
    %2798 = vmatpush.bf16.msra.mxu0 0
    %2799 = vmatpush.bf16.msra.mxu0 0
    %2800 = vmatpush.bf16.msra.mxu0 %v2581
    %2801 = vmatpush.bf16.msra.mxu0 %v2573
    %2802 = vmatmul.bf16.gmra.mxu0 %v2666
    %v2803 = vpop.f32.mrf.mxu0
    %v2804 = vadd.f32 %v2790, %v2803
    %v2805 = vpop.f32.mrf.mxu0
    %v2806 = vadd.f32 %v2792, %v2805
    %2807 = vdwg.mxu0
    %2808 = vmatpush.bf16.msra.mxu0 %v2566
    %2809 = vmatpush.bf16.msra.mxu0 %v2558
    %2810 = vmatpush.bf16.msra.mxu0 %v2550
    %2811 = vmatpush.bf16.msra.mxu0 %v2542
    %2812 = vmatpush.bf16.msra.mxu0 %v2534
    %2813 = vmatpush.bf16.msra.mxu0 %v2526
    %2814 = vmatpush.bf16.msra.mxu0 %v2518
    %2815 = vmatpush.bf16.msra.mxu0 %v2510
    %2816 = vmatmul.bf16.gmra.mxu0 %v2262
    %v2817 = vpop.f32.mrf.mxu0
    %v2818 = vadd.f32 0.0, %v2817
    %v2819 = vpop.f32.mrf.mxu0
    %v2820 = vadd.f32 0.0, %v2819
    %2821 = vdwg.mxu0
    %2822 = vmatpush.bf16.msra.mxu0 0
    %2823 = vmatpush.bf16.msra.mxu0 0
    %2824 = vmatpush.bf16.msra.mxu0 0
    %2825 = vmatpush.bf16.msra.mxu0 0
    %2826 = vmatpush.bf16.msra.mxu0 0
    %2827 = vmatpush.bf16.msra.mxu0 0
    %2828 = vmatpush.bf16.msra.mxu0 %v2582
    %2829 = vmatpush.bf16.msra.mxu0 %v2574
    %2830 = vmatmul.bf16.gmra.mxu0 %v2666
    %v2831 = vpop.f32.mrf.mxu0
    %v2832 = vadd.f32 %v2818, %v2831
    %v2833 = vpop.f32.mrf.mxu0
    %v2834 = vadd.f32 %v2820, %v2833
    %2835 = vdwg.mxu0
    %2836 = vmatpush.bf16.msra.mxu0 %v2567
    %2837 = vmatpush.bf16.msra.mxu0 %v2559
    %2838 = vmatpush.bf16.msra.mxu0 %v2551
    %2839 = vmatpush.bf16.msra.mxu0 %v2543
    %2840 = vmatpush.bf16.msra.mxu0 %v2535
    %2841 = vmatpush.bf16.msra.mxu0 %v2527
    %2842 = vmatpush.bf16.msra.mxu0 %v2519
    %2843 = vmatpush.bf16.msra.mxu0 %v2511
    %2844 = vmatmul.bf16.gmra.mxu0 %v2262
    %v2845 = vpop.f32.mrf.mxu0
    %v2846 = vadd.f32 0.0, %v2845
    %v2847 = vpop.f32.mrf.mxu0
    %v2848 = vadd.f32 0.0, %v2847
    %2849 = vdwg.mxu0
    %2850 = vmatpush.bf16.msra.mxu0 0
    %2851 = vmatpush.bf16.msra.mxu0 0
    %2852 = vmatpush.bf16.msra.mxu0 0
    %2853 = vmatpush.bf16.msra.mxu0 0
    %2854 = vmatpush.bf16.msra.mxu0 0
    %2855 = vmatpush.bf16.msra.mxu0 0
    %2856 = vmatpush.bf16.msra.mxu0 %v2583
    %2857 = vmatpush.bf16.msra.mxu0 %v2575
    %2858 = vmatmul.bf16.gmra.mxu0 %v2666
    %v2859 = vpop.f32.mrf.mxu0
    %v2860 = vadd.f32 %v2846, %v2859
    %v2861 = vpop.f32.mrf.mxu0
    %v2862 = vadd.f32 %v2848, %v2861
    %2863 = vdwg.mxu0
    %2864 = vmatpush.bf16.msra.mxu0 %v2568
    %2865 = vmatpush.bf16.msra.mxu0 %v2560
    %2866 = vmatpush.bf16.msra.mxu0 %v2552
    %2867 = vmatpush.bf16.msra.mxu0 %v2544
    %2868 = vmatpush.bf16.msra.mxu0 %v2536
    %2869 = vmatpush.bf16.msra.mxu0 %v2528
    %2870 = vmatpush.bf16.msra.mxu0 %v2520
    %2871 = vmatpush.bf16.msra.mxu0 %v2512
    %2872 = vmatmul.bf16.gmra.mxu0 %v2262
    %v2873 = vpop.f32.mrf.mxu0
    %v2874 = vadd.f32 0.0, %v2873
    %v2875 = vpop.f32.mrf.mxu0
    %v2876 = vadd.f32 0.0, %v2875
    %2877 = vdwg.mxu0
    %2878 = vmatpush.bf16.msra.mxu0 0
    %2879 = vmatpush.bf16.msra.mxu0 0
    %2880 = vmatpush.bf16.msra.mxu0 0
    %2881 = vmatpush.bf16.msra.mxu0 0
    %2882 = vmatpush.bf16.msra.mxu0 0
    %2883 = vmatpush.bf16.msra.mxu0 0
    %2884 = vmatpush.bf16.msra.mxu0 %v2584
    %2885 = vmatpush.bf16.msra.mxu0 %v2576
    %2886 = vmatmul.bf16.gmra.mxu0 %v2666
    %v2887 = vpop.f32.mrf.mxu0
    %v2888 = vadd.f32 %v2874, %v2887
    %v2889 = vpop.f32.mrf.mxu0
    %v2890 = vadd.f32 %v2876, %v2889
    %2891 = vdwg.mxu0
    %v2892 = vmul.f32 %v2692, %v328
    %v2893 = vmul.f32 %v2720, %v329
    %v2894 = vmul.f32 %v2748, %v330
    %v2895 = vmul.f32 %v2776, %v331
    %v2896 = vmul.f32 %v2804, %v332
    %v2897 = vmul.f32 %v2832, %v333
    %v2898 = vmul.f32 %v2860, %v334
    %v2899 = vmul.f32 %v2888, %v335
    %v2900 = vmul.f32 %v2694, %v328
    %v2901 = vmul.f32 %v2722, %v329
    %v2902 = vmul.f32 %v2750, %v330
    %v2903 = vmul.f32 %v2778, %v331
    %v2904 = vmul.f32 %v2806, %v332
    %v2905 = vmul.f32 %v2834, %v333
    %v2906 = vmul.f32 %v2862, %v334
    %v2907 = vmul.f32 %v2890, %v335
    %v2908 = vadd.f32 %v311, %v2892
    %v2909 = vadd.f32 %v312, %v2893
    %v2910 = vadd.f32 %v313, %v2894
    %v2911 = vadd.f32 %v314, %v2895
    %v2912 = vadd.f32 %v315, %v2896
    %v2913 = vadd.f32 %v316, %v2897
    %v2914 = vadd.f32 %v317, %v2898
    %v2915 = vadd.f32 %v318, %v2899
    %v2916 = vadd.f32 %v319, %v2900
    %v2917 = vadd.f32 %v320, %v2901
    %v2918 = vadd.f32 %v321, %v2902
    %v2919 = vadd.f32 %v322, %v2903
    %v2920 = vadd.f32 %v323, %v2904
    %v2921 = vadd.f32 %v324, %v2905
    %v2922 = vadd.f32 %v325, %v2906
    %v2923 = vadd.f32 %v326, %v2907
    %v2924 = vmax.f32 %v2908, 0.0
    %v2925 = vmax.f32 %v2909, 0.0
    %v2926 = vmax.f32 %v2910, 0.0
    %v2927 = vmax.f32 %v2911, 0.0
    %v2928 = vmax.f32 %v2912, 0.0
    %v2929 = vmax.f32 %v2913, 0.0
    %v2930 = vmax.f32 %v2914, 0.0
    %v2931 = vmax.f32 %v2915, 0.0
    %v2932 = vmax.f32 %v2916, 0.0
    %v2933 = vmax.f32 %v2917, 0.0
    %v2934 = vmax.f32 %v2918, 0.0
    %v2935 = vmax.f32 %v2919, 0.0
    %v2936 = vmax.f32 %v2920, 0.0
    %v2937 = vmax.f32 %v2921, 0.0
    %v2938 = vmax.f32 %v2922, 0.0
    %v2939 = vmax.f32 %v2923, 0.0
    %2940 = vrot.lane.b32.xlu0 %v2924, 23
    %v2941 = vpop.permute.xlu0 %2940
    %2942 = vrot.lane.b32.xlu0 %v2932, 23
    %v2943 = vpop.permute.xlu0 %2942
    %2944 = vrot.lane.b32.xlu0 %v2925, 23
    %v2945 = vpop.permute.xlu0 %2944
    %2946 = vrot.lane.b32.xlu0 %v2933, 23
    %v2947 = vpop.permute.xlu0 %2946
    %2948 = vrot.lane.b32.xlu0 %v2926, 23
    %v2949 = vpop.permute.xlu0 %2948
    %2950 = vrot.lane.b32.xlu0 %v2934, 23
    %v2951 = vpop.permute.xlu0 %2950
    %2952 = vrot.lane.b32.xlu0 %v2927, 23
    %v2953 = vpop.permute.xlu0 %2952
    %2954 = vrot.lane.b32.xlu0 %v2935, 23
    %v2955 = vpop.permute.xlu0 %2954
    %2956 = vrot.lane.b32.xlu0 %v2928, 23
    %v2957 = vpop.permute.xlu0 %2956
    %2958 = vrot.lane.b32.xlu0 %v2936, 23
    %v2959 = vpop.permute.xlu0 %2958
    %2960 = vrot.lane.b32.xlu0 %v2929, 23
    %v2961 = vpop.permute.xlu0 %2960
    %2962 = vrot.lane.b32.xlu0 %v2937, 23
    %v2963 = vpop.permute.xlu0 %2962
    %2964 = vrot.lane.b32.xlu0 %v2930, 23
    %v2965 = vpop.permute.xlu0 %2964
    %2966 = vrot.lane.b32.xlu0 %v2938, 23
    %v2967 = vpop.permute.xlu0 %2966
    %2968 = vrot.lane.b32.xlu0 %v2931, 23
    %v2969 = vpop.permute.xlu0 %2968
    %2970 = vrot.lane.b32.xlu0 %v2939, 23
    %v2971 = vpop.permute.xlu0 %2970
    %v2972 = vsel %vm390, %v2965, %v2969
    %v2973 = vsel %vm390, %v2967, %v2971
    %v2974 = vsel %vm390, %v2961, %v2965
    %v2975 = vsel %vm390, %v2963, %v2967
    %v2976 = vsel %vm390, %v2957, %v2961
    %v2977 = vsel %vm390, %v2959, %v2963
    %v2978 = vsel %vm390, %v2953, %v2957
    %v2979 = vsel %vm390, %v2955, %v2959
    %v2980 = vsel %vm390, %v2949, %v2953
    %v2981 = vsel %vm390, %v2951, %v2955
    %v2982 = vsel %vm390, %v2945, %v2949
    %v2983 = vsel %vm390, %v2947, %v2951
    %v2984 = vsel %vm390, %v2941, %v2945
    %v2985 = vsel %vm390, %v2943, %v2947
    %v2986 = vsel %vm390, %v2969, %v2941
    %v2987 = vsel %vm390, %v2971, %v2943
    %v2988 = vpack.c.bf16 %v2984, %v2986
    %v2989 = vpack.c.bf16 %v2980, %v2982
    %v2990 = vpack.c.bf16 %v2976, %v2978
    %v2991 = vpack.c.bf16 %v2972, %v2974
    %v2992 = vpack.c.bf16 %v2985, %v2987
    %v2993 = vpack.c.bf16 %v2981, %v2983
    %v2994 = vpack.c.bf16 %v2977, %v2979
    %v2995 = vpack.c.bf16 %v2973, %v2975
    %2996 = vst [vmem:[#allocation2] sm:$0xff] %v2988
    %2997 = vst [vmem:[#allocation2 + $0x8] sm:$0xff] %v2989
    %2998 = vst [vmem:[#allocation2 + $0x10] sm:$0xff] %v2990
    %2999 = vst [vmem:[#allocation2 + $0x18] sm:$0xff] %v2991
    %3000 = vst [vmem:[#allocation2 + $0x20] sm:$0xff] %v2992
    %3001 = vst [vmem:[#allocation2 + $0x28] sm:$0xff] %v2993
    %3002 = vst [vmem:[#allocation2 + $0x30] sm:$0xff] %v2994
    %3003 = vst [vmem:[#allocation2 + $0x38] sm:$0xff] %v2995
    %3004 = vrot.lane.b32.xlu0 %v2924, 22
    %v3005 = vpop.permute.xlu0 %3004
    %3006 = vrot.lane.b32.xlu0 %v2932, 22
    %v3007 = vpop.permute.xlu0 %3006
    %3008 = vrot.lane.b32.xlu0 %v2925, 22
    %v3009 = vpop.permute.xlu0 %3008
    %3010 = vrot.lane.b32.xlu0 %v2933, 22
    %v3011 = vpop.permute.xlu0 %3010
    %3012 = vrot.lane.b32.xlu0 %v2926, 22
    %v3013 = vpop.permute.xlu0 %3012
    %3014 = vrot.lane.b32.xlu0 %v2934, 22
    %v3015 = vpop.permute.xlu0 %3014
    %3016 = vrot.lane.b32.xlu0 %v2927, 22
    %v3017 = vpop.permute.xlu0 %3016
    %3018 = vrot.lane.b32.xlu0 %v2935, 22
    %v3019 = vpop.permute.xlu0 %3018
    %3020 = vrot.lane.b32.xlu0 %v2928, 22
    %v3021 = vpop.permute.xlu0 %3020
    %3022 = vrot.lane.b32.xlu0 %v2936, 22
    %v3023 = vpop.permute.xlu0 %3022
    %3024 = vrot.lane.b32.xlu0 %v2929, 22
    %v3025 = vpop.permute.xlu0 %3024
    %3026 = vrot.lane.b32.xlu0 %v2937, 22
    %v3027 = vpop.permute.xlu0 %3026
    %3028 = vrot.lane.b32.xlu0 %v2930, 22
    %v3029 = vpop.permute.xlu0 %3028
    %3030 = vrot.lane.b32.xlu0 %v2938, 22
    %v3031 = vpop.permute.xlu0 %3030
    %3032 = vrot.lane.b32.xlu0 %v2931, 22
    %v3033 = vpop.permute.xlu0 %3032
    %3034 = vrot.lane.b32.xlu0 %v2939, 22
    %v3035 = vpop.permute.xlu0 %3034
    %v3036 = vsel %vm455, %v3029, %v3033
    %v3037 = vsel %vm455, %v3031, %v3035
    %v3038 = vsel %vm455, %v3025, %v3029
    %v3039 = vsel %vm455, %v3027, %v3031
    %v3040 = vsel %vm455, %v3021, %v3025
    %v3041 = vsel %vm455, %v3023, %v3027
    %v3042 = vsel %vm455, %v3017, %v3021
    %v3043 = vsel %vm455, %v3019, %v3023
    %v3044 = vsel %vm455, %v3013, %v3017
    %v3045 = vsel %vm455, %v3015, %v3019
    %v3046 = vsel %vm455, %v3009, %v3013
    %v3047 = vsel %vm455, %v3011, %v3015
    %v3048 = vsel %vm455, %v3005, %v3009
    %v3049 = vsel %vm455, %v3007, %v3011
    %v3050 = vsel %vm455, %v3033, %v3005
    %v3051 = vsel %vm455, %v3035, %v3007
    %v3052 = vpack.c.bf16 %v3048, %v3050
    %v3053 = vpack.c.bf16 %v3044, %v3046
    %v3054 = vpack.c.bf16 %v3040, %v3042
    %v3055 = vpack.c.bf16 %v3036, %v3038
    %v3056 = vpack.c.bf16 %v3049, %v3051
    %v3057 = vpack.c.bf16 %v3045, %v3047
    %v3058 = vpack.c.bf16 %v3041, %v3043
    %v3059 = vpack.c.bf16 %v3037, %v3039
    %3060 = vst [vmem:[#allocation2 + $0x40] sm:$0xff] %v3052
    %3061 = vst [vmem:[#allocation2 + $0x48] sm:$0xff] %v3053
    %3062 = vst [vmem:[#allocation2 + $0x50] sm:$0xff] %v3054
    %3063 = vst [vmem:[#allocation2 + $0x58] sm:$0xff] %v3055
    %3064 = vst [vmem:[#allocation2 + $0x60] sm:$0xff] %v3056
    %3065 = vst [vmem:[#allocation2 + $0x68] sm:$0xff] %v3057
    %3066 = vst [vmem:[#allocation2 + $0x70] sm:$0xff] %v3058
    %3067 = vst [vmem:[#allocation2 + $0x78] sm:$0xff] %v3059
    %3068 = vrot.lane.b32.xlu0 %v2924, 21
    %v3069 = vpop.permute.xlu0 %3068
    %3070 = vrot.lane.b32.xlu0 %v2932, 21
    %v3071 = vpop.permute.xlu0 %3070
    %3072 = vrot.lane.b32.xlu0 %v2925, 21
    %v3073 = vpop.permute.xlu0 %3072
    %3074 = vrot.lane.b32.xlu0 %v2933, 21
    %v3075 = vpop.permute.xlu0 %3074
    %3076 = vrot.lane.b32.xlu0 %v2926, 21
    %v3077 = vpop.permute.xlu0 %3076
    %3078 = vrot.lane.b32.xlu0 %v2934, 21
    %v3079 = vpop.permute.xlu0 %3078
    %3080 = vrot.lane.b32.xlu0 %v2927, 21
    %v3081 = vpop.permute.xlu0 %3080
    %3082 = vrot.lane.b32.xlu0 %v2935, 21
    %v3083 = vpop.permute.xlu0 %3082
    %3084 = vrot.lane.b32.xlu0 %v2928, 21
    %v3085 = vpop.permute.xlu0 %3084
    %3086 = vrot.lane.b32.xlu0 %v2936, 21
    %v3087 = vpop.permute.xlu0 %3086
    %3088 = vrot.lane.b32.xlu0 %v2929, 21
    %v3089 = vpop.permute.xlu0 %3088
    %3090 = vrot.lane.b32.xlu0 %v2937, 21
    %v3091 = vpop.permute.xlu0 %3090
    %3092 = vrot.lane.b32.xlu0 %v2930, 21
    %v3093 = vpop.permute.xlu0 %3092
    %3094 = vrot.lane.b32.xlu0 %v2938, 21
    %v3095 = vpop.permute.xlu0 %3094
    %3096 = vrot.lane.b32.xlu0 %v2931, 21
    %v3097 = vpop.permute.xlu0 %3096
    %3098 = vrot.lane.b32.xlu0 %v2939, 21
    %v3099 = vpop.permute.xlu0 %3098
    %v3100 = vsel %vm520, %v3093, %v3097
    %v3101 = vsel %vm520, %v3095, %v3099
    %v3102 = vsel %vm520, %v3089, %v3093
    %v3103 = vsel %vm520, %v3091, %v3095
    %v3104 = vsel %vm520, %v3085, %v3089
    %v3105 = vsel %vm520, %v3087, %v3091
    %v3106 = vsel %vm520, %v3081, %v3085
    %v3107 = vsel %vm520, %v3083, %v3087
    %v3108 = vsel %vm520, %v3077, %v3081
    %v3109 = vsel %vm520, %v3079, %v3083
    %v3110 = vsel %vm520, %v3073, %v3077
    %v3111 = vsel %vm520, %v3075, %v3079
    %v3112 = vsel %vm520, %v3069, %v3073
    %v3113 = vsel %vm520, %v3071, %v3075
    %v3114 = vsel %vm520, %v3097, %v3069
    %v3115 = vsel %vm520, %v3099, %v3071
    %v3116 = vpack.c.bf16 %v3112, %v3114
    %v3117 = vpack.c.bf16 %v3108, %v3110
    %v3118 = vpack.c.bf16 %v3104, %v3106
    %v3119 = vpack.c.bf16 %v3100, %v3102
    %v3120 = vpack.c.bf16 %v3113, %v3115
    %v3121 = vpack.c.bf16 %v3109, %v3111
    %v3122 = vpack.c.bf16 %v3105, %v3107
    %v3123 = vpack.c.bf16 %v3101, %v3103
    %3124 = vst [vmem:[#allocation2 + $0x80] sm:$0xff] %v3116
    %3125 = vst [vmem:[#allocation2 + $0x88] sm:$0xff] %v3117
    %3126 = vst [vmem:[#allocation2 + $0x90] sm:$0xff] %v3118
    %3127 = vst [vmem:[#allocation2 + $0x98] sm:$0xff] %v3119
    %3128 = vst [vmem:[#allocation2 + $0xa0] sm:$0xff] %v3120
    %3129 = vst [vmem:[#allocation2 + $0xa8] sm:$0xff] %v3121
    %3130 = vst [vmem:[#allocation2 + $0xb0] sm:$0xff] %v3122
    %3131 = vst [vmem:[#allocation2 + $0xb8] sm:$0xff] %v3123
    %3132 = vrot.lane.b32.xlu0 %v2924, 1
    %v3133 = vpop.permute.xlu0 %3132
    %3134 = vrot.lane.b32.xlu0 %v2932, 1
    %v3135 = vpop.permute.xlu0 %3134
    %3136 = vrot.lane.b32.xlu0 %v2925, 1
    %v3137 = vpop.permute.xlu0 %3136
    %3138 = vrot.lane.b32.xlu0 %v2933, 1
    %v3139 = vpop.permute.xlu0 %3138
    %3140 = vrot.lane.b32.xlu0 %v2926, 1
    %v3141 = vpop.permute.xlu0 %3140
    %3142 = vrot.lane.b32.xlu0 %v2934, 1
    %v3143 = vpop.permute.xlu0 %3142
    %3144 = vrot.lane.b32.xlu0 %v2927, 1
    %v3145 = vpop.permute.xlu0 %3144
    %3146 = vrot.lane.b32.xlu0 %v2935, 1
    %v3147 = vpop.permute.xlu0 %3146
    %3148 = vrot.lane.b32.xlu0 %v2928, 1
    %v3149 = vpop.permute.xlu0 %3148
    %3150 = vrot.lane.b32.xlu0 %v2936, 1
    %v3151 = vpop.permute.xlu0 %3150
    %3152 = vrot.lane.b32.xlu0 %v2929, 1
    %v3153 = vpop.permute.xlu0 %3152
    %3154 = vrot.lane.b32.xlu0 %v2937, 1
    %v3155 = vpop.permute.xlu0 %3154
    %3156 = vrot.lane.b32.xlu0 %v2930, 1
    %v3157 = vpop.permute.xlu0 %3156
    %3158 = vrot.lane.b32.xlu0 %v2938, 1
    %v3159 = vpop.permute.xlu0 %3158
    %3160 = vrot.lane.b32.xlu0 %v2931, 1
    %v3161 = vpop.permute.xlu0 %3160
    %3162 = vrot.lane.b32.xlu0 %v2939, 1
    %v3163 = vpop.permute.xlu0 %3162
    %v3164 = vsel %vm585, %v3157, %v3161
    %v3165 = vsel %vm585, %v3159, %v3163
    %v3166 = vsel %vm585, %v3153, %v3157
    %v3167 = vsel %vm585, %v3155, %v3159
    %v3168 = vsel %vm585, %v3149, %v3153
    %v3169 = vsel %vm585, %v3151, %v3155
    %v3170 = vsel %vm585, %v3145, %v3149
    %v3171 = vsel %vm585, %v3147, %v3151
    %v3172 = vsel %vm585, %v3141, %v3145
    %v3173 = vsel %vm585, %v3143, %v3147
    %v3174 = vsel %vm585, %v3137, %v3141
    %v3175 = vsel %vm585, %v3139, %v3143
    %v3176 = vsel %vm585, %v3133, %v3137
    %v3177 = vsel %vm585, %v3135, %v3139
    %v3178 = vsel %vm585, %v3161, %v3133
    %v3179 = vsel %vm585, %v3163, %v3135
    %v3180 = vpack.c.bf16 %v3176, %v3178
    %v3181 = vpack.c.bf16 %v3172, %v3174
    %v3182 = vpack.c.bf16 %v3168, %v3170
    %v3183 = vpack.c.bf16 %v3164, %v3166
    %v3184 = vpack.c.bf16 %v3177, %v3179
    %v3185 = vpack.c.bf16 %v3173, %v3175
    %v3186 = vpack.c.bf16 %v3169, %v3171
    %v3187 = vpack.c.bf16 %v3165, %v3167
    %3188 = vst [vmem:[#allocation2 + $0xc0] sm:$0xff] %v3180
    %3189 = vst [vmem:[#allocation2 + $0xc8] sm:$0xff] %v3181
    %3190 = vst [vmem:[#allocation2 + $0xd0] sm:$0xff] %v3182
    %3191 = vst [vmem:[#allocation2 + $0xd8] sm:$0xff] %v3183
    %3192 = vst [vmem:[#allocation2 + $0xe0] sm:$0xff] %v3184
    %3193 = vst [vmem:[#allocation2 + $0xe8] sm:$0xff] %v3185
    %3194 = vst [vmem:[#allocation2 + $0xf0] sm:$0xff] %v3186
    %3195 = vst [vmem:[#allocation2 + $0xf8] sm:$0xff] %v3187
    %v3196 = vpack.c.bf16 %v2925, %v2924
    %v3197 = vpack.c.bf16 %v2927, %v2926
    %v3198 = vpack.c.bf16 %v2929, %v2928
    %v3199 = vpack.c.bf16 %v2931, %v2930
    %v3200 = vpack.c.bf16 %v2933, %v2932
    %v3201 = vpack.c.bf16 %v2935, %v2934
    %v3202 = vpack.c.bf16 %v2937, %v2936
    %v3203 = vpack.c.bf16 %v2939, %v2938
    %3204 = vst [vmem:[#allocation2 + $0x100] sm:$0xff] %v3196
    %3205 = vst [vmem:[#allocation2 + $0x108] sm:$0xff] %v3197
    %3206 = vst [vmem:[#allocation2 + $0x110] sm:$0xff] %v3198
    %3207 = vst [vmem:[#allocation2 + $0x118] sm:$0xff] %v3199
    %3208 = vst [vmem:[#allocation2 + $0x120] sm:$0xff] %v3200
    %3209 = vst [vmem:[#allocation2 + $0x128] sm:$0xff] %v3201
    %3210 = vst [vmem:[#allocation2 + $0x130] sm:$0xff] %v3202
    %3211 = vst [vmem:[#allocation2 + $0x138] sm:$0xff] %v3203
    %3212 = vrot.lane.b32.xlu0 %v2924, 127
    %v3213 = vpop.permute.xlu0 %3212
    %3214 = vrot.lane.b32.xlu0 %v2932, 127
    %v3215 = vpop.permute.xlu0 %3214
    %3216 = vrot.lane.b32.xlu0 %v2925, 127
    %v3217 = vpop.permute.xlu0 %3216
    %3218 = vrot.lane.b32.xlu0 %v2933, 127
    %v3219 = vpop.permute.xlu0 %3218
    %3220 = vrot.lane.b32.xlu0 %v2926, 127
    %v3221 = vpop.permute.xlu0 %3220
    %3222 = vrot.lane.b32.xlu0 %v2934, 127
    %v3223 = vpop.permute.xlu0 %3222
    %3224 = vrot.lane.b32.xlu0 %v2927, 127
    %v3225 = vpop.permute.xlu0 %3224
    %3226 = vrot.lane.b32.xlu0 %v2935, 127
    %v3227 = vpop.permute.xlu0 %3226
    %3228 = vrot.lane.b32.xlu0 %v2928, 127
    %v3229 = vpop.permute.xlu0 %3228
    %3230 = vrot.lane.b32.xlu0 %v2936, 127
    %v3231 = vpop.permute.xlu0 %3230
    %3232 = vrot.lane.b32.xlu0 %v2929, 127
    %v3233 = vpop.permute.xlu0 %3232
    %3234 = vrot.lane.b32.xlu0 %v2937, 127
    %v3235 = vpop.permute.xlu0 %3234
    %3236 = vrot.lane.b32.xlu0 %v2930, 127
    %v3237 = vpop.permute.xlu0 %3236
    %3238 = vrot.lane.b32.xlu0 %v2938, 127
    %v3239 = vpop.permute.xlu0 %3238
    %3240 = vrot.lane.b32.xlu0 %v2931, 127
    %v3241 = vpop.permute.xlu0 %3240
    %3242 = vrot.lane.b32.xlu0 %v2939, 127
    %v3243 = vpop.permute.xlu0 %3242
    %v3244 = vsel %vm666, %v3237, %v3241
    %v3245 = vsel %vm666, %v3239, %v3243
    %v3246 = vsel %vm666, %v3233, %v3237
    %v3247 = vsel %vm666, %v3235, %v3239
    %v3248 = vsel %vm666, %v3229, %v3233
    %v3249 = vsel %vm666, %v3231, %v3235
    %v3250 = vsel %vm666, %v3225, %v3229
    %v3251 = vsel %vm666, %v3227, %v3231
    %v3252 = vsel %vm666, %v3221, %v3225
    %v3253 = vsel %vm666, %v3223, %v3227
    %v3254 = vsel %vm666, %v3217, %v3221
    %v3255 = vsel %vm666, %v3219, %v3223
    %v3256 = vsel %vm666, %v3213, %v3217
    %v3257 = vsel %vm666, %v3215, %v3219
    %v3258 = vsel %vm666, %v3241, %v3213
    %v3259 = vsel %vm666, %v3243, %v3215
    %v3260 = vpack.c.bf16 %v3254, %v3256
    %v3261 = vpack.c.bf16 %v3250, %v3252
    %v3262 = vpack.c.bf16 %v3246, %v3248
    %v3263 = vpack.c.bf16 %v3258, %v3244
    %v3264 = vpack.c.bf16 %v3255, %v3257
    %v3265 = vpack.c.bf16 %v3251, %v3253
    %v3266 = vpack.c.bf16 %v3247, %v3249
    %v3267 = vpack.c.bf16 %v3259, %v3245
    %3268 = vst [vmem:[#allocation2 + $0x140] sm:$0xff] %v3260
    %3269 = vst [vmem:[#allocation2 + $0x148] sm:$0xff] %v3261
    %3270 = vst [vmem:[#allocation2 + $0x150] sm:$0xff] %v3262
    %3271 = vst [vmem:[#allocation2 + $0x158] sm:$0xff] %v3263
    %3272 = vst [vmem:[#allocation2 + $0x160] sm:$0xff] %v3264
    %3273 = vst [vmem:[#allocation2 + $0x168] sm:$0xff] %v3265
    %3274 = vst [vmem:[#allocation2 + $0x170] sm:$0xff] %v3266
    %3275 = vst [vmem:[#allocation2 + $0x178] sm:$0xff] %v3267
    %3276 = vrot.lane.b32.xlu0 %v2924, 107
    %v3277 = vpop.permute.xlu0 %3276
    %3278 = vrot.lane.b32.xlu0 %v2932, 107
    %v3279 = vpop.permute.xlu0 %3278
    %3280 = vrot.lane.b32.xlu0 %v2925, 107
    %v3281 = vpop.permute.xlu0 %3280
    %3282 = vrot.lane.b32.xlu0 %v2933, 107
    %v3283 = vpop.permute.xlu0 %3282
    %3284 = vrot.lane.b32.xlu0 %v2926, 107
    %v3285 = vpop.permute.xlu0 %3284
    %3286 = vrot.lane.b32.xlu0 %v2934, 107
    %v3287 = vpop.permute.xlu0 %3286
    %3288 = vrot.lane.b32.xlu0 %v2927, 107
    %v3289 = vpop.permute.xlu0 %3288
    %3290 = vrot.lane.b32.xlu0 %v2935, 107
    %v3291 = vpop.permute.xlu0 %3290
    %3292 = vrot.lane.b32.xlu0 %v2928, 107
    %v3293 = vpop.permute.xlu0 %3292
    %3294 = vrot.lane.b32.xlu0 %v2936, 107
    %v3295 = vpop.permute.xlu0 %3294
    %3296 = vrot.lane.b32.xlu0 %v2929, 107
    %v3297 = vpop.permute.xlu0 %3296
    %3298 = vrot.lane.b32.xlu0 %v2937, 107
    %v3299 = vpop.permute.xlu0 %3298
    %3300 = vrot.lane.b32.xlu0 %v2930, 107
    %v3301 = vpop.permute.xlu0 %3300
    %3302 = vrot.lane.b32.xlu0 %v2938, 107
    %v3303 = vpop.permute.xlu0 %3302
    %3304 = vrot.lane.b32.xlu0 %v2931, 107
    %v3305 = vpop.permute.xlu0 %3304
    %3306 = vrot.lane.b32.xlu0 %v2939, 107
    %v3307 = vpop.permute.xlu0 %3306
    %v3308 = vsel %vm731, %v3301, %v3305
    %v3309 = vsel %vm731, %v3303, %v3307
    %v3310 = vsel %vm731, %v3297, %v3301
    %v3311 = vsel %vm731, %v3299, %v3303
    %v3312 = vsel %vm731, %v3293, %v3297
    %v3313 = vsel %vm731, %v3295, %v3299
    %v3314 = vsel %vm731, %v3289, %v3293
    %v3315 = vsel %vm731, %v3291, %v3295
    %v3316 = vsel %vm731, %v3285, %v3289
    %v3317 = vsel %vm731, %v3287, %v3291
    %v3318 = vsel %vm731, %v3281, %v3285
    %v3319 = vsel %vm731, %v3283, %v3287
    %v3320 = vsel %vm731, %v3277, %v3281
    %v3321 = vsel %vm731, %v3279, %v3283
    %v3322 = vsel %vm731, %v3305, %v3277
    %v3323 = vsel %vm731, %v3307, %v3279
    %v3324 = vpack.c.bf16 %v3318, %v3320
    %v3325 = vpack.c.bf16 %v3314, %v3316
    %v3326 = vpack.c.bf16 %v3310, %v3312
    %v3327 = vpack.c.bf16 %v3322, %v3308
    %v3328 = vpack.c.bf16 %v3319, %v3321
    %v3329 = vpack.c.bf16 %v3315, %v3317
    %v3330 = vpack.c.bf16 %v3311, %v3313
    %v3331 = vpack.c.bf16 %v3323, %v3309
    %3332 = vst [vmem:[#allocation2 + $0x180] sm:$0xff] %v3324
    %3333 = vst [vmem:[#allocation2 + $0x188] sm:$0xff] %v3325
    %3334 = vst [vmem:[#allocation2 + $0x190] sm:$0xff] %v3326
    %3335 = vst [vmem:[#allocation2 + $0x198] sm:$0xff] %v3327
    %3336 = vst [vmem:[#allocation2 + $0x1a0] sm:$0xff] %v3328
    %3337 = vst [vmem:[#allocation2 + $0x1a8] sm:$0xff] %v3329
    %3338 = vst [vmem:[#allocation2 + $0x1b0] sm:$0xff] %v3330
    %3339 = vst [vmem:[#allocation2 + $0x1b8] sm:$0xff] %v3331
    %3340 = vrot.lane.b32.xlu0 %v2924, 106
    %v3341 = vpop.permute.xlu0 %3340
    %3342 = vrot.lane.b32.xlu0 %v2932, 106
    %v3343 = vpop.permute.xlu0 %3342
    %3344 = vrot.lane.b32.xlu0 %v2925, 106
    %v3345 = vpop.permute.xlu0 %3344
    %3346 = vrot.lane.b32.xlu0 %v2933, 106
    %v3347 = vpop.permute.xlu0 %3346
    %3348 = vrot.lane.b32.xlu0 %v2926, 106
    %v3349 = vpop.permute.xlu0 %3348
    %3350 = vrot.lane.b32.xlu0 %v2934, 106
    %v3351 = vpop.permute.xlu0 %3350
    %3352 = vrot.lane.b32.xlu0 %v2927, 106
    %v3353 = vpop.permute.xlu0 %3352
    %3354 = vrot.lane.b32.xlu0 %v2935, 106
    %v3355 = vpop.permute.xlu0 %3354
    %3356 = vrot.lane.b32.xlu0 %v2928, 106
    %v3357 = vpop.permute.xlu0 %3356
    %3358 = vrot.lane.b32.xlu0 %v2936, 106
    %v3359 = vpop.permute.xlu0 %3358
    %3360 = vrot.lane.b32.xlu0 %v2929, 106
    %v3361 = vpop.permute.xlu0 %3360
    %3362 = vrot.lane.b32.xlu0 %v2937, 106
    %v3363 = vpop.permute.xlu0 %3362
    %3364 = vrot.lane.b32.xlu0 %v2930, 106
    %v3365 = vpop.permute.xlu0 %3364
    %3366 = vrot.lane.b32.xlu0 %v2938, 106
    %v3367 = vpop.permute.xlu0 %3366
    %3368 = vrot.lane.b32.xlu0 %v2931, 106
    %v3369 = vpop.permute.xlu0 %3368
    %3370 = vrot.lane.b32.xlu0 %v2939, 106
    %v3371 = vpop.permute.xlu0 %3370
    %v3372 = vsel %vm796, %v3365, %v3369
    %v3373 = vsel %vm796, %v3367, %v3371
    %v3374 = vsel %vm796, %v3361, %v3365
    %v3375 = vsel %vm796, %v3363, %v3367
    %v3376 = vsel %vm796, %v3357, %v3361
    %v3377 = vsel %vm796, %v3359, %v3363
    %v3378 = vsel %vm796, %v3353, %v3357
    %v3379 = vsel %vm796, %v3355, %v3359
    %v3380 = vsel %vm796, %v3349, %v3353
    %v3381 = vsel %vm796, %v3351, %v3355
    %v3382 = vsel %vm796, %v3345, %v3349
    %v3383 = vsel %vm796, %v3347, %v3351
    %v3384 = vsel %vm796, %v3341, %v3345
    %v3385 = vsel %vm796, %v3343, %v3347
    %v3386 = vsel %vm796, %v3369, %v3341
    %v3387 = vsel %vm796, %v3371, %v3343
    %v3388 = vpack.c.bf16 %v3382, %v3384
    %v3389 = vpack.c.bf16 %v3378, %v3380
    %v3390 = vpack.c.bf16 %v3374, %v3376
    %v3391 = vpack.c.bf16 %v3386, %v3372
    %v3392 = vpack.c.bf16 %v3383, %v3385
    %v3393 = vpack.c.bf16 %v3379, %v3381
    %v3394 = vpack.c.bf16 %v3375, %v3377
    %v3395 = vpack.c.bf16 %v3387, %v3373
    %3396 = vst [vmem:[#allocation2 + $0x1c0] sm:$0xff] %v3388
    %3397 = vst [vmem:[#allocation2 + $0x1c8] sm:$0xff] %v3389
    %3398 = vst [vmem:[#allocation2 + $0x1d0] sm:$0xff] %v3390
    %3399 = vst [vmem:[#allocation2 + $0x1d8] sm:$0xff] %v3391
    %3400 = vst [vmem:[#allocation2 + $0x1e0] sm:$0xff] %v3392
    %3401 = vst [vmem:[#allocation2 + $0x1e8] sm:$0xff] %v3393
    %3402 = vst [vmem:[#allocation2 + $0x1f0] sm:$0xff] %v3394
    %3403 = vst [vmem:[#allocation2 + $0x1f8] sm:$0xff] %v3395
    %3404 = vrot.lane.b32.xlu0 %v2924, 105
    %v3405 = vpop.permute.xlu0 %3404
    %3406 = vrot.lane.b32.xlu0 %v2932, 105
    %v3407 = vpop.permute.xlu0 %3406
    %3408 = vrot.lane.b32.xlu0 %v2925, 105
    %v3409 = vpop.permute.xlu0 %3408
    %3410 = vrot.lane.b32.xlu0 %v2933, 105
    %v3411 = vpop.permute.xlu0 %3410
    %3412 = vrot.lane.b32.xlu0 %v2926, 105
    %v3413 = vpop.permute.xlu0 %3412
    %3414 = vrot.lane.b32.xlu0 %v2934, 105
    %v3415 = vpop.permute.xlu0 %3414
    %3416 = vrot.lane.b32.xlu0 %v2927, 105
    %v3417 = vpop.permute.xlu0 %3416
    %3418 = vrot.lane.b32.xlu0 %v2935, 105
    %v3419 = vpop.permute.xlu0 %3418
    %3420 = vrot.lane.b32.xlu0 %v2928, 105
    %v3421 = vpop.permute.xlu0 %3420
    %3422 = vrot.lane.b32.xlu0 %v2936, 105
    %v3423 = vpop.permute.xlu0 %3422
    %3424 = vrot.lane.b32.xlu0 %v2929, 105
    %v3425 = vpop.permute.xlu0 %3424
    %3426 = vrot.lane.b32.xlu0 %v2937, 105
    %v3427 = vpop.permute.xlu0 %3426
    %3428 = vrot.lane.b32.xlu0 %v2930, 105
    %v3429 = vpop.permute.xlu0 %3428
    %3430 = vrot.lane.b32.xlu0 %v2938, 105
    %v3431 = vpop.permute.xlu0 %3430
    %3432 = vrot.lane.b32.xlu0 %v2931, 105
    %v3433 = vpop.permute.xlu0 %3432
    %3434 = vrot.lane.b32.xlu0 %v2939, 105
    %v3435 = vpop.permute.xlu0 %3434
    %v3436 = vsel %vm861, %v3429, %v3433
    %v3437 = vsel %vm861, %v3431, %v3435
    %v3438 = vsel %vm861, %v3425, %v3429
    %v3439 = vsel %vm861, %v3427, %v3431
    %v3440 = vsel %vm861, %v3421, %v3425
    %v3441 = vsel %vm861, %v3423, %v3427
    %v3442 = vsel %vm861, %v3417, %v3421
    %v3443 = vsel %vm861, %v3419, %v3423
    %v3444 = vsel %vm861, %v3413, %v3417
    %v3445 = vsel %vm861, %v3415, %v3419
    %v3446 = vsel %vm861, %v3409, %v3413
    %v3447 = vsel %vm861, %v3411, %v3415
    %v3448 = vsel %vm861, %v3405, %v3409
    %v3449 = vsel %vm861, %v3407, %v3411
    %v3450 = vsel %vm861, %v3433, %v3405
    %v3451 = vsel %vm861, %v3435, %v3407
    %v3452 = vpack.c.bf16 %v3446, %v3448
    %v3453 = vpack.c.bf16 %v3442, %v3444
    %v3454 = vpack.c.bf16 %v3438, %v3440
    %v3455 = vpack.c.bf16 %v3450, %v3436
    %v3456 = vpack.c.bf16 %v3447, %v3449
    %v3457 = vpack.c.bf16 %v3443, %v3445
    %v3458 = vpack.c.bf16 %v3439, %v3441
    %v3459 = vpack.c.bf16 %v3451, %v3437
    %3460 = vst [vmem:[#allocation2 + $0x200] sm:$0xff] %v3452
    %3461 = vst [vmem:[#allocation2 + $0x208] sm:$0xff] %v3453
    %3462 = vst [vmem:[#allocation2 + $0x210] sm:$0xff] %v3454
    %3463 = vst [vmem:[#allocation2 + $0x218] sm:$0xff] %v3455
    %3464 = vst [vmem:[#allocation2 + $0x220] sm:$0xff] %v3456
    %3465 = vst [vmem:[#allocation2 + $0x228] sm:$0xff] %v3457
    %3466 = vst [vmem:[#allocation2 + $0x230] sm:$0xff] %v3458
    %3467 = vst [vmem:[#allocation2 + $0x238] sm:$0xff] %v3459
    %s3468 = scalar_lea.vmem [#allocation9], 32
    %v3469 = vld [vmem:[%s3468] sm:$0xff]
    %v3470 = vld [vmem:[%s3468 + $0x8] sm:$0xff]
    %v3471 = vld [vmem:[#allocation2] sm:$0xff]
    %v3472 = vld [vmem:[#allocation2 + $0x8] sm:$0xff]
    %v3473 = vld [vmem:[#allocation2 + $0x10] sm:$0xff]
    %v3474 = vld [vmem:[#allocation2 + $0x18] sm:$0xff]
    %v3475 = vld [vmem:[#allocation2 + $0x20] sm:$0xff]
    %v3476 = vld [vmem:[#allocation2 + $0x28] sm:$0xff]
    %v3477 = vld [vmem:[#allocation2 + $0x30] sm:$0xff]
    %v3478 = vld [vmem:[#allocation2 + $0x38] sm:$0xff]
    %v3479 = vld [vmem:[#allocation2 + $0x40] sm:$0xff]
    %v3480 = vld [vmem:[#allocation2 + $0x48] sm:$0xff]
    %v3481 = vld [vmem:[#allocation2 + $0x50] sm:$0xff]
    %v3482 = vld [vmem:[#allocation2 + $0x58] sm:$0xff]
    %v3483 = vld [vmem:[#allocation2 + $0x60] sm:$0xff]
    %v3484 = vld [vmem:[#allocation2 + $0x68] sm:$0xff]
    %v3485 = vld [vmem:[#allocation2 + $0x70] sm:$0xff]
    %v3486 = vld [vmem:[#allocation2 + $0x78] sm:$0xff]
    %v3487 = vld [vmem:[#allocation2 + $0x80] sm:$0xff]
    %v3488 = vld [vmem:[#allocation2 + $0x88] sm:$0xff]
    %v3489 = vld [vmem:[#allocation2 + $0x90] sm:$0xff]
    %v3490 = vld [vmem:[#allocation2 + $0x98] sm:$0xff]
    %v3491 = vld [vmem:[#allocation2 + $0xa0] sm:$0xff]
    %v3492 = vld [vmem:[#allocation2 + $0xa8] sm:$0xff]
    %v3493 = vld [vmem:[#allocation2 + $0xb0] sm:$0xff]
    %v3494 = vld [vmem:[#allocation2 + $0xb8] sm:$0xff]
    %v3495 = vld [vmem:[#allocation2 + $0xc0] sm:$0xff]
    %v3496 = vld [vmem:[#allocation2 + $0xc8] sm:$0xff]
    %v3497 = vld [vmem:[#allocation2 + $0xd0] sm:$0xff]
    %v3498 = vld [vmem:[#allocation2 + $0xd8] sm:$0xff]
    %v3499 = vld [vmem:[#allocation2 + $0xe0] sm:$0xff]
    %v3500 = vld [vmem:[#allocation2 + $0xe8] sm:$0xff]
    %v3501 = vld [vmem:[#allocation2 + $0xf0] sm:$0xff]
    %v3502 = vld [vmem:[#allocation2 + $0xf8] sm:$0xff]
    %v3503 = vld [vmem:[#allocation2 + $0x100] sm:$0xff]
    %v3504 = vld [vmem:[#allocation2 + $0x108] sm:$0xff]
    %v3505 = vld [vmem:[#allocation2 + $0x110] sm:$0xff]
    %v3506 = vld [vmem:[#allocation2 + $0x118] sm:$0xff]
    %v3507 = vld [vmem:[#allocation2 + $0x120] sm:$0xff]
    %v3508 = vld [vmem:[#allocation2 + $0x128] sm:$0xff]
    %v3509 = vld [vmem:[#allocation2 + $0x130] sm:$0xff]
    %v3510 = vld [vmem:[#allocation2 + $0x138] sm:$0xff]
    %v3511 = vld [vmem:[#allocation2 + $0x140] sm:$0xff]
    %v3512 = vld [vmem:[#allocation2 + $0x148] sm:$0xff]
    %v3513 = vld [vmem:[#allocation2 + $0x150] sm:$0xff]
    %v3514 = vld [vmem:[#allocation2 + $0x158] sm:$0xff]
    %v3515 = vld [vmem:[#allocation2 + $0x160] sm:$0xff]
    %v3516 = vld [vmem:[#allocation2 + $0x168] sm:$0xff]
    %v3517 = vld [vmem:[#allocation2 + $0x170] sm:$0xff]
    %v3518 = vld [vmem:[#allocation2 + $0x178] sm:$0xff]
    %v3519 = vld [vmem:[#allocation2 + $0x180] sm:$0xff]
    %v3520 = vld [vmem:[#allocation2 + $0x188] sm:$0xff]
    %v3521 = vld [vmem:[#allocation2 + $0x190] sm:$0xff]
    %v3522 = vld [vmem:[#allocation2 + $0x198] sm:$0xff]
    %v3523 = vld [vmem:[#allocation2 + $0x1a0] sm:$0xff]
    %v3524 = vld [vmem:[#allocation2 + $0x1a8] sm:$0xff]
    %v3525 = vld [vmem:[#allocation2 + $0x1b0] sm:$0xff]
    %v3526 = vld [vmem:[#allocation2 + $0x1b8] sm:$0xff]
    %v3527 = vld [vmem:[#allocation2 + $0x1c0] sm:$0xff]
    %v3528 = vld [vmem:[#allocation2 + $0x1c8] sm:$0xff]
    %v3529 = vld [vmem:[#allocation2 + $0x1d0] sm:$0xff]
    %v3530 = vld [vmem:[#allocation2 + $0x1d8] sm:$0xff]
    %v3531 = vld [vmem:[#allocation2 + $0x1e0] sm:$0xff]
    %v3532 = vld [vmem:[#allocation2 + $0x1e8] sm:$0xff]
    %v3533 = vld [vmem:[#allocation2 + $0x1f0] sm:$0xff]
    %v3534 = vld [vmem:[#allocation2 + $0x1f8] sm:$0xff]
    %v3535 = vld [vmem:[#allocation2 + $0x200] sm:$0xff]
    %v3536 = vld [vmem:[#allocation2 + $0x208] sm:$0xff]
    %v3537 = vld [vmem:[#allocation2 + $0x210] sm:$0xff]
    %v3538 = vld [vmem:[#allocation2 + $0x218] sm:$0xff]
    %v3539 = vld [vmem:[#allocation2 + $0x220] sm:$0xff]
    %v3540 = vld [vmem:[#allocation2 + $0x228] sm:$0xff]
    %v3541 = vld [vmem:[#allocation2 + $0x230] sm:$0xff]
    %v3542 = vld [vmem:[#allocation2 + $0x238] sm:$0xff]
    %v3543 = vld [vmem:[#allocation2 + $0x240] sm:$0xff]
    %v3544 = vld [vmem:[#allocation2 + $0x248] sm:$0xff]
    %v3545 = vld [vmem:[#allocation2 + $0x250] sm:$0xff]
    %v3546 = vld [vmem:[#allocation2 + $0x258] sm:$0xff]
    %v3547 = vld [vmem:[#allocation2 + $0x260] sm:$0xff]
    %v3548 = vld [vmem:[#allocation2 + $0x268] sm:$0xff]
    %v3549 = vld [vmem:[#allocation2 + $0x270] sm:$0xff]
    %v3550 = vld [vmem:[#allocation2 + $0x278] sm:$0xff]
    %v3553 = vunpack.c.l.b16 %v3469
    %v3554 = vunpack.c.h.b16 %v3469
    %v3555 = vunpack.c.l.b16 %v3470
    %v3556 = vunpack.c.h.b16 %v3470
    %v3557 = vpack.c.b16 %v3555, %v3553
    %v3558 = vpack.c.b16 %v3556, %v3554
    %v3640 = vunpack.c.l.b16 %v3471
    %v3641 = vunpack.c.h.b16 %v3471
    %v3642 = vunpack.c.l.b16 %v3472
    %v3643 = vunpack.c.h.b16 %v3472
    %v3644 = vunpack.c.l.b16 %v3473
    %v3645 = vunpack.c.h.b16 %v3473
    %v3646 = vunpack.c.l.b16 %v3474
    %v3647 = vunpack.c.h.b16 %v3474
    %v3648 = vunpack.c.l.b16 %v3475
    %v3649 = vunpack.c.h.b16 %v3475
    %v3650 = vunpack.c.l.b16 %v3476
    %v3651 = vunpack.c.h.b16 %v3476
    %v3652 = vunpack.c.l.b16 %v3477
    %v3653 = vunpack.c.h.b16 %v3477
    %v3654 = vunpack.c.l.b16 %v3478
    %v3655 = vunpack.c.h.b16 %v3478
    %v3656 = vunpack.c.l.b16 %v3479
    %v3657 = vunpack.c.h.b16 %v3479
    %v3658 = vunpack.c.l.b16 %v3480
    %v3659 = vunpack.c.h.b16 %v3480
    %v3660 = vunpack.c.l.b16 %v3481
    %v3661 = vunpack.c.h.b16 %v3481
    %v3662 = vunpack.c.l.b16 %v3482
    %v3663 = vunpack.c.h.b16 %v3482
    %v3664 = vunpack.c.l.b16 %v3483
    %v3665 = vunpack.c.h.b16 %v3483
    %v3666 = vunpack.c.l.b16 %v3484
    %v3667 = vunpack.c.h.b16 %v3484
    %v3668 = vunpack.c.l.b16 %v3485
    %v3669 = vunpack.c.h.b16 %v3485
    %v3670 = vunpack.c.l.b16 %v3486
    %v3671 = vunpack.c.h.b16 %v3486
    %v3672 = vunpack.c.l.b16 %v3487
    %v3673 = vunpack.c.h.b16 %v3487
    %v3674 = vunpack.c.l.b16 %v3488
    %v3675 = vunpack.c.h.b16 %v3488
    %v3676 = vunpack.c.l.b16 %v3489
    %v3677 = vunpack.c.h.b16 %v3489
    %v3678 = vunpack.c.l.b16 %v3490
    %v3679 = vunpack.c.h.b16 %v3490
    %v3680 = vunpack.c.l.b16 %v3491
    %v3681 = vunpack.c.h.b16 %v3491
    %v3682 = vunpack.c.l.b16 %v3492
    %v3683 = vunpack.c.h.b16 %v3492
    %v3684 = vunpack.c.l.b16 %v3493
    %v3685 = vunpack.c.h.b16 %v3493
    %v3686 = vunpack.c.l.b16 %v3494
    %v3687 = vunpack.c.h.b16 %v3494
    %v3688 = vunpack.c.l.b16 %v3495
    %v3689 = vunpack.c.h.b16 %v3495
    %v3690 = vunpack.c.l.b16 %v3496
    %v3691 = vunpack.c.h.b16 %v3496
    %v3692 = vunpack.c.l.b16 %v3497
    %v3693 = vunpack.c.h.b16 %v3497
    %v3694 = vunpack.c.l.b16 %v3498
    %v3695 = vunpack.c.h.b16 %v3498
    %v3696 = vunpack.c.l.b16 %v3499
    %v3697 = vunpack.c.h.b16 %v3499
    %v3698 = vunpack.c.l.b16 %v3500
    %v3699 = vunpack.c.h.b16 %v3500
    %v3700 = vunpack.c.l.b16 %v3501
    %v3701 = vunpack.c.h.b16 %v3501
    %v3702 = vunpack.c.l.b16 %v3502
    %v3703 = vunpack.c.h.b16 %v3502
    %v3704 = vunpack.c.l.b16 %v3503
    %v3705 = vunpack.c.h.b16 %v3503
    %v3706 = vunpack.c.l.b16 %v3504
    %v3707 = vunpack.c.h.b16 %v3504
    %v3708 = vunpack.c.l.b16 %v3505
    %v3709 = vunpack.c.h.b16 %v3505
    %v3710 = vunpack.c.l.b16 %v3506
    %v3711 = vunpack.c.h.b16 %v3506
    %v3712 = vunpack.c.l.b16 %v3507
    %v3713 = vunpack.c.h.b16 %v3507
    %v3714 = vunpack.c.l.b16 %v3508
    %v3715 = vunpack.c.h.b16 %v3508
    %v3716 = vunpack.c.l.b16 %v3509
    %v3717 = vunpack.c.h.b16 %v3509
    %v3718 = vunpack.c.l.b16 %v3510
    %v3719 = vunpack.c.h.b16 %v3510
    %v3720 = vunpack.c.l.b16 %v3511
    %v3721 = vunpack.c.h.b16 %v3511
    %v3722 = vunpack.c.l.b16 %v3512
    %v3723 = vunpack.c.h.b16 %v3512
    %v3724 = vunpack.c.l.b16 %v3513
    %v3725 = vunpack.c.h.b16 %v3513
    %v3726 = vunpack.c.l.b16 %v3514
    %v3727 = vunpack.c.h.b16 %v3514
    %v3728 = vunpack.c.l.b16 %v3515
    %v3729 = vunpack.c.h.b16 %v3515
    %v3730 = vunpack.c.l.b16 %v3516
    %v3731 = vunpack.c.h.b16 %v3516
    %v3732 = vunpack.c.l.b16 %v3517
    %v3733 = vunpack.c.h.b16 %v3517
    %v3734 = vunpack.c.l.b16 %v3518
    %v3735 = vunpack.c.h.b16 %v3518
    %v3736 = vunpack.c.l.b16 %v3519
    %v3737 = vunpack.c.h.b16 %v3519
    %v3738 = vunpack.c.l.b16 %v3520
    %v3739 = vunpack.c.h.b16 %v3520
    %v3740 = vunpack.c.l.b16 %v3521
    %v3741 = vunpack.c.h.b16 %v3521
    %v3742 = vunpack.c.l.b16 %v3522
    %v3743 = vunpack.c.h.b16 %v3522
    %v3744 = vunpack.c.l.b16 %v3523
    %v3745 = vunpack.c.h.b16 %v3523
    %v3746 = vunpack.c.l.b16 %v3524
    %v3747 = vunpack.c.h.b16 %v3524
    %v3748 = vunpack.c.l.b16 %v3525
    %v3749 = vunpack.c.h.b16 %v3525
    %v3750 = vunpack.c.l.b16 %v3526
    %v3751 = vunpack.c.h.b16 %v3526
    %v3752 = vunpack.c.l.b16 %v3527
    %v3753 = vunpack.c.h.b16 %v3527
    %v3754 = vunpack.c.l.b16 %v3528
    %v3755 = vunpack.c.h.b16 %v3528
    %v3756 = vunpack.c.l.b16 %v3529
    %v3757 = vunpack.c.h.b16 %v3529
    %v3758 = vunpack.c.l.b16 %v3530
    %v3759 = vunpack.c.h.b16 %v3530
    %v3760 = vunpack.c.l.b16 %v3531
    %v3761 = vunpack.c.h.b16 %v3531
    %v3762 = vunpack.c.l.b16 %v3532
    %v3763 = vunpack.c.h.b16 %v3532
    %v3764 = vunpack.c.l.b16 %v3533
    %v3765 = vunpack.c.h.b16 %v3533
    %v3766 = vunpack.c.l.b16 %v3534
    %v3767 = vunpack.c.h.b16 %v3534
    %v3768 = vunpack.c.l.b16 %v3535
    %v3769 = vunpack.c.h.b16 %v3535
    %v3770 = vunpack.c.l.b16 %v3536
    %v3771 = vunpack.c.h.b16 %v3536
    %v3772 = vunpack.c.l.b16 %v3537
    %v3773 = vunpack.c.h.b16 %v3537
    %v3774 = vunpack.c.l.b16 %v3538
    %v3775 = vunpack.c.h.b16 %v3538
    %v3776 = vunpack.c.l.b16 %v3539
    %v3777 = vunpack.c.h.b16 %v3539
    %v3778 = vunpack.c.l.b16 %v3540
    %v3779 = vunpack.c.h.b16 %v3540
    %v3780 = vunpack.c.l.b16 %v3541
    %v3781 = vunpack.c.h.b16 %v3541
    %v3782 = vunpack.c.l.b16 %v3542
    %v3783 = vunpack.c.h.b16 %v3542
    %v3784 = vunpack.c.l.b16 %v3543
    %v3785 = vunpack.c.h.b16 %v3543
    %v3786 = vunpack.c.l.b16 %v3544
    %v3787 = vunpack.c.h.b16 %v3544
    %v3788 = vunpack.c.l.b16 %v3545
    %v3789 = vunpack.c.h.b16 %v3545
    %v3790 = vunpack.c.l.b16 %v3546
    %v3791 = vunpack.c.h.b16 %v3546
    %v3792 = vunpack.c.l.b16 %v3547
    %v3793 = vunpack.c.h.b16 %v3547
    %v3794 = vunpack.c.l.b16 %v3548
    %v3795 = vunpack.c.h.b16 %v3548
    %v3796 = vunpack.c.l.b16 %v3549
    %v3797 = vunpack.c.h.b16 %v3549
    %v3798 = vunpack.c.l.b16 %v3550
    %v3799 = vunpack.c.h.b16 %v3550
    %v3800 = vpack.c.b16 %v3648, %v3640
    %v3801 = vpack.c.b16 %v3649, %v3641
    %v3802 = vpack.c.b16 %v3650, %v3642
    %v3803 = vpack.c.b16 %v3651, %v3643
    %v3804 = vpack.c.b16 %v3652, %v3644
    %v3805 = vpack.c.b16 %v3653, %v3645
    %v3806 = vpack.c.b16 %v3654, %v3646
    %v3807 = vpack.c.b16 %v3655, %v3647
    %v3808 = vpack.c.b16 %v3664, %v3656
    %v3809 = vpack.c.b16 %v3665, %v3657
    %v3810 = vpack.c.b16 %v3666, %v3658
    %v3811 = vpack.c.b16 %v3667, %v3659
    %v3812 = vpack.c.b16 %v3668, %v3660
    %v3813 = vpack.c.b16 %v3669, %v3661
    %v3814 = vpack.c.b16 %v3670, %v3662
    %v3815 = vpack.c.b16 %v3671, %v3663
    %v3816 = vpack.c.b16 %v3680, %v3672
    %v3817 = vpack.c.b16 %v3681, %v3673
    %v3818 = vpack.c.b16 %v3682, %v3674
    %v3819 = vpack.c.b16 %v3683, %v3675
    %v3820 = vpack.c.b16 %v3684, %v3676
    %v3821 = vpack.c.b16 %v3685, %v3677
    %v3822 = vpack.c.b16 %v3686, %v3678
    %v3823 = vpack.c.b16 %v3687, %v3679
    %v3824 = vpack.c.b16 %v3696, %v3688
    %v3825 = vpack.c.b16 %v3697, %v3689
    %v3826 = vpack.c.b16 %v3698, %v3690
    %v3827 = vpack.c.b16 %v3699, %v3691
    %v3828 = vpack.c.b16 %v3700, %v3692
    %v3829 = vpack.c.b16 %v3701, %v3693
    %v3830 = vpack.c.b16 %v3702, %v3694
    %v3831 = vpack.c.b16 %v3703, %v3695
    %v3832 = vpack.c.b16 %v3712, %v3704
    %v3833 = vpack.c.b16 %v3713, %v3705
    %v3834 = vpack.c.b16 %v3714, %v3706
    %v3835 = vpack.c.b16 %v3715, %v3707
    %v3836 = vpack.c.b16 %v3716, %v3708
    %v3837 = vpack.c.b16 %v3717, %v3709
    %v3838 = vpack.c.b16 %v3718, %v3710
    %v3839 = vpack.c.b16 %v3719, %v3711
    %v3840 = vpack.c.b16 %v3728, %v3720
    %v3841 = vpack.c.b16 %v3729, %v3721
    %v3842 = vpack.c.b16 %v3730, %v3722
    %v3843 = vpack.c.b16 %v3731, %v3723
    %v3844 = vpack.c.b16 %v3732, %v3724
    %v3845 = vpack.c.b16 %v3733, %v3725
    %v3846 = vpack.c.b16 %v3734, %v3726
    %v3847 = vpack.c.b16 %v3735, %v3727
    %v3848 = vpack.c.b16 %v3744, %v3736
    %v3849 = vpack.c.b16 %v3745, %v3737
    %v3850 = vpack.c.b16 %v3746, %v3738
    %v3851 = vpack.c.b16 %v3747, %v3739
    %v3852 = vpack.c.b16 %v3748, %v3740
    %v3853 = vpack.c.b16 %v3749, %v3741
    %v3854 = vpack.c.b16 %v3750, %v3742
    %v3855 = vpack.c.b16 %v3751, %v3743
    %v3856 = vpack.c.b16 %v3760, %v3752
    %v3857 = vpack.c.b16 %v3761, %v3753
    %v3858 = vpack.c.b16 %v3762, %v3754
    %v3859 = vpack.c.b16 %v3763, %v3755
    %v3860 = vpack.c.b16 %v3764, %v3756
    %v3861 = vpack.c.b16 %v3765, %v3757
    %v3862 = vpack.c.b16 %v3766, %v3758
    %v3863 = vpack.c.b16 %v3767, %v3759
    %v3864 = vpack.c.b16 %v3776, %v3768
    %v3865 = vpack.c.b16 %v3777, %v3769
    %v3866 = vpack.c.b16 %v3778, %v3770
    %v3867 = vpack.c.b16 %v3779, %v3771
    %v3868 = vpack.c.b16 %v3780, %v3772
    %v3869 = vpack.c.b16 %v3781, %v3773
    %v3870 = vpack.c.b16 %v3782, %v3774
    %v3871 = vpack.c.b16 %v3783, %v3775
    %v3872 = vpack.c.b16 %v3792, %v3784
    %v3873 = vpack.c.b16 %v3793, %v3785
    %v3874 = vpack.c.b16 %v3794, %v3786
    %v3875 = vpack.c.b16 %v3795, %v3787
    %v3876 = vpack.c.b16 %v3796, %v3788
    %v3877 = vpack.c.b16 %v3797, %v3789
    %v3878 = vpack.c.b16 %v3798, %v3790
    %v3879 = vpack.c.b16 %v3799, %v3791
    %v3961 = vsel %vm1385, %v3558, 0
    %3963 = vmatpush.bf16.msra.mxu0 %v3856
    %3964 = vmatpush.bf16.msra.mxu0 %v3848
    %3965 = vmatpush.bf16.msra.mxu0 %v3840
    %3966 = vmatpush.bf16.msra.mxu0 %v3832
    %3967 = vmatpush.bf16.msra.mxu0 %v3824
    %3968 = vmatpush.bf16.msra.mxu0 %v3816
    %3969 = vmatpush.bf16.msra.mxu0 %v3808
    %3970 = vmatpush.bf16.msra.mxu0 %v3800
    %3971 = vmatmul.bf16.gmra.mxu0 %v3557
    %v3972 = vpop.f32.mrf.mxu0
    %v3973 = vadd.f32 0.0, %v3972
    %v3974 = vpop.f32.mrf.mxu0
    %v3975 = vadd.f32 0.0, %v3974
    %3976 = vdwg.mxu0
    %3977 = vmatpush.bf16.msra.mxu0 0
    %3978 = vmatpush.bf16.msra.mxu0 0
    %3979 = vmatpush.bf16.msra.mxu0 0
    %3980 = vmatpush.bf16.msra.mxu0 0
    %3981 = vmatpush.bf16.msra.mxu0 0
    %3982 = vmatpush.bf16.msra.mxu0 0
    %3983 = vmatpush.bf16.msra.mxu0 %v3872
    %3984 = vmatpush.bf16.msra.mxu0 %v3864
    %3985 = vmatmul.bf16.gmra.mxu0 %v3961
    %v3986 = vpop.f32.mrf.mxu0
    %v3987 = vadd.f32 %v3973, %v3986
    %v3988 = vpop.f32.mrf.mxu0
    %v3989 = vadd.f32 %v3975, %v3988
    %3990 = vdwg.mxu0
    %3991 = vmatpush.bf16.msra.mxu0 %v3857
    %3992 = vmatpush.bf16.msra.mxu0 %v3849
    %3993 = vmatpush.bf16.msra.mxu0 %v3841
    %3994 = vmatpush.bf16.msra.mxu0 %v3833
    %3995 = vmatpush.bf16.msra.mxu0 %v3825
    %3996 = vmatpush.bf16.msra.mxu0 %v3817
    %3997 = vmatpush.bf16.msra.mxu0 %v3809
    %3998 = vmatpush.bf16.msra.mxu0 %v3801
    %3999 = vmatmul.bf16.gmra.mxu0 %v3557
    %v4000 = vpop.f32.mrf.mxu0
    %v4001 = vadd.f32 0.0, %v4000
    %v4002 = vpop.f32.mrf.mxu0
    %v4003 = vadd.f32 0.0, %v4002
    %4004 = vdwg.mxu0
    %4005 = vmatpush.bf16.msra.mxu0 0
    %4006 = vmatpush.bf16.msra.mxu0 0
    %4007 = vmatpush.bf16.msra.mxu0 0
    %4008 = vmatpush.bf16.msra.mxu0 0
    %4009 = vmatpush.bf16.msra.mxu0 0
    %4010 = vmatpush.bf16.msra.mxu0 0
    %4011 = vmatpush.bf16.msra.mxu0 %v3873
    %4012 = vmatpush.bf16.msra.mxu0 %v3865
    %4013 = vmatmul.bf16.gmra.mxu0 %v3961
    %v4014 = vpop.f32.mrf.mxu0
    %v4015 = vadd.f32 %v4001, %v4014
    %v4016 = vpop.f32.mrf.mxu0
    %v4017 = vadd.f32 %v4003, %v4016
    %4018 = vdwg.mxu0
    %4019 = vmatpush.bf16.msra.mxu0 %v3858
    %4020 = vmatpush.bf16.msra.mxu0 %v3850
    %4021 = vmatpush.bf16.msra.mxu0 %v3842
    %4022 = vmatpush.bf16.msra.mxu0 %v3834
    %4023 = vmatpush.bf16.msra.mxu0 %v3826
    %4024 = vmatpush.bf16.msra.mxu0 %v3818
    %4025 = vmatpush.bf16.msra.mxu0 %v3810
    %4026 = vmatpush.bf16.msra.mxu0 %v3802
    %4027 = vmatmul.bf16.gmra.mxu0 %v3557
    %v4028 = vpop.f32.mrf.mxu0
    %v4029 = vadd.f32 0.0, %v4028
    %v4030 = vpop.f32.mrf.mxu0
    %v4031 = vadd.f32 0.0, %v4030
    %4032 = vdwg.mxu0
    %4033 = vmatpush.bf16.msra.mxu0 0
    %4034 = vmatpush.bf16.msra.mxu0 0
    %4035 = vmatpush.bf16.msra.mxu0 0
    %4036 = vmatpush.bf16.msra.mxu0 0
    %4037 = vmatpush.bf16.msra.mxu0 0
    %4038 = vmatpush.bf16.msra.mxu0 0
    %4039 = vmatpush.bf16.msra.mxu0 %v3874
    %4040 = vmatpush.bf16.msra.mxu0 %v3866
    %4041 = vmatmul.bf16.gmra.mxu0 %v3961
    %v4042 = vpop.f32.mrf.mxu0
    %v4043 = vadd.f32 %v4029, %v4042
    %v4044 = vpop.f32.mrf.mxu0
    %v4045 = vadd.f32 %v4031, %v4044
    %4046 = vdwg.mxu0
    %4047 = vmatpush.bf16.msra.mxu0 %v3859
    %4048 = vmatpush.bf16.msra.mxu0 %v3851
    %4049 = vmatpush.bf16.msra.mxu0 %v3843
    %4050 = vmatpush.bf16.msra.mxu0 %v3835
    %4051 = vmatpush.bf16.msra.mxu0 %v3827
    %4052 = vmatpush.bf16.msra.mxu0 %v3819
    %4053 = vmatpush.bf16.msra.mxu0 %v3811
    %4054 = vmatpush.bf16.msra.mxu0 %v3803
    %4055 = vmatmul.bf16.gmra.mxu0 %v3557
    %v4056 = vpop.f32.mrf.mxu0
    %v4057 = vadd.f32 0.0, %v4056
    %v4058 = vpop.f32.mrf.mxu0
    %v4059 = vadd.f32 0.0, %v4058
    %4060 = vdwg.mxu0
    %4061 = vmatpush.bf16.msra.mxu0 0
    %4062 = vmatpush.bf16.msra.mxu0 0
    %4063 = vmatpush.bf16.msra.mxu0 0
    %4064 = vmatpush.bf16.msra.mxu0 0
    %4065 = vmatpush.bf16.msra.mxu0 0
    %4066 = vmatpush.bf16.msra.mxu0 0
    %4067 = vmatpush.bf16.msra.mxu0 %v3875
    %4068 = vmatpush.bf16.msra.mxu0 %v3867
    %4069 = vmatmul.bf16.gmra.mxu0 %v3961
    %v4070 = vpop.f32.mrf.mxu0
    %v4071 = vadd.f32 %v4057, %v4070
    %v4072 = vpop.f32.mrf.mxu0
    %v4073 = vadd.f32 %v4059, %v4072
    %4074 = vdwg.mxu0
    %4075 = vmatpush.bf16.msra.mxu0 %v3860
    %4076 = vmatpush.bf16.msra.mxu0 %v3852
    %4077 = vmatpush.bf16.msra.mxu0 %v3844
    %4078 = vmatpush.bf16.msra.mxu0 %v3836
    %4079 = vmatpush.bf16.msra.mxu0 %v3828
    %4080 = vmatpush.bf16.msra.mxu0 %v3820
    %4081 = vmatpush.bf16.msra.mxu0 %v3812
    %4082 = vmatpush.bf16.msra.mxu0 %v3804
    %4083 = vmatmul.bf16.gmra.mxu0 %v3557
    %v4084 = vpop.f32.mrf.mxu0
    %v4085 = vadd.f32 0.0, %v4084
    %v4086 = vpop.f32.mrf.mxu0
    %v4087 = vadd.f32 0.0, %v4086
    %4088 = vdwg.mxu0
    %4089 = vmatpush.bf16.msra.mxu0 0
    %4090 = vmatpush.bf16.msra.mxu0 0
    %4091 = vmatpush.bf16.msra.mxu0 0
    %4092 = vmatpush.bf16.msra.mxu0 0
    %4093 = vmatpush.bf16.msra.mxu0 0
    %4094 = vmatpush.bf16.msra.mxu0 0
    %4095 = vmatpush.bf16.msra.mxu0 %v3876
    %4096 = vmatpush.bf16.msra.mxu0 %v3868
    %4097 = vmatmul.bf16.gmra.mxu0 %v3961
    %v4098 = vpop.f32.mrf.mxu0
    %v4099 = vadd.f32 %v4085, %v4098
    %v4100 = vpop.f32.mrf.mxu0
    %v4101 = vadd.f32 %v4087, %v4100
    %4102 = vdwg.mxu0
    %4103 = vmatpush.bf16.msra.mxu0 %v3861
    %4104 = vmatpush.bf16.msra.mxu0 %v3853
    %4105 = vmatpush.bf16.msra.mxu0 %v3845
    %4106 = vmatpush.bf16.msra.mxu0 %v3837
    %4107 = vmatpush.bf16.msra.mxu0 %v3829
    %4108 = vmatpush.bf16.msra.mxu0 %v3821
    %4109 = vmatpush.bf16.msra.mxu0 %v3813
    %4110 = vmatpush.bf16.msra.mxu0 %v3805
    %4111 = vmatmul.bf16.gmra.mxu0 %v3557
    %v4112 = vpop.f32.mrf.mxu0
    %v4113 = vadd.f32 0.0, %v4112
    %v4114 = vpop.f32.mrf.mxu0
    %v4115 = vadd.f32 0.0, %v4114
    %4116 = vdwg.mxu0
    %4117 = vmatpush.bf16.msra.mxu0 0
    %4118 = vmatpush.bf16.msra.mxu0 0
    %4119 = vmatpush.bf16.msra.mxu0 0
    %4120 = vmatpush.bf16.msra.mxu0 0
    %4121 = vmatpush.bf16.msra.mxu0 0
    %4122 = vmatpush.bf16.msra.mxu0 0
    %4123 = vmatpush.bf16.msra.mxu0 %v3877
    %4124 = vmatpush.bf16.msra.mxu0 %v3869
    %4125 = vmatmul.bf16.gmra.mxu0 %v3961
    %v4126 = vpop.f32.mrf.mxu0
    %v4127 = vadd.f32 %v4113, %v4126
    %v4128 = vpop.f32.mrf.mxu0
    %v4129 = vadd.f32 %v4115, %v4128
    %4130 = vdwg.mxu0
    %4131 = vmatpush.bf16.msra.mxu0 %v3862
    %4132 = vmatpush.bf16.msra.mxu0 %v3854
    %4133 = vmatpush.bf16.msra.mxu0 %v3846
    %4134 = vmatpush.bf16.msra.mxu0 %v3838
    %4135 = vmatpush.bf16.msra.mxu0 %v3830
    %4136 = vmatpush.bf16.msra.mxu0 %v3822
    %4137 = vmatpush.bf16.msra.mxu0 %v3814
    %4138 = vmatpush.bf16.msra.mxu0 %v3806
    %4139 = vmatmul.bf16.gmra.mxu0 %v3557
    %v4140 = vpop.f32.mrf.mxu0
    %v4141 = vadd.f32 0.0, %v4140
    %v4142 = vpop.f32.mrf.mxu0
    %v4143 = vadd.f32 0.0, %v4142
    %4144 = vdwg.mxu0
    %4145 = vmatpush.bf16.msra.mxu0 0
    %4146 = vmatpush.bf16.msra.mxu0 0
    %4147 = vmatpush.bf16.msra.mxu0 0
    %4148 = vmatpush.bf16.msra.mxu0 0
    %4149 = vmatpush.bf16.msra.mxu0 0
    %4150 = vmatpush.bf16.msra.mxu0 0
    %4151 = vmatpush.bf16.msra.mxu0 %v3878
    %4152 = vmatpush.bf16.msra.mxu0 %v3870
    %4153 = vmatmul.bf16.gmra.mxu0 %v3961
    %v4154 = vpop.f32.mrf.mxu0
    %v4155 = vadd.f32 %v4141, %v4154
    %v4156 = vpop.f32.mrf.mxu0
    %v4157 = vadd.f32 %v4143, %v4156
    %4158 = vdwg.mxu0
    %4159 = vmatpush.bf16.msra.mxu0 %v3863
    %4160 = vmatpush.bf16.msra.mxu0 %v3855
    %4161 = vmatpush.bf16.msra.mxu0 %v3847
    %4162 = vmatpush.bf16.msra.mxu0 %v3839
    %4163 = vmatpush.bf16.msra.mxu0 %v3831
    %4164 = vmatpush.bf16.msra.mxu0 %v3823
    %4165 = vmatpush.bf16.msra.mxu0 %v3815
    %4166 = vmatpush.bf16.msra.mxu0 %v3807
    %4167 = vmatmul.bf16.gmra.mxu0 %v3557
    %v4168 = vpop.f32.mrf.mxu0
    %v4169 = vadd.f32 0.0, %v4168
    %v4170 = vpop.f32.mrf.mxu0
    %v4171 = vadd.f32 0.0, %v4170
    %4172 = vdwg.mxu0
    %4173 = vmatpush.bf16.msra.mxu0 0
    %4174 = vmatpush.bf16.msra.mxu0 0
    %4175 = vmatpush.bf16.msra.mxu0 0
    %4176 = vmatpush.bf16.msra.mxu0 0
    %4177 = vmatpush.bf16.msra.mxu0 0
    %4178 = vmatpush.bf16.msra.mxu0 0
    %4179 = vmatpush.bf16.msra.mxu0 %v3879
    %4180 = vmatpush.bf16.msra.mxu0 %v3871
    %4181 = vmatmul.bf16.gmra.mxu0 %v3961
    %v4182 = vpop.f32.mrf.mxu0
    %v4183 = vadd.f32 %v4169, %v4182
    %v4184 = vpop.f32.mrf.mxu0
    %v4185 = vadd.f32 %v4171, %v4184
    %4186 = vdwg.mxu0
    %v4187 = vmul.f32 %v3987, %v328
    %v4188 = vmul.f32 %v4015, %v329
    %v4189 = vmul.f32 %v4043, %v330
    %v4190 = vmul.f32 %v4071, %v331
    %v4191 = vmul.f32 %v4099, %v332
    %v4192 = vmul.f32 %v4127, %v333
    %v4193 = vmul.f32 %v4155, %v334
    %v4194 = vmul.f32 %v4183, %v335
    %v4195 = vmul.f32 %v3989, %v328
    %v4196 = vmul.f32 %v4017, %v329
    %v4197 = vmul.f32 %v4045, %v330
    %v4198 = vmul.f32 %v4073, %v331
    %v4199 = vmul.f32 %v4101, %v332
    %v4200 = vmul.f32 %v4129, %v333
    %v4201 = vmul.f32 %v4157, %v334
    %v4202 = vmul.f32 %v4185, %v335
    %v4203 = vmax.f32 %v4187, 0.0
    %v4204 = vmax.f32 %v4188, 0.0
    %v4205 = vmax.f32 %v4189, 0.0
    %v4206 = vmax.f32 %v4190, 0.0
    %v4207 = vmax.f32 %v4191, 0.0
    %v4208 = vmax.f32 %v4192, 0.0
    %v4209 = vmax.f32 %v4193, 0.0
    %v4210 = vmax.f32 %v4194, 0.0
    %v4211 = vmax.f32 %v4195, 0.0
    %v4212 = vmax.f32 %v4196, 0.0
    %v4213 = vmax.f32 %v4197, 0.0
    %v4214 = vmax.f32 %v4198, 0.0
    %v4215 = vmax.f32 %v4199, 0.0
    %v4216 = vmax.f32 %v4200, 0.0
    %v4217 = vmax.f32 %v4201, 0.0
    %v4218 = vmax.f32 %v4202, 0.0
    %4219 = vrot.lane.b32.xlu0 %v4203, 23
    %v4220 = vpop.permute.xlu0 %4219
    %4221 = vrot.lane.b32.xlu0 %v4211, 23
    %v4222 = vpop.permute.xlu0 %4221
    %4223 = vrot.lane.b32.xlu0 %v4204, 23
    %v4224 = vpop.permute.xlu0 %4223
    %4225 = vrot.lane.b32.xlu0 %v4212, 23
    %v4226 = vpop.permute.xlu0 %4225
    %4227 = vrot.lane.b32.xlu0 %v4205, 23
    %v4228 = vpop.permute.xlu0 %4227
    %4229 = vrot.lane.b32.xlu0 %v4213, 23
    %v4230 = vpop.permute.xlu0 %4229
    %4231 = vrot.lane.b32.xlu0 %v4206, 23
    %v4232 = vpop.permute.xlu0 %4231
    %4233 = vrot.lane.b32.xlu0 %v4214, 23
    %v4234 = vpop.permute.xlu0 %4233
    %4235 = vrot.lane.b32.xlu0 %v4207, 23
    %v4236 = vpop.permute.xlu0 %4235
    %4237 = vrot.lane.b32.xlu0 %v4215, 23
    %v4238 = vpop.permute.xlu0 %4237
    %4239 = vrot.lane.b32.xlu0 %v4208, 23
    %v4240 = vpop.permute.xlu0 %4239
    %4241 = vrot.lane.b32.xlu0 %v4216, 23
    %v4242 = vpop.permute.xlu0 %4241
    %4243 = vrot.lane.b32.xlu0 %v4209, 23
    %v4244 = vpop.permute.xlu0 %4243
    %4245 = vrot.lane.b32.xlu0 %v4217, 23
    %v4246 = vpop.permute.xlu0 %4245
    %4247 = vrot.lane.b32.xlu0 %v4210, 23
    %v4248 = vpop.permute.xlu0 %4247
    %4249 = vrot.lane.b32.xlu0 %v4218, 23
    %v4250 = vpop.permute.xlu0 %4249
    %v4251 = vsel %vm390, %v4244, %v4248
    %v4252 = vsel %vm390, %v4246, %v4250
    %v4253 = vsel %vm390, %v4240, %v4244
    %v4254 = vsel %vm390, %v4242, %v4246
    %v4255 = vsel %vm390, %v4236, %v4240
    %v4256 = vsel %vm390, %v4238, %v4242
    %v4257 = vsel %vm390, %v4232, %v4236
    %v4258 = vsel %vm390, %v4234, %v4238
    %v4259 = vsel %vm390, %v4228, %v4232
    %v4260 = vsel %vm390, %v4230, %v4234
    %v4261 = vsel %vm390, %v4224, %v4228
    %v4262 = vsel %vm390, %v4226, %v4230
    %v4263 = vsel %vm390, %v4220, %v4224
    %v4264 = vsel %vm390, %v4222, %v4226
    %v4265 = vsel %vm390, %v4248, %v4220
    %v4266 = vsel %vm390, %v4250, %v4222
    %v4267 = vpack.c.bf16 %v4263, %v4265
    %v4268 = vpack.c.bf16 %v4259, %v4261
    %v4269 = vpack.c.bf16 %v4255, %v4257
    %v4270 = vpack.c.bf16 %v4251, %v4253
    %v4271 = vpack.c.bf16 %v4264, %v4266
    %v4272 = vpack.c.bf16 %v4260, %v4262
    %v4273 = vpack.c.bf16 %v4256, %v4258
    %v4274 = vpack.c.bf16 %v4252, %v4254
    %4275 = vst [vmem:[#allocation2] sm:$0xff] %v4267
    %4276 = vst [vmem:[#allocation2 + $0x8] sm:$0xff] %v4268
    %4277 = vst [vmem:[#allocation2 + $0x10] sm:$0xff] %v4269
    %4278 = vst [vmem:[#allocation2 + $0x18] sm:$0xff] %v4270
    %4279 = vst [vmem:[#allocation2 + $0x20] sm:$0xff] %v4271
    %4280 = vst [vmem:[#allocation2 + $0x28] sm:$0xff] %v4272
    %4281 = vst [vmem:[#allocation2 + $0x30] sm:$0xff] %v4273
    %4282 = vst [vmem:[#allocation2 + $0x38] sm:$0xff] %v4274
    %4283 = vrot.lane.b32.xlu0 %v4203, 22
    %v4284 = vpop.permute.xlu0 %4283
    %4285 = vrot.lane.b32.xlu0 %v4211, 22
    %v4286 = vpop.permute.xlu0 %4285
    %4287 = vrot.lane.b32.xlu0 %v4204, 22
    %v4288 = vpop.permute.xlu0 %4287
    %4289 = vrot.lane.b32.xlu0 %v4212, 22
    %v4290 = vpop.permute.xlu0 %4289
    %4291 = vrot.lane.b32.xlu0 %v4205, 22
    %v4292 = vpop.permute.xlu0 %4291
    %4293 = vrot.lane.b32.xlu0 %v4213, 22
    %v4294 = vpop.permute.xlu0 %4293
    %4295 = vrot.lane.b32.xlu0 %v4206, 22
    %v4296 = vpop.permute.xlu0 %4295
    %4297 = vrot.lane.b32.xlu0 %v4214, 22
    %v4298 = vpop.permute.xlu0 %4297
    %4299 = vrot.lane.b32.xlu0 %v4207, 22
    %v4300 = vpop.permute.xlu0 %4299
    %4301 = vrot.lane.b32.xlu0 %v4215, 22
    %v4302 = vpop.permute.xlu0 %4301
    %4303 = vrot.lane.b32.xlu0 %v4208, 22
    %v4304 = vpop.permute.xlu0 %4303
    %4305 = vrot.lane.b32.xlu0 %v4216, 22
    %v4306 = vpop.permute.xlu0 %4305
    %4307 = vrot.lane.b32.xlu0 %v4209, 22
    %v4308 = vpop.permute.xlu0 %4307
    %4309 = vrot.lane.b32.xlu0 %v4217, 22
    %v4310 = vpop.permute.xlu0 %4309
    %4311 = vrot.lane.b32.xlu0 %v4210, 22
    %v4312 = vpop.permute.xlu0 %4311
    %4313 = vrot.lane.b32.xlu0 %v4218, 22
    %v4314 = vpop.permute.xlu0 %4313
    %v4315 = vsel %vm455, %v4308, %v4312
    %v4316 = vsel %vm455, %v4310, %v4314
    %v4317 = vsel %vm455, %v4304, %v4308
    %v4318 = vsel %vm455, %v4306, %v4310
    %v4319 = vsel %vm455, %v4300, %v4304
    %v4320 = vsel %vm455, %v4302, %v4306
    %v4321 = vsel %vm455, %v4296, %v4300
    %v4322 = vsel %vm455, %v4298, %v4302
    %v4323 = vsel %vm455, %v4292, %v4296
    %v4324 = vsel %vm455, %v4294, %v4298
    %v4325 = vsel %vm455, %v4288, %v4292
    %v4326 = vsel %vm455, %v4290, %v4294
    %v4327 = vsel %vm455, %v4284, %v4288
    %v4328 = vsel %vm455, %v4286, %v4290
    %v4329 = vsel %vm455, %v4312, %v4284
    %v4330 = vsel %vm455, %v4314, %v4286
    %v4331 = vpack.c.bf16 %v4327, %v4329
    %v4332 = vpack.c.bf16 %v4323, %v4325
    %v4333 = vpack.c.bf16 %v4319, %v4321
    %v4334 = vpack.c.bf16 %v4315, %v4317
    %v4335 = vpack.c.bf16 %v4328, %v4330
    %v4336 = vpack.c.bf16 %v4324, %v4326
    %v4337 = vpack.c.bf16 %v4320, %v4322
    %v4338 = vpack.c.bf16 %v4316, %v4318
    %4339 = vst [vmem:[#allocation2 + $0x40] sm:$0xff] %v4331
    %4340 = vst [vmem:[#allocation2 + $0x48] sm:$0xff] %v4332
    %4341 = vst [vmem:[#allocation2 + $0x50] sm:$0xff] %v4333
    %4342 = vst [vmem:[#allocation2 + $0x58] sm:$0xff] %v4334
    %4343 = vst [vmem:[#allocation2 + $0x60] sm:$0xff] %v4335
    %4344 = vst [vmem:[#allocation2 + $0x68] sm:$0xff] %v4336
    %4345 = vst [vmem:[#allocation2 + $0x70] sm:$0xff] %v4337
    %4346 = vst [vmem:[#allocation2 + $0x78] sm:$0xff] %v4338
    %4347 = vrot.lane.b32.xlu0 %v4203, 21
    %v4348 = vpop.permute.xlu0 %4347
    %4349 = vrot.lane.b32.xlu0 %v4211, 21
    %v4350 = vpop.permute.xlu0 %4349
    %4351 = vrot.lane.b32.xlu0 %v4204, 21
    %v4352 = vpop.permute.xlu0 %4351
    %4353 = vrot.lane.b32.xlu0 %v4212, 21
    %v4354 = vpop.permute.xlu0 %4353
    %4355 = vrot.lane.b32.xlu0 %v4205, 21
    %v4356 = vpop.permute.xlu0 %4355
    %4357 = vrot.lane.b32.xlu0 %v4213, 21
    %v4358 = vpop.permute.xlu0 %4357
    %4359 = vrot.lane.b32.xlu0 %v4206, 21
    %v4360 = vpop.permute.xlu0 %4359
    %4361 = vrot.lane.b32.xlu0 %v4214, 21
    %v4362 = vpop.permute.xlu0 %4361
    %4363 = vrot.lane.b32.xlu0 %v4207, 21
    %v4364 = vpop.permute.xlu0 %4363
    %4365 = vrot.lane.b32.xlu0 %v4215, 21
    %v4366 = vpop.permute.xlu0 %4365
    %4367 = vrot.lane.b32.xlu0 %v4208, 21
    %v4368 = vpop.permute.xlu0 %4367
    %4369 = vrot.lane.b32.xlu0 %v4216, 21
    %v4370 = vpop.permute.xlu0 %4369
    %4371 = vrot.lane.b32.xlu0 %v4209, 21
    %v4372 = vpop.permute.xlu0 %4371
    %4373 = vrot.lane.b32.xlu0 %v4217, 21
    %v4374 = vpop.permute.xlu0 %4373
    %4375 = vrot.lane.b32.xlu0 %v4210, 21
    %v4376 = vpop.permute.xlu0 %4375
    %4377 = vrot.lane.b32.xlu0 %v4218, 21
    %v4378 = vpop.permute.xlu0 %4377
    %v4379 = vsel %vm520, %v4372, %v4376
    %v4380 = vsel %vm520, %v4374, %v4378
    %v4381 = vsel %vm520, %v4368, %v4372
    %v4382 = vsel %vm520, %v4370, %v4374
    %v4383 = vsel %vm520, %v4364, %v4368
    %v4384 = vsel %vm520, %v4366, %v4370
    %v4385 = vsel %vm520, %v4360, %v4364
    %v4386 = vsel %vm520, %v4362, %v4366
    %v4387 = vsel %vm520, %v4356, %v4360
    %v4388 = vsel %vm520, %v4358, %v4362
    %v4389 = vsel %vm520, %v4352, %v4356
    %v4390 = vsel %vm520, %v4354, %v4358
    %v4391 = vsel %vm520, %v4348, %v4352
    %v4392 = vsel %vm520, %v4350, %v4354
    %v4393 = vsel %vm520, %v4376, %v4348
    %v4394 = vsel %vm520, %v4378, %v4350
    %v4395 = vpack.c.bf16 %v4391, %v4393
    %v4396 = vpack.c.bf16 %v4387, %v4389
    %v4397 = vpack.c.bf16 %v4383, %v4385
    %v4398 = vpack.c.bf16 %v4379, %v4381
    %v4399 = vpack.c.bf16 %v4392, %v4394
    %v4400 = vpack.c.bf16 %v4388, %v4390
    %v4401 = vpack.c.bf16 %v4384, %v4386
    %v4402 = vpack.c.bf16 %v4380, %v4382
    %4403 = vst [vmem:[#allocation2 + $0x80] sm:$0xff] %v4395
    %4404 = vst [vmem:[#allocation2 + $0x88] sm:$0xff] %v4396
    %4405 = vst [vmem:[#allocation2 + $0x90] sm:$0xff] %v4397
    %4406 = vst [vmem:[#allocation2 + $0x98] sm:$0xff] %v4398
    %4407 = vst [vmem:[#allocation2 + $0xa0] sm:$0xff] %v4399
    %4408 = vst [vmem:[#allocation2 + $0xa8] sm:$0xff] %v4400
    %4409 = vst [vmem:[#allocation2 + $0xb0] sm:$0xff] %v4401
    %4410 = vst [vmem:[#allocation2 + $0xb8] sm:$0xff] %v4402
    %4411 = vrot.lane.b32.xlu0 %v4203, 1
    %v4412 = vpop.permute.xlu0 %4411
    %4413 = vrot.lane.b32.xlu0 %v4211, 1
    %v4414 = vpop.permute.xlu0 %4413
    %4415 = vrot.lane.b32.xlu0 %v4204, 1
    %v4416 = vpop.permute.xlu0 %4415
    %4417 = vrot.lane.b32.xlu0 %v4212, 1
    %v4418 = vpop.permute.xlu0 %4417
    %4419 = vrot.lane.b32.xlu0 %v4205, 1
    %v4420 = vpop.permute.xlu0 %4419
    %4421 = vrot.lane.b32.xlu0 %v4213, 1
    %v4422 = vpop.permute.xlu0 %4421
    %4423 = vrot.lane.b32.xlu0 %v4206, 1
    %v4424 = vpop.permute.xlu0 %4423
    %4425 = vrot.lane.b32.xlu0 %v4214, 1
    %v4426 = vpop.permute.xlu0 %4425
    %4427 = vrot.lane.b32.xlu0 %v4207, 1
    %v4428 = vpop.permute.xlu0 %4427
    %4429 = vrot.lane.b32.xlu0 %v4215, 1
    %v4430 = vpop.permute.xlu0 %4429
    %4431 = vrot.lane.b32.xlu0 %v4208, 1
    %v4432 = vpop.permute.xlu0 %4431
    %4433 = vrot.lane.b32.xlu0 %v4216, 1
    %v4434 = vpop.permute.xlu0 %4433
    %4435 = vrot.lane.b32.xlu0 %v4209, 1
    %v4436 = vpop.permute.xlu0 %4435
    %4437 = vrot.lane.b32.xlu0 %v4217, 1
    %v4438 = vpop.permute.xlu0 %4437
    %4439 = vrot.lane.b32.xlu0 %v4210, 1
    %v4440 = vpop.permute.xlu0 %4439
    %4441 = vrot.lane.b32.xlu0 %v4218, 1
    %v4442 = vpop.permute.xlu0 %4441
    %v4443 = vsel %vm585, %v4436, %v4440
    %v4444 = vsel %vm585, %v4438, %v4442
    %v4445 = vsel %vm585, %v4432, %v4436
    %v4446 = vsel %vm585, %v4434, %v4438
    %v4447 = vsel %vm585, %v4428, %v4432
    %v4448 = vsel %vm585, %v4430, %v4434
    %v4449 = vsel %vm585, %v4424, %v4428
    %v4450 = vsel %vm585, %v4426, %v4430
    %v4451 = vsel %vm585, %v4420, %v4424
    %v4452 = vsel %vm585, %v4422, %v4426
    %v4453 = vsel %vm585, %v4416, %v4420
    %v4454 = vsel %vm585, %v4418, %v4422
    %v4455 = vsel %vm585, %v4412, %v4416
    %v4456 = vsel %vm585, %v4414, %v4418
    %v4457 = vsel %vm585, %v4440, %v4412
    %v4458 = vsel %vm585, %v4442, %v4414
    %v4459 = vpack.c.bf16 %v4455, %v4457
    %v4460 = vpack.c.bf16 %v4451, %v4453
    %v4461 = vpack.c.bf16 %v4447, %v4449
    %v4462 = vpack.c.bf16 %v4443, %v4445
    %v4463 = vpack.c.bf16 %v4456, %v4458
    %v4464 = vpack.c.bf16 %v4452, %v4454
    %v4465 = vpack.c.bf16 %v4448, %v4450
    %v4466 = vpack.c.bf16 %v4444, %v4446
    %4467 = vst [vmem:[#allocation2 + $0xc0] sm:$0xff] %v4459
    %4468 = vst [vmem:[#allocation2 + $0xc8] sm:$0xff] %v4460
    %4469 = vst [vmem:[#allocation2 + $0xd0] sm:$0xff] %v4461
    %4470 = vst [vmem:[#allocation2 + $0xd8] sm:$0xff] %v4462
    %4471 = vst [vmem:[#allocation2 + $0xe0] sm:$0xff] %v4463
    %4472 = vst [vmem:[#allocation2 + $0xe8] sm:$0xff] %v4464
    %4473 = vst [vmem:[#allocation2 + $0xf0] sm:$0xff] %v4465
    %4474 = vst [vmem:[#allocation2 + $0xf8] sm:$0xff] %v4466
    %v4475 = vpack.c.bf16 %v4204, %v4203
    %v4476 = vpack.c.bf16 %v4206, %v4205
    %v4477 = vpack.c.bf16 %v4208, %v4207
    %v4478 = vpack.c.bf16 %v4210, %v4209
    %v4479 = vpack.c.bf16 %v4212, %v4211
    %v4480 = vpack.c.bf16 %v4214, %v4213
    %v4481 = vpack.c.bf16 %v4216, %v4215
    %v4482 = vpack.c.bf16 %v4218, %v4217
    %4483 = vst [vmem:[#allocation2 + $0x100] sm:$0xff] %v4475
    %4484 = vst [vmem:[#allocation2 + $0x108] sm:$0xff] %v4476
    %4485 = vst [vmem:[#allocation2 + $0x110] sm:$0xff] %v4477
    %4486 = vst [vmem:[#allocation2 + $0x118] sm:$0xff] %v4478
    %4487 = vst [vmem:[#allocation2 + $0x120] sm:$0xff] %v4479
    %4488 = vst [vmem:[#allocation2 + $0x128] sm:$0xff] %v4480
    %4489 = vst [vmem:[#allocation2 + $0x130] sm:$0xff] %v4481
    %4490 = vst [vmem:[#allocation2 + $0x138] sm:$0xff] %v4482
    %4491 = vrot.lane.b32.xlu0 %v4203, 127
    %v4492 = vpop.permute.xlu0 %4491
    %4493 = vrot.lane.b32.xlu0 %v4211, 127
    %v4494 = vpop.permute.xlu0 %4493
    %4495 = vrot.lane.b32.xlu0 %v4204, 127
    %v4496 = vpop.permute.xlu0 %4495
    %4497 = vrot.lane.b32.xlu0 %v4212, 127
    %v4498 = vpop.permute.xlu0 %4497
    %4499 = vrot.lane.b32.xlu0 %v4205, 127
    %v4500 = vpop.permute.xlu0 %4499
    %4501 = vrot.lane.b32.xlu0 %v4213, 127
    %v4502 = vpop.permute.xlu0 %4501
    %4503 = vrot.lane.b32.xlu0 %v4206, 127
    %v4504 = vpop.permute.xlu0 %4503
    %4505 = vrot.lane.b32.xlu0 %v4214, 127
    %v4506 = vpop.permute.xlu0 %4505
    %4507 = vrot.lane.b32.xlu0 %v4207, 127
    %v4508 = vpop.permute.xlu0 %4507
    %4509 = vrot.lane.b32.xlu0 %v4215, 127
    %v4510 = vpop.permute.xlu0 %4509
    %4511 = vrot.lane.b32.xlu0 %v4208, 127
    %v4512 = vpop.permute.xlu0 %4511
    %4513 = vrot.lane.b32.xlu0 %v4216, 127
    %v4514 = vpop.permute.xlu0 %4513
    %4515 = vrot.lane.b32.xlu0 %v4209, 127
    %v4516 = vpop.permute.xlu0 %4515
    %4517 = vrot.lane.b32.xlu0 %v4217, 127
    %v4518 = vpop.permute.xlu0 %4517
    %4519 = vrot.lane.b32.xlu0 %v4210, 127
    %v4520 = vpop.permute.xlu0 %4519
    %4521 = vrot.lane.b32.xlu0 %v4218, 127
    %v4522 = vpop.permute.xlu0 %4521
    %v4523 = vsel %vm666, %v4516, %v4520
    %v4524 = vsel %vm666, %v4518, %v4522
    %v4525 = vsel %vm666, %v4512, %v4516
    %v4526 = vsel %vm666, %v4514, %v4518
    %v4527 = vsel %vm666, %v4508, %v4512
    %v4528 = vsel %vm666, %v4510, %v4514
    %v4529 = vsel %vm666, %v4504, %v4508
    %v4530 = vsel %vm666, %v4506, %v4510
    %v4531 = vsel %vm666, %v4500, %v4504
    %v4532 = vsel %vm666, %v4502, %v4506
    %v4533 = vsel %vm666, %v4496, %v4500
    %v4534 = vsel %vm666, %v4498, %v4502
    %v4535 = vsel %vm666, %v4492, %v4496
    %v4536 = vsel %vm666, %v4494, %v4498
    %v4537 = vsel %vm666, %v4520, %v4492
    %v4538 = vsel %vm666, %v4522, %v4494
    %v4539 = vpack.c.bf16 %v4533, %v4535
    %v4540 = vpack.c.bf16 %v4529, %v4531
    %v4541 = vpack.c.bf16 %v4525, %v4527
    %v4542 = vpack.c.bf16 %v4537, %v4523
    %v4543 = vpack.c.bf16 %v4534, %v4536
    %v4544 = vpack.c.bf16 %v4530, %v4532
    %v4545 = vpack.c.bf16 %v4526, %v4528
    %v4546 = vpack.c.bf16 %v4538, %v4524
    %4547 = vst [vmem:[#allocation2 + $0x140] sm:$0xff] %v4539
    %4548 = vst [vmem:[#allocation2 + $0x148] sm:$0xff] %v4540
    %4549 = vst [vmem:[#allocation2 + $0x150] sm:$0xff] %v4541
    %4550 = vst [vmem:[#allocation2 + $0x158] sm:$0xff] %v4542
    %4551 = vst [vmem:[#allocation2 + $0x160] sm:$0xff] %v4543
    %4552 = vst [vmem:[#allocation2 + $0x168] sm:$0xff] %v4544
    %4553 = vst [vmem:[#allocation2 + $0x170] sm:$0xff] %v4545
    %4554 = vst [vmem:[#allocation2 + $0x178] sm:$0xff] %v4546
    %4555 = vrot.lane.b32.xlu0 %v4203, 107
    %v4556 = vpop.permute.xlu0 %4555
    %4557 = vrot.lane.b32.xlu0 %v4211, 107
    %v4558 = vpop.permute.xlu0 %4557
    %4559 = vrot.lane.b32.xlu0 %v4204, 107
    %v4560 = vpop.permute.xlu0 %4559
    %4561 = vrot.lane.b32.xlu0 %v4212, 107
    %v4562 = vpop.permute.xlu0 %4561
    %4563 = vrot.lane.b32.xlu0 %v4205, 107
    %v4564 = vpop.permute.xlu0 %4563
    %4565 = vrot.lane.b32.xlu0 %v4213, 107
    %v4566 = vpop.permute.xlu0 %4565
    %4567 = vrot.lane.b32.xlu0 %v4206, 107
    %v4568 = vpop.permute.xlu0 %4567
    %4569 = vrot.lane.b32.xlu0 %v4214, 107
    %v4570 = vpop.permute.xlu0 %4569
    %4571 = vrot.lane.b32.xlu0 %v4207, 107
    %v4572 = vpop.permute.xlu0 %4571
    %4573 = vrot.lane.b32.xlu0 %v4215, 107
    %v4574 = vpop.permute.xlu0 %4573
    %4575 = vrot.lane.b32.xlu0 %v4208, 107
    %v4576 = vpop.permute.xlu0 %4575
    %4577 = vrot.lane.b32.xlu0 %v4216, 107
    %v4578 = vpop.permute.xlu0 %4577
    %4579 = vrot.lane.b32.xlu0 %v4209, 107
    %v4580 = vpop.permute.xlu0 %4579
    %4581 = vrot.lane.b32.xlu0 %v4217, 107
    %v4582 = vpop.permute.xlu0 %4581
    %4583 = vrot.lane.b32.xlu0 %v4210, 107
    %v4584 = vpop.permute.xlu0 %4583
    %4585 = vrot.lane.b32.xlu0 %v4218, 107
    %v4586 = vpop.permute.xlu0 %4585
    %v4587 = vsel %vm731, %v4580, %v4584
    %v4588 = vsel %vm731, %v4582, %v4586
    %v4589 = vsel %vm731, %v4576, %v4580
    %v4590 = vsel %vm731, %v4578, %v4582
    %v4591 = vsel %vm731, %v4572, %v4576
    %v4592 = vsel %vm731, %v4574, %v4578
    %v4593 = vsel %vm731, %v4568, %v4572
    %v4594 = vsel %vm731, %v4570, %v4574
    %v4595 = vsel %vm731, %v4564, %v4568
    %v4596 = vsel %vm731, %v4566, %v4570
    %v4597 = vsel %vm731, %v4560, %v4564
    %v4598 = vsel %vm731, %v4562, %v4566
    %v4599 = vsel %vm731, %v4556, %v4560
    %v4600 = vsel %vm731, %v4558, %v4562
    %v4601 = vsel %vm731, %v4584, %v4556
    %v4602 = vsel %vm731, %v4586, %v4558
    %v4603 = vpack.c.bf16 %v4597, %v4599
    %v4604 = vpack.c.bf16 %v4593, %v4595
    %v4605 = vpack.c.bf16 %v4589, %v4591
    %v4606 = vpack.c.bf16 %v4601, %v4587
    %v4607 = vpack.c.bf16 %v4598, %v4600
    %v4608 = vpack.c.bf16 %v4594, %v4596
    %v4609 = vpack.c.bf16 %v4590, %v4592
    %v4610 = vpack.c.bf16 %v4602, %v4588
    %4611 = vst [vmem:[#allocation2 + $0x180] sm:$0xff] %v4603
    %4612 = vst [vmem:[#allocation2 + $0x188] sm:$0xff] %v4604
    %4613 = vst [vmem:[#allocation2 + $0x190] sm:$0xff] %v4605
    %4614 = vst [vmem:[#allocation2 + $0x198] sm:$0xff] %v4606
    %4615 = vst [vmem:[#allocation2 + $0x1a0] sm:$0xff] %v4607
    %4616 = vst [vmem:[#allocation2 + $0x1a8] sm:$0xff] %v4608
    %4617 = vst [vmem:[#allocation2 + $0x1b0] sm:$0xff] %v4609
    %4618 = vst [vmem:[#allocation2 + $0x1b8] sm:$0xff] %v4610
    %4619 = vrot.lane.b32.xlu0 %v4203, 106
    %v4620 = vpop.permute.xlu0 %4619
    %4621 = vrot.lane.b32.xlu0 %v4211, 106
    %v4622 = vpop.permute.xlu0 %4621
    %4623 = vrot.lane.b32.xlu0 %v4204, 106
    %v4624 = vpop.permute.xlu0 %4623
    %4625 = vrot.lane.b32.xlu0 %v4212, 106
    %v4626 = vpop.permute.xlu0 %4625
    %4627 = vrot.lane.b32.xlu0 %v4205, 106
    %v4628 = vpop.permute.xlu0 %4627
    %4629 = vrot.lane.b32.xlu0 %v4213, 106
    %v4630 = vpop.permute.xlu0 %4629
    %4631 = vrot.lane.b32.xlu0 %v4206, 106
    %v4632 = vpop.permute.xlu0 %4631
    %4633 = vrot.lane.b32.xlu0 %v4214, 106
    %v4634 = vpop.permute.xlu0 %4633
    %4635 = vrot.lane.b32.xlu0 %v4207, 106
    %v4636 = vpop.permute.xlu0 %4635
    %4637 = vrot.lane.b32.xlu0 %v4215, 106
    %v4638 = vpop.permute.xlu0 %4637
    %4639 = vrot.lane.b32.xlu0 %v4208, 106
    %v4640 = vpop.permute.xlu0 %4639
    %4641 = vrot.lane.b32.xlu0 %v4216, 106
    %v4642 = vpop.permute.xlu0 %4641
    %4643 = vrot.lane.b32.xlu0 %v4209, 106
    %v4644 = vpop.permute.xlu0 %4643
    %4645 = vrot.lane.b32.xlu0 %v4217, 106
    %v4646 = vpop.permute.xlu0 %4645
    %4647 = vrot.lane.b32.xlu0 %v4210, 106
    %v4648 = vpop.permute.xlu0 %4647
    %4649 = vrot.lane.b32.xlu0 %v4218, 106
    %v4650 = vpop.permute.xlu0 %4649
    %v4651 = vsel %vm796, %v4644, %v4648
    %v4652 = vsel %vm796, %v4646, %v4650
    %v4653 = vsel %vm796, %v4640, %v4644
    %v4654 = vsel %vm796, %v4642, %v4646
    %v4655 = vsel %vm796, %v4636, %v4640
    %v4656 = vsel %vm796, %v4638, %v4642
    %v4657 = vsel %vm796, %v4632, %v4636
    %v4658 = vsel %vm796, %v4634, %v4638
    %v4659 = vsel %vm796, %v4628, %v4632
    %v4660 = vsel %vm796, %v4630, %v4634
    %v4661 = vsel %vm796, %v4624, %v4628
    %v4662 = vsel %vm796, %v4626, %v4630
    %v4663 = vsel %vm796, %v4620, %v4624
    %v4664 = vsel %vm796, %v4622, %v4626
    %v4665 = vsel %vm796, %v4648, %v4620
    %v4666 = vsel %vm796, %v4650, %v4622
    %v4667 = vpack.c.bf16 %v4661, %v4663
    %v4668 = vpack.c.bf16 %v4657, %v4659
    %v4669 = vpack.c.bf16 %v4653, %v4655
    %v4670 = vpack.c.bf16 %v4665, %v4651
    %v4671 = vpack.c.bf16 %v4662, %v4664
    %v4672 = vpack.c.bf16 %v4658, %v4660
    %v4673 = vpack.c.bf16 %v4654, %v4656
    %v4674 = vpack.c.bf16 %v4666, %v4652
    %4675 = vst [vmem:[#allocation2 + $0x1c0] sm:$0xff] %v4667
    %4676 = vst [vmem:[#allocation2 + $0x1c8] sm:$0xff] %v4668
    %4677 = vst [vmem:[#allocation2 + $0x1d0] sm:$0xff] %v4669
    %4678 = vst [vmem:[#allocation2 + $0x1d8] sm:$0xff] %v4670
    %4679 = vst [vmem:[#allocation2 + $0x1e0] sm:$0xff] %v4671
    %4680 = vst [vmem:[#allocation2 + $0x1e8] sm:$0xff] %v4672
    %4681 = vst [vmem:[#allocation2 + $0x1f0] sm:$0xff] %v4673
    %4682 = vst [vmem:[#allocation2 + $0x1f8] sm:$0xff] %v4674
    %4683 = vrot.lane.b32.xlu0 %v4203, 105
    %v4684 = vpop.permute.xlu0 %4683
    %4685 = vrot.lane.b32.xlu0 %v4211, 105
    %v4686 = vpop.permute.xlu0 %4685
    %4687 = vrot.lane.b32.xlu0 %v4204, 105
    %v4688 = vpop.permute.xlu0 %4687
    %4689 = vrot.lane.b32.xlu0 %v4212, 105
    %v4690 = vpop.permute.xlu0 %4689
    %4691 = vrot.lane.b32.xlu0 %v4205, 105
    %v4692 = vpop.permute.xlu0 %4691
    %4693 = vrot.lane.b32.xlu0 %v4213, 105
    %v4694 = vpop.permute.xlu0 %4693
    %4695 = vrot.lane.b32.xlu0 %v4206, 105
    %v4696 = vpop.permute.xlu0 %4695
    %4697 = vrot.lane.b32.xlu0 %v4214, 105
    %v4698 = vpop.permute.xlu0 %4697
    %4699 = vrot.lane.b32.xlu0 %v4207, 105
    %v4700 = vpop.permute.xlu0 %4699
    %4701 = vrot.lane.b32.xlu0 %v4215, 105
    %v4702 = vpop.permute.xlu0 %4701
    %4703 = vrot.lane.b32.xlu0 %v4208, 105
    %v4704 = vpop.permute.xlu0 %4703
    %4705 = vrot.lane.b32.xlu0 %v4216, 105
    %v4706 = vpop.permute.xlu0 %4705
    %4707 = vrot.lane.b32.xlu0 %v4209, 105
    %v4708 = vpop.permute.xlu0 %4707
    %4709 = vrot.lane.b32.xlu0 %v4217, 105
    %v4710 = vpop.permute.xlu0 %4709
    %4711 = vrot.lane.b32.xlu0 %v4210, 105
    %v4712 = vpop.permute.xlu0 %4711
    %4713 = vrot.lane.b32.xlu0 %v4218, 105
    %v4714 = vpop.permute.xlu0 %4713
    %v4715 = vsel %vm861, %v4708, %v4712
    %v4716 = vsel %vm861, %v4710, %v4714
    %v4717 = vsel %vm861, %v4704, %v4708
    %v4718 = vsel %vm861, %v4706, %v4710
    %v4719 = vsel %vm861, %v4700, %v4704
    %v4720 = vsel %vm861, %v4702, %v4706
    %v4721 = vsel %vm861, %v4696, %v4700
    %v4722 = vsel %vm861, %v4698, %v4702
    %v4723 = vsel %vm861, %v4692, %v4696
    %v4724 = vsel %vm861, %v4694, %v4698
    %v4725 = vsel %vm861, %v4688, %v4692
    %v4726 = vsel %vm861, %v4690, %v4694
    %v4727 = vsel %vm861, %v4684, %v4688
    %v4728 = vsel %vm861, %v4686, %v4690
    %v4729 = vsel %vm861, %v4712, %v4684
    %v4730 = vsel %vm861, %v4714, %v4686
    %v4731 = vpack.c.bf16 %v4725, %v4727
    %v4732 = vpack.c.bf16 %v4721, %v4723
    %v4733 = vpack.c.bf16 %v4717, %v4719
    %v4734 = vpack.c.bf16 %v4729, %v4715
    %v4735 = vpack.c.bf16 %v4726, %v4728
    %v4736 = vpack.c.bf16 %v4722, %v4724
    %v4737 = vpack.c.bf16 %v4718, %v4720
    %v4738 = vpack.c.bf16 %v4730, %v4716
    %4739 = vst [vmem:[#allocation2 + $0x200] sm:$0xff] %v4731
    %4740 = vst [vmem:[#allocation2 + $0x208] sm:$0xff] %v4732
    %4741 = vst [vmem:[#allocation2 + $0x210] sm:$0xff] %v4733
    %4742 = vst [vmem:[#allocation2 + $0x218] sm:$0xff] %v4734
    %4743 = vst [vmem:[#allocation2 + $0x220] sm:$0xff] %v4735
    %4744 = vst [vmem:[#allocation2 + $0x228] sm:$0xff] %v4736
    %4745 = vst [vmem:[#allocation2 + $0x230] sm:$0xff] %v4737
    %4746 = vst [vmem:[#allocation2 + $0x238] sm:$0xff] %v4738
    %s4747 = scalar_lea.vmem [#allocation9], 48
    %v4748 = vld [vmem:[%s4747] sm:$0xff]
    %v4749 = vld [vmem:[%s4747 + $0x8] sm:$0xff]
    %v4750 = vld [vmem:[#allocation2] sm:$0xff]
    %v4751 = vld [vmem:[#allocation2 + $0x8] sm:$0xff]
    %v4752 = vld [vmem:[#allocation2 + $0x10] sm:$0xff]
    %v4753 = vld [vmem:[#allocation2 + $0x18] sm:$0xff]
    %v4754 = vld [vmem:[#allocation2 + $0x20] sm:$0xff]
    %v4755 = vld [vmem:[#allocation2 + $0x28] sm:$0xff]
    %v4756 = vld [vmem:[#allocation2 + $0x30] sm:$0xff]
    %v4757 = vld [vmem:[#allocation2 + $0x38] sm:$0xff]
    %v4758 = vld [vmem:[#allocation2 + $0x40] sm:$0xff]
    %v4759 = vld [vmem:[#allocation2 + $0x48] sm:$0xff]
    %v4760 = vld [vmem:[#allocation2 + $0x50] sm:$0xff]
    %v4761 = vld [vmem:[#allocation2 + $0x58] sm:$0xff]
    %v4762 = vld [vmem:[#allocation2 + $0x60] sm:$0xff]
    %v4763 = vld [vmem:[#allocation2 + $0x68] sm:$0xff]
    %v4764 = vld [vmem:[#allocation2 + $0x70] sm:$0xff]
    %v4765 = vld [vmem:[#allocation2 + $0x78] sm:$0xff]
    %v4766 = vld [vmem:[#allocation2 + $0x80] sm:$0xff]
    %v4767 = vld [vmem:[#allocation2 + $0x88] sm:$0xff]
    %v4768 = vld [vmem:[#allocation2 + $0x90] sm:$0xff]
    %v4769 = vld [vmem:[#allocation2 + $0x98] sm:$0xff]
    %v4770 = vld [vmem:[#allocation2 + $0xa0] sm:$0xff]
    %v4771 = vld [vmem:[#allocation2 + $0xa8] sm:$0xff]
    %v4772 = vld [vmem:[#allocation2 + $0xb0] sm:$0xff]
    %v4773 = vld [vmem:[#allocation2 + $0xb8] sm:$0xff]
    %v4774 = vld [vmem:[#allocation2 + $0xc0] sm:$0xff]
    %v4775 = vld [vmem:[#allocation2 + $0xc8] sm:$0xff]
    %v4776 = vld [vmem:[#allocation2 + $0xd0] sm:$0xff]
    %v4777 = vld [vmem:[#allocation2 + $0xd8] sm:$0xff]
    %v4778 = vld [vmem:[#allocation2 + $0xe0] sm:$0xff]
    %v4779 = vld [vmem:[#allocation2 + $0xe8] sm:$0xff]
    %v4780 = vld [vmem:[#allocation2 + $0xf0] sm:$0xff]
    %v4781 = vld [vmem:[#allocation2 + $0xf8] sm:$0xff]
    %v4782 = vld [vmem:[#allocation2 + $0x100] sm:$0xff]
    %v4783 = vld [vmem:[#allocation2 + $0x108] sm:$0xff]
    %v4784 = vld [vmem:[#allocation2 + $0x110] sm:$0xff]
    %v4785 = vld [vmem:[#allocation2 + $0x118] sm:$0xff]
    %v4786 = vld [vmem:[#allocation2 + $0x120] sm:$0xff]
    %v4787 = vld [vmem:[#allocation2 + $0x128] sm:$0xff]
    %v4788 = vld [vmem:[#allocation2 + $0x130] sm:$0xff]
    %v4789 = vld [vmem:[#allocation2 + $0x138] sm:$0xff]
    %v4790 = vld [vmem:[#allocation2 + $0x140] sm:$0xff]
    %v4791 = vld [vmem:[#allocation2 + $0x148] sm:$0xff]
    %v4792 = vld [vmem:[#allocation2 + $0x150] sm:$0xff]
    %v4793 = vld [vmem:[#allocation2 + $0x158] sm:$0xff]
    %v4794 = vld [vmem:[#allocation2 + $0x160] sm:$0xff]
    %v4795 = vld [vmem:[#allocation2 + $0x168] sm:$0xff]
    %v4796 = vld [vmem:[#allocation2 + $0x170] sm:$0xff]
    %v4797 = vld [vmem:[#allocation2 + $0x178] sm:$0xff]
    %v4798 = vld [vmem:[#allocation2 + $0x180] sm:$0xff]
    %v4799 = vld [vmem:[#allocation2 + $0x188] sm:$0xff]
    %v4800 = vld [vmem:[#allocation2 + $0x190] sm:$0xff]
    %v4801 = vld [vmem:[#allocation2 + $0x198] sm:$0xff]
    %v4802 = vld [vmem:[#allocation2 + $0x1a0] sm:$0xff]
    %v4803 = vld [vmem:[#allocation2 + $0x1a8] sm:$0xff]
    %v4804 = vld [vmem:[#allocation2 + $0x1b0] sm:$0xff]
    %v4805 = vld [vmem:[#allocation2 + $0x1b8] sm:$0xff]
    %v4806 = vld [vmem:[#allocation2 + $0x1c0] sm:$0xff]
    %v4807 = vld [vmem:[#allocation2 + $0x1c8] sm:$0xff]
    %v4808 = vld [vmem:[#allocation2 + $0x1d0] sm:$0xff]
    %v4809 = vld [vmem:[#allocation2 + $0x1d8] sm:$0xff]
    %v4810 = vld [vmem:[#allocation2 + $0x1e0] sm:$0xff]
    %v4811 = vld [vmem:[#allocation2 + $0x1e8] sm:$0xff]
    %v4812 = vld [vmem:[#allocation2 + $0x1f0] sm:$0xff]
    %v4813 = vld [vmem:[#allocation2 + $0x1f8] sm:$0xff]
    %v4814 = vld [vmem:[#allocation2 + $0x200] sm:$0xff]
    %v4815 = vld [vmem:[#allocation2 + $0x208] sm:$0xff]
    %v4816 = vld [vmem:[#allocation2 + $0x210] sm:$0xff]
    %v4817 = vld [vmem:[#allocation2 + $0x218] sm:$0xff]
    %v4818 = vld [vmem:[#allocation2 + $0x220] sm:$0xff]
    %v4819 = vld [vmem:[#allocation2 + $0x228] sm:$0xff]
    %v4820 = vld [vmem:[#allocation2 + $0x230] sm:$0xff]
    %v4821 = vld [vmem:[#allocation2 + $0x238] sm:$0xff]
    %v4822 = vld [vmem:[#allocation2 + $0x240] sm:$0xff]
    %v4823 = vld [vmem:[#allocation2 + $0x248] sm:$0xff]
    %v4824 = vld [vmem:[#allocation2 + $0x250] sm:$0xff]
    %v4825 = vld [vmem:[#allocation2 + $0x258] sm:$0xff]
    %v4826 = vld [vmem:[#allocation2 + $0x260] sm:$0xff]
    %v4827 = vld [vmem:[#allocation2 + $0x268] sm:$0xff]
    %v4828 = vld [vmem:[#allocation2 + $0x270] sm:$0xff]
    %v4829 = vld [vmem:[#allocation2 + $0x278] sm:$0xff]
    %v4832 = vunpack.c.l.b16 %v4748
    %v4833 = vunpack.c.h.b16 %v4748
    %v4834 = vunpack.c.l.b16 %v4749
    %v4835 = vunpack.c.h.b16 %v4749
    %v4836 = vpack.c.b16 %v4834, %v4832
    %v4837 = vpack.c.b16 %v4835, %v4833
    %v4919 = vunpack.c.l.b16 %v4750
    %v4920 = vunpack.c.h.b16 %v4750
    %v4921 = vunpack.c.l.b16 %v4751
    %v4922 = vunpack.c.h.b16 %v4751
    %v4923 = vunpack.c.l.b16 %v4752
    %v4924 = vunpack.c.h.b16 %v4752
    %v4925 = vunpack.c.l.b16 %v4753
    %v4926 = vunpack.c.h.b16 %v4753
    %v4927 = vunpack.c.l.b16 %v4754
    %v4928 = vunpack.c.h.b16 %v4754
    %v4929 = vunpack.c.l.b16 %v4755
    %v4930 = vunpack.c.h.b16 %v4755
    %v4931 = vunpack.c.l.b16 %v4756
    %v4932 = vunpack.c.h.b16 %v4756
    %v4933 = vunpack.c.l.b16 %v4757
    %v4934 = vunpack.c.h.b16 %v4757
    %v4935 = vunpack.c.l.b16 %v4758
    %v4936 = vunpack.c.h.b16 %v4758
    %v4937 = vunpack.c.l.b16 %v4759
    %v4938 = vunpack.c.h.b16 %v4759
    %v4939 = vunpack.c.l.b16 %v4760
    %v4940 = vunpack.c.h.b16 %v4760
    %v4941 = vunpack.c.l.b16 %v4761
    %v4942 = vunpack.c.h.b16 %v4761
    %v4943 = vunpack.c.l.b16 %v4762
    %v4944 = vunpack.c.h.b16 %v4762
    %v4945 = vunpack.c.l.b16 %v4763
    %v4946 = vunpack.c.h.b16 %v4763
    %v4947 = vunpack.c.l.b16 %v4764
    %v4948 = vunpack.c.h.b16 %v4764
    %v4949 = vunpack.c.l.b16 %v4765
    %v4950 = vunpack.c.h.b16 %v4765
    %v4951 = vunpack.c.l.b16 %v4766
    %v4952 = vunpack.c.h.b16 %v4766
    %v4953 = vunpack.c.l.b16 %v4767
    %v4954 = vunpack.c.h.b16 %v4767
    %v4955 = vunpack.c.l.b16 %v4768
    %v4956 = vunpack.c.h.b16 %v4768
    %v4957 = vunpack.c.l.b16 %v4769
    %v4958 = vunpack.c.h.b16 %v4769
    %v4959 = vunpack.c.l.b16 %v4770
    %v4960 = vunpack.c.h.b16 %v4770
    %v4961 = vunpack.c.l.b16 %v4771
    %v4962 = vunpack.c.h.b16 %v4771
    %v4963 = vunpack.c.l.b16 %v4772
    %v4964 = vunpack.c.h.b16 %v4772
    %v4965 = vunpack.c.l.b16 %v4773
    %v4966 = vunpack.c.h.b16 %v4773
    %v4967 = vunpack.c.l.b16 %v4774
    %v4968 = vunpack.c.h.b16 %v4774
    %v4969 = vunpack.c.l.b16 %v4775
    %v4970 = vunpack.c.h.b16 %v4775
    %v4971 = vunpack.c.l.b16 %v4776
    %v4972 = vunpack.c.h.b16 %v4776
    %v4973 = vunpack.c.l.b16 %v4777
    %v4974 = vunpack.c.h.b16 %v4777
    %v4975 = vunpack.c.l.b16 %v4778
    %v4976 = vunpack.c.h.b16 %v4778
    %v4977 = vunpack.c.l.b16 %v4779
    %v4978 = vunpack.c.h.b16 %v4779
    %v4979 = vunpack.c.l.b16 %v4780
    %v4980 = vunpack.c.h.b16 %v4780
    %v4981 = vunpack.c.l.b16 %v4781
    %v4982 = vunpack.c.h.b16 %v4781
    %v4983 = vunpack.c.l.b16 %v4782
    %v4984 = vunpack.c.h.b16 %v4782
    %v4985 = vunpack.c.l.b16 %v4783
    %v4986 = vunpack.c.h.b16 %v4783
    %v4987 = vunpack.c.l.b16 %v4784
    %v4988 = vunpack.c.h.b16 %v4784
    %v4989 = vunpack.c.l.b16 %v4785
    %v4990 = vunpack.c.h.b16 %v4785
    %v4991 = vunpack.c.l.b16 %v4786
    %v4992 = vunpack.c.h.b16 %v4786
    %v4993 = vunpack.c.l.b16 %v4787
    %v4994 = vunpack.c.h.b16 %v4787
    %v4995 = vunpack.c.l.b16 %v4788
    %v4996 = vunpack.c.h.b16 %v4788
    %v4997 = vunpack.c.l.b16 %v4789
    %v4998 = vunpack.c.h.b16 %v4789
    %v4999 = vunpack.c.l.b16 %v4790
    %v5000 = vunpack.c.h.b16 %v4790
    %v5001 = vunpack.c.l.b16 %v4791
    %v5002 = vunpack.c.h.b16 %v4791
    %v5003 = vunpack.c.l.b16 %v4792
    %v5004 = vunpack.c.h.b16 %v4792
    %v5005 = vunpack.c.l.b16 %v4793
    %v5006 = vunpack.c.h.b16 %v4793
    %v5007 = vunpack.c.l.b16 %v4794
    %v5008 = vunpack.c.h.b16 %v4794
    %v5009 = vunpack.c.l.b16 %v4795
    %v5010 = vunpack.c.h.b16 %v4795
    %v5011 = vunpack.c.l.b16 %v4796
    %v5012 = vunpack.c.h.b16 %v4796
    %v5013 = vunpack.c.l.b16 %v4797
    %v5014 = vunpack.c.h.b16 %v4797
    %v5015 = vunpack.c.l.b16 %v4798
    %v5016 = vunpack.c.h.b16 %v4798
    %v5017 = vunpack.c.l.b16 %v4799
    %v5018 = vunpack.c.h.b16 %v4799
    %v5019 = vunpack.c.l.b16 %v4800
    %v5020 = vunpack.c.h.b16 %v4800
    %v5021 = vunpack.c.l.b16 %v4801
    %v5022 = vunpack.c.h.b16 %v4801
    %v5023 = vunpack.c.l.b16 %v4802
    %v5024 = vunpack.c.h.b16 %v4802
    %v5025 = vunpack.c.l.b16 %v4803
    %v5026 = vunpack.c.h.b16 %v4803
    %v5027 = vunpack.c.l.b16 %v4804
    %v5028 = vunpack.c.h.b16 %v4804
    %v5029 = vunpack.c.l.b16 %v4805
    %v5030 = vunpack.c.h.b16 %v4805
    %v5031 = vunpack.c.l.b16 %v4806
    %v5032 = vunpack.c.h.b16 %v4806
    %v5033 = vunpack.c.l.b16 %v4807
    %v5034 = vunpack.c.h.b16 %v4807
    %v5035 = vunpack.c.l.b16 %v4808
    %v5036 = vunpack.c.h.b16 %v4808
    %v5037 = vunpack.c.l.b16 %v4809
    %v5038 = vunpack.c.h.b16 %v4809
    %v5039 = vunpack.c.l.b16 %v4810
    %v5040 = vunpack.c.h.b16 %v4810
    %v5041 = vunpack.c.l.b16 %v4811
    %v5042 = vunpack.c.h.b16 %v4811
    %v5043 = vunpack.c.l.b16 %v4812
    %v5044 = vunpack.c.h.b16 %v4812
    %v5045 = vunpack.c.l.b16 %v4813
    %v5046 = vunpack.c.h.b16 %v4813
    %v5047 = vunpack.c.l.b16 %v4814
    %v5048 = vunpack.c.h.b16 %v4814
    %v5049 = vunpack.c.l.b16 %v4815
    %v5050 = vunpack.c.h.b16 %v4815
    %v5051 = vunpack.c.l.b16 %v4816
    %v5052 = vunpack.c.h.b16 %v4816
    %v5053 = vunpack.c.l.b16 %v4817
    %v5054 = vunpack.c.h.b16 %v4817
    %v5055 = vunpack.c.l.b16 %v4818
    %v5056 = vunpack.c.h.b16 %v4818
    %v5057 = vunpack.c.l.b16 %v4819
    %v5058 = vunpack.c.h.b16 %v4819
    %v5059 = vunpack.c.l.b16 %v4820
    %v5060 = vunpack.c.h.b16 %v4820
    %v5061 = vunpack.c.l.b16 %v4821
    %v5062 = vunpack.c.h.b16 %v4821
    %v5063 = vunpack.c.l.b16 %v4822
    %v5064 = vunpack.c.h.b16 %v4822
    %v5065 = vunpack.c.l.b16 %v4823
    %v5066 = vunpack.c.h.b16 %v4823
    %v5067 = vunpack.c.l.b16 %v4824
    %v5068 = vunpack.c.h.b16 %v4824
    %v5069 = vunpack.c.l.b16 %v4825
    %v5070 = vunpack.c.h.b16 %v4825
    %v5071 = vunpack.c.l.b16 %v4826
    %v5072 = vunpack.c.h.b16 %v4826
    %v5073 = vunpack.c.l.b16 %v4827
    %v5074 = vunpack.c.h.b16 %v4827
    %v5075 = vunpack.c.l.b16 %v4828
    %v5076 = vunpack.c.h.b16 %v4828
    %v5077 = vunpack.c.l.b16 %v4829
    %v5078 = vunpack.c.h.b16 %v4829
    %v5079 = vpack.c.b16 %v4927, %v4919
    %v5080 = vpack.c.b16 %v4928, %v4920
    %v5081 = vpack.c.b16 %v4929, %v4921
    %v5082 = vpack.c.b16 %v4930, %v4922
    %v5083 = vpack.c.b16 %v4931, %v4923
    %v5084 = vpack.c.b16 %v4932, %v4924
    %v5085 = vpack.c.b16 %v4933, %v4925
    %v5086 = vpack.c.b16 %v4934, %v4926
    %v5087 = vpack.c.b16 %v4943, %v4935
    %v5088 = vpack.c.b16 %v4944, %v4936
    %v5089 = vpack.c.b16 %v4945, %v4937
    %v5090 = vpack.c.b16 %v4946, %v4938
    %v5091 = vpack.c.b16 %v4947, %v4939
    %v5092 = vpack.c.b16 %v4948, %v4940
    %v5093 = vpack.c.b16 %v4949, %v4941
    %v5094 = vpack.c.b16 %v4950, %v4942
    %v5095 = vpack.c.b16 %v4959, %v4951
    %v5096 = vpack.c.b16 %v4960, %v4952
    %v5097 = vpack.c.b16 %v4961, %v4953
    %v5098 = vpack.c.b16 %v4962, %v4954
    %v5099 = vpack.c.b16 %v4963, %v4955
    %v5100 = vpack.c.b16 %v4964, %v4956
    %v5101 = vpack.c.b16 %v4965, %v4957
    %v5102 = vpack.c.b16 %v4966, %v4958
    %v5103 = vpack.c.b16 %v4975, %v4967
    %v5104 = vpack.c.b16 %v4976, %v4968
    %v5105 = vpack.c.b16 %v4977, %v4969
    %v5106 = vpack.c.b16 %v4978, %v4970
    %v5107 = vpack.c.b16 %v4979, %v4971
    %v5108 = vpack.c.b16 %v4980, %v4972
    %v5109 = vpack.c.b16 %v4981, %v4973
    %v5110 = vpack.c.b16 %v4982, %v4974
    %v5111 = vpack.c.b16 %v4991, %v4983
    %v5112 = vpack.c.b16 %v4992, %v4984
    %v5113 = vpack.c.b16 %v4993, %v4985
    %v5114 = vpack.c.b16 %v4994, %v4986
    %v5115 = vpack.c.b16 %v4995, %v4987
    %v5116 = vpack.c.b16 %v4996, %v4988
    %v5117 = vpack.c.b16 %v4997, %v4989
    %v5118 = vpack.c.b16 %v4998, %v4990
    %v5119 = vpack.c.b16 %v5007, %v4999
    %v5120 = vpack.c.b16 %v5008, %v5000
    %v5121 = vpack.c.b16 %v5009, %v5001
    %v5122 = vpack.c.b16 %v5010, %v5002
    %v5123 = vpack.c.b16 %v5011, %v5003
    %v5124 = vpack.c.b16 %v5012, %v5004
    %v5125 = vpack.c.b16 %v5013, %v5005
    %v5126 = vpack.c.b16 %v5014, %v5006
    %v5127 = vpack.c.b16 %v5023, %v5015
    %v5128 = vpack.c.b16 %v5024, %v5016
    %v5129 = vpack.c.b16 %v5025, %v5017
    %v5130 = vpack.c.b16 %v5026, %v5018
    %v5131 = vpack.c.b16 %v5027, %v5019
    %v5132 = vpack.c.b16 %v5028, %v5020
    %v5133 = vpack.c.b16 %v5029, %v5021
    %v5134 = vpack.c.b16 %v5030, %v5022
    %v5135 = vpack.c.b16 %v5039, %v5031
    %v5136 = vpack.c.b16 %v5040, %v5032
    %v5137 = vpack.c.b16 %v5041, %v5033
    %v5138 = vpack.c.b16 %v5042, %v5034
    %v5139 = vpack.c.b16 %v5043, %v5035
    %v5140 = vpack.c.b16 %v5044, %v5036
    %v5141 = vpack.c.b16 %v5045, %v5037
    %v5142 = vpack.c.b16 %v5046, %v5038
    %v5143 = vpack.c.b16 %v5055, %v5047
    %v5144 = vpack.c.b16 %v5056, %v5048
    %v5145 = vpack.c.b16 %v5057, %v5049
    %v5146 = vpack.c.b16 %v5058, %v5050
    %v5147 = vpack.c.b16 %v5059, %v5051
    %v5148 = vpack.c.b16 %v5060, %v5052
    %v5149 = vpack.c.b16 %v5061, %v5053
    %v5150 = vpack.c.b16 %v5062, %v5054
    %v5151 = vpack.c.b16 %v5071, %v5063
    %v5152 = vpack.c.b16 %v5072, %v5064
    %v5153 = vpack.c.b16 %v5073, %v5065
    %v5154 = vpack.c.b16 %v5074, %v5066
    %v5155 = vpack.c.b16 %v5075, %v5067
    %v5156 = vpack.c.b16 %v5076, %v5068
    %v5157 = vpack.c.b16 %v5077, %v5069
    %v5158 = vpack.c.b16 %v5078, %v5070
    %v5240 = vsel %vm1385, %v4837, 0
    %5242 = vmatpush.bf16.msra.mxu0 %v5135
    %5243 = vmatpush.bf16.msra.mxu0 %v5127
    %5244 = vmatpush.bf16.msra.mxu0 %v5119
    %5245 = vmatpush.bf16.msra.mxu0 %v5111
    %5246 = vmatpush.bf16.msra.mxu0 %v5103
    %5247 = vmatpush.bf16.msra.mxu0 %v5095
    %5248 = vmatpush.bf16.msra.mxu0 %v5087
    %5249 = vmatpush.bf16.msra.mxu0 %v5079
    %5250 = vmatmul.bf16.gmra.mxu0 %v4836
    %v5251 = vpop.f32.mrf.mxu0
    %v5252 = vadd.f32 0.0, %v5251
    %v5253 = vpop.f32.mrf.mxu0
    %v5254 = vadd.f32 0.0, %v5253
    %5255 = vdwg.mxu0
    %5256 = vmatpush.bf16.msra.mxu0 0
    %5257 = vmatpush.bf16.msra.mxu0 0
    %5258 = vmatpush.bf16.msra.mxu0 0
    %5259 = vmatpush.bf16.msra.mxu0 0
    %5260 = vmatpush.bf16.msra.mxu0 0
    %5261 = vmatpush.bf16.msra.mxu0 0
    %5262 = vmatpush.bf16.msra.mxu0 %v5151
    %5263 = vmatpush.bf16.msra.mxu0 %v5143
    %5264 = vmatmul.bf16.gmra.mxu0 %v5240
    %v5265 = vpop.f32.mrf.mxu0
    %v5266 = vadd.f32 %v5252, %v5265
    %v5267 = vpop.f32.mrf.mxu0
    %v5268 = vadd.f32 %v5254, %v5267
    %5269 = vdwg.mxu0
    %5270 = vmatpush.bf16.msra.mxu0 %v5136
    %5271 = vmatpush.bf16.msra.mxu0 %v5128
    %5272 = vmatpush.bf16.msra.mxu0 %v5120
    %5273 = vmatpush.bf16.msra.mxu0 %v5112
    %5274 = vmatpush.bf16.msra.mxu0 %v5104
    %5275 = vmatpush.bf16.msra.mxu0 %v5096
    %5276 = vmatpush.bf16.msra.mxu0 %v5088
    %5277 = vmatpush.bf16.msra.mxu0 %v5080
    %5278 = vmatmul.bf16.gmra.mxu0 %v4836
    %v5279 = vpop.f32.mrf.mxu0
    %v5280 = vadd.f32 0.0, %v5279
    %v5281 = vpop.f32.mrf.mxu0
    %v5282 = vadd.f32 0.0, %v5281
    %5283 = vdwg.mxu0
    %5284 = vmatpush.bf16.msra.mxu0 0
    %5285 = vmatpush.bf16.msra.mxu0 0
    %5286 = vmatpush.bf16.msra.mxu0 0
    %5287 = vmatpush.bf16.msra.mxu0 0
    %5288 = vmatpush.bf16.msra.mxu0 0
    %5289 = vmatpush.bf16.msra.mxu0 0
    %5290 = vmatpush.bf16.msra.mxu0 %v5152
    %5291 = vmatpush.bf16.msra.mxu0 %v5144
    %5292 = vmatmul.bf16.gmra.mxu0 %v5240
    %v5293 = vpop.f32.mrf.mxu0
    %v5294 = vadd.f32 %v5280, %v5293
    %v5295 = vpop.f32.mrf.mxu0
    %v5296 = vadd.f32 %v5282, %v5295
    %5297 = vdwg.mxu0
    %5298 = vmatpush.bf16.msra.mxu0 %v5137
    %5299 = vmatpush.bf16.msra.mxu0 %v5129
    %5300 = vmatpush.bf16.msra.mxu0 %v5121
    %5301 = vmatpush.bf16.msra.mxu0 %v5113
    %5302 = vmatpush.bf16.msra.mxu0 %v5105
    %5303 = vmatpush.bf16.msra.mxu0 %v5097
    %5304 = vmatpush.bf16.msra.mxu0 %v5089
    %5305 = vmatpush.bf16.msra.mxu0 %v5081
    %5306 = vmatmul.bf16.gmra.mxu0 %v4836
    %v5307 = vpop.f32.mrf.mxu0
    %v5308 = vadd.f32 0.0, %v5307
    %v5309 = vpop.f32.mrf.mxu0
    %v5310 = vadd.f32 0.0, %v5309
    %5311 = vdwg.mxu0
    %5312 = vmatpush.bf16.msra.mxu0 0
    %5313 = vmatpush.bf16.msra.mxu0 0
    %5314 = vmatpush.bf16.msra.mxu0 0
    %5315 = vmatpush.bf16.msra.mxu0 0
    %5316 = vmatpush.bf16.msra.mxu0 0
    %5317 = vmatpush.bf16.msra.mxu0 0
    %5318 = vmatpush.bf16.msra.mxu0 %v5153
    %5319 = vmatpush.bf16.msra.mxu0 %v5145
    %5320 = vmatmul.bf16.gmra.mxu0 %v5240
    %v5321 = vpop.f32.mrf.mxu0
    %v5322 = vadd.f32 %v5308, %v5321
    %v5323 = vpop.f32.mrf.mxu0
    %v5324 = vadd.f32 %v5310, %v5323
    %5325 = vdwg.mxu0
    %5326 = vmatpush.bf16.msra.mxu0 %v5138
    %5327 = vmatpush.bf16.msra.mxu0 %v5130
    %5328 = vmatpush.bf16.msra.mxu0 %v5122
    %5329 = vmatpush.bf16.msra.mxu0 %v5114
    %5330 = vmatpush.bf16.msra.mxu0 %v5106
    %5331 = vmatpush.bf16.msra.mxu0 %v5098
    %5332 = vmatpush.bf16.msra.mxu0 %v5090
    %5333 = vmatpush.bf16.msra.mxu0 %v5082
    %5334 = vmatmul.bf16.gmra.mxu0 %v4836
    %v5335 = vpop.f32.mrf.mxu0
    %v5336 = vadd.f32 0.0, %v5335
    %v5337 = vpop.f32.mrf.mxu0
    %v5338 = vadd.f32 0.0, %v5337
    %5339 = vdwg.mxu0
    %5340 = vmatpush.bf16.msra.mxu0 0
    %5341 = vmatpush.bf16.msra.mxu0 0
    %5342 = vmatpush.bf16.msra.mxu0 0
    %5343 = vmatpush.bf16.msra.mxu0 0
    %5344 = vmatpush.bf16.msra.mxu0 0
    %5345 = vmatpush.bf16.msra.mxu0 0
    %5346 = vmatpush.bf16.msra.mxu0 %v5154
    %5347 = vmatpush.bf16.msra.mxu0 %v5146
    %5348 = vmatmul.bf16.gmra.mxu0 %v5240
    %v5349 = vpop.f32.mrf.mxu0
    %v5350 = vadd.f32 %v5336, %v5349
    %v5351 = vpop.f32.mrf.mxu0
    %v5352 = vadd.f32 %v5338, %v5351
    %5353 = vdwg.mxu0
    %5354 = vmatpush.bf16.msra.mxu0 %v5139
    %5355 = vmatpush.bf16.msra.mxu0 %v5131
    %5356 = vmatpush.bf16.msra.mxu0 %v5123
    %5357 = vmatpush.bf16.msra.mxu0 %v5115
    %5358 = vmatpush.bf16.msra.mxu0 %v5107
    %5359 = vmatpush.bf16.msra.mxu0 %v5099
    %5360 = vmatpush.bf16.msra.mxu0 %v5091
    %5361 = vmatpush.bf16.msra.mxu0 %v5083
    %5362 = vmatmul.bf16.gmra.mxu0 %v4836
    %v5363 = vpop.f32.mrf.mxu0
    %v5364 = vadd.f32 0.0, %v5363
    %v5365 = vpop.f32.mrf.mxu0
    %v5366 = vadd.f32 0.0, %v5365
    %5367 = vdwg.mxu0
    %5368 = vmatpush.bf16.msra.mxu0 0
    %5369 = vmatpush.bf16.msra.mxu0 0
    %5370 = vmatpush.bf16.msra.mxu0 0
    %5371 = vmatpush.bf16.msra.mxu0 0
    %5372 = vmatpush.bf16.msra.mxu0 0
    %5373 = vmatpush.bf16.msra.mxu0 0
    %5374 = vmatpush.bf16.msra.mxu0 %v5155
    %5375 = vmatpush.bf16.msra.mxu0 %v5147
    %5376 = vmatmul.bf16.gmra.mxu0 %v5240
    %v5377 = vpop.f32.mrf.mxu0
    %v5378 = vadd.f32 %v5364, %v5377
    %v5379 = vpop.f32.mrf.mxu0
    %v5380 = vadd.f32 %v5366, %v5379
    %5381 = vdwg.mxu0
    %5382 = vmatpush.bf16.msra.mxu0 %v5140
    %5383 = vmatpush.bf16.msra.mxu0 %v5132
    %5384 = vmatpush.bf16.msra.mxu0 %v5124
    %5385 = vmatpush.bf16.msra.mxu0 %v5116
    %5386 = vmatpush.bf16.msra.mxu0 %v5108
    %5387 = vmatpush.bf16.msra.mxu0 %v5100
    %5388 = vmatpush.bf16.msra.mxu0 %v5092
    %5389 = vmatpush.bf16.msra.mxu0 %v5084
    %5390 = vmatmul.bf16.gmra.mxu0 %v4836
    %v5391 = vpop.f32.mrf.mxu0
    %v5392 = vadd.f32 0.0, %v5391
    %v5393 = vpop.f32.mrf.mxu0
    %v5394 = vadd.f32 0.0, %v5393
    %5395 = vdwg.mxu0
    %5396 = vmatpush.bf16.msra.mxu0 0
    %5397 = vmatpush.bf16.msra.mxu0 0
    %5398 = vmatpush.bf16.msra.mxu0 0
    %5399 = vmatpush.bf16.msra.mxu0 0
    %5400 = vmatpush.bf16.msra.mxu0 0
    %5401 = vmatpush.bf16.msra.mxu0 0
    %5402 = vmatpush.bf16.msra.mxu0 %v5156
    %5403 = vmatpush.bf16.msra.mxu0 %v5148
    %5404 = vmatmul.bf16.gmra.mxu0 %v5240
    %v5405 = vpop.f32.mrf.mxu0
    %v5406 = vadd.f32 %v5392, %v5405
    %v5407 = vpop.f32.mrf.mxu0
    %v5408 = vadd.f32 %v5394, %v5407
    %5409 = vdwg.mxu0
    %5410 = vmatpush.bf16.msra.mxu0 %v5141
    %5411 = vmatpush.bf16.msra.mxu0 %v5133
    %5412 = vmatpush.bf16.msra.mxu0 %v5125
    %5413 = vmatpush.bf16.msra.mxu0 %v5117
    %5414 = vmatpush.bf16.msra.mxu0 %v5109
    %5415 = vmatpush.bf16.msra.mxu0 %v5101
    %5416 = vmatpush.bf16.msra.mxu0 %v5093
    %5417 = vmatpush.bf16.msra.mxu0 %v5085
    %5418 = vmatmul.bf16.gmra.mxu0 %v4836
    %v5419 = vpop.f32.mrf.mxu0
    %v5420 = vadd.f32 0.0, %v5419
    %v5421 = vpop.f32.mrf.mxu0
    %v5422 = vadd.f32 0.0, %v5421
    %5423 = vdwg.mxu0
    %5424 = vmatpush.bf16.msra.mxu0 0
    %5425 = vmatpush.bf16.msra.mxu0 0
    %5426 = vmatpush.bf16.msra.mxu0 0
    %5427 = vmatpush.bf16.msra.mxu0 0
    %5428 = vmatpush.bf16.msra.mxu0 0
    %5429 = vmatpush.bf16.msra.mxu0 0
    %5430 = vmatpush.bf16.msra.mxu0 %v5157
    %5431 = vmatpush.bf16.msra.mxu0 %v5149
    %5432 = vmatmul.bf16.gmra.mxu0 %v5240
    %v5433 = vpop.f32.mrf.mxu0
    %v5434 = vadd.f32 %v5420, %v5433
    %v5435 = vpop.f32.mrf.mxu0
    %v5436 = vadd.f32 %v5422, %v5435
    %5437 = vdwg.mxu0
    %5438 = vmatpush.bf16.msra.mxu0 %v5142
    %5439 = vmatpush.bf16.msra.mxu0 %v5134
    %5440 = vmatpush.bf16.msra.mxu0 %v5126
    %5441 = vmatpush.bf16.msra.mxu0 %v5118
    %5442 = vmatpush.bf16.msra.mxu0 %v5110
    %5443 = vmatpush.bf16.msra.mxu0 %v5102
    %5444 = vmatpush.bf16.msra.mxu0 %v5094
    %5445 = vmatpush.bf16.msra.mxu0 %v5086
    %5446 = vmatmul.bf16.gmra.mxu0 %v4836
    %v5447 = vpop.f32.mrf.mxu0
    %v5448 = vadd.f32 0.0, %v5447
    %v5449 = vpop.f32.mrf.mxu0
    %v5450 = vadd.f32 0.0, %v5449
    %5451 = vdwg.mxu0
    %5452 = vmatpush.bf16.msra.mxu0 0
    %5453 = vmatpush.bf16.msra.mxu0 0
    %5454 = vmatpush.bf16.msra.mxu0 0
    %5455 = vmatpush.bf16.msra.mxu0 0
    %5456 = vmatpush.bf16.msra.mxu0 0
    %5457 = vmatpush.bf16.msra.mxu0 0
    %5458 = vmatpush.bf16.msra.mxu0 %v5158
    %5459 = vmatpush.bf16.msra.mxu0 %v5150
    %5460 = vmatmul.bf16.gmra.mxu0 %v5240
    %v5461 = vpop.f32.mrf.mxu0
    %v5462 = vadd.f32 %v5448, %v5461
    %v5463 = vpop.f32.mrf.mxu0
    %v5464 = vadd.f32 %v5450, %v5463
    %5465 = vdwg.mxu0
    %v5466 = vmul.f32 %v5266, %v328
    %v5467 = vmul.f32 %v5294, %v329
    %v5468 = vmul.f32 %v5322, %v330
    %v5469 = vmul.f32 %v5350, %v331
    %v5470 = vmul.f32 %v5378, %v332
    %v5471 = vmul.f32 %v5406, %v333
    %v5472 = vmul.f32 %v5434, %v334
    %v5473 = vmul.f32 %v5462, %v335
    %v5474 = vmul.f32 %v5268, %v328
    %v5475 = vmul.f32 %v5296, %v329
    %v5476 = vmul.f32 %v5324, %v330
    %v5477 = vmul.f32 %v5352, %v331
    %v5478 = vmul.f32 %v5380, %v332
    %v5479 = vmul.f32 %v5408, %v333
    %v5480 = vmul.f32 %v5436, %v334
    %v5481 = vmul.f32 %v5464, %v335
    %v5482 = vadd.f32 %v2924, %v5466
    %v5483 = vadd.f32 %v2925, %v5467
    %v5484 = vadd.f32 %v2926, %v5468
    %v5485 = vadd.f32 %v2927, %v5469
    %v5486 = vadd.f32 %v2928, %v5470
    %v5487 = vadd.f32 %v2929, %v5471
    %v5488 = vadd.f32 %v2930, %v5472
    %v5489 = vadd.f32 %v2931, %v5473
    %v5490 = vadd.f32 %v2932, %v5474
    %v5491 = vadd.f32 %v2933, %v5475
    %v5492 = vadd.f32 %v2934, %v5476
    %v5493 = vadd.f32 %v2935, %v5477
    %v5494 = vadd.f32 %v2936, %v5478
    %v5495 = vadd.f32 %v2937, %v5479
    %v5496 = vadd.f32 %v2938, %v5480
    %v5497 = vadd.f32 %v2939, %v5481
    %v5498 = vmax.f32 %v5482, 0.0
    %v5499 = vmax.f32 %v5483, 0.0
    %v5500 = vmax.f32 %v5484, 0.0
    %v5501 = vmax.f32 %v5485, 0.0
    %v5502 = vmax.f32 %v5486, 0.0
    %v5503 = vmax.f32 %v5487, 0.0
    %v5504 = vmax.f32 %v5488, 0.0
    %v5505 = vmax.f32 %v5489, 0.0
    %v5506 = vmax.f32 %v5490, 0.0
    %v5507 = vmax.f32 %v5491, 0.0
    %v5508 = vmax.f32 %v5492, 0.0
    %v5509 = vmax.f32 %v5493, 0.0
    %v5510 = vmax.f32 %v5494, 0.0
    %v5511 = vmax.f32 %v5495, 0.0
    %v5512 = vmax.f32 %v5496, 0.0
    %v5513 = vmax.f32 %v5497, 0.0
    %5514 = vrot.lane.b32.xlu0 %v5498, 23
    %v5515 = vpop.permute.xlu0 %5514
    %5516 = vrot.lane.b32.xlu0 %v5506, 23
    %v5517 = vpop.permute.xlu0 %5516
    %5518 = vrot.lane.b32.xlu0 %v5499, 23
    %v5519 = vpop.permute.xlu0 %5518
    %5520 = vrot.lane.b32.xlu0 %v5507, 23
    %v5521 = vpop.permute.xlu0 %5520
    %5522 = vrot.lane.b32.xlu0 %v5500, 23
    %v5523 = vpop.permute.xlu0 %5522
    %5524 = vrot.lane.b32.xlu0 %v5508, 23
    %v5525 = vpop.permute.xlu0 %5524
    %5526 = vrot.lane.b32.xlu0 %v5501, 23
    %v5527 = vpop.permute.xlu0 %5526
    %5528 = vrot.lane.b32.xlu0 %v5509, 23
    %v5529 = vpop.permute.xlu0 %5528
    %5530 = vrot.lane.b32.xlu0 %v5502, 23
    %v5531 = vpop.permute.xlu0 %5530
    %5532 = vrot.lane.b32.xlu0 %v5510, 23
    %v5533 = vpop.permute.xlu0 %5532
    %5534 = vrot.lane.b32.xlu0 %v5503, 23
    %v5535 = vpop.permute.xlu0 %5534
    %5536 = vrot.lane.b32.xlu0 %v5511, 23
    %v5537 = vpop.permute.xlu0 %5536
    %5538 = vrot.lane.b32.xlu0 %v5504, 23
    %v5539 = vpop.permute.xlu0 %5538
    %5540 = vrot.lane.b32.xlu0 %v5512, 23
    %v5541 = vpop.permute.xlu0 %5540
    %5542 = vrot.lane.b32.xlu0 %v5505, 23
    %v5543 = vpop.permute.xlu0 %5542
    %5544 = vrot.lane.b32.xlu0 %v5513, 23
    %v5545 = vpop.permute.xlu0 %5544
    %v5546 = vsel %vm390, %v5539, %v5543
    %v5547 = vsel %vm390, %v5541, %v5545
    %v5548 = vsel %vm390, %v5535, %v5539
    %v5549 = vsel %vm390, %v5537, %v5541
    %v5550 = vsel %vm390, %v5531, %v5535
    %v5551 = vsel %vm390, %v5533, %v5537
    %v5552 = vsel %vm390, %v5527, %v5531
    %v5553 = vsel %vm390, %v5529, %v5533
    %v5554 = vsel %vm390, %v5523, %v5527
    %v5555 = vsel %vm390, %v5525, %v5529
    %v5556 = vsel %vm390, %v5519, %v5523
    %v5557 = vsel %vm390, %v5521, %v5525
    %v5558 = vsel %vm390, %v5515, %v5519
    %v5559 = vsel %vm390, %v5517, %v5521
    %v5560 = vsel %vm390, %v5543, %v5515
    %v5561 = vsel %vm390, %v5545, %v5517
    %v5562 = vpack.c.bf16 %v5558, %v5560
    %v5563 = vpack.c.bf16 %v5554, %v5556
    %v5564 = vpack.c.bf16 %v5550, %v5552
    %v5565 = vpack.c.bf16 %v5546, %v5548
    %v5566 = vpack.c.bf16 %v5559, %v5561
    %v5567 = vpack.c.bf16 %v5555, %v5557
    %v5568 = vpack.c.bf16 %v5551, %v5553
    %v5569 = vpack.c.bf16 %v5547, %v5549
    %5570 = vst [vmem:[#allocation2] sm:$0xff] %v5562
    %5571 = vst [vmem:[#allocation2 + $0x8] sm:$0xff] %v5563
    %5572 = vst [vmem:[#allocation2 + $0x10] sm:$0xff] %v5564
    %5573 = vst [vmem:[#allocation2 + $0x18] sm:$0xff] %v5565
    %5574 = vst [vmem:[#allocation2 + $0x20] sm:$0xff] %v5566
    %5575 = vst [vmem:[#allocation2 + $0x28] sm:$0xff] %v5567
    %5576 = vst [vmem:[#allocation2 + $0x30] sm:$0xff] %v5568
    %5577 = vst [vmem:[#allocation2 + $0x38] sm:$0xff] %v5569
    %5578 = vrot.lane.b32.xlu0 %v5498, 22
    %v5579 = vpop.permute.xlu0 %5578
    %5580 = vrot.lane.b32.xlu0 %v5506, 22
    %v5581 = vpop.permute.xlu0 %5580
    %5582 = vrot.lane.b32.xlu0 %v5499, 22
    %v5583 = vpop.permute.xlu0 %5582
    %5584 = vrot.lane.b32.xlu0 %v5507, 22
    %v5585 = vpop.permute.xlu0 %5584
    %5586 = vrot.lane.b32.xlu0 %v5500, 22
    %v5587 = vpop.permute.xlu0 %5586
    %5588 = vrot.lane.b32.xlu0 %v5508, 22
    %v5589 = vpop.permute.xlu0 %5588
    %5590 = vrot.lane.b32.xlu0 %v5501, 22
    %v5591 = vpop.permute.xlu0 %5590
    %5592 = vrot.lane.b32.xlu0 %v5509, 22
    %v5593 = vpop.permute.xlu0 %5592
    %5594 = vrot.lane.b32.xlu0 %v5502, 22
    %v5595 = vpop.permute.xlu0 %5594
    %5596 = vrot.lane.b32.xlu0 %v5510, 22
    %v5597 = vpop.permute.xlu0 %5596
    %5598 = vrot.lane.b32.xlu0 %v5503, 22
    %v5599 = vpop.permute.xlu0 %5598
    %5600 = vrot.lane.b32.xlu0 %v5511, 22
    %v5601 = vpop.permute.xlu0 %5600
    %5602 = vrot.lane.b32.xlu0 %v5504, 22
    %v5603 = vpop.permute.xlu0 %5602
    %5604 = vrot.lane.b32.xlu0 %v5512, 22
    %v5605 = vpop.permute.xlu0 %5604
    %5606 = vrot.lane.b32.xlu0 %v5505, 22
    %v5607 = vpop.permute.xlu0 %5606
    %5608 = vrot.lane.b32.xlu0 %v5513, 22
    %v5609 = vpop.permute.xlu0 %5608
    %v5610 = vsel %vm455, %v5603, %v5607
    %v5611 = vsel %vm455, %v5605, %v5609
    %v5612 = vsel %vm455, %v5599, %v5603
    %v5613 = vsel %vm455, %v5601, %v5605
    %v5614 = vsel %vm455, %v5595, %v5599
    %v5615 = vsel %vm455, %v5597, %v5601
    %v5616 = vsel %vm455, %v5591, %v5595
    %v5617 = vsel %vm455, %v5593, %v5597
    %v5618 = vsel %vm455, %v5587, %v5591
    %v5619 = vsel %vm455, %v5589, %v5593
    %v5620 = vsel %vm455, %v5583, %v5587
    %v5621 = vsel %vm455, %v5585, %v5589
    %v5622 = vsel %vm455, %v5579, %v5583
    %v5623 = vsel %vm455, %v5581, %v5585
    %v5624 = vsel %vm455, %v5607, %v5579
    %v5625 = vsel %vm455, %v5609, %v5581
    %v5626 = vpack.c.bf16 %v5622, %v5624
    %v5627 = vpack.c.bf16 %v5618, %v5620
    %v5628 = vpack.c.bf16 %v5614, %v5616
    %v5629 = vpack.c.bf16 %v5610, %v5612
    %v5630 = vpack.c.bf16 %v5623, %v5625
    %v5631 = vpack.c.bf16 %v5619, %v5621
    %v5632 = vpack.c.bf16 %v5615, %v5617
    %v5633 = vpack.c.bf16 %v5611, %v5613
    %5634 = vst [vmem:[#allocation2 + $0x40] sm:$0xff] %v5626
    %5635 = vst [vmem:[#allocation2 + $0x48] sm:$0xff] %v5627
    %5636 = vst [vmem:[#allocation2 + $0x50] sm:$0xff] %v5628
    %5637 = vst [vmem:[#allocation2 + $0x58] sm:$0xff] %v5629
    %5638 = vst [vmem:[#allocation2 + $0x60] sm:$0xff] %v5630
    %5639 = vst [vmem:[#allocation2 + $0x68] sm:$0xff] %v5631
    %5640 = vst [vmem:[#allocation2 + $0x70] sm:$0xff] %v5632
    %5641 = vst [vmem:[#allocation2 + $0x78] sm:$0xff] %v5633
    %5642 = vrot.lane.b32.xlu0 %v5498, 21
    %v5643 = vpop.permute.xlu0 %5642
    %5644 = vrot.lane.b32.xlu0 %v5506, 21
    %v5645 = vpop.permute.xlu0 %5644
    %5646 = vrot.lane.b32.xlu0 %v5499, 21
    %v5647 = vpop.permute.xlu0 %5646
    %5648 = vrot.lane.b32.xlu0 %v5507, 21
    %v5649 = vpop.permute.xlu0 %5648
    %5650 = vrot.lane.b32.xlu0 %v5500, 21
    %v5651 = vpop.permute.xlu0 %5650
    %5652 = vrot.lane.b32.xlu0 %v5508, 21
    %v5653 = vpop.permute.xlu0 %5652
    %5654 = vrot.lane.b32.xlu0 %v5501, 21
    %v5655 = vpop.permute.xlu0 %5654
    %5656 = vrot.lane.b32.xlu0 %v5509, 21
    %v5657 = vpop.permute.xlu0 %5656
    %5658 = vrot.lane.b32.xlu0 %v5502, 21
    %v5659 = vpop.permute.xlu0 %5658
    %5660 = vrot.lane.b32.xlu0 %v5510, 21
    %v5661 = vpop.permute.xlu0 %5660
    %5662 = vrot.lane.b32.xlu0 %v5503, 21
    %v5663 = vpop.permute.xlu0 %5662
    %5664 = vrot.lane.b32.xlu0 %v5511, 21
    %v5665 = vpop.permute.xlu0 %5664
    %5666 = vrot.lane.b32.xlu0 %v5504, 21
    %v5667 = vpop.permute.xlu0 %5666
    %5668 = vrot.lane.b32.xlu0 %v5512, 21
    %v5669 = vpop.permute.xlu0 %5668
    %5670 = vrot.lane.b32.xlu0 %v5505, 21
    %v5671 = vpop.permute.xlu0 %5670
    %5672 = vrot.lane.b32.xlu0 %v5513, 21
    %v5673 = vpop.permute.xlu0 %5672
    %v5674 = vsel %vm520, %v5667, %v5671
    %v5675 = vsel %vm520, %v5669, %v5673
    %v5676 = vsel %vm520, %v5663, %v5667
    %v5677 = vsel %vm520, %v5665, %v5669
    %v5678 = vsel %vm520, %v5659, %v5663
    %v5679 = vsel %vm520, %v5661, %v5665
    %v5680 = vsel %vm520, %v5655, %v5659
    %v5681 = vsel %vm520, %v5657, %v5661
    %v5682 = vsel %vm520, %v5651, %v5655
    %v5683 = vsel %vm520, %v5653, %v5657
    %v5684 = vsel %vm520, %v5647, %v5651
    %v5685 = vsel %vm520, %v5649, %v5653
    %v5686 = vsel %vm520, %v5643, %v5647
    %v5687 = vsel %vm520, %v5645, %v5649
    %v5688 = vsel %vm520, %v5671, %v5643
    %v5689 = vsel %vm520, %v5673, %v5645
    %v5690 = vpack.c.bf16 %v5686, %v5688
    %v5691 = vpack.c.bf16 %v5682, %v5684
    %v5692 = vpack.c.bf16 %v5678, %v5680
    %v5693 = vpack.c.bf16 %v5674, %v5676
    %v5694 = vpack.c.bf16 %v5687, %v5689
    %v5695 = vpack.c.bf16 %v5683, %v5685
    %v5696 = vpack.c.bf16 %v5679, %v5681
    %v5697 = vpack.c.bf16 %v5675, %v5677
    %5698 = vst [vmem:[#allocation2 + $0x80] sm:$0xff] %v5690
    %5699 = vst [vmem:[#allocation2 + $0x88] sm:$0xff] %v5691
    %5700 = vst [vmem:[#allocation2 + $0x90] sm:$0xff] %v5692
    %5701 = vst [vmem:[#allocation2 + $0x98] sm:$0xff] %v5693
    %5702 = vst [vmem:[#allocation2 + $0xa0] sm:$0xff] %v5694
    %5703 = vst [vmem:[#allocation2 + $0xa8] sm:$0xff] %v5695
    %5704 = vst [vmem:[#allocation2 + $0xb0] sm:$0xff] %v5696
    %5705 = vst [vmem:[#allocation2 + $0xb8] sm:$0xff] %v5697
    %5706 = vrot.lane.b32.xlu0 %v5498, 1
    %v5707 = vpop.permute.xlu0 %5706
    %5708 = vrot.lane.b32.xlu0 %v5506, 1
    %v5709 = vpop.permute.xlu0 %5708
    %5710 = vrot.lane.b32.xlu0 %v5499, 1
    %v5711 = vpop.permute.xlu0 %5710
    %5712 = vrot.lane.b32.xlu0 %v5507, 1
    %v5713 = vpop.permute.xlu0 %5712
    %5714 = vrot.lane.b32.xlu0 %v5500, 1
    %v5715 = vpop.permute.xlu0 %5714
    %5716 = vrot.lane.b32.xlu0 %v5508, 1
    %v5717 = vpop.permute.xlu0 %5716
    %5718 = vrot.lane.b32.xlu0 %v5501, 1
    %v5719 = vpop.permute.xlu0 %5718
    %5720 = vrot.lane.b32.xlu0 %v5509, 1
    %v5721 = vpop.permute.xlu0 %5720
    %5722 = vrot.lane.b32.xlu0 %v5502, 1
    %v5723 = vpop.permute.xlu0 %5722
    %5724 = vrot.lane.b32.xlu0 %v5510, 1
    %v5725 = vpop.permute.xlu0 %5724
    %5726 = vrot.lane.b32.xlu0 %v5503, 1
    %v5727 = vpop.permute.xlu0 %5726
    %5728 = vrot.lane.b32.xlu0 %v5511, 1
    %v5729 = vpop.permute.xlu0 %5728
    %5730 = vrot.lane.b32.xlu0 %v5504, 1
    %v5731 = vpop.permute.xlu0 %5730
    %5732 = vrot.lane.b32.xlu0 %v5512, 1
    %v5733 = vpop.permute.xlu0 %5732
    %5734 = vrot.lane.b32.xlu0 %v5505, 1
    %v5735 = vpop.permute.xlu0 %5734
    %5736 = vrot.lane.b32.xlu0 %v5513, 1
    %v5737 = vpop.permute.xlu0 %5736
    %v5738 = vsel %vm585, %v5731, %v5735
    %v5739 = vsel %vm585, %v5733, %v5737
    %v5740 = vsel %vm585, %v5727, %v5731
    %v5741 = vsel %vm585, %v5729, %v5733
    %v5742 = vsel %vm585, %v5723, %v5727
    %v5743 = vsel %vm585, %v5725, %v5729
    %v5744 = vsel %vm585, %v5719, %v5723
    %v5745 = vsel %vm585, %v5721, %v5725
    %v5746 = vsel %vm585, %v5715, %v5719
    %v5747 = vsel %vm585, %v5717, %v5721
    %v5748 = vsel %vm585, %v5711, %v5715
    %v5749 = vsel %vm585, %v5713, %v5717
    %v5750 = vsel %vm585, %v5707, %v5711
    %v5751 = vsel %vm585, %v5709, %v5713
    %v5752 = vsel %vm585, %v5735, %v5707
    %v5753 = vsel %vm585, %v5737, %v5709
    %v5754 = vpack.c.bf16 %v5750, %v5752
    %v5755 = vpack.c.bf16 %v5746, %v5748
    %v5756 = vpack.c.bf16 %v5742, %v5744
    %v5757 = vpack.c.bf16 %v5738, %v5740
    %v5758 = vpack.c.bf16 %v5751, %v5753
    %v5759 = vpack.c.bf16 %v5747, %v5749
    %v5760 = vpack.c.bf16 %v5743, %v5745
    %v5761 = vpack.c.bf16 %v5739, %v5741
    %5762 = vst [vmem:[#allocation2 + $0xc0] sm:$0xff] %v5754
    %5763 = vst [vmem:[#allocation2 + $0xc8] sm:$0xff] %v5755
    %5764 = vst [vmem:[#allocation2 + $0xd0] sm:$0xff] %v5756
    %5765 = vst [vmem:[#allocation2 + $0xd8] sm:$0xff] %v5757
    %5766 = vst [vmem:[#allocation2 + $0xe0] sm:$0xff] %v5758
    %5767 = vst [vmem:[#allocation2 + $0xe8] sm:$0xff] %v5759
    %5768 = vst [vmem:[#allocation2 + $0xf0] sm:$0xff] %v5760
    %5769 = vst [vmem:[#allocation2 + $0xf8] sm:$0xff] %v5761
    %v5770 = vpack.c.bf16 %v5499, %v5498
    %v5771 = vpack.c.bf16 %v5501, %v5500
    %v5772 = vpack.c.bf16 %v5503, %v5502
    %v5773 = vpack.c.bf16 %v5505, %v5504
    %v5774 = vpack.c.bf16 %v5507, %v5506
    %v5775 = vpack.c.bf16 %v5509, %v5508
    %v5776 = vpack.c.bf16 %v5511, %v5510
    %v5777 = vpack.c.bf16 %v5513, %v5512
    %5778 = vst [vmem:[#allocation2 + $0x100] sm:$0xff] %v5770
    %5779 = vst [vmem:[#allocation2 + $0x108] sm:$0xff] %v5771
    %5780 = vst [vmem:[#allocation2 + $0x110] sm:$0xff] %v5772
    %5781 = vst [vmem:[#allocation2 + $0x118] sm:$0xff] %v5773
    %5782 = vst [vmem:[#allocation2 + $0x120] sm:$0xff] %v5774
    %5783 = vst [vmem:[#allocation2 + $0x128] sm:$0xff] %v5775
    %5784 = vst [vmem:[#allocation2 + $0x130] sm:$0xff] %v5776
    %5785 = vst [vmem:[#allocation2 + $0x138] sm:$0xff] %v5777
    %5786 = vrot.lane.b32.xlu0 %v5498, 127
    %v5787 = vpop.permute.xlu0 %5786
    %5788 = vrot.lane.b32.xlu0 %v5506, 127
    %v5789 = vpop.permute.xlu0 %5788
    %5790 = vrot.lane.b32.xlu0 %v5499, 127
    %v5791 = vpop.permute.xlu0 %5790
    %5792 = vrot.lane.b32.xlu0 %v5507, 127
    %v5793 = vpop.permute.xlu0 %5792
    %5794 = vrot.lane.b32.xlu0 %v5500, 127
    %v5795 = vpop.permute.xlu0 %5794
    %5796 = vrot.lane.b32.xlu0 %v5508, 127
    %v5797 = vpop.permute.xlu0 %5796
    %5798 = vrot.lane.b32.xlu0 %v5501, 127
    %v5799 = vpop.permute.xlu0 %5798
    %5800 = vrot.lane.b32.xlu0 %v5509, 127
    %v5801 = vpop.permute.xlu0 %5800
    %5802 = vrot.lane.b32.xlu0 %v5502, 127
    %v5803 = vpop.permute.xlu0 %5802
    %5804 = vrot.lane.b32.xlu0 %v5510, 127
    %v5805 = vpop.permute.xlu0 %5804
    %5806 = vrot.lane.b32.xlu0 %v5503, 127
    %v5807 = vpop.permute.xlu0 %5806
    %5808 = vrot.lane.b32.xlu0 %v5511, 127
    %v5809 = vpop.permute.xlu0 %5808
    %5810 = vrot.lane.b32.xlu0 %v5504, 127
    %v5811 = vpop.permute.xlu0 %5810
    %5812 = vrot.lane.b32.xlu0 %v5512, 127
    %v5813 = vpop.permute.xlu0 %5812
    %5814 = vrot.lane.b32.xlu0 %v5505, 127
    %v5815 = vpop.permute.xlu0 %5814
    %5816 = vrot.lane.b32.xlu0 %v5513, 127
    %v5817 = vpop.permute.xlu0 %5816
    %v5818 = vsel %vm666, %v5811, %v5815
    %v5819 = vsel %vm666, %v5813, %v5817
    %v5820 = vsel %vm666, %v5807, %v5811
    %v5821 = vsel %vm666, %v5809, %v5813
    %v5822 = vsel %vm666, %v5803, %v5807
    %v5823 = vsel %vm666, %v5805, %v5809
    %v5824 = vsel %vm666, %v5799, %v5803
    %v5825 = vsel %vm666, %v5801, %v5805
    %v5826 = vsel %vm666, %v5795, %v5799
    %v5827 = vsel %vm666, %v5797, %v5801
    %v5828 = vsel %vm666, %v5791, %v5795
    %v5829 = vsel %vm666, %v5793, %v5797
    %v5830 = vsel %vm666, %v5787, %v5791
    %v5831 = vsel %vm666, %v5789, %v5793
    %v5832 = vsel %vm666, %v5815, %v5787
    %v5833 = vsel %vm666, %v5817, %v5789
    %v5834 = vpack.c.bf16 %v5828, %v5830
    %v5835 = vpack.c.bf16 %v5824, %v5826
    %v5836 = vpack.c.bf16 %v5820, %v5822
    %v5837 = vpack.c.bf16 %v5832, %v5818
    %v5838 = vpack.c.bf16 %v5829, %v5831
    %v5839 = vpack.c.bf16 %v5825, %v5827
    %v5840 = vpack.c.bf16 %v5821, %v5823
    %v5841 = vpack.c.bf16 %v5833, %v5819
    %5842 = vst [vmem:[#allocation2 + $0x140] sm:$0xff] %v5834
    %5843 = vst [vmem:[#allocation2 + $0x148] sm:$0xff] %v5835
    %5844 = vst [vmem:[#allocation2 + $0x150] sm:$0xff] %v5836
    %5845 = vst [vmem:[#allocation2 + $0x158] sm:$0xff] %v5837
    %5846 = vst [vmem:[#allocation2 + $0x160] sm:$0xff] %v5838
    %5847 = vst [vmem:[#allocation2 + $0x168] sm:$0xff] %v5839
    %5848 = vst [vmem:[#allocation2 + $0x170] sm:$0xff] %v5840
    %5849 = vst [vmem:[#allocation2 + $0x178] sm:$0xff] %v5841
    %5850 = vrot.lane.b32.xlu0 %v5498, 107
    %v5851 = vpop.permute.xlu0 %5850
    %5852 = vrot.lane.b32.xlu0 %v5506, 107
    %v5853 = vpop.permute.xlu0 %5852
    %5854 = vrot.lane.b32.xlu0 %v5499, 107
    %v5855 = vpop.permute.xlu0 %5854
    %5856 = vrot.lane.b32.xlu0 %v5507, 107
    %v5857 = vpop.permute.xlu0 %5856
    %5858 = vrot.lane.b32.xlu0 %v5500, 107
    %v5859 = vpop.permute.xlu0 %5858
    %5860 = vrot.lane.b32.xlu0 %v5508, 107
    %v5861 = vpop.permute.xlu0 %5860
    %5862 = vrot.lane.b32.xlu0 %v5501, 107
    %v5863 = vpop.permute.xlu0 %5862
    %5864 = vrot.lane.b32.xlu0 %v5509, 107
    %v5865 = vpop.permute.xlu0 %5864
    %5866 = vrot.lane.b32.xlu0 %v5502, 107
    %v5867 = vpop.permute.xlu0 %5866
    %5868 = vrot.lane.b32.xlu0 %v5510, 107
    %v5869 = vpop.permute.xlu0 %5868
    %5870 = vrot.lane.b32.xlu0 %v5503, 107
    %v5871 = vpop.permute.xlu0 %5870
    %5872 = vrot.lane.b32.xlu0 %v5511, 107
    %v5873 = vpop.permute.xlu0 %5872
    %5874 = vrot.lane.b32.xlu0 %v5504, 107
    %v5875 = vpop.permute.xlu0 %5874
    %5876 = vrot.lane.b32.xlu0 %v5512, 107
    %v5877 = vpop.permute.xlu0 %5876
    %5878 = vrot.lane.b32.xlu0 %v5505, 107
    %v5879 = vpop.permute.xlu0 %5878
    %5880 = vrot.lane.b32.xlu0 %v5513, 107
    %v5881 = vpop.permute.xlu0 %5880
    %v5882 = vsel %vm731, %v5875, %v5879
    %v5883 = vsel %vm731, %v5877, %v5881
    %v5884 = vsel %vm731, %v5871, %v5875
    %v5885 = vsel %vm731, %v5873, %v5877
    %v5886 = vsel %vm731, %v5867, %v5871
    %v5887 = vsel %vm731, %v5869, %v5873
    %v5888 = vsel %vm731, %v5863, %v5867
    %v5889 = vsel %vm731, %v5865, %v5869
    %v5890 = vsel %vm731, %v5859, %v5863
    %v5891 = vsel %vm731, %v5861, %v5865
    %v5892 = vsel %vm731, %v5855, %v5859
    %v5893 = vsel %vm731, %v5857, %v5861
    %v5894 = vsel %vm731, %v5851, %v5855
    %v5895 = vsel %vm731, %v5853, %v5857
    %v5896 = vsel %vm731, %v5879, %v5851
    %v5897 = vsel %vm731, %v5881, %v5853
    %v5898 = vpack.c.bf16 %v5892, %v5894
    %v5899 = vpack.c.bf16 %v5888, %v5890
    %v5900 = vpack.c.bf16 %v5884, %v5886
    %v5901 = vpack.c.bf16 %v5896, %v5882
    %v5902 = vpack.c.bf16 %v5893, %v5895
    %v5903 = vpack.c.bf16 %v5889, %v5891
    %v5904 = vpack.c.bf16 %v5885, %v5887
    %v5905 = vpack.c.bf16 %v5897, %v5883
    %5906 = vst [vmem:[#allocation2 + $0x180] sm:$0xff] %v5898
    %5907 = vst [vmem:[#allocation2 + $0x188] sm:$0xff] %v5899
    %5908 = vst [vmem:[#allocation2 + $0x190] sm:$0xff] %v5900
    %5909 = vst [vmem:[#allocation2 + $0x198] sm:$0xff] %v5901
    %5910 = vst [vmem:[#allocation2 + $0x1a0] sm:$0xff] %v5902
    %5911 = vst [vmem:[#allocation2 + $0x1a8] sm:$0xff] %v5903
    %5912 = vst [vmem:[#allocation2 + $0x1b0] sm:$0xff] %v5904
    %5913 = vst [vmem:[#allocation2 + $0x1b8] sm:$0xff] %v5905
    %5914 = vrot.lane.b32.xlu0 %v5498, 106
    %v5915 = vpop.permute.xlu0 %5914
    %5916 = vrot.lane.b32.xlu0 %v5506, 106
    %v5917 = vpop.permute.xlu0 %5916
    %5918 = vrot.lane.b32.xlu0 %v5499, 106
    %v5919 = vpop.permute.xlu0 %5918
    %5920 = vrot.lane.b32.xlu0 %v5507, 106
    %v5921 = vpop.permute.xlu0 %5920
    %5922 = vrot.lane.b32.xlu0 %v5500, 106
    %v5923 = vpop.permute.xlu0 %5922
    %5924 = vrot.lane.b32.xlu0 %v5508, 106
    %v5925 = vpop.permute.xlu0 %5924
    %5926 = vrot.lane.b32.xlu0 %v5501, 106
    %v5927 = vpop.permute.xlu0 %5926
    %5928 = vrot.lane.b32.xlu0 %v5509, 106
    %v5929 = vpop.permute.xlu0 %5928
    %5930 = vrot.lane.b32.xlu0 %v5502, 106
    %v5931 = vpop.permute.xlu0 %5930
    %5932 = vrot.lane.b32.xlu0 %v5510, 106
    %v5933 = vpop.permute.xlu0 %5932
    %5934 = vrot.lane.b32.xlu0 %v5503, 106
    %v5935 = vpop.permute.xlu0 %5934
    %5936 = vrot.lane.b32.xlu0 %v5511, 106
    %v5937 = vpop.permute.xlu0 %5936
    %5938 = vrot.lane.b32.xlu0 %v5504, 106
    %v5939 = vpop.permute.xlu0 %5938
    %5940 = vrot.lane.b32.xlu0 %v5512, 106
    %v5941 = vpop.permute.xlu0 %5940
    %5942 = vrot.lane.b32.xlu0 %v5505, 106
    %v5943 = vpop.permute.xlu0 %5942
    %5944 = vrot.lane.b32.xlu0 %v5513, 106
    %v5945 = vpop.permute.xlu0 %5944
    %v5946 = vsel %vm796, %v5939, %v5943
    %v5947 = vsel %vm796, %v5941, %v5945
    %v5948 = vsel %vm796, %v5935, %v5939
    %v5949 = vsel %vm796, %v5937, %v5941
    %v5950 = vsel %vm796, %v5931, %v5935
    %v5951 = vsel %vm796, %v5933, %v5937
    %v5952 = vsel %vm796, %v5927, %v5931
    %v5953 = vsel %vm796, %v5929, %v5933
    %v5954 = vsel %vm796, %v5923, %v5927
    %v5955 = vsel %vm796, %v5925, %v5929
    %v5956 = vsel %vm796, %v5919, %v5923
    %v5957 = vsel %vm796, %v5921, %v5925
    %v5958 = vsel %vm796, %v5915, %v5919
    %v5959 = vsel %vm796, %v5917, %v5921
    %v5960 = vsel %vm796, %v5943, %v5915
    %v5961 = vsel %vm796, %v5945, %v5917
    %v5962 = vpack.c.bf16 %v5956, %v5958
    %v5963 = vpack.c.bf16 %v5952, %v5954
    %v5964 = vpack.c.bf16 %v5948, %v5950
    %v5965 = vpack.c.bf16 %v5960, %v5946
    %v5966 = vpack.c.bf16 %v5957, %v5959
    %v5967 = vpack.c.bf16 %v5953, %v5955
    %v5968 = vpack.c.bf16 %v5949, %v5951
    %v5969 = vpack.c.bf16 %v5961, %v5947
    %5970 = vst [vmem:[#allocation2 + $0x1c0] sm:$0xff] %v5962
    %5971 = vst [vmem:[#allocation2 + $0x1c8] sm:$0xff] %v5963
    %5972 = vst [vmem:[#allocation2 + $0x1d0] sm:$0xff] %v5964
    %5973 = vst [vmem:[#allocation2 + $0x1d8] sm:$0xff] %v5965
    %5974 = vst [vmem:[#allocation2 + $0x1e0] sm:$0xff] %v5966
    %5975 = vst [vmem:[#allocation2 + $0x1e8] sm:$0xff] %v5967
    %5976 = vst [vmem:[#allocation2 + $0x1f0] sm:$0xff] %v5968
    %5977 = vst [vmem:[#allocation2 + $0x1f8] sm:$0xff] %v5969
    %5978 = vrot.lane.b32.xlu0 %v5498, 105
    %v5979 = vpop.permute.xlu0 %5978
    %5980 = vrot.lane.b32.xlu0 %v5506, 105
    %v5981 = vpop.permute.xlu0 %5980
    %5982 = vrot.lane.b32.xlu0 %v5499, 105
    %v5983 = vpop.permute.xlu0 %5982
    %5984 = vrot.lane.b32.xlu0 %v5507, 105
    %v5985 = vpop.permute.xlu0 %5984
    %5986 = vrot.lane.b32.xlu0 %v5500, 105
    %v5987 = vpop.permute.xlu0 %5986
    %5988 = vrot.lane.b32.xlu0 %v5508, 105
    %v5989 = vpop.permute.xlu0 %5988
    %5990 = vrot.lane.b32.xlu0 %v5501, 105
    %v5991 = vpop.permute.xlu0 %5990
    %5992 = vrot.lane.b32.xlu0 %v5509, 105
    %v5993 = vpop.permute.xlu0 %5992
    %5994 = vrot.lane.b32.xlu0 %v5502, 105
    %v5995 = vpop.permute.xlu0 %5994
    %5996 = vrot.lane.b32.xlu0 %v5510, 105
    %v5997 = vpop.permute.xlu0 %5996
    %5998 = vrot.lane.b32.xlu0 %v5503, 105
    %v5999 = vpop.permute.xlu0 %5998
    %6000 = vrot.lane.b32.xlu0 %v5511, 105
    %v6001 = vpop.permute.xlu0 %6000
    %6002 = vrot.lane.b32.xlu0 %v5504, 105
    %v6003 = vpop.permute.xlu0 %6002
    %6004 = vrot.lane.b32.xlu0 %v5512, 105
    %v6005 = vpop.permute.xlu0 %6004
    %6006 = vrot.lane.b32.xlu0 %v5505, 105
    %v6007 = vpop.permute.xlu0 %6006
    %6008 = vrot.lane.b32.xlu0 %v5513, 105
    %v6009 = vpop.permute.xlu0 %6008
    %v6010 = vsel %vm861, %v6003, %v6007
    %v6011 = vsel %vm861, %v6005, %v6009
    %v6012 = vsel %vm861, %v5999, %v6003
    %v6013 = vsel %vm861, %v6001, %v6005
    %v6014 = vsel %vm861, %v5995, %v5999
    %v6015 = vsel %vm861, %v5997, %v6001
    %v6016 = vsel %vm861, %v5991, %v5995
    %v6017 = vsel %vm861, %v5993, %v5997
    %v6018 = vsel %vm861, %v5987, %v5991
    %v6019 = vsel %vm861, %v5989, %v5993
    %v6020 = vsel %vm861, %v5983, %v5987
    %v6021 = vsel %vm861, %v5985, %v5989
    %v6022 = vsel %vm861, %v5979, %v5983
    %v6023 = vsel %vm861, %v5981, %v5985
    %v6024 = vsel %vm861, %v6007, %v5979
    %v6025 = vsel %vm861, %v6009, %v5981
    %v6026 = vpack.c.bf16 %v6020, %v6022
    %v6027 = vpack.c.bf16 %v6016, %v6018
    %v6028 = vpack.c.bf16 %v6012, %v6014
    %v6029 = vpack.c.bf16 %v6024, %v6010
    %v6030 = vpack.c.bf16 %v6021, %v6023
    %v6031 = vpack.c.bf16 %v6017, %v6019
    %v6032 = vpack.c.bf16 %v6013, %v6015
    %v6033 = vpack.c.bf16 %v6025, %v6011
    %6034 = vst [vmem:[#allocation2 + $0x200] sm:$0xff] %v6026
    %6035 = vst [vmem:[#allocation2 + $0x208] sm:$0xff] %v6027
    %6036 = vst [vmem:[#allocation2 + $0x210] sm:$0xff] %v6028
    %6037 = vst [vmem:[#allocation2 + $0x218] sm:$0xff] %v6029
    %6038 = vst [vmem:[#allocation2 + $0x220] sm:$0xff] %v6030
    %6039 = vst [vmem:[#allocation2 + $0x228] sm:$0xff] %v6031
    %6040 = vst [vmem:[#allocation2 + $0x230] sm:$0xff] %v6032
    %6041 = vst [vmem:[#allocation2 + $0x238] sm:$0xff] %v6033
    %s6042 = scalar_lea.vmem [#allocation9], 64
    %v6043 = vld [vmem:[%s6042] sm:$0xff]
    %v6044 = vld [vmem:[%s6042 + $0x8] sm:$0xff]
    %v6045 = vld [vmem:[#allocation2] sm:$0xff]
    %v6046 = vld [vmem:[#allocation2 + $0x8] sm:$0xff]
    %v6047 = vld [vmem:[#allocation2 + $0x10] sm:$0xff]
    %v6048 = vld [vmem:[#allocation2 + $0x18] sm:$0xff]
    %v6049 = vld [vmem:[#allocation2 + $0x20] sm:$0xff]
    %v6050 = vld [vmem:[#allocation2 + $0x28] sm:$0xff]
    %v6051 = vld [vmem:[#allocation2 + $0x30] sm:$0xff]
    %v6052 = vld [vmem:[#allocation2 + $0x38] sm:$0xff]
    %v6053 = vld [vmem:[#allocation2 + $0x40] sm:$0xff]
    %v6054 = vld [vmem:[#allocation2 + $0x48] sm:$0xff]
    %v6055 = vld [vmem:[#allocation2 + $0x50] sm:$0xff]
    %v6056 = vld [vmem:[#allocation2 + $0x58] sm:$0xff]
    %v6057 = vld [vmem:[#allocation2 + $0x60] sm:$0xff]
    %v6058 = vld [vmem:[#allocation2 + $0x68] sm:$0xff]
    %v6059 = vld [vmem:[#allocation2 + $0x70] sm:$0xff]
    %v6060 = vld [vmem:[#allocation2 + $0x78] sm:$0xff]
    %v6061 = vld [vmem:[#allocation2 + $0x80] sm:$0xff]
    %v6062 = vld [vmem:[#allocation2 + $0x88] sm:$0xff]
    %v6063 = vld [vmem:[#allocation2 + $0x90] sm:$0xff]
    %v6064 = vld [vmem:[#allocation2 + $0x98] sm:$0xff]
    %v6065 = vld [vmem:[#allocation2 + $0xa0] sm:$0xff]
    %v6066 = vld [vmem:[#allocation2 + $0xa8] sm:$0xff]
    %v6067 = vld [vmem:[#allocation2 + $0xb0] sm:$0xff]
    %v6068 = vld [vmem:[#allocation2 + $0xb8] sm:$0xff]
    %v6069 = vld [vmem:[#allocation2 + $0xc0] sm:$0xff]
    %v6070 = vld [vmem:[#allocation2 + $0xc8] sm:$0xff]
    %v6071 = vld [vmem:[#allocation2 + $0xd0] sm:$0xff]
    %v6072 = vld [vmem:[#allocation2 + $0xd8] sm:$0xff]
    %v6073 = vld [vmem:[#allocation2 + $0xe0] sm:$0xff]
    %v6074 = vld [vmem:[#allocation2 + $0xe8] sm:$0xff]
    %v6075 = vld [vmem:[#allocation2 + $0xf0] sm:$0xff]
    %v6076 = vld [vmem:[#allocation2 + $0xf8] sm:$0xff]
    %v6077 = vld [vmem:[#allocation2 + $0x100] sm:$0xff]
    %v6078 = vld [vmem:[#allocation2 + $0x108] sm:$0xff]
    %v6079 = vld [vmem:[#allocation2 + $0x110] sm:$0xff]
    %v6080 = vld [vmem:[#allocation2 + $0x118] sm:$0xff]
    %v6081 = vld [vmem:[#allocation2 + $0x120] sm:$0xff]
    %v6082 = vld [vmem:[#allocation2 + $0x128] sm:$0xff]
    %v6083 = vld [vmem:[#allocation2 + $0x130] sm:$0xff]
    %v6084 = vld [vmem:[#allocation2 + $0x138] sm:$0xff]
    %v6085 = vld [vmem:[#allocation2 + $0x140] sm:$0xff]
    %v6086 = vld [vmem:[#allocation2 + $0x148] sm:$0xff]
    %v6087 = vld [vmem:[#allocation2 + $0x150] sm:$0xff]
    %v6088 = vld [vmem:[#allocation2 + $0x158] sm:$0xff]
    %v6089 = vld [vmem:[#allocation2 + $0x160] sm:$0xff]
    %v6090 = vld [vmem:[#allocation2 + $0x168] sm:$0xff]
    %v6091 = vld [vmem:[#allocation2 + $0x170] sm:$0xff]
    %v6092 = vld [vmem:[#allocation2 + $0x178] sm:$0xff]
    %v6093 = vld [vmem:[#allocation2 + $0x180] sm:$0xff]
    %v6094 = vld [vmem:[#allocation2 + $0x188] sm:$0xff]
    %v6095 = vld [vmem:[#allocation2 + $0x190] sm:$0xff]
    %v6096 = vld [vmem:[#allocation2 + $0x198] sm:$0xff]
    %v6097 = vld [vmem:[#allocation2 + $0x1a0] sm:$0xff]
    %v6098 = vld [vmem:[#allocation2 + $0x1a8] sm:$0xff]
    %v6099 = vld [vmem:[#allocation2 + $0x1b0] sm:$0xff]
    %v6100 = vld [vmem:[#allocation2 + $0x1b8] sm:$0xff]
    %v6101 = vld [vmem:[#allocation2 + $0x1c0] sm:$0xff]
    %v6102 = vld [vmem:[#allocation2 + $0x1c8] sm:$0xff]
    %v6103 = vld [vmem:[#allocation2 + $0x1d0] sm:$0xff]
    %v6104 = vld [vmem:[#allocation2 + $0x1d8] sm:$0xff]
    %v6105 = vld [vmem:[#allocation2 + $0x1e0] sm:$0xff]
    %v6106 = vld [vmem:[#allocation2 + $0x1e8] sm:$0xff]
    %v6107 = vld [vmem:[#allocation2 + $0x1f0] sm:$0xff]
    %v6108 = vld [vmem:[#allocation2 + $0x1f8] sm:$0xff]
    %v6109 = vld [vmem:[#allocation2 + $0x200] sm:$0xff]
    %v6110 = vld [vmem:[#allocation2 + $0x208] sm:$0xff]
    %v6111 = vld [vmem:[#allocation2 + $0x210] sm:$0xff]
    %v6112 = vld [vmem:[#allocation2 + $0x218] sm:$0xff]
    %v6113 = vld [vmem:[#allocation2 + $0x220] sm:$0xff]
    %v6114 = vld [vmem:[#allocation2 + $0x228] sm:$0xff]
    %v6115 = vld [vmem:[#allocation2 + $0x230] sm:$0xff]
    %v6116 = vld [vmem:[#allocation2 + $0x238] sm:$0xff]
    %v6117 = vld [vmem:[#allocation2 + $0x240] sm:$0xff]
    %v6118 = vld [vmem:[#allocation2 + $0x248] sm:$0xff]
    %v6119 = vld [vmem:[#allocation2 + $0x250] sm:$0xff]
    %v6120 = vld [vmem:[#allocation2 + $0x258] sm:$0xff]
    %v6121 = vld [vmem:[#allocation2 + $0x260] sm:$0xff]
    %v6122 = vld [vmem:[#allocation2 + $0x268] sm:$0xff]
    %v6123 = vld [vmem:[#allocation2 + $0x270] sm:$0xff]
    %v6124 = vld [vmem:[#allocation2 + $0x278] sm:$0xff]
    %v6127 = vunpack.c.l.b16 %v6043
    %v6128 = vunpack.c.h.b16 %v6043
    %v6129 = vunpack.c.l.b16 %v6044
    %v6130 = vunpack.c.h.b16 %v6044
    %v6131 = vpack.c.b16 %v6129, %v6127
    %v6132 = vpack.c.b16 %v6130, %v6128
    %v6214 = vunpack.c.l.b16 %v6045
    %v6215 = vunpack.c.h.b16 %v6045
    %v6216 = vunpack.c.l.b16 %v6046
    %v6217 = vunpack.c.h.b16 %v6046
    %v6218 = vunpack.c.l.b16 %v6047
    %v6219 = vunpack.c.h.b16 %v6047
    %v6220 = vunpack.c.l.b16 %v6048
    %v6221 = vunpack.c.h.b16 %v6048
    %v6222 = vunpack.c.l.b16 %v6049
    %v6223 = vunpack.c.h.b16 %v6049
    %v6224 = vunpack.c.l.b16 %v6050
    %v6225 = vunpack.c.h.b16 %v6050
    %v6226 = vunpack.c.l.b16 %v6051
    %v6227 = vunpack.c.h.b16 %v6051
    %v6228 = vunpack.c.l.b16 %v6052
    %v6229 = vunpack.c.h.b16 %v6052
    %v6230 = vunpack.c.l.b16 %v6053
    %v6231 = vunpack.c.h.b16 %v6053
    %v6232 = vunpack.c.l.b16 %v6054
    %v6233 = vunpack.c.h.b16 %v6054
    %v6234 = vunpack.c.l.b16 %v6055
    %v6235 = vunpack.c.h.b16 %v6055
    %v6236 = vunpack.c.l.b16 %v6056
    %v6237 = vunpack.c.h.b16 %v6056
    %v6238 = vunpack.c.l.b16 %v6057
    %v6239 = vunpack.c.h.b16 %v6057
    %v6240 = vunpack.c.l.b16 %v6058
    %v6241 = vunpack.c.h.b16 %v6058
    %v6242 = vunpack.c.l.b16 %v6059
    %v6243 = vunpack.c.h.b16 %v6059
    %v6244 = vunpack.c.l.b16 %v6060
    %v6245 = vunpack.c.h.b16 %v6060
    %v6246 = vunpack.c.l.b16 %v6061
    %v6247 = vunpack.c.h.b16 %v6061
    %v6248 = vunpack.c.l.b16 %v6062
    %v6249 = vunpack.c.h.b16 %v6062
    %v6250 = vunpack.c.l.b16 %v6063
    %v6251 = vunpack.c.h.b16 %v6063
    %v6252 = vunpack.c.l.b16 %v6064
    %v6253 = vunpack.c.h.b16 %v6064
    %v6254 = vunpack.c.l.b16 %v6065
    %v6255 = vunpack.c.h.b16 %v6065
    %v6256 = vunpack.c.l.b16 %v6066
    %v6257 = vunpack.c.h.b16 %v6066
    %v6258 = vunpack.c.l.b16 %v6067
    %v6259 = vunpack.c.h.b16 %v6067
    %v6260 = vunpack.c.l.b16 %v6068
    %v6261 = vunpack.c.h.b16 %v6068
    %v6262 = vunpack.c.l.b16 %v6069
    %v6263 = vunpack.c.h.b16 %v6069
    %v6264 = vunpack.c.l.b16 %v6070
    %v6265 = vunpack.c.h.b16 %v6070
    %v6266 = vunpack.c.l.b16 %v6071
    %v6267 = vunpack.c.h.b16 %v6071
    %v6268 = vunpack.c.l.b16 %v6072
    %v6269 = vunpack.c.h.b16 %v6072
    %v6270 = vunpack.c.l.b16 %v6073
    %v6271 = vunpack.c.h.b16 %v6073
    %v6272 = vunpack.c.l.b16 %v6074
    %v6273 = vunpack.c.h.b16 %v6074
    %v6274 = vunpack.c.l.b16 %v6075
    %v6275 = vunpack.c.h.b16 %v6075
    %v6276 = vunpack.c.l.b16 %v6076
    %v6277 = vunpack.c.h.b16 %v6076
    %v6278 = vunpack.c.l.b16 %v6077
    %v6279 = vunpack.c.h.b16 %v6077
    %v6280 = vunpack.c.l.b16 %v6078
    %v6281 = vunpack.c.h.b16 %v6078
    %v6282 = vunpack.c.l.b16 %v6079
    %v6283 = vunpack.c.h.b16 %v6079
    %v6284 = vunpack.c.l.b16 %v6080
    %v6285 = vunpack.c.h.b16 %v6080
    %v6286 = vunpack.c.l.b16 %v6081
    %v6287 = vunpack.c.h.b16 %v6081
    %v6288 = vunpack.c.l.b16 %v6082
    %v6289 = vunpack.c.h.b16 %v6082
    %v6290 = vunpack.c.l.b16 %v6083
    %v6291 = vunpack.c.h.b16 %v6083
    %v6292 = vunpack.c.l.b16 %v6084
    %v6293 = vunpack.c.h.b16 %v6084
    %v6294 = vunpack.c.l.b16 %v6085
    %v6295 = vunpack.c.h.b16 %v6085
    %v6296 = vunpack.c.l.b16 %v6086
    %v6297 = vunpack.c.h.b16 %v6086
    %v6298 = vunpack.c.l.b16 %v6087
    %v6299 = vunpack.c.h.b16 %v6087
    %v6300 = vunpack.c.l.b16 %v6088
    %v6301 = vunpack.c.h.b16 %v6088
    %v6302 = vunpack.c.l.b16 %v6089
    %v6303 = vunpack.c.h.b16 %v6089
    %v6304 = vunpack.c.l.b16 %v6090
    %v6305 = vunpack.c.h.b16 %v6090
    %v6306 = vunpack.c.l.b16 %v6091
    %v6307 = vunpack.c.h.b16 %v6091
    %v6308 = vunpack.c.l.b16 %v6092
    %v6309 = vunpack.c.h.b16 %v6092
    %v6310 = vunpack.c.l.b16 %v6093
    %v6311 = vunpack.c.h.b16 %v6093
    %v6312 = vunpack.c.l.b16 %v6094
    %v6313 = vunpack.c.h.b16 %v6094
    %v6314 = vunpack.c.l.b16 %v6095
    %v6315 = vunpack.c.h.b16 %v6095
    %v6316 = vunpack.c.l.b16 %v6096
    %v6317 = vunpack.c.h.b16 %v6096
    %v6318 = vunpack.c.l.b16 %v6097
    %v6319 = vunpack.c.h.b16 %v6097
    %v6320 = vunpack.c.l.b16 %v6098
    %v6321 = vunpack.c.h.b16 %v6098
    %v6322 = vunpack.c.l.b16 %v6099
    %v6323 = vunpack.c.h.b16 %v6099
    %v6324 = vunpack.c.l.b16 %v6100
    %v6325 = vunpack.c.h.b16 %v6100
    %v6326 = vunpack.c.l.b16 %v6101
    %v6327 = vunpack.c.h.b16 %v6101
    %v6328 = vunpack.c.l.b16 %v6102
    %v6329 = vunpack.c.h.b16 %v6102
    %v6330 = vunpack.c.l.b16 %v6103
    %v6331 = vunpack.c.h.b16 %v6103
    %v6332 = vunpack.c.l.b16 %v6104
    %v6333 = vunpack.c.h.b16 %v6104
    %v6334 = vunpack.c.l.b16 %v6105
    %v6335 = vunpack.c.h.b16 %v6105
    %v6336 = vunpack.c.l.b16 %v6106
    %v6337 = vunpack.c.h.b16 %v6106
    %v6338 = vunpack.c.l.b16 %v6107
    %v6339 = vunpack.c.h.b16 %v6107
    %v6340 = vunpack.c.l.b16 %v6108
    %v6341 = vunpack.c.h.b16 %v6108
    %v6342 = vunpack.c.l.b16 %v6109
    %v6343 = vunpack.c.h.b16 %v6109
    %v6344 = vunpack.c.l.b16 %v6110
    %v6345 = vunpack.c.h.b16 %v6110
    %v6346 = vunpack.c.l.b16 %v6111
    %v6347 = vunpack.c.h.b16 %v6111
    %v6348 = vunpack.c.l.b16 %v6112
    %v6349 = vunpack.c.h.b16 %v6112
    %v6350 = vunpack.c.l.b16 %v6113
    %v6351 = vunpack.c.h.b16 %v6113
    %v6352 = vunpack.c.l.b16 %v6114
    %v6353 = vunpack.c.h.b16 %v6114
    %v6354 = vunpack.c.l.b16 %v6115
    %v6355 = vunpack.c.h.b16 %v6115
    %v6356 = vunpack.c.l.b16 %v6116
    %v6357 = vunpack.c.h.b16 %v6116
    %v6358 = vunpack.c.l.b16 %v6117
    %v6359 = vunpack.c.h.b16 %v6117
    %v6360 = vunpack.c.l.b16 %v6118
    %v6361 = vunpack.c.h.b16 %v6118
    %v6362 = vunpack.c.l.b16 %v6119
    %v6363 = vunpack.c.h.b16 %v6119
    %v6364 = vunpack.c.l.b16 %v6120
    %v6365 = vunpack.c.h.b16 %v6120
    %v6366 = vunpack.c.l.b16 %v6121
    %v6367 = vunpack.c.h.b16 %v6121
    %v6368 = vunpack.c.l.b16 %v6122
    %v6369 = vunpack.c.h.b16 %v6122
    %v6370 = vunpack.c.l.b16 %v6123
    %v6371 = vunpack.c.h.b16 %v6123
    %v6372 = vunpack.c.l.b16 %v6124
    %v6373 = vunpack.c.h.b16 %v6124
    %v6374 = vpack.c.b16 %v6222, %v6214
    %v6375 = vpack.c.b16 %v6223, %v6215
    %v6376 = vpack.c.b16 %v6224, %v6216
    %v6377 = vpack.c.b16 %v6225, %v6217
    %v6378 = vpack.c.b16 %v6226, %v6218
    %v6379 = vpack.c.b16 %v6227, %v6219
    %v6380 = vpack.c.b16 %v6228, %v6220
    %v6381 = vpack.c.b16 %v6229, %v6221
    %v6382 = vpack.c.b16 %v6238, %v6230
    %v6383 = vpack.c.b16 %v6239, %v6231
    %v6384 = vpack.c.b16 %v6240, %v6232
    %v6385 = vpack.c.b16 %v6241, %v6233
    %v6386 = vpack.c.b16 %v6242, %v6234
    %v6387 = vpack.c.b16 %v6243, %v6235
    %v6388 = vpack.c.b16 %v6244, %v6236
    %v6389 = vpack.c.b16 %v6245, %v6237
    %v6390 = vpack.c.b16 %v6254, %v6246
    %v6391 = vpack.c.b16 %v6255, %v6247
    %v6392 = vpack.c.b16 %v6256, %v6248
    %v6393 = vpack.c.b16 %v6257, %v6249
    %v6394 = vpack.c.b16 %v6258, %v6250
    %v6395 = vpack.c.b16 %v6259, %v6251
    %v6396 = vpack.c.b16 %v6260, %v6252
    %v6397 = vpack.c.b16 %v6261, %v6253
    %v6398 = vpack.c.b16 %v6270, %v6262
    %v6399 = vpack.c.b16 %v6271, %v6263
    %v6400 = vpack.c.b16 %v6272, %v6264
    %v6401 = vpack.c.b16 %v6273, %v6265
    %v6402 = vpack.c.b16 %v6274, %v6266
    %v6403 = vpack.c.b16 %v6275, %v6267
    %v6404 = vpack.c.b16 %v6276, %v6268
    %v6405 = vpack.c.b16 %v6277, %v6269
    %v6406 = vpack.c.b16 %v6286, %v6278
    %v6407 = vpack.c.b16 %v6287, %v6279
    %v6408 = vpack.c.b16 %v6288, %v6280
    %v6409 = vpack.c.b16 %v6289, %v6281
    %v6410 = vpack.c.b16 %v6290, %v6282
    %v6411 = vpack.c.b16 %v6291, %v6283
    %v6412 = vpack.c.b16 %v6292, %v6284
    %v6413 = vpack.c.b16 %v6293, %v6285
    %v6414 = vpack.c.b16 %v6302, %v6294
    %v6415 = vpack.c.b16 %v6303, %v6295
    %v6416 = vpack.c.b16 %v6304, %v6296
    %v6417 = vpack.c.b16 %v6305, %v6297
    %v6418 = vpack.c.b16 %v6306, %v6298
    %v6419 = vpack.c.b16 %v6307, %v6299
    %v6420 = vpack.c.b16 %v6308, %v6300
    %v6421 = vpack.c.b16 %v6309, %v6301
    %v6422 = vpack.c.b16 %v6318, %v6310
    %v6423 = vpack.c.b16 %v6319, %v6311
    %v6424 = vpack.c.b16 %v6320, %v6312
    %v6425 = vpack.c.b16 %v6321, %v6313
    %v6426 = vpack.c.b16 %v6322, %v6314
    %v6427 = vpack.c.b16 %v6323, %v6315
    %v6428 = vpack.c.b16 %v6324, %v6316
    %v6429 = vpack.c.b16 %v6325, %v6317
    %v6430 = vpack.c.b16 %v6334, %v6326
    %v6431 = vpack.c.b16 %v6335, %v6327
    %v6432 = vpack.c.b16 %v6336, %v6328
    %v6433 = vpack.c.b16 %v6337, %v6329
    %v6434 = vpack.c.b16 %v6338, %v6330
    %v6435 = vpack.c.b16 %v6339, %v6331
    %v6436 = vpack.c.b16 %v6340, %v6332
    %v6437 = vpack.c.b16 %v6341, %v6333
    %v6438 = vpack.c.b16 %v6350, %v6342
    %v6439 = vpack.c.b16 %v6351, %v6343
    %v6440 = vpack.c.b16 %v6352, %v6344
    %v6441 = vpack.c.b16 %v6353, %v6345
    %v6442 = vpack.c.b16 %v6354, %v6346
    %v6443 = vpack.c.b16 %v6355, %v6347
    %v6444 = vpack.c.b16 %v6356, %v6348
    %v6445 = vpack.c.b16 %v6357, %v6349
    %v6446 = vpack.c.b16 %v6366, %v6358
    %v6447 = vpack.c.b16 %v6367, %v6359
    %v6448 = vpack.c.b16 %v6368, %v6360
    %v6449 = vpack.c.b16 %v6369, %v6361
    %v6450 = vpack.c.b16 %v6370, %v6362
    %v6451 = vpack.c.b16 %v6371, %v6363
    %v6452 = vpack.c.b16 %v6372, %v6364
    %v6453 = vpack.c.b16 %v6373, %v6365
    %v6535 = vsel %vm1385, %v6132, 0
    %6537 = vmatpush.bf16.msra.mxu0 %v6430
    %6538 = vmatpush.bf16.msra.mxu0 %v6422
    %6539 = vmatpush.bf16.msra.mxu0 %v6414
    %6540 = vmatpush.bf16.msra.mxu0 %v6406
    %6541 = vmatpush.bf16.msra.mxu0 %v6398
    %6542 = vmatpush.bf16.msra.mxu0 %v6390
    %6543 = vmatpush.bf16.msra.mxu0 %v6382
    %6544 = vmatpush.bf16.msra.mxu0 %v6374
    %6545 = vmatmul.bf16.gmra.mxu0 %v6131
    %v6546 = vpop.f32.mrf.mxu0
    %v6547 = vadd.f32 0.0, %v6546
    %v6548 = vpop.f32.mrf.mxu0
    %v6549 = vadd.f32 0.0, %v6548
    %6550 = vdwg.mxu0
    %6551 = vmatpush.bf16.msra.mxu0 0
    %6552 = vmatpush.bf16.msra.mxu0 0
    %6553 = vmatpush.bf16.msra.mxu0 0
    %6554 = vmatpush.bf16.msra.mxu0 0
    %6555 = vmatpush.bf16.msra.mxu0 0
    %6556 = vmatpush.bf16.msra.mxu0 0
    %6557 = vmatpush.bf16.msra.mxu0 %v6446
    %6558 = vmatpush.bf16.msra.mxu0 %v6438
    %6559 = vmatmul.bf16.gmra.mxu0 %v6535
    %v6560 = vpop.f32.mrf.mxu0
    %v6561 = vadd.f32 %v6547, %v6560
    %v6562 = vpop.f32.mrf.mxu0
    %v6563 = vadd.f32 %v6549, %v6562
    %6564 = vdwg.mxu0
    %6565 = vmatpush.bf16.msra.mxu0 %v6431
    %6566 = vmatpush.bf16.msra.mxu0 %v6423
    %6567 = vmatpush.bf16.msra.mxu0 %v6415
    %6568 = vmatpush.bf16.msra.mxu0 %v6407
    %6569 = vmatpush.bf16.msra.mxu0 %v6399
    %6570 = vmatpush.bf16.msra.mxu0 %v6391
    %6571 = vmatpush.bf16.msra.mxu0 %v6383
    %6572 = vmatpush.bf16.msra.mxu0 %v6375
    %6573 = vmatmul.bf16.gmra.mxu0 %v6131
    %v6574 = vpop.f32.mrf.mxu0
    %v6575 = vadd.f32 0.0, %v6574
    %v6576 = vpop.f32.mrf.mxu0
    %v6577 = vadd.f32 0.0, %v6576
    %6578 = vdwg.mxu0
    %6579 = vmatpush.bf16.msra.mxu0 0
    %6580 = vmatpush.bf16.msra.mxu0 0
    %6581 = vmatpush.bf16.msra.mxu0 0
    %6582 = vmatpush.bf16.msra.mxu0 0
    %6583 = vmatpush.bf16.msra.mxu0 0
    %6584 = vmatpush.bf16.msra.mxu0 0
    %6585 = vmatpush.bf16.msra.mxu0 %v6447
    %6586 = vmatpush.bf16.msra.mxu0 %v6439
    %6587 = vmatmul.bf16.gmra.mxu0 %v6535
    %v6588 = vpop.f32.mrf.mxu0
    %v6589 = vadd.f32 %v6575, %v6588
    %v6590 = vpop.f32.mrf.mxu0
    %v6591 = vadd.f32 %v6577, %v6590
    %6592 = vdwg.mxu0
    %6593 = vmatpush.bf16.msra.mxu0 %v6432
    %6594 = vmatpush.bf16.msra.mxu0 %v6424
    %6595 = vmatpush.bf16.msra.mxu0 %v6416
    %6596 = vmatpush.bf16.msra.mxu0 %v6408
    %6597 = vmatpush.bf16.msra.mxu0 %v6400
    %6598 = vmatpush.bf16.msra.mxu0 %v6392
    %6599 = vmatpush.bf16.msra.mxu0 %v6384
    %6600 = vmatpush.bf16.msra.mxu0 %v6376
    %6601 = vmatmul.bf16.gmra.mxu0 %v6131
    %v6602 = vpop.f32.mrf.mxu0
    %v6603 = vadd.f32 0.0, %v6602
    %v6604 = vpop.f32.mrf.mxu0
    %v6605 = vadd.f32 0.0, %v6604
    %6606 = vdwg.mxu0
    %6607 = vmatpush.bf16.msra.mxu0 0
    %6608 = vmatpush.bf16.msra.mxu0 0
    %6609 = vmatpush.bf16.msra.mxu0 0
    %6610 = vmatpush.bf16.msra.mxu0 0
    %6611 = vmatpush.bf16.msra.mxu0 0
    %6612 = vmatpush.bf16.msra.mxu0 0
    %6613 = vmatpush.bf16.msra.mxu0 %v6448
    %6614 = vmatpush.bf16.msra.mxu0 %v6440
    %6615 = vmatmul.bf16.gmra.mxu0 %v6535
    %v6616 = vpop.f32.mrf.mxu0
    %v6617 = vadd.f32 %v6603, %v6616
    %v6618 = vpop.f32.mrf.mxu0
    %v6619 = vadd.f32 %v6605, %v6618
    %6620 = vdwg.mxu0
    %6621 = vmatpush.bf16.msra.mxu0 %v6433
    %6622 = vmatpush.bf16.msra.mxu0 %v6425
    %6623 = vmatpush.bf16.msra.mxu0 %v6417
    %6624 = vmatpush.bf16.msra.mxu0 %v6409
    %6625 = vmatpush.bf16.msra.mxu0 %v6401
    %6626 = vmatpush.bf16.msra.mxu0 %v6393
    %6627 = vmatpush.bf16.msra.mxu0 %v6385
    %6628 = vmatpush.bf16.msra.mxu0 %v6377
    %6629 = vmatmul.bf16.gmra.mxu0 %v6131
    %v6630 = vpop.f32.mrf.mxu0
    %v6631 = vadd.f32 0.0, %v6630
    %v6632 = vpop.f32.mrf.mxu0
    %v6633 = vadd.f32 0.0, %v6632
    %6634 = vdwg.mxu0
    %6635 = vmatpush.bf16.msra.mxu0 0
    %6636 = vmatpush.bf16.msra.mxu0 0
    %6637 = vmatpush.bf16.msra.mxu0 0
    %6638 = vmatpush.bf16.msra.mxu0 0
    %6639 = vmatpush.bf16.msra.mxu0 0
    %6640 = vmatpush.bf16.msra.mxu0 0
    %6641 = vmatpush.bf16.msra.mxu0 %v6449
    %6642 = vmatpush.bf16.msra.mxu0 %v6441
    %6643 = vmatmul.bf16.gmra.mxu0 %v6535
    %v6644 = vpop.f32.mrf.mxu0
    %v6645 = vadd.f32 %v6631, %v6644
    %v6646 = vpop.f32.mrf.mxu0
    %v6647 = vadd.f32 %v6633, %v6646
    %6648 = vdwg.mxu0
    %6649 = vmatpush.bf16.msra.mxu0 %v6434
    %6650 = vmatpush.bf16.msra.mxu0 %v6426
    %6651 = vmatpush.bf16.msra.mxu0 %v6418
    %6652 = vmatpush.bf16.msra.mxu0 %v6410
    %6653 = vmatpush.bf16.msra.mxu0 %v6402
    %6654 = vmatpush.bf16.msra.mxu0 %v6394
    %6655 = vmatpush.bf16.msra.mxu0 %v6386
    %6656 = vmatpush.bf16.msra.mxu0 %v6378
    %6657 = vmatmul.bf16.gmra.mxu0 %v6131
    %v6658 = vpop.f32.mrf.mxu0
    %v6659 = vadd.f32 0.0, %v6658
    %v6660 = vpop.f32.mrf.mxu0
    %v6661 = vadd.f32 0.0, %v6660
    %6662 = vdwg.mxu0
    %6663 = vmatpush.bf16.msra.mxu0 0
    %6664 = vmatpush.bf16.msra.mxu0 0
    %6665 = vmatpush.bf16.msra.mxu0 0
    %6666 = vmatpush.bf16.msra.mxu0 0
    %6667 = vmatpush.bf16.msra.mxu0 0
    %6668 = vmatpush.bf16.msra.mxu0 0
    %6669 = vmatpush.bf16.msra.mxu0 %v6450
    %6670 = vmatpush.bf16.msra.mxu0 %v6442
    %6671 = vmatmul.bf16.gmra.mxu0 %v6535
    %v6672 = vpop.f32.mrf.mxu0
    %v6673 = vadd.f32 %v6659, %v6672
    %v6674 = vpop.f32.mrf.mxu0
    %v6675 = vadd.f32 %v6661, %v6674
    %6676 = vdwg.mxu0
    %6677 = vmatpush.bf16.msra.mxu0 %v6435
    %6678 = vmatpush.bf16.msra.mxu0 %v6427
    %6679 = vmatpush.bf16.msra.mxu0 %v6419
    %6680 = vmatpush.bf16.msra.mxu0 %v6411
    %6681 = vmatpush.bf16.msra.mxu0 %v6403
    %6682 = vmatpush.bf16.msra.mxu0 %v6395
    %6683 = vmatpush.bf16.msra.mxu0 %v6387
    %6684 = vmatpush.bf16.msra.mxu0 %v6379
    %6685 = vmatmul.bf16.gmra.mxu0 %v6131
    %v6686 = vpop.f32.mrf.mxu0
    %v6687 = vadd.f32 0.0, %v6686
    %v6688 = vpop.f32.mrf.mxu0
    %v6689 = vadd.f32 0.0, %v6688
    %6690 = vdwg.mxu0
    %6691 = vmatpush.bf16.msra.mxu0 0
    %6692 = vmatpush.bf16.msra.mxu0 0
    %6693 = vmatpush.bf16.msra.mxu0 0
    %6694 = vmatpush.bf16.msra.mxu0 0
    %6695 = vmatpush.bf16.msra.mxu0 0
    %6696 = vmatpush.bf16.msra.mxu0 0
    %6697 = vmatpush.bf16.msra.mxu0 %v6451
    %6698 = vmatpush.bf16.msra.mxu0 %v6443
    %6699 = vmatmul.bf16.gmra.mxu0 %v6535
    %v6700 = vpop.f32.mrf.mxu0
    %v6701 = vadd.f32 %v6687, %v6700
    %v6702 = vpop.f32.mrf.mxu0
    %v6703 = vadd.f32 %v6689, %v6702
    %6704 = vdwg.mxu0
    %6705 = vmatpush.bf16.msra.mxu0 %v6436
    %6706 = vmatpush.bf16.msra.mxu0 %v6428
    %6707 = vmatpush.bf16.msra.mxu0 %v6420
    %6708 = vmatpush.bf16.msra.mxu0 %v6412
    %6709 = vmatpush.bf16.msra.mxu0 %v6404
    %6710 = vmatpush.bf16.msra.mxu0 %v6396
    %6711 = vmatpush.bf16.msra.mxu0 %v6388
    %6712 = vmatpush.bf16.msra.mxu0 %v6380
    %6713 = vmatmul.bf16.gmra.mxu0 %v6131
    %v6714 = vpop.f32.mrf.mxu0
    %v6715 = vadd.f32 0.0, %v6714
    %v6716 = vpop.f32.mrf.mxu0
    %v6717 = vadd.f32 0.0, %v6716
    %6718 = vdwg.mxu0
    %6719 = vmatpush.bf16.msra.mxu0 0
    %6720 = vmatpush.bf16.msra.mxu0 0
    %6721 = vmatpush.bf16.msra.mxu0 0
    %6722 = vmatpush.bf16.msra.mxu0 0
    %6723 = vmatpush.bf16.msra.mxu0 0
    %6724 = vmatpush.bf16.msra.mxu0 0
    %6725 = vmatpush.bf16.msra.mxu0 %v6452
    %6726 = vmatpush.bf16.msra.mxu0 %v6444
    %6727 = vmatmul.bf16.gmra.mxu0 %v6535
    %v6728 = vpop.f32.mrf.mxu0
    %v6729 = vadd.f32 %v6715, %v6728
    %v6730 = vpop.f32.mrf.mxu0
    %v6731 = vadd.f32 %v6717, %v6730
    %6732 = vdwg.mxu0
    %6733 = vmatpush.bf16.msra.mxu0 %v6437
    %6734 = vmatpush.bf16.msra.mxu0 %v6429
    %6735 = vmatpush.bf16.msra.mxu0 %v6421
    %6736 = vmatpush.bf16.msra.mxu0 %v6413
    %6737 = vmatpush.bf16.msra.mxu0 %v6405
    %6738 = vmatpush.bf16.msra.mxu0 %v6397
    %6739 = vmatpush.bf16.msra.mxu0 %v6389
    %6740 = vmatpush.bf16.msra.mxu0 %v6381
    %6741 = vmatmul.bf16.gmra.mxu0 %v6131
    %v6742 = vpop.f32.mrf.mxu0
    %v6743 = vadd.f32 0.0, %v6742
    %v6744 = vpop.f32.mrf.mxu0
    %v6745 = vadd.f32 0.0, %v6744
    %6746 = vdwg.mxu0
    %6747 = vmatpush.bf16.msra.mxu0 0
    %6748 = vmatpush.bf16.msra.mxu0 0
    %6749 = vmatpush.bf16.msra.mxu0 0
    %6750 = vmatpush.bf16.msra.mxu0 0
    %6751 = vmatpush.bf16.msra.mxu0 0
    %6752 = vmatpush.bf16.msra.mxu0 0
    %6753 = vmatpush.bf16.msra.mxu0 %v6453
    %6754 = vmatpush.bf16.msra.mxu0 %v6445
    %6755 = vmatmul.bf16.gmra.mxu0 %v6535
    %v6756 = vpop.f32.mrf.mxu0
    %v6757 = vadd.f32 %v6743, %v6756
    %v6758 = vpop.f32.mrf.mxu0
    %v6759 = vadd.f32 %v6745, %v6758
    %6760 = vdwg.mxu0
    %v6761 = vmul.f32 %v6561, %v328
    %v6762 = vmul.f32 %v6589, %v329
    %v6763 = vmul.f32 %v6617, %v330
    %v6764 = vmul.f32 %v6645, %v331
    %v6765 = vmul.f32 %v6673, %v332
    %v6766 = vmul.f32 %v6701, %v333
    %v6767 = vmul.f32 %v6729, %v334
    %v6768 = vmul.f32 %v6757, %v335
    %v6769 = vmul.f32 %v6563, %v328
    %v6770 = vmul.f32 %v6591, %v329
    %v6771 = vmul.f32 %v6619, %v330
    %v6772 = vmul.f32 %v6647, %v331
    %v6773 = vmul.f32 %v6675, %v332
    %v6774 = vmul.f32 %v6703, %v333
    %v6775 = vmul.f32 %v6731, %v334
    %v6776 = vmul.f32 %v6759, %v335
    %v6777 = vmax.f32 %v6761, 0.0
    %v6778 = vmax.f32 %v6762, 0.0
    %v6779 = vmax.f32 %v6763, 0.0
    %v6780 = vmax.f32 %v6764, 0.0
    %v6781 = vmax.f32 %v6765, 0.0
    %v6782 = vmax.f32 %v6766, 0.0
    %v6783 = vmax.f32 %v6767, 0.0
    %v6784 = vmax.f32 %v6768, 0.0
    %v6785 = vmax.f32 %v6769, 0.0
    %v6786 = vmax.f32 %v6770, 0.0
    %v6787 = vmax.f32 %v6771, 0.0
    %v6788 = vmax.f32 %v6772, 0.0
    %v6789 = vmax.f32 %v6773, 0.0
    %v6790 = vmax.f32 %v6774, 0.0
    %v6791 = vmax.f32 %v6775, 0.0
    %v6792 = vmax.f32 %v6776, 0.0
    %6793 = vrot.lane.b32.xlu0 %v6777, 23
    %v6794 = vpop.permute.xlu0 %6793
    %6795 = vrot.lane.b32.xlu0 %v6785, 23
    %v6796 = vpop.permute.xlu0 %6795
    %6797 = vrot.lane.b32.xlu0 %v6778, 23
    %v6798 = vpop.permute.xlu0 %6797
    %6799 = vrot.lane.b32.xlu0 %v6786, 23
    %v6800 = vpop.permute.xlu0 %6799
    %6801 = vrot.lane.b32.xlu0 %v6779, 23
    %v6802 = vpop.permute.xlu0 %6801
    %6803 = vrot.lane.b32.xlu0 %v6787, 23
    %v6804 = vpop.permute.xlu0 %6803
    %6805 = vrot.lane.b32.xlu0 %v6780, 23
    %v6806 = vpop.permute.xlu0 %6805
    %6807 = vrot.lane.b32.xlu0 %v6788, 23
    %v6808 = vpop.permute.xlu0 %6807
    %6809 = vrot.lane.b32.xlu0 %v6781, 23
    %v6810 = vpop.permute.xlu0 %6809
    %6811 = vrot.lane.b32.xlu0 %v6789, 23
    %v6812 = vpop.permute.xlu0 %6811
    %6813 = vrot.lane.b32.xlu0 %v6782, 23
    %v6814 = vpop.permute.xlu0 %6813
    %6815 = vrot.lane.b32.xlu0 %v6790, 23
    %v6816 = vpop.permute.xlu0 %6815
    %6817 = vrot.lane.b32.xlu0 %v6783, 23
    %v6818 = vpop.permute.xlu0 %6817
    %6819 = vrot.lane.b32.xlu0 %v6791, 23
    %v6820 = vpop.permute.xlu0 %6819
    %6821 = vrot.lane.b32.xlu0 %v6784, 23
    %v6822 = vpop.permute.xlu0 %6821
    %6823 = vrot.lane.b32.xlu0 %v6792, 23
    %v6824 = vpop.permute.xlu0 %6823
    %v6825 = vsel %vm390, %v6818, %v6822
    %v6826 = vsel %vm390, %v6820, %v6824
    %v6827 = vsel %vm390, %v6814, %v6818
    %v6828 = vsel %vm390, %v6816, %v6820
    %v6829 = vsel %vm390, %v6810, %v6814
    %v6830 = vsel %vm390, %v6812, %v6816
    %v6831 = vsel %vm390, %v6806, %v6810
    %v6832 = vsel %vm390, %v6808, %v6812
    %v6833 = vsel %vm390, %v6802, %v6806
    %v6834 = vsel %vm390, %v6804, %v6808
    %v6835 = vsel %vm390, %v6798, %v6802
    %v6836 = vsel %vm390, %v6800, %v6804
    %v6837 = vsel %vm390, %v6794, %v6798
    %v6838 = vsel %vm390, %v6796, %v6800
    %v6839 = vsel %vm390, %v6822, %v6794
    %v6840 = vsel %vm390, %v6824, %v6796
    %v6841 = vpack.c.bf16 %v6837, %v6839
    %v6842 = vpack.c.bf16 %v6833, %v6835
    %v6843 = vpack.c.bf16 %v6829, %v6831
    %v6844 = vpack.c.bf16 %v6825, %v6827
    %v6845 = vpack.c.bf16 %v6838, %v6840
    %v6846 = vpack.c.bf16 %v6834, %v6836
    %v6847 = vpack.c.bf16 %v6830, %v6832
    %v6848 = vpack.c.bf16 %v6826, %v6828
    %6849 = vst [vmem:[#allocation2] sm:$0xff] %v6841
    %6850 = vst [vmem:[#allocation2 + $0x8] sm:$0xff] %v6842
    %6851 = vst [vmem:[#allocation2 + $0x10] sm:$0xff] %v6843
    %6852 = vst [vmem:[#allocation2 + $0x18] sm:$0xff] %v6844
    %6853 = vst [vmem:[#allocation2 + $0x20] sm:$0xff] %v6845
    %6854 = vst [vmem:[#allocation2 + $0x28] sm:$0xff] %v6846
    %6855 = vst [vmem:[#allocation2 + $0x30] sm:$0xff] %v6847
    %6856 = vst [vmem:[#allocation2 + $0x38] sm:$0xff] %v6848
    %6857 = vrot.lane.b32.xlu0 %v6777, 22
    %v6858 = vpop.permute.xlu0 %6857
    %6859 = vrot.lane.b32.xlu0 %v6785, 22
    %v6860 = vpop.permute.xlu0 %6859
    %6861 = vrot.lane.b32.xlu0 %v6778, 22
    %v6862 = vpop.permute.xlu0 %6861
    %6863 = vrot.lane.b32.xlu0 %v6786, 22
    %v6864 = vpop.permute.xlu0 %6863
    %6865 = vrot.lane.b32.xlu0 %v6779, 22
    %v6866 = vpop.permute.xlu0 %6865
    %6867 = vrot.lane.b32.xlu0 %v6787, 22
    %v6868 = vpop.permute.xlu0 %6867
    %6869 = vrot.lane.b32.xlu0 %v6780, 22
    %v6870 = vpop.permute.xlu0 %6869
    %6871 = vrot.lane.b32.xlu0 %v6788, 22
    %v6872 = vpop.permute.xlu0 %6871
    %6873 = vrot.lane.b32.xlu0 %v6781, 22
    %v6874 = vpop.permute.xlu0 %6873
    %6875 = vrot.lane.b32.xlu0 %v6789, 22
    %v6876 = vpop.permute.xlu0 %6875
    %6877 = vrot.lane.b32.xlu0 %v6782, 22
    %v6878 = vpop.permute.xlu0 %6877
    %6879 = vrot.lane.b32.xlu0 %v6790, 22
    %v6880 = vpop.permute.xlu0 %6879
    %6881 = vrot.lane.b32.xlu0 %v6783, 22
    %v6882 = vpop.permute.xlu0 %6881
    %6883 = vrot.lane.b32.xlu0 %v6791, 22
    %v6884 = vpop.permute.xlu0 %6883
    %6885 = vrot.lane.b32.xlu0 %v6784, 22
    %v6886 = vpop.permute.xlu0 %6885
    %6887 = vrot.lane.b32.xlu0 %v6792, 22
    %v6888 = vpop.permute.xlu0 %6887
    %v6889 = vsel %vm455, %v6882, %v6886
    %v6890 = vsel %vm455, %v6884, %v6888
    %v6891 = vsel %vm455, %v6878, %v6882
    %v6892 = vsel %vm455, %v6880, %v6884
    %v6893 = vsel %vm455, %v6874, %v6878
    %v6894 = vsel %vm455, %v6876, %v6880
    %v6895 = vsel %vm455, %v6870, %v6874
    %v6896 = vsel %vm455, %v6872, %v6876
    %v6897 = vsel %vm455, %v6866, %v6870
    %v6898 = vsel %vm455, %v6868, %v6872
    %v6899 = vsel %vm455, %v6862, %v6866
    %v6900 = vsel %vm455, %v6864, %v6868
    %v6901 = vsel %vm455, %v6858, %v6862
    %v6902 = vsel %vm455, %v6860, %v6864
    %v6903 = vsel %vm455, %v6886, %v6858
    %v6904 = vsel %vm455, %v6888, %v6860
    %v6905 = vpack.c.bf16 %v6901, %v6903
    %v6906 = vpack.c.bf16 %v6897, %v6899
    %v6907 = vpack.c.bf16 %v6893, %v6895
    %v6908 = vpack.c.bf16 %v6889, %v6891
    %v6909 = vpack.c.bf16 %v6902, %v6904
    %v6910 = vpack.c.bf16 %v6898, %v6900
    %v6911 = vpack.c.bf16 %v6894, %v6896
    %v6912 = vpack.c.bf16 %v6890, %v6892
    %6913 = vst [vmem:[#allocation2 + $0x40] sm:$0xff] %v6905
    %6914 = vst [vmem:[#allocation2 + $0x48] sm:$0xff] %v6906
    %6915 = vst [vmem:[#allocation2 + $0x50] sm:$0xff] %v6907
    %6916 = vst [vmem:[#allocation2 + $0x58] sm:$0xff] %v6908
    %6917 = vst [vmem:[#allocation2 + $0x60] sm:$0xff] %v6909
    %6918 = vst [vmem:[#allocation2 + $0x68] sm:$0xff] %v6910
    %6919 = vst [vmem:[#allocation2 + $0x70] sm:$0xff] %v6911
    %6920 = vst [vmem:[#allocation2 + $0x78] sm:$0xff] %v6912
    %6921 = vrot.lane.b32.xlu0 %v6777, 21
    %v6922 = vpop.permute.xlu0 %6921
    %6923 = vrot.lane.b32.xlu0 %v6785, 21
    %v6924 = vpop.permute.xlu0 %6923
    %6925 = vrot.lane.b32.xlu0 %v6778, 21
    %v6926 = vpop.permute.xlu0 %6925
    %6927 = vrot.lane.b32.xlu0 %v6786, 21
    %v6928 = vpop.permute.xlu0 %6927
    %6929 = vrot.lane.b32.xlu0 %v6779, 21
    %v6930 = vpop.permute.xlu0 %6929
    %6931 = vrot.lane.b32.xlu0 %v6787, 21
    %v6932 = vpop.permute.xlu0 %6931
    %6933 = vrot.lane.b32.xlu0 %v6780, 21
    %v6934 = vpop.permute.xlu0 %6933
    %6935 = vrot.lane.b32.xlu0 %v6788, 21
    %v6936 = vpop.permute.xlu0 %6935
    %6937 = vrot.lane.b32.xlu0 %v6781, 21
    %v6938 = vpop.permute.xlu0 %6937
    %6939 = vrot.lane.b32.xlu0 %v6789, 21
    %v6940 = vpop.permute.xlu0 %6939
    %6941 = vrot.lane.b32.xlu0 %v6782, 21
    %v6942 = vpop.permute.xlu0 %6941
    %6943 = vrot.lane.b32.xlu0 %v6790, 21
    %v6944 = vpop.permute.xlu0 %6943
    %6945 = vrot.lane.b32.xlu0 %v6783, 21
    %v6946 = vpop.permute.xlu0 %6945
    %6947 = vrot.lane.b32.xlu0 %v6791, 21
    %v6948 = vpop.permute.xlu0 %6947
    %6949 = vrot.lane.b32.xlu0 %v6784, 21
    %v6950 = vpop.permute.xlu0 %6949
    %6951 = vrot.lane.b32.xlu0 %v6792, 21
    %v6952 = vpop.permute.xlu0 %6951
    %v6953 = vsel %vm520, %v6946, %v6950
    %v6954 = vsel %vm520, %v6948, %v6952
    %v6955 = vsel %vm520, %v6942, %v6946
    %v6956 = vsel %vm520, %v6944, %v6948
    %v6957 = vsel %vm520, %v6938, %v6942
    %v6958 = vsel %vm520, %v6940, %v6944
    %v6959 = vsel %vm520, %v6934, %v6938
    %v6960 = vsel %vm520, %v6936, %v6940
    %v6961 = vsel %vm520, %v6930, %v6934
    %v6962 = vsel %vm520, %v6932, %v6936
    %v6963 = vsel %vm520, %v6926, %v6930
    %v6964 = vsel %vm520, %v6928, %v6932
    %v6965 = vsel %vm520, %v6922, %v6926
    %v6966 = vsel %vm520, %v6924, %v6928
    %v6967 = vsel %vm520, %v6950, %v6922
    %v6968 = vsel %vm520, %v6952, %v6924
    %v6969 = vpack.c.bf16 %v6965, %v6967
    %v6970 = vpack.c.bf16 %v6961, %v6963
    %v6971 = vpack.c.bf16 %v6957, %v6959
    %v6972 = vpack.c.bf16 %v6953, %v6955
    %v6973 = vpack.c.bf16 %v6966, %v6968
    %v6974 = vpack.c.bf16 %v6962, %v6964
    %v6975 = vpack.c.bf16 %v6958, %v6960
    %v6976 = vpack.c.bf16 %v6954, %v6956
    %6977 = vst [vmem:[#allocation2 + $0x80] sm:$0xff] %v6969
    %6978 = vst [vmem:[#allocation2 + $0x88] sm:$0xff] %v6970
    %6979 = vst [vmem:[#allocation2 + $0x90] sm:$0xff] %v6971
    %6980 = vst [vmem:[#allocation2 + $0x98] sm:$0xff] %v6972
    %6981 = vst [vmem:[#allocation2 + $0xa0] sm:$0xff] %v6973
    %6982 = vst [vmem:[#allocation2 + $0xa8] sm:$0xff] %v6974
    %6983 = vst [vmem:[#allocation2 + $0xb0] sm:$0xff] %v6975
    %6984 = vst [vmem:[#allocation2 + $0xb8] sm:$0xff] %v6976
    %6985 = vrot.lane.b32.xlu0 %v6777, 1
    %v6986 = vpop.permute.xlu0 %6985
    %6987 = vrot.lane.b32.xlu0 %v6785, 1
    %v6988 = vpop.permute.xlu0 %6987
    %6989 = vrot.lane.b32.xlu0 %v6778, 1
    %v6990 = vpop.permute.xlu0 %6989
    %6991 = vrot.lane.b32.xlu0 %v6786, 1
    %v6992 = vpop.permute.xlu0 %6991
    %6993 = vrot.lane.b32.xlu0 %v6779, 1
    %v6994 = vpop.permute.xlu0 %6993
    %6995 = vrot.lane.b32.xlu0 %v6787, 1
    %v6996 = vpop.permute.xlu0 %6995
    %6997 = vrot.lane.b32.xlu0 %v6780, 1
    %v6998 = vpop.permute.xlu0 %6997
    %6999 = vrot.lane.b32.xlu0 %v6788, 1
    %v7000 = vpop.permute.xlu0 %6999
    %7001 = vrot.lane.b32.xlu0 %v6781, 1
    %v7002 = vpop.permute.xlu0 %7001
    %7003 = vrot.lane.b32.xlu0 %v6789, 1
    %v7004 = vpop.permute.xlu0 %7003
    %7005 = vrot.lane.b32.xlu0 %v6782, 1
    %v7006 = vpop.permute.xlu0 %7005
    %7007 = vrot.lane.b32.xlu0 %v6790, 1
    %v7008 = vpop.permute.xlu0 %7007
    %7009 = vrot.lane.b32.xlu0 %v6783, 1
    %v7010 = vpop.permute.xlu0 %7009
    %7011 = vrot.lane.b32.xlu0 %v6791, 1
    %v7012 = vpop.permute.xlu0 %7011
    %7013 = vrot.lane.b32.xlu0 %v6784, 1
    %v7014 = vpop.permute.xlu0 %7013
    %7015 = vrot.lane.b32.xlu0 %v6792, 1
    %v7016 = vpop.permute.xlu0 %7015
    %v7017 = vsel %vm585, %v7010, %v7014
    %v7018 = vsel %vm585, %v7012, %v7016
    %v7019 = vsel %vm585, %v7006, %v7010
    %v7020 = vsel %vm585, %v7008, %v7012
    %v7021 = vsel %vm585, %v7002, %v7006
    %v7022 = vsel %vm585, %v7004, %v7008
    %v7023 = vsel %vm585, %v6998, %v7002
    %v7024 = vsel %vm585, %v7000, %v7004
    %v7025 = vsel %vm585, %v6994, %v6998
    %v7026 = vsel %vm585, %v6996, %v7000
    %v7027 = vsel %vm585, %v6990, %v6994
    %v7028 = vsel %vm585, %v6992, %v6996
    %v7029 = vsel %vm585, %v6986, %v6990
    %v7030 = vsel %vm585, %v6988, %v6992
    %v7031 = vsel %vm585, %v7014, %v6986
    %v7032 = vsel %vm585, %v7016, %v6988
    %v7033 = vpack.c.bf16 %v7029, %v7031
    %v7034 = vpack.c.bf16 %v7025, %v7027
    %v7035 = vpack.c.bf16 %v7021, %v7023
    %v7036 = vpack.c.bf16 %v7017, %v7019
    %v7037 = vpack.c.bf16 %v7030, %v7032
    %v7038 = vpack.c.bf16 %v7026, %v7028
    %v7039 = vpack.c.bf16 %v7022, %v7024
    %v7040 = vpack.c.bf16 %v7018, %v7020
    %7041 = vst [vmem:[#allocation2 + $0xc0] sm:$0xff] %v7033
    %7042 = vst [vmem:[#allocation2 + $0xc8] sm:$0xff] %v7034
    %7043 = vst [vmem:[#allocation2 + $0xd0] sm:$0xff] %v7035
    %7044 = vst [vmem:[#allocation2 + $0xd8] sm:$0xff] %v7036
    %7045 = vst [vmem:[#allocation2 + $0xe0] sm:$0xff] %v7037
    %7046 = vst [vmem:[#allocation2 + $0xe8] sm:$0xff] %v7038
    %7047 = vst [vmem:[#allocation2 + $0xf0] sm:$0xff] %v7039
    %7048 = vst [vmem:[#allocation2 + $0xf8] sm:$0xff] %v7040
    %v7049 = vpack.c.bf16 %v6778, %v6777
    %v7050 = vpack.c.bf16 %v6780, %v6779
    %v7051 = vpack.c.bf16 %v6782, %v6781
    %v7052 = vpack.c.bf16 %v6784, %v6783
    %v7053 = vpack.c.bf16 %v6786, %v6785
    %v7054 = vpack.c.bf16 %v6788, %v6787
    %v7055 = vpack.c.bf16 %v6790, %v6789
    %v7056 = vpack.c.bf16 %v6792, %v6791
    %7057 = vst [vmem:[#allocation2 + $0x100] sm:$0xff] %v7049
    %7058 = vst [vmem:[#allocation2 + $0x108] sm:$0xff] %v7050
    %7059 = vst [vmem:[#allocation2 + $0x110] sm:$0xff] %v7051
    %7060 = vst [vmem:[#allocation2 + $0x118] sm:$0xff] %v7052
    %7061 = vst [vmem:[#allocation2 + $0x120] sm:$0xff] %v7053
    %7062 = vst [vmem:[#allocation2 + $0x128] sm:$0xff] %v7054
    %7063 = vst [vmem:[#allocation2 + $0x130] sm:$0xff] %v7055
    %7064 = vst [vmem:[#allocation2 + $0x138] sm:$0xff] %v7056
    %7065 = vrot.lane.b32.xlu0 %v6777, 127
    %v7066 = vpop.permute.xlu0 %7065
    %7067 = vrot.lane.b32.xlu0 %v6785, 127
    %v7068 = vpop.permute.xlu0 %7067
    %7069 = vrot.lane.b32.xlu0 %v6778, 127
    %v7070 = vpop.permute.xlu0 %7069
    %7071 = vrot.lane.b32.xlu0 %v6786, 127
    %v7072 = vpop.permute.xlu0 %7071
    %7073 = vrot.lane.b32.xlu0 %v6779, 127
    %v7074 = vpop.permute.xlu0 %7073
    %7075 = vrot.lane.b32.xlu0 %v6787, 127
    %v7076 = vpop.permute.xlu0 %7075
    %7077 = vrot.lane.b32.xlu0 %v6780, 127
    %v7078 = vpop.permute.xlu0 %7077
    %7079 = vrot.lane.b32.xlu0 %v6788, 127
    %v7080 = vpop.permute.xlu0 %7079
    %7081 = vrot.lane.b32.xlu0 %v6781, 127
    %v7082 = vpop.permute.xlu0 %7081
    %7083 = vrot.lane.b32.xlu0 %v6789, 127
    %v7084 = vpop.permute.xlu0 %7083
    %7085 = vrot.lane.b32.xlu0 %v6782, 127
    %v7086 = vpop.permute.xlu0 %7085
    %7087 = vrot.lane.b32.xlu0 %v6790, 127
    %v7088 = vpop.permute.xlu0 %7087
    %7089 = vrot.lane.b32.xlu0 %v6783, 127
    %v7090 = vpop.permute.xlu0 %7089
    %7091 = vrot.lane.b32.xlu0 %v6791, 127
    %v7092 = vpop.permute.xlu0 %7091
    %7093 = vrot.lane.b32.xlu0 %v6784, 127
    %v7094 = vpop.permute.xlu0 %7093
    %7095 = vrot.lane.b32.xlu0 %v6792, 127
    %v7096 = vpop.permute.xlu0 %7095
    %v7097 = vsel %vm666, %v7090, %v7094
    %v7098 = vsel %vm666, %v7092, %v7096
    %v7099 = vsel %vm666, %v7086, %v7090
    %v7100 = vsel %vm666, %v7088, %v7092
    %v7101 = vsel %vm666, %v7082, %v7086
    %v7102 = vsel %vm666, %v7084, %v7088
    %v7103 = vsel %vm666, %v7078, %v7082
    %v7104 = vsel %vm666, %v7080, %v7084
    %v7105 = vsel %vm666, %v7074, %v7078
    %v7106 = vsel %vm666, %v7076, %v7080
    %v7107 = vsel %vm666, %v7070, %v7074
    %v7108 = vsel %vm666, %v7072, %v7076
    %v7109 = vsel %vm666, %v7066, %v7070
    %v7110 = vsel %vm666, %v7068, %v7072
    %v7111 = vsel %vm666, %v7094, %v7066
    %v7112 = vsel %vm666, %v7096, %v7068
    %v7113 = vpack.c.bf16 %v7107, %v7109
    %v7114 = vpack.c.bf16 %v7103, %v7105
    %v7115 = vpack.c.bf16 %v7099, %v7101
    %v7116 = vpack.c.bf16 %v7111, %v7097
    %v7117 = vpack.c.bf16 %v7108, %v7110
    %v7118 = vpack.c.bf16 %v7104, %v7106
    %v7119 = vpack.c.bf16 %v7100, %v7102
    %v7120 = vpack.c.bf16 %v7112, %v7098
    %7121 = vst [vmem:[#allocation2 + $0x140] sm:$0xff] %v7113
    %7122 = vst [vmem:[#allocation2 + $0x148] sm:$0xff] %v7114
    %7123 = vst [vmem:[#allocation2 + $0x150] sm:$0xff] %v7115
    %7124 = vst [vmem:[#allocation2 + $0x158] sm:$0xff] %v7116
    %7125 = vst [vmem:[#allocation2 + $0x160] sm:$0xff] %v7117
    %7126 = vst [vmem:[#allocation2 + $0x168] sm:$0xff] %v7118
    %7127 = vst [vmem:[#allocation2 + $0x170] sm:$0xff] %v7119
    %7128 = vst [vmem:[#allocation2 + $0x178] sm:$0xff] %v7120
    %7129 = vrot.lane.b32.xlu0 %v6777, 107
    %v7130 = vpop.permute.xlu0 %7129
    %7131 = vrot.lane.b32.xlu0 %v6785, 107
    %v7132 = vpop.permute.xlu0 %7131
    %7133 = vrot.lane.b32.xlu0 %v6778, 107
    %v7134 = vpop.permute.xlu0 %7133
    %7135 = vrot.lane.b32.xlu0 %v6786, 107
    %v7136 = vpop.permute.xlu0 %7135
    %7137 = vrot.lane.b32.xlu0 %v6779, 107
    %v7138 = vpop.permute.xlu0 %7137
    %7139 = vrot.lane.b32.xlu0 %v6787, 107
    %v7140 = vpop.permute.xlu0 %7139
    %7141 = vrot.lane.b32.xlu0 %v6780, 107
    %v7142 = vpop.permute.xlu0 %7141
    %7143 = vrot.lane.b32.xlu0 %v6788, 107
    %v7144 = vpop.permute.xlu0 %7143
    %7145 = vrot.lane.b32.xlu0 %v6781, 107
    %v7146 = vpop.permute.xlu0 %7145
    %7147 = vrot.lane.b32.xlu0 %v6789, 107
    %v7148 = vpop.permute.xlu0 %7147
    %7149 = vrot.lane.b32.xlu0 %v6782, 107
    %v7150 = vpop.permute.xlu0 %7149
    %7151 = vrot.lane.b32.xlu0 %v6790, 107
    %v7152 = vpop.permute.xlu0 %7151
    %7153 = vrot.lane.b32.xlu0 %v6783, 107
    %v7154 = vpop.permute.xlu0 %7153
    %7155 = vrot.lane.b32.xlu0 %v6791, 107
    %v7156 = vpop.permute.xlu0 %7155
    %7157 = vrot.lane.b32.xlu0 %v6784, 107
    %v7158 = vpop.permute.xlu0 %7157
    %7159 = vrot.lane.b32.xlu0 %v6792, 107
    %v7160 = vpop.permute.xlu0 %7159
    %v7161 = vsel %vm731, %v7154, %v7158
    %v7162 = vsel %vm731, %v7156, %v7160
    %v7163 = vsel %vm731, %v7150, %v7154
    %v7164 = vsel %vm731, %v7152, %v7156
    %v7165 = vsel %vm731, %v7146, %v7150
    %v7166 = vsel %vm731, %v7148, %v7152
    %v7167 = vsel %vm731, %v7142, %v7146
    %v7168 = vsel %vm731, %v7144, %v7148
    %v7169 = vsel %vm731, %v7138, %v7142
    %v7170 = vsel %vm731, %v7140, %v7144
    %v7171 = vsel %vm731, %v7134, %v7138
    %v7172 = vsel %vm731, %v7136, %v7140
    %v7173 = vsel %vm731, %v7130, %v7134
    %v7174 = vsel %vm731, %v7132, %v7136
    %v7175 = vsel %vm731, %v7158, %v7130
    %v7176 = vsel %vm731, %v7160, %v7132
    %v7177 = vpack.c.bf16 %v7171, %v7173
    %v7178 = vpack.c.bf16 %v7167, %v7169
    %v7179 = vpack.c.bf16 %v7163, %v7165
    %v7180 = vpack.c.bf16 %v7175, %v7161
    %v7181 = vpack.c.bf16 %v7172, %v7174
    %v7182 = vpack.c.bf16 %v7168, %v7170
    %v7183 = vpack.c.bf16 %v7164, %v7166
    %v7184 = vpack.c.bf16 %v7176, %v7162
    %7185 = vst [vmem:[#allocation2 + $0x180] sm:$0xff] %v7177
    %7186 = vst [vmem:[#allocation2 + $0x188] sm:$0xff] %v7178
    %7187 = vst [vmem:[#allocation2 + $0x190] sm:$0xff] %v7179
    %7188 = vst [vmem:[#allocation2 + $0x198] sm:$0xff] %v7180
    %7189 = vst [vmem:[#allocation2 + $0x1a0] sm:$0xff] %v7181
    %7190 = vst [vmem:[#allocation2 + $0x1a8] sm:$0xff] %v7182
    %7191 = vst [vmem:[#allocation2 + $0x1b0] sm:$0xff] %v7183
    %7192 = vst [vmem:[#allocation2 + $0x1b8] sm:$0xff] %v7184
    %7193 = vrot.lane.b32.xlu0 %v6777, 106
    %v7194 = vpop.permute.xlu0 %7193
    %7195 = vrot.lane.b32.xlu0 %v6785, 106
    %v7196 = vpop.permute.xlu0 %7195
    %7197 = vrot.lane.b32.xlu0 %v6778, 106
    %v7198 = vpop.permute.xlu0 %7197
    %7199 = vrot.lane.b32.xlu0 %v6786, 106
    %v7200 = vpop.permute.xlu0 %7199
    %7201 = vrot.lane.b32.xlu0 %v6779, 106
    %v7202 = vpop.permute.xlu0 %7201
    %7203 = vrot.lane.b32.xlu0 %v6787, 106
    %v7204 = vpop.permute.xlu0 %7203
    %7205 = vrot.lane.b32.xlu0 %v6780, 106
    %v7206 = vpop.permute.xlu0 %7205
    %7207 = vrot.lane.b32.xlu0 %v6788, 106
    %v7208 = vpop.permute.xlu0 %7207
    %7209 = vrot.lane.b32.xlu0 %v6781, 106
    %v7210 = vpop.permute.xlu0 %7209
    %7211 = vrot.lane.b32.xlu0 %v6789, 106
    %v7212 = vpop.permute.xlu0 %7211
    %7213 = vrot.lane.b32.xlu0 %v6782, 106
    %v7214 = vpop.permute.xlu0 %7213
    %7215 = vrot.lane.b32.xlu0 %v6790, 106
    %v7216 = vpop.permute.xlu0 %7215
    %7217 = vrot.lane.b32.xlu0 %v6783, 106
    %v7218 = vpop.permute.xlu0 %7217
    %7219 = vrot.lane.b32.xlu0 %v6791, 106
    %v7220 = vpop.permute.xlu0 %7219
    %7221 = vrot.lane.b32.xlu0 %v6784, 106
    %v7222 = vpop.permute.xlu0 %7221
    %7223 = vrot.lane.b32.xlu0 %v6792, 106
    %v7224 = vpop.permute.xlu0 %7223
    %v7225 = vsel %vm796, %v7218, %v7222
    %v7226 = vsel %vm796, %v7220, %v7224
    %v7227 = vsel %vm796, %v7214, %v7218
    %v7228 = vsel %vm796, %v7216, %v7220
    %v7229 = vsel %vm796, %v7210, %v7214
    %v7230 = vsel %vm796, %v7212, %v7216
    %v7231 = vsel %vm796, %v7206, %v7210
    %v7232 = vsel %vm796, %v7208, %v7212
    %v7233 = vsel %vm796, %v7202, %v7206
    %v7234 = vsel %vm796, %v7204, %v7208
    %v7235 = vsel %vm796, %v7198, %v7202
    %v7236 = vsel %vm796, %v7200, %v7204
    %v7237 = vsel %vm796, %v7194, %v7198
    %v7238 = vsel %vm796, %v7196, %v7200
    %v7239 = vsel %vm796, %v7222, %v7194
    %v7240 = vsel %vm796, %v7224, %v7196
    %v7241 = vpack.c.bf16 %v7235, %v7237
    %v7242 = vpack.c.bf16 %v7231, %v7233
    %v7243 = vpack.c.bf16 %v7227, %v7229
    %v7244 = vpack.c.bf16 %v7239, %v7225
    %v7245 = vpack.c.bf16 %v7236, %v7238
    %v7246 = vpack.c.bf16 %v7232, %v7234
    %v7247 = vpack.c.bf16 %v7228, %v7230
    %v7248 = vpack.c.bf16 %v7240, %v7226
    %7249 = vst [vmem:[#allocation2 + $0x1c0] sm:$0xff] %v7241
    %7250 = vst [vmem:[#allocation2 + $0x1c8] sm:$0xff] %v7242
    %7251 = vst [vmem:[#allocation2 + $0x1d0] sm:$0xff] %v7243
    %7252 = vst [vmem:[#allocation2 + $0x1d8] sm:$0xff] %v7244
    %7253 = vst [vmem:[#allocation2 + $0x1e0] sm:$0xff] %v7245
    %7254 = vst [vmem:[#allocation2 + $0x1e8] sm:$0xff] %v7246
    %7255 = vst [vmem:[#allocation2 + $0x1f0] sm:$0xff] %v7247
    %7256 = vst [vmem:[#allocation2 + $0x1f8] sm:$0xff] %v7248
    %7257 = vrot.lane.b32.xlu0 %v6777, 105
    %v7258 = vpop.permute.xlu0 %7257
    %7259 = vrot.lane.b32.xlu0 %v6785, 105
    %v7260 = vpop.permute.xlu0 %7259
    %7261 = vrot.lane.b32.xlu0 %v6778, 105
    %v7262 = vpop.permute.xlu0 %7261
    %7263 = vrot.lane.b32.xlu0 %v6786, 105
    %v7264 = vpop.permute.xlu0 %7263
    %7265 = vrot.lane.b32.xlu0 %v6779, 105
    %v7266 = vpop.permute.xlu0 %7265
    %7267 = vrot.lane.b32.xlu0 %v6787, 105
    %v7268 = vpop.permute.xlu0 %7267
    %7269 = vrot.lane.b32.xlu0 %v6780, 105
    %v7270 = vpop.permute.xlu0 %7269
    %7271 = vrot.lane.b32.xlu0 %v6788, 105
    %v7272 = vpop.permute.xlu0 %7271
    %7273 = vrot.lane.b32.xlu0 %v6781, 105
    %v7274 = vpop.permute.xlu0 %7273
    %7275 = vrot.lane.b32.xlu0 %v6789, 105
    %v7276 = vpop.permute.xlu0 %7275
    %7277 = vrot.lane.b32.xlu0 %v6782, 105
    %v7278 = vpop.permute.xlu0 %7277
    %7279 = vrot.lane.b32.xlu0 %v6790, 105
    %v7280 = vpop.permute.xlu0 %7279
    %7281 = vrot.lane.b32.xlu0 %v6783, 105
    %v7282 = vpop.permute.xlu0 %7281
    %7283 = vrot.lane.b32.xlu0 %v6791, 105
    %v7284 = vpop.permute.xlu0 %7283
    %7285 = vrot.lane.b32.xlu0 %v6784, 105
    %v7286 = vpop.permute.xlu0 %7285
    %7287 = vrot.lane.b32.xlu0 %v6792, 105
    %v7288 = vpop.permute.xlu0 %7287
    %v7289 = vsel %vm861, %v7282, %v7286
    %v7290 = vsel %vm861, %v7284, %v7288
    %v7291 = vsel %vm861, %v7278, %v7282
    %v7292 = vsel %vm861, %v7280, %v7284
    %v7293 = vsel %vm861, %v7274, %v7278
    %v7294 = vsel %vm861, %v7276, %v7280
    %v7295 = vsel %vm861, %v7270, %v7274
    %v7296 = vsel %vm861, %v7272, %v7276
    %v7297 = vsel %vm861, %v7266, %v7270
    %v7298 = vsel %vm861, %v7268, %v7272
    %v7299 = vsel %vm861, %v7262, %v7266
    %v7300 = vsel %vm861, %v7264, %v7268
    %v7301 = vsel %vm861, %v7258, %v7262
    %v7302 = vsel %vm861, %v7260, %v7264
    %v7303 = vsel %vm861, %v7286, %v7258
    %v7304 = vsel %vm861, %v7288, %v7260
    %v7305 = vpack.c.bf16 %v7299, %v7301
    %v7306 = vpack.c.bf16 %v7295, %v7297
    %v7307 = vpack.c.bf16 %v7291, %v7293
    %v7308 = vpack.c.bf16 %v7303, %v7289
    %v7309 = vpack.c.bf16 %v7300, %v7302
    %v7310 = vpack.c.bf16 %v7296, %v7298
    %v7311 = vpack.c.bf16 %v7292, %v7294
    %v7312 = vpack.c.bf16 %v7304, %v7290
    %7313 = vst [vmem:[#allocation2 + $0x200] sm:$0xff] %v7305
    %7314 = vst [vmem:[#allocation2 + $0x208] sm:$0xff] %v7306
    %7315 = vst [vmem:[#allocation2 + $0x210] sm:$0xff] %v7307
    %7316 = vst [vmem:[#allocation2 + $0x218] sm:$0xff] %v7308
    %7317 = vst [vmem:[#allocation2 + $0x220] sm:$0xff] %v7309
    %7318 = vst [vmem:[#allocation2 + $0x228] sm:$0xff] %v7310
    %7319 = vst [vmem:[#allocation2 + $0x230] sm:$0xff] %v7311
    %7320 = vst [vmem:[#allocation2 + $0x238] sm:$0xff] %v7312
    %s7321 = scalar_lea.vmem [#allocation9], 80
    %v7322 = vld [vmem:[%s7321] sm:$0xff]
    %v7323 = vld [vmem:[%s7321 + $0x8] sm:$0xff]
    %v7324 = vld [vmem:[#allocation2] sm:$0xff]
    %v7325 = vld [vmem:[#allocation2 + $0x8] sm:$0xff]
    %v7326 = vld [vmem:[#allocation2 + $0x10] sm:$0xff]
    %v7327 = vld [vmem:[#allocation2 + $0x18] sm:$0xff]
    %v7328 = vld [vmem:[#allocation2 + $0x20] sm:$0xff]
    %v7329 = vld [vmem:[#allocation2 + $0x28] sm:$0xff]
    %v7330 = vld [vmem:[#allocation2 + $0x30] sm:$0xff]
    %v7331 = vld [vmem:[#allocation2 + $0x38] sm:$0xff]
    %v7332 = vld [vmem:[#allocation2 + $0x40] sm:$0xff]
    %v7333 = vld [vmem:[#allocation2 + $0x48] sm:$0xff]
    %v7334 = vld [vmem:[#allocation2 + $0x50] sm:$0xff]
    %v7335 = vld [vmem:[#allocation2 + $0x58] sm:$0xff]
    %v7336 = vld [vmem:[#allocation2 + $0x60] sm:$0xff]
    %v7337 = vld [vmem:[#allocation2 + $0x68] sm:$0xff]
    %v7338 = vld [vmem:[#allocation2 + $0x70] sm:$0xff]
    %v7339 = vld [vmem:[#allocation2 + $0x78] sm:$0xff]
    %v7340 = vld [vmem:[#allocation2 + $0x80] sm:$0xff]
    %v7341 = vld [vmem:[#allocation2 + $0x88] sm:$0xff]
    %v7342 = vld [vmem:[#allocation2 + $0x90] sm:$0xff]
    %v7343 = vld [vmem:[#allocation2 + $0x98] sm:$0xff]
    %v7344 = vld [vmem:[#allocation2 + $0xa0] sm:$0xff]
    %v7345 = vld [vmem:[#allocation2 + $0xa8] sm:$0xff]
    %v7346 = vld [vmem:[#allocation2 + $0xb0] sm:$0xff]
    %v7347 = vld [vmem:[#allocation2 + $0xb8] sm:$0xff]
    %v7348 = vld [vmem:[#allocation2 + $0xc0] sm:$0xff]
    %v7349 = vld [vmem:[#allocation2 + $0xc8] sm:$0xff]
    %v7350 = vld [vmem:[#allocation2 + $0xd0] sm:$0xff]
    %v7351 = vld [vmem:[#allocation2 + $0xd8] sm:$0xff]
    %v7352 = vld [vmem:[#allocation2 + $0xe0] sm:$0xff]
    %v7353 = vld [vmem:[#allocation2 + $0xe8] sm:$0xff]
    %v7354 = vld [vmem:[#allocation2 + $0xf0] sm:$0xff]
    %v7355 = vld [vmem:[#allocation2 + $0xf8] sm:$0xff]
    %v7356 = vld [vmem:[#allocation2 + $0x100] sm:$0xff]
    %v7357 = vld [vmem:[#allocation2 + $0x108] sm:$0xff]
    %v7358 = vld [vmem:[#allocation2 + $0x110] sm:$0xff]
    %v7359 = vld [vmem:[#allocation2 + $0x118] sm:$0xff]
    %v7360 = vld [vmem:[#allocation2 + $0x120] sm:$0xff]
    %v7361 = vld [vmem:[#allocation2 + $0x128] sm:$0xff]
    %v7362 = vld [vmem:[#allocation2 + $0x130] sm:$0xff]
    %v7363 = vld [vmem:[#allocation2 + $0x138] sm:$0xff]
    %v7364 = vld [vmem:[#allocation2 + $0x140] sm:$0xff]
    %v7365 = vld [vmem:[#allocation2 + $0x148] sm:$0xff]
    %v7366 = vld [vmem:[#allocation2 + $0x150] sm:$0xff]
    %v7367 = vld [vmem:[#allocation2 + $0x158] sm:$0xff]
    %v7368 = vld [vmem:[#allocation2 + $0x160] sm:$0xff]
    %v7369 = vld [vmem:[#allocation2 + $0x168] sm:$0xff]
    %v7370 = vld [vmem:[#allocation2 + $0x170] sm:$0xff]
    %v7371 = vld [vmem:[#allocation2 + $0x178] sm:$0xff]
    %v7372 = vld [vmem:[#allocation2 + $0x180] sm:$0xff]
    %v7373 = vld [vmem:[#allocation2 + $0x188] sm:$0xff]
    %v7374 = vld [vmem:[#allocation2 + $0x190] sm:$0xff]
    %v7375 = vld [vmem:[#allocation2 + $0x198] sm:$0xff]
    %v7376 = vld [vmem:[#allocation2 + $0x1a0] sm:$0xff]
    %v7377 = vld [vmem:[#allocation2 + $0x1a8] sm:$0xff]
    %v7378 = vld [vmem:[#allocation2 + $0x1b0] sm:$0xff]
    %v7379 = vld [vmem:[#allocation2 + $0x1b8] sm:$0xff]
    %v7380 = vld [vmem:[#allocation2 + $0x1c0] sm:$0xff]
    %v7381 = vld [vmem:[#allocation2 + $0x1c8] sm:$0xff]
    %v7382 = vld [vmem:[#allocation2 + $0x1d0] sm:$0xff]
    %v7383 = vld [vmem:[#allocation2 + $0x1d8] sm:$0xff]
    %v7384 = vld [vmem:[#allocation2 + $0x1e0] sm:$0xff]
    %v7385 = vld [vmem:[#allocation2 + $0x1e8] sm:$0xff]
    %v7386 = vld [vmem:[#allocation2 + $0x1f0] sm:$0xff]
    %v7387 = vld [vmem:[#allocation2 + $0x1f8] sm:$0xff]
    %v7388 = vld [vmem:[#allocation2 + $0x200] sm:$0xff]
    %v7389 = vld [vmem:[#allocation2 + $0x208] sm:$0xff]
    %v7390 = vld [vmem:[#allocation2 + $0x210] sm:$0xff]
    %v7391 = vld [vmem:[#allocation2 + $0x218] sm:$0xff]
    %v7392 = vld [vmem:[#allocation2 + $0x220] sm:$0xff]
    %v7393 = vld [vmem:[#allocation2 + $0x228] sm:$0xff]
    %v7394 = vld [vmem:[#allocation2 + $0x230] sm:$0xff]
    %v7395 = vld [vmem:[#allocation2 + $0x238] sm:$0xff]
    %v7396 = vld [vmem:[#allocation2 + $0x240] sm:$0xff]
    %v7397 = vld [vmem:[#allocation2 + $0x248] sm:$0xff]
    %v7398 = vld [vmem:[#allocation2 + $0x250] sm:$0xff]
    %v7399 = vld [vmem:[#allocation2 + $0x258] sm:$0xff]
    %v7400 = vld [vmem:[#allocation2 + $0x260] sm:$0xff]
    %v7401 = vld [vmem:[#allocation2 + $0x268] sm:$0xff]
    %v7402 = vld [vmem:[#allocation2 + $0x270] sm:$0xff]
    %v7403 = vld [vmem:[#allocation2 + $0x278] sm:$0xff]
    %v7406 = vunpack.c.l.b16 %v7322
    %v7407 = vunpack.c.h.b16 %v7322
    %v7408 = vunpack.c.l.b16 %v7323
    %v7409 = vunpack.c.h.b16 %v7323
    %v7410 = vpack.c.b16 %v7408, %v7406
    %v7411 = vpack.c.b16 %v7409, %v7407
    %v7493 = vunpack.c.l.b16 %v7324
    %v7494 = vunpack.c.h.b16 %v7324
    %v7495 = vunpack.c.l.b16 %v7325
    %v7496 = vunpack.c.h.b16 %v7325
    %v7497 = vunpack.c.l.b16 %v7326
    %v7498 = vunpack.c.h.b16 %v7326
    %v7499 = vunpack.c.l.b16 %v7327
    %v7500 = vunpack.c.h.b16 %v7327
    %v7501 = vunpack.c.l.b16 %v7328
    %v7502 = vunpack.c.h.b16 %v7328
    %v7503 = vunpack.c.l.b16 %v7329
    %v7504 = vunpack.c.h.b16 %v7329
    %v7505 = vunpack.c.l.b16 %v7330
    %v7506 = vunpack.c.h.b16 %v7330
    %v7507 = vunpack.c.l.b16 %v7331
    %v7508 = vunpack.c.h.b16 %v7331
    %v7509 = vunpack.c.l.b16 %v7332
    %v7510 = vunpack.c.h.b16 %v7332
    %v7511 = vunpack.c.l.b16 %v7333
    %v7512 = vunpack.c.h.b16 %v7333
    %v7513 = vunpack.c.l.b16 %v7334
    %v7514 = vunpack.c.h.b16 %v7334
    %v7515 = vunpack.c.l.b16 %v7335
    %v7516 = vunpack.c.h.b16 %v7335
    %v7517 = vunpack.c.l.b16 %v7336
    %v7518 = vunpack.c.h.b16 %v7336
    %v7519 = vunpack.c.l.b16 %v7337
    %v7520 = vunpack.c.h.b16 %v7337
    %v7521 = vunpack.c.l.b16 %v7338
    %v7522 = vunpack.c.h.b16 %v7338
    %v7523 = vunpack.c.l.b16 %v7339
    %v7524 = vunpack.c.h.b16 %v7339
    %v7525 = vunpack.c.l.b16 %v7340
    %v7526 = vunpack.c.h.b16 %v7340
    %v7527 = vunpack.c.l.b16 %v7341
    %v7528 = vunpack.c.h.b16 %v7341
    %v7529 = vunpack.c.l.b16 %v7342
    %v7530 = vunpack.c.h.b16 %v7342
    %v7531 = vunpack.c.l.b16 %v7343
    %v7532 = vunpack.c.h.b16 %v7343
    %v7533 = vunpack.c.l.b16 %v7344
    %v7534 = vunpack.c.h.b16 %v7344
    %v7535 = vunpack.c.l.b16 %v7345
    %v7536 = vunpack.c.h.b16 %v7345
    %v7537 = vunpack.c.l.b16 %v7346
    %v7538 = vunpack.c.h.b16 %v7346
    %v7539 = vunpack.c.l.b16 %v7347
    %v7540 = vunpack.c.h.b16 %v7347
    %v7541 = vunpack.c.l.b16 %v7348
    %v7542 = vunpack.c.h.b16 %v7348
    %v7543 = vunpack.c.l.b16 %v7349
    %v7544 = vunpack.c.h.b16 %v7349
    %v7545 = vunpack.c.l.b16 %v7350
    %v7546 = vunpack.c.h.b16 %v7350
    %v7547 = vunpack.c.l.b16 %v7351
    %v7548 = vunpack.c.h.b16 %v7351
    %v7549 = vunpack.c.l.b16 %v7352
    %v7550 = vunpack.c.h.b16 %v7352
    %v7551 = vunpack.c.l.b16 %v7353
    %v7552 = vunpack.c.h.b16 %v7353
    %v7553 = vunpack.c.l.b16 %v7354
    %v7554 = vunpack.c.h.b16 %v7354
    %v7555 = vunpack.c.l.b16 %v7355
    %v7556 = vunpack.c.h.b16 %v7355
    %v7557 = vunpack.c.l.b16 %v7356
    %v7558 = vunpack.c.h.b16 %v7356
    %v7559 = vunpack.c.l.b16 %v7357
    %v7560 = vunpack.c.h.b16 %v7357
    %v7561 = vunpack.c.l.b16 %v7358
    %v7562 = vunpack.c.h.b16 %v7358
    %v7563 = vunpack.c.l.b16 %v7359
    %v7564 = vunpack.c.h.b16 %v7359
    %v7565 = vunpack.c.l.b16 %v7360
    %v7566 = vunpack.c.h.b16 %v7360
    %v7567 = vunpack.c.l.b16 %v7361
    %v7568 = vunpack.c.h.b16 %v7361
    %v7569 = vunpack.c.l.b16 %v7362
    %v7570 = vunpack.c.h.b16 %v7362
    %v7571 = vunpack.c.l.b16 %v7363
    %v7572 = vunpack.c.h.b16 %v7363
    %v7573 = vunpack.c.l.b16 %v7364
    %v7574 = vunpack.c.h.b16 %v7364
    %v7575 = vunpack.c.l.b16 %v7365
    %v7576 = vunpack.c.h.b16 %v7365
    %v7577 = vunpack.c.l.b16 %v7366
    %v7578 = vunpack.c.h.b16 %v7366
    %v7579 = vunpack.c.l.b16 %v7367
    %v7580 = vunpack.c.h.b16 %v7367
    %v7581 = vunpack.c.l.b16 %v7368
    %v7582 = vunpack.c.h.b16 %v7368
    %v7583 = vunpack.c.l.b16 %v7369
    %v7584 = vunpack.c.h.b16 %v7369
    %v7585 = vunpack.c.l.b16 %v7370
    %v7586 = vunpack.c.h.b16 %v7370
    %v7587 = vunpack.c.l.b16 %v7371
    %v7588 = vunpack.c.h.b16 %v7371
    %v7589 = vunpack.c.l.b16 %v7372
    %v7590 = vunpack.c.h.b16 %v7372
    %v7591 = vunpack.c.l.b16 %v7373
    %v7592 = vunpack.c.h.b16 %v7373
    %v7593 = vunpack.c.l.b16 %v7374
    %v7594 = vunpack.c.h.b16 %v7374
    %v7595 = vunpack.c.l.b16 %v7375
    %v7596 = vunpack.c.h.b16 %v7375
    %v7597 = vunpack.c.l.b16 %v7376
    %v7598 = vunpack.c.h.b16 %v7376
    %v7599 = vunpack.c.l.b16 %v7377
    %v7600 = vunpack.c.h.b16 %v7377
    %v7601 = vunpack.c.l.b16 %v7378
    %v7602 = vunpack.c.h.b16 %v7378
    %v7603 = vunpack.c.l.b16 %v7379
    %v7604 = vunpack.c.h.b16 %v7379
    %v7605 = vunpack.c.l.b16 %v7380
    %v7606 = vunpack.c.h.b16 %v7380
    %v7607 = vunpack.c.l.b16 %v7381
    %v7608 = vunpack.c.h.b16 %v7381
    %v7609 = vunpack.c.l.b16 %v7382
    %v7610 = vunpack.c.h.b16 %v7382
    %v7611 = vunpack.c.l.b16 %v7383
    %v7612 = vunpack.c.h.b16 %v7383
    %v7613 = vunpack.c.l.b16 %v7384
    %v7614 = vunpack.c.h.b16 %v7384
    %v7615 = vunpack.c.l.b16 %v7385
    %v7616 = vunpack.c.h.b16 %v7385
    %v7617 = vunpack.c.l.b16 %v7386
    %v7618 = vunpack.c.h.b16 %v7386
    %v7619 = vunpack.c.l.b16 %v7387
    %v7620 = vunpack.c.h.b16 %v7387
    %v7621 = vunpack.c.l.b16 %v7388
    %v7622 = vunpack.c.h.b16 %v7388
    %v7623 = vunpack.c.l.b16 %v7389
    %v7624 = vunpack.c.h.b16 %v7389
    %v7625 = vunpack.c.l.b16 %v7390
    %v7626 = vunpack.c.h.b16 %v7390
    %v7627 = vunpack.c.l.b16 %v7391
    %v7628 = vunpack.c.h.b16 %v7391
    %v7629 = vunpack.c.l.b16 %v7392
    %v7630 = vunpack.c.h.b16 %v7392
    %v7631 = vunpack.c.l.b16 %v7393
    %v7632 = vunpack.c.h.b16 %v7393
    %v7633 = vunpack.c.l.b16 %v7394
    %v7634 = vunpack.c.h.b16 %v7394
    %v7635 = vunpack.c.l.b16 %v7395
    %v7636 = vunpack.c.h.b16 %v7395
    %v7637 = vunpack.c.l.b16 %v7396
    %v7638 = vunpack.c.h.b16 %v7396
    %v7639 = vunpack.c.l.b16 %v7397
    %v7640 = vunpack.c.h.b16 %v7397
    %v7641 = vunpack.c.l.b16 %v7398
    %v7642 = vunpack.c.h.b16 %v7398
    %v7643 = vunpack.c.l.b16 %v7399
    %v7644 = vunpack.c.h.b16 %v7399
    %v7645 = vunpack.c.l.b16 %v7400
    %v7646 = vunpack.c.h.b16 %v7400
    %v7647 = vunpack.c.l.b16 %v7401
    %v7648 = vunpack.c.h.b16 %v7401
    %v7649 = vunpack.c.l.b16 %v7402
    %v7650 = vunpack.c.h.b16 %v7402
    %v7651 = vunpack.c.l.b16 %v7403
    %v7652 = vunpack.c.h.b16 %v7403
    %v7653 = vpack.c.b16 %v7501, %v7493
    %v7654 = vpack.c.b16 %v7502, %v7494
    %v7655 = vpack.c.b16 %v7503, %v7495
    %v7656 = vpack.c.b16 %v7504, %v7496
    %v7657 = vpack.c.b16 %v7505, %v7497
    %v7658 = vpack.c.b16 %v7506, %v7498
    %v7659 = vpack.c.b16 %v7507, %v7499
    %v7660 = vpack.c.b16 %v7508, %v7500
    %v7661 = vpack.c.b16 %v7517, %v7509
    %v7662 = vpack.c.b16 %v7518, %v7510
    %v7663 = vpack.c.b16 %v7519, %v7511
    %v7664 = vpack.c.b16 %v7520, %v7512
    %v7665 = vpack.c.b16 %v7521, %v7513
    %v7666 = vpack.c.b16 %v7522, %v7514
    %v7667 = vpack.c.b16 %v7523, %v7515
    %v7668 = vpack.c.b16 %v7524, %v7516
    %v7669 = vpack.c.b16 %v7533, %v7525
    %v7670 = vpack.c.b16 %v7534, %v7526
    %v7671 = vpack.c.b16 %v7535, %v7527
    %v7672 = vpack.c.b16 %v7536, %v7528
    %v7673 = vpack.c.b16 %v7537, %v7529
    %v7674 = vpack.c.b16 %v7538, %v7530
    %v7675 = vpack.c.b16 %v7539, %v7531
    %v7676 = vpack.c.b16 %v7540, %v7532
    %v7677 = vpack.c.b16 %v7549, %v7541
    %v7678 = vpack.c.b16 %v7550, %v7542
    %v7679 = vpack.c.b16 %v7551, %v7543
    %v7680 = vpack.c.b16 %v7552, %v7544
    %v7681 = vpack.c.b16 %v7553, %v7545
    %v7682 = vpack.c.b16 %v7554, %v7546
    %v7683 = vpack.c.b16 %v7555, %v7547
    %v7684 = vpack.c.b16 %v7556, %v7548
    %v7685 = vpack.c.b16 %v7565, %v7557
    %v7686 = vpack.c.b16 %v7566, %v7558
    %v7687 = vpack.c.b16 %v7567, %v7559
    %v7688 = vpack.c.b16 %v7568, %v7560
    %v7689 = vpack.c.b16 %v7569, %v7561
    %v7690 = vpack.c.b16 %v7570, %v7562
    %v7691 = vpack.c.b16 %v7571, %v7563
    %v7692 = vpack.c.b16 %v7572, %v7564
    %v7693 = vpack.c.b16 %v7581, %v7573
    %v7694 = vpack.c.b16 %v7582, %v7574
    %v7695 = vpack.c.b16 %v7583, %v7575
    %v7696 = vpack.c.b16 %v7584, %v7576
    %v7697 = vpack.c.b16 %v7585, %v7577
    %v7698 = vpack.c.b16 %v7586, %v7578
    %v7699 = vpack.c.b16 %v7587, %v7579
    %v7700 = vpack.c.b16 %v7588, %v7580
    %v7701 = vpack.c.b16 %v7597, %v7589
    %v7702 = vpack.c.b16 %v7598, %v7590
    %v7703 = vpack.c.b16 %v7599, %v7591
    %v7704 = vpack.c.b16 %v7600, %v7592
    %v7705 = vpack.c.b16 %v7601, %v7593
    %v7706 = vpack.c.b16 %v7602, %v7594
    %v7707 = vpack.c.b16 %v7603, %v7595
    %v7708 = vpack.c.b16 %v7604, %v7596
    %v7709 = vpack.c.b16 %v7613, %v7605
    %v7710 = vpack.c.b16 %v7614, %v7606
    %v7711 = vpack.c.b16 %v7615, %v7607
    %v7712 = vpack.c.b16 %v7616, %v7608
    %v7713 = vpack.c.b16 %v7617, %v7609
    %v7714 = vpack.c.b16 %v7618, %v7610
    %v7715 = vpack.c.b16 %v7619, %v7611
    %v7716 = vpack.c.b16 %v7620, %v7612
    %v7717 = vpack.c.b16 %v7629, %v7621
    %v7718 = vpack.c.b16 %v7630, %v7622
    %v7719 = vpack.c.b16 %v7631, %v7623
    %v7720 = vpack.c.b16 %v7632, %v7624
    %v7721 = vpack.c.b16 %v7633, %v7625
    %v7722 = vpack.c.b16 %v7634, %v7626
    %v7723 = vpack.c.b16 %v7635, %v7627
    %v7724 = vpack.c.b16 %v7636, %v7628
    %v7725 = vpack.c.b16 %v7645, %v7637
    %v7726 = vpack.c.b16 %v7646, %v7638
    %v7727 = vpack.c.b16 %v7647, %v7639
    %v7728 = vpack.c.b16 %v7648, %v7640
    %v7729 = vpack.c.b16 %v7649, %v7641
    %v7730 = vpack.c.b16 %v7650, %v7642
    %v7731 = vpack.c.b16 %v7651, %v7643
    %v7732 = vpack.c.b16 %v7652, %v7644
    %v7814 = vsel %vm1385, %v7411, 0
    %7816 = vmatpush.bf16.msra.mxu0 %v7709
    %7817 = vmatpush.bf16.msra.mxu0 %v7701
    %7818 = vmatpush.bf16.msra.mxu0 %v7693
    %7819 = vmatpush.bf16.msra.mxu0 %v7685
    %7820 = vmatpush.bf16.msra.mxu0 %v7677
    %7821 = vmatpush.bf16.msra.mxu0 %v7669
    %7822 = vmatpush.bf16.msra.mxu0 %v7661
    %7823 = vmatpush.bf16.msra.mxu0 %v7653
    %7824 = vmatmul.bf16.gmra.mxu0 %v7410
    %v7825 = vpop.f32.mrf.mxu0
    %v7826 = vadd.f32 0.0, %v7825
    %v7827 = vpop.f32.mrf.mxu0
    %v7828 = vadd.f32 0.0, %v7827
    %7829 = vdwg.mxu0
    %7830 = vmatpush.bf16.msra.mxu0 0
    %7831 = vmatpush.bf16.msra.mxu0 0
    %7832 = vmatpush.bf16.msra.mxu0 0
    %7833 = vmatpush.bf16.msra.mxu0 0
    %7834 = vmatpush.bf16.msra.mxu0 0
    %7835 = vmatpush.bf16.msra.mxu0 0
    %7836 = vmatpush.bf16.msra.mxu0 %v7725
    %7837 = vmatpush.bf16.msra.mxu0 %v7717
    %7838 = vmatmul.bf16.gmra.mxu0 %v7814
    %v7839 = vpop.f32.mrf.mxu0
    %v7840 = vadd.f32 %v7826, %v7839
    %v7841 = vpop.f32.mrf.mxu0
    %v7842 = vadd.f32 %v7828, %v7841
    %7843 = vdwg.mxu0
    %7844 = vmatpush.bf16.msra.mxu0 %v7710
    %7845 = vmatpush.bf16.msra.mxu0 %v7702
    %7846 = vmatpush.bf16.msra.mxu0 %v7694
    %7847 = vmatpush.bf16.msra.mxu0 %v7686
    %7848 = vmatpush.bf16.msra.mxu0 %v7678
    %7849 = vmatpush.bf16.msra.mxu0 %v7670
    %7850 = vmatpush.bf16.msra.mxu0 %v7662
    %7851 = vmatpush.bf16.msra.mxu0 %v7654
    %7852 = vmatmul.bf16.gmra.mxu0 %v7410
    %v7853 = vpop.f32.mrf.mxu0
    %v7854 = vadd.f32 0.0, %v7853
    %v7855 = vpop.f32.mrf.mxu0
    %v7856 = vadd.f32 0.0, %v7855
    %7857 = vdwg.mxu0
    %7858 = vmatpush.bf16.msra.mxu0 0
    %7859 = vmatpush.bf16.msra.mxu0 0
    %7860 = vmatpush.bf16.msra.mxu0 0
    %7861 = vmatpush.bf16.msra.mxu0 0
    %7862 = vmatpush.bf16.msra.mxu0 0
    %7863 = vmatpush.bf16.msra.mxu0 0
    %7864 = vmatpush.bf16.msra.mxu0 %v7726
    %7865 = vmatpush.bf16.msra.mxu0 %v7718
    %7866 = vmatmul.bf16.gmra.mxu0 %v7814
    %v7867 = vpop.f32.mrf.mxu0
    %v7868 = vadd.f32 %v7854, %v7867
    %v7869 = vpop.f32.mrf.mxu0
    %v7870 = vadd.f32 %v7856, %v7869
    %7871 = vdwg.mxu0
    %7872 = vmatpush.bf16.msra.mxu0 %v7711
    %7873 = vmatpush.bf16.msra.mxu0 %v7703
    %7874 = vmatpush.bf16.msra.mxu0 %v7695
    %7875 = vmatpush.bf16.msra.mxu0 %v7687
    %7876 = vmatpush.bf16.msra.mxu0 %v7679
    %7877 = vmatpush.bf16.msra.mxu0 %v7671
    %7878 = vmatpush.bf16.msra.mxu0 %v7663
    %7879 = vmatpush.bf16.msra.mxu0 %v7655
    %7880 = vmatmul.bf16.gmra.mxu0 %v7410
    %v7881 = vpop.f32.mrf.mxu0
    %v7882 = vadd.f32 0.0, %v7881
    %v7883 = vpop.f32.mrf.mxu0
    %v7884 = vadd.f32 0.0, %v7883
    %7885 = vdwg.mxu0
    %7886 = vmatpush.bf16.msra.mxu0 0
    %7887 = vmatpush.bf16.msra.mxu0 0
    %7888 = vmatpush.bf16.msra.mxu0 0
    %7889 = vmatpush.bf16.msra.mxu0 0
    %7890 = vmatpush.bf16.msra.mxu0 0
    %7891 = vmatpush.bf16.msra.mxu0 0
    %7892 = vmatpush.bf16.msra.mxu0 %v7727
    %7893 = vmatpush.bf16.msra.mxu0 %v7719
    %7894 = vmatmul.bf16.gmra.mxu0 %v7814
    %v7895 = vpop.f32.mrf.mxu0
    %v7896 = vadd.f32 %v7882, %v7895
    %v7897 = vpop.f32.mrf.mxu0
    %v7898 = vadd.f32 %v7884, %v7897
    %7899 = vdwg.mxu0
    %7900 = vmatpush.bf16.msra.mxu0 %v7712
    %7901 = vmatpush.bf16.msra.mxu0 %v7704
    %7902 = vmatpush.bf16.msra.mxu0 %v7696
    %7903 = vmatpush.bf16.msra.mxu0 %v7688
    %7904 = vmatpush.bf16.msra.mxu0 %v7680
    %7905 = vmatpush.bf16.msra.mxu0 %v7672
    %7906 = vmatpush.bf16.msra.mxu0 %v7664
    %7907 = vmatpush.bf16.msra.mxu0 %v7656
    %7908 = vmatmul.bf16.gmra.mxu0 %v7410
    %v7909 = vpop.f32.mrf.mxu0
    %v7910 = vadd.f32 0.0, %v7909
    %v7911 = vpop.f32.mrf.mxu0
    %v7912 = vadd.f32 0.0, %v7911
    %7913 = vdwg.mxu0
    %7914 = vmatpush.bf16.msra.mxu0 0
    %7915 = vmatpush.bf16.msra.mxu0 0
    %7916 = vmatpush.bf16.msra.mxu0 0
    %7917 = vmatpush.bf16.msra.mxu0 0
    %7918 = vmatpush.bf16.msra.mxu0 0
    %7919 = vmatpush.bf16.msra.mxu0 0
    %7920 = vmatpush.bf16.msra.mxu0 %v7728
    %7921 = vmatpush.bf16.msra.mxu0 %v7720
    %7922 = vmatmul.bf16.gmra.mxu0 %v7814
    %v7923 = vpop.f32.mrf.mxu0
    %v7924 = vadd.f32 %v7910, %v7923
    %v7925 = vpop.f32.mrf.mxu0
    %v7926 = vadd.f32 %v7912, %v7925
    %7927 = vdwg.mxu0
    %7928 = vmatpush.bf16.msra.mxu0 %v7713
    %7929 = vmatpush.bf16.msra.mxu0 %v7705
    %7930 = vmatpush.bf16.msra.mxu0 %v7697
    %7931 = vmatpush.bf16.msra.mxu0 %v7689
    %7932 = vmatpush.bf16.msra.mxu0 %v7681
    %7933 = vmatpush.bf16.msra.mxu0 %v7673
    %7934 = vmatpush.bf16.msra.mxu0 %v7665
    %7935 = vmatpush.bf16.msra.mxu0 %v7657
    %7936 = vmatmul.bf16.gmra.mxu0 %v7410
    %v7937 = vpop.f32.mrf.mxu0
    %v7938 = vadd.f32 0.0, %v7937
    %v7939 = vpop.f32.mrf.mxu0
    %v7940 = vadd.f32 0.0, %v7939
    %7941 = vdwg.mxu0
    %7942 = vmatpush.bf16.msra.mxu0 0
    %7943 = vmatpush.bf16.msra.mxu0 0
    %7944 = vmatpush.bf16.msra.mxu0 0
    %7945 = vmatpush.bf16.msra.mxu0 0
    %7946 = vmatpush.bf16.msra.mxu0 0
    %7947 = vmatpush.bf16.msra.mxu0 0
    %7948 = vmatpush.bf16.msra.mxu0 %v7729
    %7949 = vmatpush.bf16.msra.mxu0 %v7721
    %7950 = vmatmul.bf16.gmra.mxu0 %v7814
    %v7951 = vpop.f32.mrf.mxu0
    %v7952 = vadd.f32 %v7938, %v7951
    %v7953 = vpop.f32.mrf.mxu0
    %v7954 = vadd.f32 %v7940, %v7953
    %7955 = vdwg.mxu0
    %7956 = vmatpush.bf16.msra.mxu0 %v7714
    %7957 = vmatpush.bf16.msra.mxu0 %v7706
    %7958 = vmatpush.bf16.msra.mxu0 %v7698
    %7959 = vmatpush.bf16.msra.mxu0 %v7690
    %7960 = vmatpush.bf16.msra.mxu0 %v7682
    %7961 = vmatpush.bf16.msra.mxu0 %v7674
    %7962 = vmatpush.bf16.msra.mxu0 %v7666
    %7963 = vmatpush.bf16.msra.mxu0 %v7658
    %7964 = vmatmul.bf16.gmra.mxu0 %v7410
    %v7965 = vpop.f32.mrf.mxu0
    %v7966 = vadd.f32 0.0, %v7965
    %v7967 = vpop.f32.mrf.mxu0
    %v7968 = vadd.f32 0.0, %v7967
    %7969 = vdwg.mxu0
    %7970 = vmatpush.bf16.msra.mxu0 0
    %7971 = vmatpush.bf16.msra.mxu0 0
    %7972 = vmatpush.bf16.msra.mxu0 0
    %7973 = vmatpush.bf16.msra.mxu0 0
    %7974 = vmatpush.bf16.msra.mxu0 0
    %7975 = vmatpush.bf16.msra.mxu0 0
    %7976 = vmatpush.bf16.msra.mxu0 %v7730
    %7977 = vmatpush.bf16.msra.mxu0 %v7722
    %7978 = vmatmul.bf16.gmra.mxu0 %v7814
    %v7979 = vpop.f32.mrf.mxu0
    %v7980 = vadd.f32 %v7966, %v7979
    %v7981 = vpop.f32.mrf.mxu0
    %v7982 = vadd.f32 %v7968, %v7981
    %7983 = vdwg.mxu0
    %7984 = vmatpush.bf16.msra.mxu0 %v7715
    %7985 = vmatpush.bf16.msra.mxu0 %v7707
    %7986 = vmatpush.bf16.msra.mxu0 %v7699
    %7987 = vmatpush.bf16.msra.mxu0 %v7691
    %7988 = vmatpush.bf16.msra.mxu0 %v7683
    %7989 = vmatpush.bf16.msra.mxu0 %v7675
    %7990 = vmatpush.bf16.msra.mxu0 %v7667
    %7991 = vmatpush.bf16.msra.mxu0 %v7659
    %7992 = vmatmul.bf16.gmra.mxu0 %v7410
    %v7993 = vpop.f32.mrf.mxu0
    %v7994 = vadd.f32 0.0, %v7993
    %v7995 = vpop.f32.mrf.mxu0
    %v7996 = vadd.f32 0.0, %v7995
    %7997 = vdwg.mxu0
    %7998 = vmatpush.bf16.msra.mxu0 0
    %7999 = vmatpush.bf16.msra.mxu0 0
    %8000 = vmatpush.bf16.msra.mxu0 0
    %8001 = vmatpush.bf16.msra.mxu0 0
    %8002 = vmatpush.bf16.msra.mxu0 0
    %8003 = vmatpush.bf16.msra.mxu0 0
    %8004 = vmatpush.bf16.msra.mxu0 %v7731
    %8005 = vmatpush.bf16.msra.mxu0 %v7723
    %8006 = vmatmul.bf16.gmra.mxu0 %v7814
    %v8007 = vpop.f32.mrf.mxu0
    %v8008 = vadd.f32 %v7994, %v8007
    %v8009 = vpop.f32.mrf.mxu0
    %v8010 = vadd.f32 %v7996, %v8009
    %8011 = vdwg.mxu0
    %8012 = vmatpush.bf16.msra.mxu0 %v7716
    %8013 = vmatpush.bf16.msra.mxu0 %v7708
    %8014 = vmatpush.bf16.msra.mxu0 %v7700
    %8015 = vmatpush.bf16.msra.mxu0 %v7692
    %8016 = vmatpush.bf16.msra.mxu0 %v7684
    %8017 = vmatpush.bf16.msra.mxu0 %v7676
    %8018 = vmatpush.bf16.msra.mxu0 %v7668
    %8019 = vmatpush.bf16.msra.mxu0 %v7660
    %8020 = vmatmul.bf16.gmra.mxu0 %v7410
    %v8021 = vpop.f32.mrf.mxu0
    %v8022 = vadd.f32 0.0, %v8021
    %v8023 = vpop.f32.mrf.mxu0
    %v8024 = vadd.f32 0.0, %v8023
    %8025 = vdwg.mxu0
    %8026 = vmatpush.bf16.msra.mxu0 0
    %8027 = vmatpush.bf16.msra.mxu0 0
    %8028 = vmatpush.bf16.msra.mxu0 0
    %8029 = vmatpush.bf16.msra.mxu0 0
    %8030 = vmatpush.bf16.msra.mxu0 0
    %8031 = vmatpush.bf16.msra.mxu0 0
    %8032 = vmatpush.bf16.msra.mxu0 %v7732
    %8033 = vmatpush.bf16.msra.mxu0 %v7724
    %8034 = vmatmul.bf16.gmra.mxu0 %v7814
    %v8035 = vpop.f32.mrf.mxu0
    %v8036 = vadd.f32 %v8022, %v8035
    %v8037 = vpop.f32.mrf.mxu0
    %v8038 = vadd.f32 %v8024, %v8037
    %8039 = vdwg.mxu0
    %v8040 = vmul.f32 %v7840, %v328
    %v8041 = vmul.f32 %v7868, %v329
    %v8042 = vmul.f32 %v7896, %v330
    %v8043 = vmul.f32 %v7924, %v331
    %v8044 = vmul.f32 %v7952, %v332
    %v8045 = vmul.f32 %v7980, %v333
    %v8046 = vmul.f32 %v8008, %v334
    %v8047 = vmul.f32 %v8036, %v335
    %v8048 = vmul.f32 %v7842, %v328
    %v8049 = vmul.f32 %v7870, %v329
    %v8050 = vmul.f32 %v7898, %v330
    %v8051 = vmul.f32 %v7926, %v331
    %v8052 = vmul.f32 %v7954, %v332
    %v8053 = vmul.f32 %v7982, %v333
    %v8054 = vmul.f32 %v8010, %v334
    %v8055 = vmul.f32 %v8038, %v335
    %v8056 = vadd.f32 %v5498, %v8040
    %v8057 = vadd.f32 %v5499, %v8041
    %v8058 = vadd.f32 %v5500, %v8042
    %v8059 = vadd.f32 %v5501, %v8043
    %v8060 = vadd.f32 %v5502, %v8044
    %v8061 = vadd.f32 %v5503, %v8045
    %v8062 = vadd.f32 %v5504, %v8046
    %v8063 = vadd.f32 %v5505, %v8047
    %v8064 = vadd.f32 %v5506, %v8048
    %v8065 = vadd.f32 %v5507, %v8049
    %v8066 = vadd.f32 %v5508, %v8050
    %v8067 = vadd.f32 %v5509, %v8051
    %v8068 = vadd.f32 %v5510, %v8052
    %v8069 = vadd.f32 %v5511, %v8053
    %v8070 = vadd.f32 %v5512, %v8054
    %v8071 = vadd.f32 %v5513, %v8055
    %v8072 = vmax.f32 %v8056, 0.0
    %v8073 = vmax.f32 %v8057, 0.0
    %v8074 = vmax.f32 %v8058, 0.0
    %v8075 = vmax.f32 %v8059, 0.0
    %v8076 = vmax.f32 %v8060, 0.0
    %v8077 = vmax.f32 %v8061, 0.0
    %v8078 = vmax.f32 %v8062, 0.0
    %v8079 = vmax.f32 %v8063, 0.0
    %v8080 = vmax.f32 %v8064, 0.0
    %v8081 = vmax.f32 %v8065, 0.0
    %v8082 = vmax.f32 %v8066, 0.0
    %v8083 = vmax.f32 %v8067, 0.0
    %v8084 = vmax.f32 %v8068, 0.0
    %v8085 = vmax.f32 %v8069, 0.0
    %v8086 = vmax.f32 %v8070, 0.0
    %v8087 = vmax.f32 %v8071, 0.0
    %8088 = vst [vmem:[#allocation12] sm:$0xff] %v8072
    %8089 = vst [vmem:[#allocation12 + $0x8] sm:$0xff] %v8073
    %8090 = vst [vmem:[#allocation12 + $0x10] sm:$0xff] %v8074
    %8091 = vst [vmem:[#allocation12 + $0x18] sm:$0xff] %v8075
    %8092 = vst [vmem:[#allocation12 + $0x20] sm:$0xff] %v8076
    %8093 = vst [vmem:[#allocation12 + $0x28] sm:$0xff] %v8077
    %8094 = vst [vmem:[#allocation12 + $0x30] sm:$0xff] %v8078
    %8095 = vst [vmem:[#allocation12 + $0x38] sm:$0xff] %v8079
    %8096 = vst [vmem:[#allocation12 + $0x40] sm:$0xff] %v8080
    %8097 = vst [vmem:[#allocation12 + $0x48] sm:$0xff] %v8081
    %8098 = vst [vmem:[#allocation12 + $0x50] sm:$0xff] %v8082
    %8099 = vst [vmem:[#allocation12 + $0x58] sm:$0xff] %v8083
    %8100 = vst [vmem:[#allocation12 + $0x60] sm:$0xff] %v8084
    %8101 = vst [vmem:[#allocation12 + $0x68] sm:$0xff] %v8085
    %8102 = vst [vmem:[#allocation12 + $0x70] sm:$0xff] %v8086
    %8103 = vst [vmem:[#allocation12 + $0x78] sm:$0xff] %v8087
    // Predicated region
    $region42: #{tpu_custom_call.1} parent=1 // pred_check
      _
    $region43: #{tpu_custom_call.1} parent=1 // pred_check_branch
      %8105 = sbr.rel (0) target = $region45
    $region44: #{tpu_custom_call.1} parent=1 // pred_region
      %8107 = vsyncadd [#allocation5], 0
      %s8108 = sshll.u32 [#allocation12], 4
      %s8109 = int_to_ptr.vmem [resolvable:$true] %s8108
      %s8110 = sshll.u32 %s5, 4
      %s8111 = int_to_ptr.hbm [resolvable:$true] %s8110
      %8116 = dma.vmem_to_hbm [thread:$0]  %s8109, 2048, %s8111, [#allocation5], 1024, 1024, 64
    $region45: #{tpu_custom_call.1} parent=1 // pred_fallthru
      _
    // Predicated region
    $region46: #{tpu_custom_call.1} parent=1 // pred_check
      _
    $region47: #{tpu_custom_call.1} parent=1 // pred_check_branch
      %8118 = sbr.rel (0) target = $region49
    $region48: #{tpu_custom_call.1} parent=1 // pred_region
      %8120 = dma.done [#allocation5], 2048
    $region49: #{tpu_custom_call.1} parent=1 // pred_fallthru
      _
    %8121 = vsyncpa [#allocation4], 1
    %8122 = vsyncpa [#allocation7], 1
    %8123 = vsyncpa [#allocation10], 1
    %8124 = vsyncpa [#allocation5], 1

</llo_original>
